<compile_context>
chip_gen: v7x
topology: tpu7x:2x2x1
jax: 0.10.0
libtpu: 0.0.40
codegen_flags: <defaults>
</compile_context>

<pallas_src>
import functools

import jax
import jax.numpy as jnp
from jax.experimental import pallas as pl
from jax.experimental.pallas import tpu as pltpu


def _dot(a, b):
    return jnp.dot(a, b, preferred_element_type=jnp.float32)


def lenet5_kernel(x0_ref, w1e_ref, w1o_ref, b1_ref, w2e_ref, w2o_ref, b2_ref,
                  g_ref, s_ref, f1b_ref, f2w_ref, f2b_ref, f3w_ref, f3b_ref,
                  out_ref):
    n0 = x0_ref.shape[0]                      # BT * 32 rows (32 rows / sample)

    # ---- conv1 (1->6, 5x5, pad 2) + maxpool(2), x-pool folded into weights ----
    l1 = n0 - 4
    c1e = None
    c1o = None
    for kh in range(5):
        lhs = x0_ref[pl.ds(kh, l1), :]                       # (l1, 32)
        te = _dot(lhs, w1e_ref[kh * 32:(kh + 1) * 32, :])    # (l1, 84)
        to = _dot(lhs, w1o_ref[kh * 32:(kh + 1) * 32, :])
        c1e = te if c1e is None else c1e + te
        c1o = to if c1o is None else c1o + to
    a1x = jnp.maximum(c1e, c1o)                              # pool over x
    a1 = jnp.maximum(a1x[0:l1 - 1, :], a1x[1:l1, :])         # pool over y
    act1 = jnp.maximum(a1 + b1_ref[...], 0.0)                # (n0-5, 84)

    # ---- conv2 (6->16, 5x5, valid) + maxpool(2), v-pool folded into weights ----
    l2 = (n0 - 5) - 8
    c2e = None
    c2o = None
    for kh in range(5):
        lhs = act1[2 * kh:2 * kh + l2, :]                    # (l2, 84)
        te = _dot(lhs, w2e_ref[kh * 84:(kh + 1) * 84, :])    # (l2, 80)
        to = _dot(lhs, w2o_ref[kh * 84:(kh + 1) * 84, :])
        c2e = te if c2e is None else c2e + te
        c2o = to if c2o is None else c2o + to
    a2v = jnp.maximum(c2e, c2o)                              # pool over v
    a2 = jnp.maximum(a2v[0:l2 - 2, :], a2v[2:l2, :])         # pool over u
    pooled2 = jnp.maximum(a2 + b2_ref[...], 0.0)             # (n0-15, 80)

    # ---- fc1: contract over the 5x5 pooled grid via row-shifted matmuls ----
    l4 = (n0 - 15) - 16
    f1 = None
    for u in range(5):
        t = _dot(pooled2[4 * u:4 * u + l4, :],               # (l4, 80)
                 g_ref[u * 80:(u + 1) * 80, :])              # (80, 120)
        f1 = t if f1 is None else f1 + t                     # (l4, 120)

    # pick the single valid row per sample (row 32*b) with a 0/1 selection matmul
    h1 = jnp.maximum(_dot(s_ref[...], f1) + f1b_ref[...], 0.0)       # (BT, 120)
    h2 = jnp.maximum(_dot(h1, f2w_ref[...]) + f2b_ref[...], 0.0)     # (BT, 84)
    out_ref[...] = _dot(h2, f3w_ref[...]) + f3b_ref[...]             # (BT, 128)


# ----------------------------- wrapper / glue ------------------------------

def _conv1_toeplitz(w1, parity):
    # w1: (6,1,5,5) -> (5*32, 14*6). Rows: kh-block of padded input column xp.
    # Column (X*6 + o) = conv1 output at x = 2*X + parity, channel o.
    w = w1[:, 0]                                     # (6, 5, 5)  [o, kh, kw]
    xp = jnp.arange(32)[:, None]
    xo = 2 * jnp.arange(14)[None, :] + parity
    kw = xp - xo                                     # (32, 14)
    valid = (kw >= 0) & (kw <= 4)
    t = w[:, :, jnp.clip(kw, 0, 4)]                  # (6, 5, 32, 14)
    t = jnp.where(valid[None, None, :, :], t, 0.0)
    t = t.transpose(1, 2, 3, 0)                      # (kh, xp, X, o)
    return t.reshape(5 * 32, 14 * 6).astype(jnp.float32)


def _conv2_toeplitz(w2, parity):
    # w2: (16,6,5,5) -> (5*84, 5*16). Rows: kh-block of (X*6 + c).
    # Column (V*16 + o2) = conv2 output at v = 2*V + parity, channel o2.
    xi = jnp.arange(14)[:, None]
    vo = 2 * jnp.arange(5)[None, :] + parity
    kw = xi - vo                                     # (14, 5)
    valid = (kw >= 0) & (kw <= 4)
    t = w2[:, :, :, jnp.clip(kw, 0, 4)]              # (16, 6, 5, 14, 5)
    t = jnp.where(valid[None, None, None, :, :], t, 0.0)
    t = t.transpose(2, 3, 1, 4, 0)                   # (kh, X, c, V, o2)
    return t.reshape(5 * 84, 5 * 16).astype(jnp.float32)


def _fc1_matrix(f1w):
    # fc1 weight (120, 400) with columns ordered (o2, U, V) -> rows (U, V, o2).
    g = f1w.reshape(120, 16, 5, 5).transpose(2, 3, 1, 0)     # (U, V, o2, j)
    return g.reshape(5 * 80, 120).astype(jnp.float32)


@functools.partial(jax.jit, static_argnames=("final_size", "block_b"))
def lenet5_forward(x, params, *, final_size, block_b=32):
    (c1w, c1b, c2w, c2b, f1w, f1b, f2w, f2b, f3w, f3b) = params
    B = x.shape[0]
    bt = block_b if B >= block_b else max(8, ((B + 7) // 8) * 8)
    bp = ((B + bt - 1) // bt) * bt
    n_out_pad = 128

    # Raw zero-padded input, 32 rows of 32 lanes per sample, batch on sublanes.
    xpad = jnp.pad(x[:, 0].astype(jnp.float32), ((0, bp - B), (2, 2), (2, 2)))
    x0 = xpad.reshape(bp * 32, 32)

    w1e = _conv1_toeplitz(c1w, 0)
    w1o = _conv1_toeplitz(c1w, 1)
    b1w = jnp.tile(c1b.astype(jnp.float32), 14).reshape(1, 84)
    w2e = _conv2_toeplitz(c2w, 0)
    w2o = _conv2_toeplitz(c2w, 1)
    b2w = jnp.tile(c2b.astype(jnp.float32), 5).reshape(1, 80)
    g = _fc1_matrix(f1w)

    l4 = 32 * bt - 31
    s = (jnp.arange(l4)[None, :] == (32 * jnp.arange(bt))[:, None]
         ).astype(jnp.float32)                       # (bt, l4) row selector

    f1b_r = f1b.astype(jnp.float32).reshape(1, 120)
    f2wt = f2w.T.astype(jnp.float32)                 # (120, 84)
    f2b_r = f2b.astype(jnp.float32).reshape(1, 84)
    f3wt = jnp.zeros((84, n_out_pad), jnp.float32).at[:, :final_size].set(
        f3w.T.astype(jnp.float32))
    f3b_r = jnp.zeros((1, n_out_pad), jnp.float32).at[:, :final_size].set(
        f3b.astype(jnp.float32).reshape(1, -1))

    const = lambda i: (0, 0)
    out = pl.pallas_call(
        lenet5_kernel,
        out_shape=jax.ShapeDtypeStruct((bp, n_out_pad), jnp.float32),
        grid=(bp // bt,),
        in_specs=[
            pl.BlockSpec((bt * 32, 32), lambda i: (i, 0)),   # raw input rows
            pl.BlockSpec((160, 84), const),                  # conv1 Toeplitz even
            pl.BlockSpec((160, 84), const),                  # conv1 Toeplitz odd
            pl.BlockSpec((1, 84), const),                    # conv1 bias (wide)
            pl.BlockSpec((420, 80), const),                  # conv2 Toeplitz even
            pl.BlockSpec((420, 80), const),                  # conv2 Toeplitz odd
            pl.BlockSpec((1, 80), const),                    # conv2 bias (wide)
            pl.BlockSpec((400, 120), const),                 # fc1 weights (U-blocks)
            pl.BlockSpec((bt, l4), const),                   # 0/1 row selector
            pl.BlockSpec((1, 120), const),                   # fc1 bias
            pl.BlockSpec((120, 84), const),                  # fc2 weights
            pl.BlockSpec((1, 84), const),                    # fc2 bias
            pl.BlockSpec((84, n_out_pad), const),            # fc3 weights (padded)
            pl.BlockSpec((1, n_out_pad), const),             # fc3 bias (padded)
        ],
        out_specs=pl.BlockSpec((bt, n_out_pad), lambda i: (i, 0)),
        compiler_params=pltpu.CompilerParams(
            dimension_semantics=("parallel",)),
    )(x0, w1e, w1o, b1w, w2e, w2o, b2w, g, s,
      f1b_r, f2wt, f2b_r, f3wt, f3b_r)
    return out[:B, :final_size]


# ------------------------- pure-JAX reference ------------------------------

def _maxpool2(h):
    b, c, hh, ww = h.shape
    return h.reshape(b, c, hh // 2, 2, ww // 2, 2).max(axis=(3, 5))


def lenet5_reference(x, params, final_size):
    (c1w, c1b, c2w, c2b, f1w, f1b, f2w, f2b, f3w, f3b) = params
    dn = ("NCHW", "OIHW", "NCHW")
    h = jax.lax.conv_general_dilated(x, c1w, (1, 1), ((2, 2), (2, 2)),
                                     dimension_numbers=dn)
    h = jnp.maximum(h + c1b.reshape(1, -1, 1, 1), 0.0)
    h = _maxpool2(h)
    h = jax.lax.conv_general_dilated(h, c2w, (1, 1), "VALID",
                                     dimension_numbers=dn)
    h = jnp.maximum(h + c2b.reshape(1, -1, 1, 1), 0.0)
    h = _maxpool2(h)
    h = h.reshape(x.shape[0], 16 * 5 * 5)
    h = jnp.maximum(jnp.dot(h, f1w.T) + f1b, 0.0)
    h = jnp.maximum(jnp.dot(h, f2w.T) + f2b, 0.0)
    return jnp.dot(h, f3w.T) + f3b


if __name__ == "__main__":
    key = jax.random.PRNGKey(0)
    B, final_size = 2, 2
    ks = jax.random.split(key, 11)
    # LeNet5 with fc1 = Linear(16*5*5, ...) implies 1-channel 28x28 input.
    x = jax.random.normal(ks[0], (B, 1, 28, 28), jnp.float32)

    def xavier(k, shape, fan_in, fan_out):
        std = (2.0 / (fan_in + fan_out)) ** 0.5
        return std * jax.random.normal(k, shape, jnp.float32)

    c1w = xavier(ks[1], (6, 1, 5, 5), 1 * 25, 6 * 25)
    c1b = 0.05 * jax.random.normal(ks[2], (6,), jnp.float32)
    c2w = xavier(ks[3], (16, 6, 5, 5), 6 * 25, 16 * 25)
    c2b = 0.05 * jax.random.normal(ks[4], (16,), jnp.float32)
    f1w = xavier(ks[5], (120, 400), 400, 120)
    f1b = 0.05 * jax.random.normal(ks[6], (120,), jnp.float32)
    f2w = xavier(ks[7], (84, 120), 120, 84)
    f2b = 0.05 * jax.random.normal(ks[8], (84,), jnp.float32)
    f3w = xavier(ks[9], (final_size, 84), 84, final_size)
    f3b = 0.05 * jax.random.normal(ks[10], (final_size,), jnp.float32)

    params = (c1w, c1b, c2w, c2b, f1w, f1b, f2w, f2b, f3w, f3b)

    out = lenet5_forward(x, params, final_size=final_size, block_b=32)
    out = jax.block_until_ready(out)

    ref = jax.block_until_ready(lenet5_reference(x, params, final_size))

    assert out.shape == (B, final_size)
    assert jnp.allclose(out, ref, atol=2e-2, rtol=2e-2)
    print("KERNEL_OK")
</pallas_src>

<mosaic_0001>
module attributes {stable_mosaic.version = 11 : i64} {
  func.func @lenet5_kernel(%arg0: i32, %arg1: memref<256x32xf32, #tpu.memory_space<vmem>>, %arg2: memref<160x84xf32, #tpu.memory_space<vmem>>, %arg3: memref<160x84xf32, #tpu.memory_space<vmem>>, %arg4: memref<1x84xf32, #tpu.memory_space<vmem>>, %arg5: memref<420x80xf32, #tpu.memory_space<vmem>>, %arg6: memref<420x80xf32, #tpu.memory_space<vmem>>, %arg7: memref<1x80xf32, #tpu.memory_space<vmem>>, %arg8: memref<400x120xf32, #tpu.memory_space<vmem>>, %arg9: memref<8x225xf32, #tpu.memory_space<vmem>>, %arg10: memref<1x120xf32, #tpu.memory_space<vmem>>, %arg11: memref<120x84xf32, #tpu.memory_space<vmem>>, %arg12: memref<1x84xf32, #tpu.memory_space<vmem>>, %arg13: memref<84x128xf32, #tpu.memory_space<vmem>>, %arg14: memref<1x128xf32, #tpu.memory_space<vmem>>, %arg15: memref<8x128xf32, #tpu.memory_space<vmem>>) attributes {dimension_semantics = [#tpu.dimension_semantics<parallel>], iteration_bounds = array<i64: 1>, scalar_prefetch = 0 : i64, scratch_operands = 0 : i64, tpu.core_type = #tpu.core_type<tc>, window_params = [{transform_indices = @transform_0, window_bounds = array<i64: 256, 32>}, {pipeline_mode = #tpu.pipeline_mode<synchronous>, transform_indices = @transform_1, window_bounds = array<i64: 160, 84>}, {pipeline_mode = #tpu.pipeline_mode<synchronous>, transform_indices = @transform_2, window_bounds = array<i64: 160, 84>}, {pipeline_mode = #tpu.pipeline_mode<synchronous>, transform_indices = @transform_3, window_bounds = array<i64: 1, 84>}, {pipeline_mode = #tpu.pipeline_mode<synchronous>, transform_indices = @transform_4, window_bounds = array<i64: 420, 80>}, {pipeline_mode = #tpu.pipeline_mode<synchronous>, transform_indices = @transform_5, window_bounds = array<i64: 420, 80>}, {pipeline_mode = #tpu.pipeline_mode<synchronous>, transform_indices = @transform_6, window_bounds = array<i64: 1, 80>}, {pipeline_mode = #tpu.pipeline_mode<synchronous>, transform_indices = @transform_7, window_bounds = array<i64: 400, 120>}, {pipeline_mode = #tpu.pipeline_mode<synchronous>, transform_indices = @transform_8, window_bounds = array<i64: 8, 225>}, {pipeline_mode = #tpu.pipeline_mode<synchronous>, transform_indices = @transform_9, window_bounds = array<i64: 1, 120>}, {pipeline_mode = #tpu.pipeline_mode<synchronous>, transform_indices = @transform_10, window_bounds = array<i64: 120, 84>}, {pipeline_mode = #tpu.pipeline_mode<synchronous>, transform_indices = @transform_11, window_bounds = array<i64: 1, 84>}, {pipeline_mode = #tpu.pipeline_mode<synchronous>, transform_indices = @transform_12, window_bounds = array<i64: 84, 128>}, {pipeline_mode = #tpu.pipeline_mode<synchronous>, transform_indices = @transform_13, window_bounds = array<i64: 1, 128>}, {transform_indices = @transform_14, window_bounds = array<i64: 8, 128>}]} {
    %c0 = arith.constant 0 : index
    %c0_0 = arith.constant 0 : index
    %0 = vector.load %arg1[%c0, %c0_0] : memref<256x32xf32, #tpu.memory_space<vmem>>, vector<252x32xf32>
    %c0_1 = arith.constant 0 : index
    %c0_2 = arith.constant 0 : index
    %1 = vector.load %arg2[%c0_1, %c0_2] : memref<160x84xf32, #tpu.memory_space<vmem>>, vector<32x84xf32>
    %cst = arith.constant dense<0.000000e+00> : vector<252x84xf32>
    %2 = tpu.matmul %0, %1, %cst {dimension_numbers = #tpu.dot_dimension_numbers<[1], [0], [0], [1], [0, 0, 1, 1], [], []>} : vector<252x32xf32>, vector<32x84xf32>, vector<252x84xf32> -> vector<252x84xf32>
    %c0_3 = arith.constant 0 : index
    %c0_4 = arith.constant 0 : index
    %3 = vector.load %arg3[%c0_3, %c0_4] : memref<160x84xf32, #tpu.memory_space<vmem>>, vector<32x84xf32>
    %cst_5 = arith.constant dense<0.000000e+00> : vector<252x84xf32>
    %4 = tpu.matmul %0, %3, %cst_5 {dimension_numbers = #tpu.dot_dimension_numbers<[1], [0], [0], [1], [0, 0, 1, 1], [], []>} : vector<252x32xf32>, vector<32x84xf32>, vector<252x84xf32> -> vector<252x84xf32>
    %c1 = arith.constant 1 : index
    %c0_6 = arith.constant 0 : index
    %5 = vector.load %arg1[%c1, %c0_6] : memref<256x32xf32, #tpu.memory_space<vmem>>, vector<252x32xf32>
    %c32 = arith.constant 32 : index
    %c0_7 = arith.constant 0 : index
    %6 = vector.load %arg2[%c32, %c0_7] : memref<160x84xf32, #tpu.memory_space<vmem>>, vector<32x84xf32>
    %cst_8 = arith.constant dense<0.000000e+00> : vector<252x84xf32>
    %7 = tpu.matmul %5, %6, %cst_8 {dimension_numbers = #tpu.dot_dimension_numbers<[1], [0], [0], [1], [0, 0, 1, 1], [], []>} : vector<252x32xf32>, vector<32x84xf32>, vector<252x84xf32> -> vector<252x84xf32>
    %c32_9 = arith.constant 32 : index
    %c0_10 = arith.constant 0 : index
    %8 = vector.load %arg3[%c32_9, %c0_10] : memref<160x84xf32, #tpu.memory_space<vmem>>, vector<32x84xf32>
    %cst_11 = arith.constant dense<0.000000e+00> : vector<252x84xf32>
    %9 = tpu.matmul %5, %8, %cst_11 {dimension_numbers = #tpu.dot_dimension_numbers<[1], [0], [0], [1], [0, 0, 1, 1], [], []>} : vector<252x32xf32>, vector<32x84xf32>, vector<252x84xf32> -> vector<252x84xf32>
    %10 = arith.addf %2, %7 : vector<252x84xf32>
    %11 = arith.addf %4, %9 : vector<252x84xf32>
    %c2 = arith.constant 2 : index
    %c0_12 = arith.constant 0 : index
    %12 = vector.load %arg1[%c2, %c0_12] : memref<256x32xf32, #tpu.memory_space<vmem>>, vector<252x32xf32>
    %c64 = arith.constant 64 : index
    %c0_13 = arith.constant 0 : index
    %13 = vector.load %arg2[%c64, %c0_13] : memref<160x84xf32, #tpu.memory_space<vmem>>, vector<32x84xf32>
    %cst_14 = arith.constant dense<0.000000e+00> : vector<252x84xf32>
    %14 = tpu.matmul %12, %13, %cst_14 {dimension_numbers = #tpu.dot_dimension_numbers<[1], [0], [0], [1], [0, 0, 1, 1], [], []>} : vector<252x32xf32>, vector<32x84xf32>, vector<252x84xf32> -> vector<252x84xf32>
    %c64_15 = arith.constant 64 : index
    %c0_16 = arith.constant 0 : index
    %15 = vector.load %arg3[%c64_15, %c0_16] : memref<160x84xf32, #tpu.memory_space<vmem>>, vector<32x84xf32>
    %cst_17 = arith.constant dense<0.000000e+00> : vector<252x84xf32>
    %16 = tpu.matmul %12, %15, %cst_17 {dimension_numbers = #tpu.dot_dimension_numbers<[1], [0], [0], [1], [0, 0, 1, 1], [], []>} : vector<252x32xf32>, vector<32x84xf32>, vector<252x84xf32> -> vector<252x84xf32>
    %17 = arith.addf %10, %14 : vector<252x84xf32>
    %18 = arith.addf %11, %16 : vector<252x84xf32>
    %c3 = arith.constant 3 : index
    %c0_18 = arith.constant 0 : index
    %19 = vector.load %arg1[%c3, %c0_18] : memref<256x32xf32, #tpu.memory_space<vmem>>, vector<252x32xf32>
    %c96 = arith.constant 96 : index
    %c0_19 = arith.constant 0 : index
    %20 = vector.load %arg2[%c96, %c0_19] : memref<160x84xf32, #tpu.memory_space<vmem>>, vector<32x84xf32>
    %cst_20 = arith.constant dense<0.000000e+00> : vector<252x84xf32>
    %21 = tpu.matmul %19, %20, %cst_20 {dimension_numbers = #tpu.dot_dimension_numbers<[1], [0], [0], [1], [0, 0, 1, 1], [], []>} : vector<252x32xf32>, vector<32x84xf32>, vector<252x84xf32> -> vector<252x84xf32>
    %c96_21 = arith.constant 96 : index
    %c0_22 = arith.constant 0 : index
    %22 = vector.load %arg3[%c96_21, %c0_22] : memref<160x84xf32, #tpu.memory_space<vmem>>, vector<32x84xf32>
    %cst_23 = arith.constant dense<0.000000e+00> : vector<252x84xf32>
    %23 = tpu.matmul %19, %22, %cst_23 {dimension_numbers = #tpu.dot_dimension_numbers<[1], [0], [0], [1], [0, 0, 1, 1], [], []>} : vector<252x32xf32>, vector<32x84xf32>, vector<252x84xf32> -> vector<252x84xf32>
    %24 = arith.addf %17, %21 : vector<252x84xf32>
    %25 = arith.addf %18, %23 : vector<252x84xf32>
    %c4 = arith.constant 4 : index
    %c0_24 = arith.constant 0 : index
    %26 = vector.load %arg1[%c4, %c0_24] : memref<256x32xf32, #tpu.memory_space<vmem>>, vector<252x32xf32>
    %c128 = arith.constant 128 : index
    %c0_25 = arith.constant 0 : index
    %27 = vector.load %arg2[%c128, %c0_25] : memref<160x84xf32, #tpu.memory_space<vmem>>, vector<32x84xf32>
    %cst_26 = arith.constant dense<0.000000e+00> : vector<252x84xf32>
    %28 = tpu.matmul %26, %27, %cst_26 {dimension_numbers = #tpu.dot_dimension_numbers<[1], [0], [0], [1], [0, 0, 1, 1], [], []>} : vector<252x32xf32>, vector<32x84xf32>, vector<252x84xf32> -> vector<252x84xf32>
    %c128_27 = arith.constant 128 : index
    %c0_28 = arith.constant 0 : index
    %29 = vector.load %arg3[%c128_27, %c0_28] : memref<160x84xf32, #tpu.memory_space<vmem>>, vector<32x84xf32>
    %cst_29 = arith.constant dense<0.000000e+00> : vector<252x84xf32>
    %30 = tpu.matmul %26, %29, %cst_29 {dimension_numbers = #tpu.dot_dimension_numbers<[1], [0], [0], [1], [0, 0, 1, 1], [], []>} : vector<252x32xf32>, vector<32x84xf32>, vector<252x84xf32> -> vector<252x84xf32>
    %31 = arith.addf %24, %28 : vector<252x84xf32>
    %32 = arith.addf %25, %30 : vector<252x84xf32>
    %33 = arith.maximumf %31, %32 : vector<252x84xf32>
    %34 = vector.extract_strided_slice %33 {offsets = [0, 0], sizes = [251, 84], strides = [1, 1]} : vector<252x84xf32> to vector<251x84xf32>
    %35 = vector.extract_strided_slice %33 {offsets = [1, 0], sizes = [251, 84], strides = [1, 1]} : vector<252x84xf32> to vector<251x84xf32>
    %36 = arith.maximumf %34, %35 : vector<251x84xf32>
    %c0_30 = arith.constant 0 : index
    %c0_31 = arith.constant 0 : index
    %37 = vector.load %arg4[%c0_30, %c0_31] : memref<1x84xf32, #tpu.memory_space<vmem>>, vector<1x84xf32>
    %38 = vector.broadcast %37 : vector<1x84xf32> to vector<251x84xf32>
    %39 = arith.addf %36, %38 : vector<251x84xf32>
    %cst_32 = arith.constant 0.000000e+00 : f32
    %40 = vector.broadcast %cst_32 : f32 to vector<251x84xf32>
    %41 = arith.maximumf %39, %40 : vector<251x84xf32>
    %42 = vector.extract_strided_slice %41 {offsets = [0, 0], sizes = [243, 84], strides = [1, 1]} : vector<251x84xf32> to vector<243x84xf32>
    %c0_33 = arith.constant 0 : index
    %c0_34 = arith.constant 0 : index
    %43 = vector.load %arg5[%c0_33, %c0_34] : memref<420x80xf32, #tpu.memory_space<vmem>>, vector<84x80xf32>
    %cst_35 = arith.constant dense<0.000000e+00> : vector<243x80xf32>
    %44 = tpu.matmul %42, %43, %cst_35 {dimension_numbers = #tpu.dot_dimension_numbers<[1], [0], [0], [1], [0, 0, 1, 1], [], []>} : vector<243x84xf32>, vector<84x80xf32>, vector<243x80xf32> -> vector<243x80xf32>
    %c0_36 = arith.constant 0 : index
    %c0_37 = arith.constant 0 : index
    %45 = vector.load %arg6[%c0_36, %c0_37] : memref<420x80xf32, #tpu.memory_space<vmem>>, vector<84x80xf32>
    %cst_38 = arith.constant dense<0.000000e+00> : vector<243x80xf32>
    %46 = tpu.matmul %42, %45, %cst_38 {dimension_numbers = #tpu.dot_dimension_numbers<[1], [0], [0], [1], [0, 0, 1, 1], [], []>} : vector<243x84xf32>, vector<84x80xf32>, vector<243x80xf32> -> vector<243x80xf32>
    %47 = vector.extract_strided_slice %41 {offsets = [2, 0], sizes = [243, 84], strides = [1, 1]} : vector<251x84xf32> to vector<243x84xf32>
    %c84 = arith.constant 84 : index
    %c0_39 = arith.constant 0 : index
    %48 = vector.load %arg5[%c84, %c0_39] : memref<420x80xf32, #tpu.memory_space<vmem>>, vector<84x80xf32>
    %cst_40 = arith.constant dense<0.000000e+00> : vector<243x80xf32>
    %49 = tpu.matmul %47, %48, %cst_40 {dimension_numbers = #tpu.dot_dimension_numbers<[1], [0], [0], [1], [0, 0, 1, 1], [], []>} : vector<243x84xf32>, vector<84x80xf32>, vector<243x80xf32> -> vector<243x80xf32>
    %c84_41 = arith.constant 84 : index
    %c0_42 = arith.constant 0 : index
    %50 = vector.load %arg6[%c84_41, %c0_42] : memref<420x80xf32, #tpu.memory_space<vmem>>, vector<84x80xf32>
    %cst_43 = arith.constant dense<0.000000e+00> : vector<243x80xf32>
    %51 = tpu.matmul %47, %50, %cst_43 {dimension_numbers = #tpu.dot_dimension_numbers<[1], [0], [0], [1], [0, 0, 1, 1], [], []>} : vector<243x84xf32>, vector<84x80xf32>, vector<243x80xf32> -> vector<243x80xf32>
    %52 = arith.addf %44, %49 : vector<243x80xf32>
    %53 = arith.addf %46, %51 : vector<243x80xf32>
    %54 = vector.extract_strided_slice %41 {offsets = [4, 0], sizes = [243, 84], strides = [1, 1]} : vector<251x84xf32> to vector<243x84xf32>
    %c168 = arith.constant 168 : index
    %c0_44 = arith.constant 0 : index
    %55 = vector.load %arg5[%c168, %c0_44] : memref<420x80xf32, #tpu.memory_space<vmem>>, vector<84x80xf32>
    %cst_45 = arith.constant dense<0.000000e+00> : vector<243x80xf32>
    %56 = tpu.matmul %54, %55, %cst_45 {dimension_numbers = #tpu.dot_dimension_numbers<[1], [0], [0], [1], [0, 0, 1, 1], [], []>} : vector<243x84xf32>, vector<84x80xf32>, vector<243x80xf32> -> vector<243x80xf32>
    %c168_46 = arith.constant 168 : index
    %c0_47 = arith.constant 0 : index
    %57 = vector.load %arg6[%c168_46, %c0_47] : memref<420x80xf32, #tpu.memory_space<vmem>>, vector<84x80xf32>
    %cst_48 = arith.constant dense<0.000000e+00> : vector<243x80xf32>
    %58 = tpu.matmul %54, %57, %cst_48 {dimension_numbers = #tpu.dot_dimension_numbers<[1], [0], [0], [1], [0, 0, 1, 1], [], []>} : vector<243x84xf32>, vector<84x80xf32>, vector<243x80xf32> -> vector<243x80xf32>
    %59 = arith.addf %52, %56 : vector<243x80xf32>
    %60 = arith.addf %53, %58 : vector<243x80xf32>
    %61 = vector.extract_strided_slice %41 {offsets = [6, 0], sizes = [243, 84], strides = [1, 1]} : vector<251x84xf32> to vector<243x84xf32>
    %c252 = arith.constant 252 : index
    %c0_49 = arith.constant 0 : index
    %62 = vector.load %arg5[%c252, %c0_49] : memref<420x80xf32, #tpu.memory_space<vmem>>, vector<84x80xf32>
    %cst_50 = arith.constant dense<0.000000e+00> : vector<243x80xf32>
    %63 = tpu.matmul %61, %62, %cst_50 {dimension_numbers = #tpu.dot_dimension_numbers<[1], [0], [0], [1], [0, 0, 1, 1], [], []>} : vector<243x84xf32>, vector<84x80xf32>, vector<243x80xf32> -> vector<243x80xf32>
    %c252_51 = arith.constant 252 : index
    %c0_52 = arith.constant 0 : index
    %64 = vector.load %arg6[%c252_51, %c0_52] : memref<420x80xf32, #tpu.memory_space<vmem>>, vector<84x80xf32>
    %cst_53 = arith.constant dense<0.000000e+00> : vector<243x80xf32>
    %65 = tpu.matmul %61, %64, %cst_53 {dimension_numbers = #tpu.dot_dimension_numbers<[1], [0], [0], [1], [0, 0, 1, 1], [], []>} : vector<243x84xf32>, vector<84x80xf32>, vector<243x80xf32> -> vector<243x80xf32>
    %66 = arith.addf %59, %63 : vector<243x80xf32>
    %67 = arith.addf %60, %65 : vector<243x80xf32>
    %68 = vector.extract_strided_slice %41 {offsets = [8, 0], sizes = [243, 84], strides = [1, 1]} : vector<251x84xf32> to vector<243x84xf32>
    %c336 = arith.constant 336 : index
    %c0_54 = arith.constant 0 : index
    %69 = vector.load %arg5[%c336, %c0_54] : memref<420x80xf32, #tpu.memory_space<vmem>>, vector<84x80xf32>
    %cst_55 = arith.constant dense<0.000000e+00> : vector<243x80xf32>
    %70 = tpu.matmul %68, %69, %cst_55 {dimension_numbers = #tpu.dot_dimension_numbers<[1], [0], [0], [1], [0, 0, 1, 1], [], []>} : vector<243x84xf32>, vector<84x80xf32>, vector<243x80xf32> -> vector<243x80xf32>
    %c336_56 = arith.constant 336 : index
    %c0_57 = arith.constant 0 : index
    %71 = vector.load %arg6[%c336_56, %c0_57] : memref<420x80xf32, #tpu.memory_space<vmem>>, vector<84x80xf32>
    %cst_58 = arith.constant dense<0.000000e+00> : vector<243x80xf32>
    %72 = tpu.matmul %68, %71, %cst_58 {dimension_numbers = #tpu.dot_dimension_numbers<[1], [0], [0], [1], [0, 0, 1, 1], [], []>} : vector<243x84xf32>, vector<84x80xf32>, vector<243x80xf32> -> vector<243x80xf32>
    %73 = arith.addf %66, %70 : vector<243x80xf32>
    %74 = arith.addf %67, %72 : vector<243x80xf32>
    %75 = arith.maximumf %73, %74 : vector<243x80xf32>
    %76 = vector.extract_strided_slice %75 {offsets = [0, 0], sizes = [241, 80], strides = [1, 1]} : vector<243x80xf32> to vector<241x80xf32>
    %77 = vector.extract_strided_slice %75 {offsets = [2, 0], sizes = [241, 80], strides = [1, 1]} : vector<243x80xf32> to vector<241x80xf32>
    %78 = arith.maximumf %76, %77 : vector<241x80xf32>
    %c0_59 = arith.constant 0 : index
    %c0_60 = arith.constant 0 : index
    %79 = vector.load %arg7[%c0_59, %c0_60] : memref<1x80xf32, #tpu.memory_space<vmem>>, vector<1x80xf32>
    %80 = vector.broadcast %79 : vector<1x80xf32> to vector<241x80xf32>
    %81 = arith.addf %78, %80 : vector<241x80xf32>
    %cst_61 = arith.constant 0.000000e+00 : f32
    %82 = vector.broadcast %cst_61 : f32 to vector<241x80xf32>
    %83 = arith.maximumf %81, %82 : vector<241x80xf32>
    %84 = vector.extract_strided_slice %83 {offsets = [0, 0], sizes = [225, 80], strides = [1, 1]} : vector<241x80xf32> to vector<225x80xf32>
    %c0_62 = arith.constant 0 : index
    %c0_63 = arith.constant 0 : index
    %85 = vector.load %arg8[%c0_62, %c0_63] : memref<400x120xf32, #tpu.memory_space<vmem>>, vector<80x120xf32>
    %cst_64 = arith.constant dense<0.000000e+00> : vector<225x120xf32>
    %86 = tpu.matmul %84, %85, %cst_64 {dimension_numbers = #tpu.dot_dimension_numbers<[1], [0], [0], [1], [0, 0, 1, 1], [], []>} : vector<225x80xf32>, vector<80x120xf32>, vector<225x120xf32> -> vector<225x120xf32>
    %87 = vector.extract_strided_slice %83 {offsets = [4, 0], sizes = [225, 80], strides = [1, 1]} : vector<241x80xf32> to vector<225x80xf32>
    %c80 = arith.constant 80 : index
    %c0_65 = arith.constant 0 : index
    %88 = vector.load %arg8[%c80, %c0_65] : memref<400x120xf32, #tpu.memory_space<vmem>>, vector<80x120xf32>
    %cst_66 = arith.constant dense<0.000000e+00> : vector<225x120xf32>
    %89 = tpu.matmul %87, %88, %cst_66 {dimension_numbers = #tpu.dot_dimension_numbers<[1], [0], [0], [1], [0, 0, 1, 1], [], []>} : vector<225x80xf32>, vector<80x120xf32>, vector<225x120xf32> -> vector<225x120xf32>
    %90 = arith.addf %86, %89 : vector<225x120xf32>
    %91 = vector.extract_strided_slice %83 {offsets = [8, 0], sizes = [225, 80], strides = [1, 1]} : vector<241x80xf32> to vector<225x80xf32>
    %c160 = arith.constant 160 : index
    %c0_67 = arith.constant 0 : index
    %92 = vector.load %arg8[%c160, %c0_67] : memref<400x120xf32, #tpu.memory_space<vmem>>, vector<80x120xf32>
    %cst_68 = arith.constant dense<0.000000e+00> : vector<225x120xf32>
    %93 = tpu.matmul %91, %92, %cst_68 {dimension_numbers = #tpu.dot_dimension_numbers<[1], [0], [0], [1], [0, 0, 1, 1], [], []>} : vector<225x80xf32>, vector<80x120xf32>, vector<225x120xf32> -> vector<225x120xf32>
    %94 = arith.addf %90, %93 : vector<225x120xf32>
    %95 = vector.extract_strided_slice %83 {offsets = [12, 0], sizes = [225, 80], strides = [1, 1]} : vector<241x80xf32> to vector<225x80xf32>
    %c240 = arith.constant 240 : index
    %c0_69 = arith.constant 0 : index
    %96 = vector.load %arg8[%c240, %c0_69] : memref<400x120xf32, #tpu.memory_space<vmem>>, vector<80x120xf32>
    %cst_70 = arith.constant dense<0.000000e+00> : vector<225x120xf32>
    %97 = tpu.matmul %95, %96, %cst_70 {dimension_numbers = #tpu.dot_dimension_numbers<[1], [0], [0], [1], [0, 0, 1, 1], [], []>} : vector<225x80xf32>, vector<80x120xf32>, vector<225x120xf32> -> vector<225x120xf32>
    %98 = arith.addf %94, %97 : vector<225x120xf32>
    %99 = vector.extract_strided_slice %83 {offsets = [16, 0], sizes = [225, 80], strides = [1, 1]} : vector<241x80xf32> to vector<225x80xf32>
    %c320 = arith.constant 320 : index
    %c0_71 = arith.constant 0 : index
    %100 = vector.load %arg8[%c320, %c0_71] : memref<400x120xf32, #tpu.memory_space<vmem>>, vector<80x120xf32>
    %cst_72 = arith.constant dense<0.000000e+00> : vector<225x120xf32>
    %101 = tpu.matmul %99, %100, %cst_72 {dimension_numbers = #tpu.dot_dimension_numbers<[1], [0], [0], [1], [0, 0, 1, 1], [], []>} : vector<225x80xf32>, vector<80x120xf32>, vector<225x120xf32> -> vector<225x120xf32>
    %102 = arith.addf %98, %101 : vector<225x120xf32>
    %c0_73 = arith.constant 0 : index
    %c0_74 = arith.constant 0 : index
    %103 = vector.load %arg9[%c0_73, %c0_74] : memref<8x225xf32, #tpu.memory_space<vmem>>, vector<8x225xf32>
    %cst_75 = arith.constant dense<0.000000e+00> : vector<8x120xf32>
    %104 = tpu.matmul %103, %102, %cst_75 {dimension_numbers = #tpu.dot_dimension_numbers<[1], [0], [0], [1], [0, 0, 1, 1], [], []>} : vector<8x225xf32>, vector<225x120xf32>, vector<8x120xf32> -> vector<8x120xf32>
    %c0_76 = arith.constant 0 : index
    %c0_77 = arith.constant 0 : index
    %105 = vector.load %arg10[%c0_76, %c0_77] : memref<1x120xf32, #tpu.memory_space<vmem>>, vector<1x120xf32>
    %106 = vector.broadcast %105 : vector<1x120xf32> to vector<8x120xf32>
    %107 = arith.addf %104, %106 : vector<8x120xf32>
    %cst_78 = arith.constant 0.000000e+00 : f32
    %108 = vector.broadcast %cst_78 : f32 to vector<8x120xf32>
    %109 = arith.maximumf %107, %108 : vector<8x120xf32>
    %c0_79 = arith.constant 0 : index
    %c0_80 = arith.constant 0 : index
    %110 = vector.load %arg11[%c0_79, %c0_80] : memref<120x84xf32, #tpu.memory_space<vmem>>, vector<120x84xf32>
    %cst_81 = arith.constant dense<0.000000e+00> : vector<8x84xf32>
    %111 = tpu.matmul %109, %110, %cst_81 {dimension_numbers = #tpu.dot_dimension_numbers<[1], [0], [0], [1], [0, 0, 1, 1], [], []>} : vector<8x120xf32>, vector<120x84xf32>, vector<8x84xf32> -> vector<8x84xf32>
    %c0_82 = arith.constant 0 : index
    %c0_83 = arith.constant 0 : index
    %112 = vector.load %arg12[%c0_82, %c0_83] : memref<1x84xf32, #tpu.memory_space<vmem>>, vector<1x84xf32>
    %113 = vector.broadcast %112 : vector<1x84xf32> to vector<8x84xf32>
    %114 = arith.addf %111, %113 : vector<8x84xf32>
    %cst_84 = arith.constant 0.000000e+00 : f32
    %115 = vector.broadcast %cst_84 : f32 to vector<8x84xf32>
    %116 = arith.maximumf %114, %115 : vector<8x84xf32>
    %c0_85 = arith.constant 0 : index
    %c0_86 = arith.constant 0 : index
    %117 = vector.load %arg13[%c0_85, %c0_86] : memref<84x128xf32, #tpu.memory_space<vmem>>, vector<84x128xf32>
    %cst_87 = arith.constant dense<0.000000e+00> : vector<8x128xf32>
    %118 = tpu.matmul %116, %117, %cst_87 {dimension_numbers = #tpu.dot_dimension_numbers<[1], [0], [0], [1], [0, 0, 1, 1], [], []>} : vector<8x84xf32>, vector<84x128xf32>, vector<8x128xf32> -> vector<8x128xf32>
    %c0_88 = arith.constant 0 : index
    %c0_89 = arith.constant 0 : index
    %119 = vector.load %arg14[%c0_88, %c0_89] : memref<1x128xf32, #tpu.memory_space<vmem>>, vector<1x128xf32>
    %120 = vector.broadcast %119 : vector<1x128xf32> to vector<8x128xf32>
    %121 = arith.addf %118, %120 : vector<8x128xf32>
    %c0_90 = arith.constant 0 : index
    %c0_91 = arith.constant 0 : index
    %122 = vector.load %arg15[%c0_90, %c0_91] : memref<8x128xf32, #tpu.memory_space<vmem>>, vector<8x128xf32>
    tpu.vector_store %arg15[%c0_90, %c0_91], %121 {strides = array<i32>} : memref<8x128xf32, #tpu.memory_space<vmem>>, vector<8x128xf32>,
    return
  }
  func.func @transform_0(%arg0: i32) -> (i32, i32) {
    %c0_i32 = arith.constant 0 : i32
    %c0_i32_0 = arith.constant 0 : i32
    return %arg0, %c0_i32 : i32, i32
  }
  func.func @transform_1(%arg0: i32) -> (i32, i32) {
    %c0_i32 = arith.constant 0 : i32
    %c0_i32_0 = arith.constant 0 : i32
    %c0_i32_1 = arith.constant 0 : i32
    return %c0_i32, %c0_i32_0 : i32, i32
  }
  func.func @transform_2(%arg0: i32) -> (i32, i32) {
    %c0_i32 = arith.constant 0 : i32
    %c0_i32_0 = arith.constant 0 : i32
    %c0_i32_1 = arith.constant 0 : i32
    return %c0_i32, %c0_i32_0 : i32, i32
  }
  func.func @transform_3(%arg0: i32) -> (i32, i32) {
    %c0_i32 = arith.constant 0 : i32
    %c0_i32_0 = arith.constant 0 : i32
    %c0_i32_1 = arith.constant 0 : i32
    return %c0_i32, %c0_i32_0 : i32, i32
  }
  func.func @transform_4(%arg0: i32) -> (i32, i32) {
    %c0_i32 = arith.constant 0 : i32
    %c0_i32_0 = arith.constant 0 : i32
    %c0_i32_1 = arith.constant 0 : i32
    return %c0_i32, %c0_i32_0 : i32, i32
  }
  func.func @transform_5(%arg0: i32) -> (i32, i32) {
    %c0_i32 = arith.constant 0 : i32
    %c0_i32_0 = arith.constant 0 : i32
    %c0_i32_1 = arith.constant 0 : i32
    return %c0_i32, %c0_i32_0 : i32, i32
  }
  func.func @transform_6(%arg0: i32) -> (i32, i32) {
    %c0_i32 = arith.constant 0 : i32
    %c0_i32_0 = arith.constant 0 : i32
    %c0_i32_1 = arith.constant 0 : i32
    return %c0_i32, %c0_i32_0 : i32, i32
  }
  func.func @transform_7(%arg0: i32) -> (i32, i32) {
    %c0_i32 = arith.constant 0 : i32
    %c0_i32_0 = arith.constant 0 : i32
    %c0_i32_1 = arith.constant 0 : i32
    return %c0_i32, %c0_i32_0 : i32, i32
  }
  func.func @transform_8(%arg0: i32) -> (i32, i32) {
    %c0_i32 = arith.constant 0 : i32
    %c0_i32_0 = arith.constant 0 : i32
    %c0_i32_1 = arith.constant 0 : i32
    return %c0_i32, %c0_i32_0 : i32, i32
  }
  func.func @transform_9(%arg0: i32) -> (i32, i32) {
    %c0_i32 = arith.constant 0 : i32
    %c0_i32_0 = arith.constant 0 : i32
    %c0_i32_1 = arith.constant 0 : i32
    return %c0_i32, %c0_i32_0 : i32, i32
  }
  func.func @transform_10(%arg0: i32) -> (i32, i32) {
    %c0_i32 = arith.constant 0 : i32
    %c0_i32_0 = arith.constant 0 : i32
    %c0_i32_1 = arith.constant 0 : i32
    return %c0_i32, %c0_i32_0 : i32, i32
  }
  func.func @transform_11(%arg0: i32) -> (i32, i32) {
    %c0_i32 = arith.constant 0 : i32
    %c0_i32_0 = arith.constant 0 : i32
    %c0_i32_1 = arith.constant 0 : i32
    return %c0_i32, %c0_i32_0 : i32, i32
  }
  func.func @transform_12(%arg0: i32) -> (i32, i32) {
    %c0_i32 = arith.constant 0 : i32
    %c0_i32_0 = arith.constant 0 : i32
    %c0_i32_1 = arith.constant 0 : i32
    return %c0_i32, %c0_i32_0 : i32, i32
  }
  func.func @transform_13(%arg0: i32) -> (i32, i32) {
    %c0_i32 = arith.constant 0 : i32
    %c0_i32_0 = arith.constant 0 : i32
    %c0_i32_1 = arith.constant 0 : i32
    return %c0_i32, %c0_i32_0 : i32, i32
  }
  func.func @transform_14(%arg0: i32) -> (i32, i32) {
    %c0_i32 = arith.constant 0 : i32
    %c0_i32_0 = arith.constant 0 : i32
    return %arg0, %c0_i32 : i32, i32
  }
}

</mosaic_0001>

<llo_original>
// kernel: tile.13
$region0: #{tile.13}
  #allocation0 [shape = 's32[1]{0}', space=sflag, size = 0x4, scoped, tag = 'scoped memory for tile.13']
  %s0 = inlined_call_operand.vmem [shape: f32[6], index: 0, kind: input, shape index: {}]
  %s1 = inlined_call_operand.vmem [shape: f32[14,6], index: 1, kind: output, shape index: {}]
  // Predicated region
  $region2: #{tile.13} parent=0 // pred_check
    _
  $region3: #{tile.13} parent=0 // pred_check_branch
    %3 = sbr.rel (0) target = $region5
  $region4: #{tile.13} parent=0 // pred_region
    _
  $region5: #{tile.13} parent=0 // pred_fallthru
    _
  %v4 = vld [vmem:[%s0] ss:$0 sm:$0xff]
  %5 = vst [vmem:[%s1] sm:$0xff] %v4
  %s6 = scalar_lea.vmem %s1, 8
  %7 = vst [vmem:[%s6] sm:$0xff] %v4

// kernel: tile.14
$region0: #{tile.14}
  %s0 = inlined_call_operand.vmem [shape: f32[14,6], index: 0, kind: input, shape index: {}]
  %s1 = inlined_call_operand.vmem [shape: f32[1,84], index: 1, kind: output, shape index: {}]
  $region1: #{tile.14} parent=0
    #allocation0 [shape = 'u8[4096]{0}', space=vmem, size = 0x1000, scoped, tag = 'scoped mem for output reshape']
    %v2 = vld [vmem:[%s0] sm:$0x1]
    %vm3 = vcmask 48128
    %4 = vst.msk [vmem:[#allocation0] sm:$0x1] %vm3, %v2
    %s5 = scalar_lea.vmem %s0, 13
    %v6 = vld [vmem:[%s5] sm:$0x1]
    %7 = vrot.lane.b32.xlu0 %v6, 78
    %v8 = vpop.permute.xlu0 %7
    %vm9 = vcmask 687728
    %10 = vst.msk [vmem:[#allocation0] sm:$0x1] %vm9, %v8
    %s11 = scalar_lea.vmem %s0, 12
    %v12 = vld [vmem:[%s11] sm:$0x1]
    %13 = vrot.lane.b32.xlu0 %v12, 72
    %v14 = vpop.permute.xlu0 %13
    %vm15 = vcmask 638528
    %16 = vst.msk [vmem:[#allocation0] sm:$0x1] %vm15, %v14
    %s17 = scalar_lea.vmem %s0, 11
    %v18 = vld [vmem:[%s17] sm:$0x1]
    %19 = vrot.lane.b32.xlu0 %v18, 66
    %v20 = vpop.permute.xlu0 %19
    %vm21 = vcmask 589328
    %22 = vst.msk [vmem:[#allocation0] sm:$0x1] %vm21, %v20
    %s23 = scalar_lea.vmem %s0, 10
    %v24 = vld [vmem:[%s23] sm:$0x1]
    %25 = vrot.lane.b32.xlu0 %v24, 60
    %v26 = vpop.permute.xlu0 %25
    %vm27 = vcmask 540128
    %28 = vst.msk [vmem:[#allocation0] sm:$0x1] %vm27, %v26
    %s29 = scalar_lea.vmem %s0, 9
    %v30 = vld [vmem:[%s29] sm:$0x1]
    %31 = vrot.lane.b32.xlu0 %v30, 54
    %v32 = vpop.permute.xlu0 %31
    %vm33 = vcmask 490928
    %34 = vst.msk [vmem:[#allocation0] sm:$0x1] %vm33, %v32
    %s35 = scalar_lea.vmem %s0, 8
    %v36 = vld [vmem:[%s35] sm:$0x1]
    %37 = vrot.lane.b32.xlu0 %v36, 48
    %v38 = vpop.permute.xlu0 %37
    %vm39 = vcmask 441728
    %40 = vst.msk [vmem:[#allocation0] sm:$0x1] %vm39, %v38
    %s41 = scalar_lea.vmem %s0, 7
    %v42 = vld [vmem:[%s41] sm:$0x1]
    %43 = vrot.lane.b32.xlu0 %v42, 42
    %v44 = vpop.permute.xlu0 %43
    %vm45 = vcmask 392528
    %46 = vst.msk [vmem:[#allocation0] sm:$0x1] %vm45, %v44
    %s47 = scalar_lea.vmem %s0, 6
    %v48 = vld [vmem:[%s47] sm:$0x1]
    %49 = vrot.lane.b32.xlu0 %v48, 36
    %v50 = vpop.permute.xlu0 %49
    %vm51 = vcmask 343328
    %52 = vst.msk [vmem:[#allocation0] sm:$0x1] %vm51, %v50
    %s53 = scalar_lea.vmem %s0, 5
    %v54 = vld [vmem:[%s53] sm:$0x1]
    %55 = vrot.lane.b32.xlu0 %v54, 30
    %v56 = vpop.permute.xlu0 %55
    %vm57 = vcmask 294128
    %58 = vst.msk [vmem:[#allocation0] sm:$0x1] %vm57, %v56
    %s59 = scalar_lea.vmem %s0, 4
    %v60 = vld [vmem:[%s59] sm:$0x1]
    %61 = vrot.lane.b32.xlu0 %v60, 24
    %v62 = vpop.permute.xlu0 %61
    %vm63 = vcmask 244928
    %64 = vst.msk [vmem:[#allocation0] sm:$0x1] %vm63, %v62
    %s65 = scalar_lea.vmem %s0, 3
    %v66 = vld [vmem:[%s65] sm:$0x1]
    %67 = vrot.lane.b32.xlu0 %v66, 18
    %v68 = vpop.permute.xlu0 %67
    %vm69 = vcmask 195728
    %70 = vst.msk [vmem:[#allocation0] sm:$0x1] %vm69, %v68
    %s71 = scalar_lea.vmem %s0, 2
    %v72 = vld [vmem:[%s71] sm:$0x1]
    %73 = vrot.lane.b32.xlu0 %v72, 12
    %v74 = vpop.permute.xlu0 %73
    %vm75 = vcmask 146528
    %76 = vst.msk [vmem:[#allocation0] sm:$0x1] %vm75, %v74
    %s77 = scalar_lea.vmem %s0, 1
    %v78 = vld [vmem:[%s77] sm:$0x1]
    %79 = vrot.lane.b32.xlu0 %v78, 6
    %v80 = vpop.permute.xlu0 %79
    %vm81 = vcmask 97328
    %82 = vst.msk [vmem:[#allocation0] sm:$0x1] %vm81, %v80
    %s84 = sshllo.u32 0, 1
    %v86 = vld [vmem:[#allocation0] sm:%s84]
    %s87 = sshllo.u32 0, 1
    %88 = vst [vmem:[%s1] sm:%s87] %v86

// kernel: tile.18
$region0: #{tile.18}
  #allocation0 [shape = 's32[1]{0}', space=sflag, size = 0x4, scoped, tag = 'scoped memory for tile.18']
  %s0 = inlined_call_operand.vmem [shape: f32[16], index: 0, kind: input, shape index: {}]
  %s1 = inlined_call_operand.vmem [shape: f32[5,16], index: 1, kind: output, shape index: {}]
  // Predicated region
  $region2: #{tile.18} parent=0 // pred_check
    _
  $region3: #{tile.18} parent=0 // pred_check_branch
    %3 = sbr.rel (0) target = $region5
  $region4: #{tile.18} parent=0 // pred_region
    _
  $region5: #{tile.18} parent=0 // pred_fallthru
    _
  %v4 = vld [vmem:[%s0] ss:$0 sm:$0xff]
  %5 = vst [vmem:[%s1] sm:$0xff] %v4

// kernel: tile.19
$region0: #{tile.19}
  %s0 = inlined_call_operand.vmem [shape: f32[5,16], index: 0, kind: input, shape index: {}]
  %s1 = inlined_call_operand.vmem [shape: f32[1,80], index: 1, kind: output, shape index: {}]
  $region1: #{tile.19} parent=0
    #allocation0 [shape = 'u8[4096]{0}', space=vmem, size = 0x1000, scoped, tag = 'scoped mem for output reshape']
    %v2 = vld [vmem:[%s0] sm:$0x1]
    %vm3 = vcmask 130048
    %4 = vst.msk [vmem:[#allocation0] sm:$0x1] %vm3, %v2
    %s5 = scalar_lea.vmem %s0, 4
    %v6 = vld [vmem:[%s5] sm:$0x1]
    %7 = vrot.lane.b32.xlu0 %v6, 64
    %v8 = vpop.permute.xlu0 %7
    %vm9 = vcmask 654848
    %10 = vst.msk [vmem:[#allocation0] sm:$0x1] %vm9, %v8
    %s11 = scalar_lea.vmem %s0, 3
    %v12 = vld [vmem:[%s11] sm:$0x1]
    %13 = vrot.lane.b32.xlu0 %v12, 48
    %v14 = vpop.permute.xlu0 %13
    %vm15 = vcmask 523648
    %16 = vst.msk [vmem:[#allocation0] sm:$0x1] %vm15, %v14
    %s17 = scalar_lea.vmem %s0, 2
    %v18 = vld [vmem:[%s17] sm:$0x1]
    %19 = vrot.lane.b32.xlu0 %v18, 32
    %v20 = vpop.permute.xlu0 %19
    %vm21 = vcmask 392448
    %22 = vst.msk [vmem:[#allocation0] sm:$0x1] %vm21, %v20
    %s23 = scalar_lea.vmem %s0, 1
    %v24 = vld [vmem:[%s23] sm:$0x1]
    %25 = vrot.lane.b32.xlu0 %v24, 16
    %v26 = vpop.permute.xlu0 %25
    %vm27 = vcmask 261248
    %28 = vst.msk [vmem:[#allocation0] sm:$0x1] %vm27, %v26
    %s30 = sshllo.u32 0, 1
    %v32 = vld [vmem:[#allocation0] sm:%s30]
    %s33 = sshllo.u32 0, 1
    %34 = vst [vmem:[%s1] sm:%s33] %v32

// kernel: lenet5_forward.1
$region0: #{lenet5_forward.1}
  #allocation0 [shape = 'u32[]', space=smem, size = 0x4, offset = 0x4, fixed_abs, tag = 'smem constant byte address 0x4 - core index']
  #allocation1 [shape = 'u32[144,128]{1,0:T(1,128)}', space=vmem, size = 0x12000, scoped, tag = 'internal scratch']
  %s0 = inlined_call_operand.vmem [shape: f32[256,32], index: 0, kind: input, shape index: {}]
  %s1 = inlined_call_operand.vmem [shape: f32[160,84], index: 1, kind: input, shape index: {}]
  %s2 = inlined_call_operand.vmem [shape: f32[160,84], index: 2, kind: input, shape index: {}]
  %s3 = inlined_call_operand.vmem [shape: f32[1,84], index: 3, kind: input, shape index: {}]
  %s4 = inlined_call_operand.vmem [shape: f32[420,80], index: 4, kind: input, shape index: {}]
  %s5 = inlined_call_operand.vmem [shape: f32[420,80], index: 5, kind: input, shape index: {}]
  %s6 = inlined_call_operand.vmem [shape: f32[1,80], index: 6, kind: input, shape index: {}]
  %s7 = inlined_call_operand.vmem [shape: f32[400,120], index: 7, kind: input, shape index: {}]
  %s8 = inlined_call_operand.vmem [shape: f32[8,225], index: 8, kind: input, shape index: {}]
  %s9 = inlined_call_operand.vmem [shape: f32[1,120], index: 9, kind: input, shape index: {}]
  %s10 = inlined_call_operand.vmem [shape: f32[120,84], index: 10, kind: input, shape index: {}]
  %s11 = inlined_call_operand.vmem [shape: f32[1,84], index: 11, kind: input, shape index: {}]
  %s12 = inlined_call_operand.vmem [shape: f32[84,128], index: 12, kind: input, shape index: {}]
  %s13 = inlined_call_operand.vmem [shape: f32[1,128], index: 13, kind: input, shape index: {}]
  %s14 = inlined_call_operand.vmem [shape: f32[8,128], index: 14, kind: output, shape index: {}]
  %s15 = sld [smem:[#allocation0]]
  $region66: #{lenet5_forward.1} parent=0
    _
  %s17 = ssub.s32 1, %s15
  %s18 = scalar_select 0, %s17, %s15
  // Predicated region
  $region2: #{lenet5_forward.1} parent=0 // pred_check
    _
  $region3: #{lenet5_forward.1} parent=0 // pred_check_branch
    %20 = sbr.rel (0) target = $region5
  $region4: #{lenet5_forward.1} parent=0 // pred_region
    _
  $region5: #{lenet5_forward.1} parent=0 // pred_fallthru
    _
  // Predicated region
  $region6: #{lenet5_forward.1} parent=0 // pred_check
    _
  $region7: #{lenet5_forward.1} parent=0 // pred_check_branch
    %22 = sbr.rel (0) target = $region9
  $region8: #{lenet5_forward.1} parent=0 // pred_region
    _
  $region9: #{lenet5_forward.1} parent=0 // pred_fallthru
    _
  // Predicated region
  $region10: #{lenet5_forward.1} parent=0 // pred_check
    _
  $region11: #{lenet5_forward.1} parent=0 // pred_check_branch
    %24 = sbr.rel (0) target = $region13
  $region12: #{lenet5_forward.1} parent=0 // pred_region
    _
  $region13: #{lenet5_forward.1} parent=0 // pred_fallthru
    _
  // Predicated region
  $region14: #{lenet5_forward.1} parent=0 // pred_check
    _
  $region15: #{lenet5_forward.1} parent=0 // pred_check_branch
    %26 = sbr.rel (0) target = $region17
  $region16: #{lenet5_forward.1} parent=0 // pred_region
    _
  $region17: #{lenet5_forward.1} parent=0 // pred_fallthru
    _
  // Predicated region
  $region18: #{lenet5_forward.1} parent=0 // pred_check
    _
  $region19: #{lenet5_forward.1} parent=0 // pred_check_branch
    %28 = sbr.rel (0) target = $region21
  $region20: #{lenet5_forward.1} parent=0 // pred_region
    _
  $region21: #{lenet5_forward.1} parent=0 // pred_fallthru
    _
  // Predicated region
  $region22: #{lenet5_forward.1} parent=0 // pred_check
    _
  $region23: #{lenet5_forward.1} parent=0 // pred_check_branch
    %30 = sbr.rel (0) target = $region25
  $region24: #{lenet5_forward.1} parent=0 // pred_region
    _
  $region25: #{lenet5_forward.1} parent=0 // pred_fallthru
    _
  // Predicated region
  $region26: #{lenet5_forward.1} parent=0 // pred_check
    _
  $region27: #{lenet5_forward.1} parent=0 // pred_check_branch
    %32 = sbr.rel (0) target = $region29
  $region28: #{lenet5_forward.1} parent=0 // pred_region
    _
  $region29: #{lenet5_forward.1} parent=0 // pred_fallthru
    _
  // Predicated region
  $region30: #{lenet5_forward.1} parent=0 // pred_check
    _
  $region31: #{lenet5_forward.1} parent=0 // pred_check_branch
    %34 = sbr.rel (0) target = $region33
  $region32: #{lenet5_forward.1} parent=0 // pred_region
    _
  $region33: #{lenet5_forward.1} parent=0 // pred_fallthru
    _
  // Predicated region
  $region34: #{lenet5_forward.1} parent=0 // pred_check
    _
  $region35: #{lenet5_forward.1} parent=0 // pred_check_branch
    %36 = sbr.rel (0) target = $region37
  $region36: #{lenet5_forward.1} parent=0 // pred_region
    _
  $region37: #{lenet5_forward.1} parent=0 // pred_fallthru
    _
  // Predicated region
  $region38: #{lenet5_forward.1} parent=0 // pred_check
    _
  $region39: #{lenet5_forward.1} parent=0 // pred_check_branch
    %38 = sbr.rel (0) target = $region41
  $region40: #{lenet5_forward.1} parent=0 // pred_region
    _
  $region41: #{lenet5_forward.1} parent=0 // pred_fallthru
    _
  // Predicated region
  $region42: #{lenet5_forward.1} parent=0 // pred_check
    _
  $region43: #{lenet5_forward.1} parent=0 // pred_check_branch
    %40 = sbr.rel (0) target = $region45
  $region44: #{lenet5_forward.1} parent=0 // pred_region
    _
  $region45: #{lenet5_forward.1} parent=0 // pred_fallthru
    _
  // Predicated region
  $region46: #{lenet5_forward.1} parent=0 // pred_check
    _
  $region47: #{lenet5_forward.1} parent=0 // pred_check_branch
    %42 = sbr.rel (0) target = $region49
  $region48: #{lenet5_forward.1} parent=0 // pred_region
    _
  $region49: #{lenet5_forward.1} parent=0 // pred_fallthru
    _
  // Predicated region
  $region50: #{lenet5_forward.1} parent=0 // pred_check
    _
  $region51: #{lenet5_forward.1} parent=0 // pred_check_branch
    %44 = sbr.rel (0) target = $region53
  $region52: #{lenet5_forward.1} parent=0 // pred_region
    _
  $region53: #{lenet5_forward.1} parent=0 // pred_fallthru
    _
  // Predicated region
  $region54: #{lenet5_forward.1} parent=0 // pred_check
    _
  $region55: #{lenet5_forward.1} parent=0 // pred_check_branch
    %46 = sbr.rel (0) target = $region57
  $region56: #{lenet5_forward.1} parent=0 // pred_region
    _
  $region57: #{lenet5_forward.1} parent=0 // pred_fallthru
    _
  %v47 = vld [vmem:[%s0] sm:$0xff]
  %v48 = vld [vmem:[%s0 + $0x8] sm:$0xff]
  %v49 = vld [vmem:[%s0 + $0x10] sm:$0xff]
  %v50 = vld [vmem:[%s0 + $0x18] sm:$0xff]
  %v51 = vld [vmem:[%s0 + $0x20] sm:$0xff]
  %v52 = vld [vmem:[%s0 + $0x28] sm:$0xff]
  %v53 = vld [vmem:[%s0 + $0x30] sm:$0xff]
  %v54 = vld [vmem:[%s0 + $0x38] sm:$0xff]
  %v55 = vld [vmem:[%s0 + $0x40] sm:$0xff]
  %v56 = vld [vmem:[%s0 + $0x48] sm:$0xff]
  %v57 = vld [vmem:[%s0 + $0x50] sm:$0xff]
  %v58 = vld [vmem:[%s0 + $0x58] sm:$0xff]
  %v59 = vld [vmem:[%s0 + $0x60] sm:$0xff]
  %v60 = vld [vmem:[%s0 + $0x68] sm:$0xff]
  %v61 = vld [vmem:[%s0 + $0x70] sm:$0xff]
  %v62 = vld [vmem:[%s0 + $0x78] sm:$0xff]
  %v63 = vld [vmem:[%s0 + $0x80] sm:$0xff]
  %v64 = vld [vmem:[%s0 + $0x88] sm:$0xff]
  %v65 = vld [vmem:[%s0 + $0x90] sm:$0xff]
  %v66 = vld [vmem:[%s0 + $0x98] sm:$0xff]
  %v67 = vld [vmem:[%s0 + $0xa0] sm:$0xff]
  %v68 = vld [vmem:[%s0 + $0xa8] sm:$0xff]
  %v69 = vld [vmem:[%s0 + $0xb0] sm:$0xff]
  %v70 = vld [vmem:[%s0 + $0xb8] sm:$0xff]
  %v71 = vld [vmem:[%s0 + $0xc0] sm:$0xff]
  %v72 = vld [vmem:[%s0 + $0xc8] sm:$0xff]
  %v73 = vld [vmem:[%s0 + $0xd0] sm:$0xff]
  %v74 = vld [vmem:[%s0 + $0xd8] sm:$0xff]
  %v75 = vld [vmem:[%s0 + $0xe0] sm:$0xff]
  %v76 = vld [vmem:[%s0 + $0xe8] sm:$0xff]
  %v77 = vld [vmem:[%s0 + $0xf0] sm:$0xff]
  %v78 = vld [vmem:[%s0 + $0xf8] sm:$0xf]
  %v79 = vld [vmem:[%s1] sm:$0xff]
  %v80 = vld [vmem:[%s1 + $0x8] sm:$0xff]
  %v81 = vld [vmem:[%s1 + $0x10] sm:$0xff]
  %v82 = vld [vmem:[%s1 + $0x18] sm:$0xff]
  %v83 = vld [vmem:[%s2] sm:$0xff]
  %v84 = vld [vmem:[%s2 + $0x8] sm:$0xff]
  %v85 = vld [vmem:[%s2 + $0x10] sm:$0xff]
  %v86 = vld [vmem:[%s2 + $0x18] sm:$0xff]
  %v87 = vld [vmem:[%s0 + $0x1] sm:$0xff]
  %v88 = vld [vmem:[%s0 + $0x9] sm:$0xff]
  %v89 = vld [vmem:[%s0 + $0x11] sm:$0xff]
  %v90 = vld [vmem:[%s0 + $0x19] sm:$0xff]
  %v91 = vld [vmem:[%s0 + $0x21] sm:$0xff]
  %v92 = vld [vmem:[%s0 + $0x29] sm:$0xff]
  %v93 = vld [vmem:[%s0 + $0x31] sm:$0xff]
  %v94 = vld [vmem:[%s0 + $0x39] sm:$0xff]
  %v95 = vld [vmem:[%s0 + $0x41] sm:$0xff]
  %v96 = vld [vmem:[%s0 + $0x49] sm:$0xff]
  %v97 = vld [vmem:[%s0 + $0x51] sm:$0xff]
  %v98 = vld [vmem:[%s0 + $0x59] sm:$0xff]
  %v99 = vld [vmem:[%s0 + $0x61] sm:$0xff]
  %v100 = vld [vmem:[%s0 + $0x69] sm:$0xff]
  %v101 = vld [vmem:[%s0 + $0x71] sm:$0xff]
  %v102 = vld [vmem:[%s0 + $0x79] sm:$0xff]
  %v103 = vld [vmem:[%s0 + $0x81] sm:$0xff]
  %v104 = vld [vmem:[%s0 + $0x89] sm:$0xff]
  %v105 = vld [vmem:[%s0 + $0x91] sm:$0xff]
  %v106 = vld [vmem:[%s0 + $0x99] sm:$0xff]
  %v107 = vld [vmem:[%s0 + $0xa1] sm:$0xff]
  %v108 = vld [vmem:[%s0 + $0xa9] sm:$0xff]
  %v109 = vld [vmem:[%s0 + $0xb1] sm:$0xff]
  %v110 = vld [vmem:[%s0 + $0xb9] sm:$0xff]
  %v111 = vld [vmem:[%s0 + $0xc1] sm:$0xff]
  %v112 = vld [vmem:[%s0 + $0xc9] sm:$0xff]
  %v113 = vld [vmem:[%s0 + $0xd1] sm:$0xff]
  %v114 = vld [vmem:[%s0 + $0xd9] sm:$0xff]
  %v115 = vld [vmem:[%s0 + $0xe1] sm:$0xff]
  %v116 = vld [vmem:[%s0 + $0xe9] sm:$0xff]
  %v117 = vld [vmem:[%s0 + $0xf1] sm:$0xff]
  %v118 = vld [vmem:[%s0 + $0xf9] sm:$0xf]
  %v119 = vld [vmem:[%s1 + $0x20] sm:$0xff]
  %v120 = vld [vmem:[%s1 + $0x28] sm:$0xff]
  %v121 = vld [vmem:[%s1 + $0x30] sm:$0xff]
  %v122 = vld [vmem:[%s1 + $0x38] sm:$0xff]
  %vm123 = vcmask 261120
  %v125 = vsel %vm123, %v87, 0
  %v128 = vsel %vm123, %v88, 0
  %v131 = vsel %vm123, %v89, 0
  %v134 = vsel %vm123, %v90, 0
  %v137 = vsel %vm123, %v91, 0
  %v140 = vsel %vm123, %v92, 0
  %v143 = vsel %vm123, %v93, 0
  %v146 = vsel %vm123, %v94, 0
  %v149 = vsel %vm123, %v95, 0
  %v152 = vsel %vm123, %v96, 0
  %v155 = vsel %vm123, %v97, 0
  %v158 = vsel %vm123, %v98, 0
  %v161 = vsel %vm123, %v99, 0
  %v164 = vsel %vm123, %v100, 0
  %v167 = vsel %vm123, %v101, 0
  %v170 = vsel %vm123, %v102, 0
  %v173 = vsel %vm123, %v103, 0
  %v176 = vsel %vm123, %v104, 0
  %v179 = vsel %vm123, %v105, 0
  %v182 = vsel %vm123, %v106, 0
  %v185 = vsel %vm123, %v107, 0
  %v188 = vsel %vm123, %v108, 0
  %v191 = vsel %vm123, %v109, 0
  %v194 = vsel %vm123, %v110, 0
  %v197 = vsel %vm123, %v111, 0
  %v200 = vsel %vm123, %v112, 0
  %v203 = vsel %vm123, %v113, 0
  %v206 = vsel %vm123, %v114, 0
  %v209 = vsel %vm123, %v115, 0
  %v212 = vsel %vm123, %v116, 0
  %v215 = vsel %vm123, %v117, 0
  %v218 = vsel %vm123, %v118, 0
  %220 = vmatprep.subr.mxu0 0.0
  %221 = vmatpush1.msra.mxu0 %v119
  %222 = vmatprep.subr.mxu0 0.0
  %223 = vmatpush1.msra.mxu0 %v120
  %224 = vmatprep.subr.mxu0 0.0
  %225 = vmatpush1.msra.mxu0 %v121
  %226 = vmatprep.subr.mxu0 0.0
  %227 = vmatpush1.msra.mxu0 %v122
  %228 = vmatprep.subr.mxu0 0.0
  %229 = vmatpush1.msra.mxu0 0.0
  %230 = vmatprep.subr.mxu0 0.0
  %231 = vmatpush1.msra.mxu0 0.0
  %232 = vmatprep.subr.mxu0 0.0
  %233 = vmatpush1.msra.mxu0 0.0
  %234 = vmatprep.subr.mxu0 0.0
  %235 = vmatpush1.msra.mxu0 0.0
  %236 = vmatprep.subr.mxu0 0.0
  %237 = vmatpush1.msra.mxu0 0.0
  %238 = vmatprep.subr.mxu0 0.0
  %239 = vmatpush1.msra.mxu0 0.0
  %240 = vmatprep.subr.mxu0 0.0
  %241 = vmatpush1.msra.mxu0 0.0
  %242 = vmatprep.subr.mxu0 0.0
  %243 = vmatpush1.msra.mxu0 0.0
  %244 = vmatprep.subr.mxu0 0.0
  %245 = vmatpush1.msra.mxu0 0.0
  %246 = vmatprep.subr.mxu0 0.0
  %247 = vmatpush1.msra.mxu0 0.0
  %248 = vmatprep.subr.mxu0 0.0
  %249 = vmatpush1.msra.mxu0 0.0
  %250 = vmatprep.subr.mxu0 0.0
  %251 = vmatpush1.msra.mxu0 0.0
  %252 = vmatprep.subr.mxu0 0.0
  %253 = vmatpush1.msra.mxu0 0.0
  %254 = vmatprep.subr.mxu0 0.0
  %255 = vmatpush1.msra.mxu0 0.0
  %256 = vmatprep.subr.mxu0 0.0
  %257 = vmatpush1.msra.mxu0 0.0
  %258 = vmatprep.subr.mxu0 0.0
  %259 = vmatpush1.msra.mxu0 0.0
  %260 = vmatprep.subr.mxu0 0.0
  %261 = vmatpush1.msra.mxu0 0.0
  %262 = vmatprep.subr.mxu0 0.0
  %263 = vmatpush1.msra.mxu0 0.0
  %264 = vmatprep.subr.mxu0 0.0
  %265 = vmatpush1.msra.mxu0 0.0
  %266 = vmatprep.subr.mxu0 0.0
  %267 = vmatpush1.msra.mxu0 0.0
  %268 = vmatprep.subr.mxu0 0.0
  %269 = vmatpush1.msra.mxu0 0.0
  %270 = vmatprep.subr.mxu0 0.0
  %271 = vmatpush1.msra.mxu0 0.0
  %272 = vmatprep.subr.mxu0 0.0
  %273 = vmatpush1.msra.mxu0 0.0
  %274 = vmatprep.subr.mxu0 0.0
  %275 = vmatpush1.msra.mxu0 0.0
  %276 = vmatprep.subr.mxu0 0.0
  %277 = vmatpush1.msra.mxu0 0.0
  %278 = vmatprep.subr.mxu0 0.0
  %279 = vmatpush1.msra.mxu0 0.0
  %280 = vmatprep.subr.mxu0 0.0
  %281 = vmatpush1.msra.mxu0 0.0
  %282 = vmatprep.subr.mxu0 0.0
  %283 = vmatpush1.msra.mxu0 0.0
  %284 = vmatprep.mubr.f32.mxu0 0.0
  %285 = vmatmul.mubr.f32.gmra.mrb[0].mxu0 %v125
  %v286 = vpop.f32.mrb[0].mxu0
  %v287 = vadd.f32 0.0, %v286
  %v288 = vpop.f32.mrb[0].mxu0
  %289 = vmatprep.mubr.f32.mxu0 0.0
  %290 = vmatmul.mubr.f32.gmra.mrb[0].mxu0 %v128
  %v291 = vpop.f32.mrb[0].mxu0
  %v292 = vadd.f32 0.0, %v291
  %v293 = vpop.f32.mrb[0].mxu0
  %294 = vmatprep.mubr.f32.mxu0 0.0
  %295 = vmatmul.mubr.f32.gmra.mrb[0].mxu0 %v131
  %v296 = vpop.f32.mrb[0].mxu0
  %v297 = vadd.f32 0.0, %v296
  %v298 = vpop.f32.mrb[0].mxu0
  %299 = vmatprep.mubr.f32.mxu0 0.0
  %300 = vmatmul.mubr.f32.gmra.mrb[0].mxu0 %v134
  %v301 = vpop.f32.mrb[0].mxu0
  %v302 = vadd.f32 0.0, %v301
  %v303 = vpop.f32.mrb[0].mxu0
  %304 = vmatprep.mubr.f32.mxu0 0.0
  %305 = vmatmul.mubr.f32.gmra.mrb[0].mxu0 %v137
  %v306 = vpop.f32.mrb[0].mxu0
  %v307 = vadd.f32 0.0, %v306
  %v308 = vpop.f32.mrb[0].mxu0
  %309 = vmatprep.mubr.f32.mxu0 0.0
  %310 = vmatmul.mubr.f32.gmra.mrb[0].mxu0 %v140
  %v311 = vpop.f32.mrb[0].mxu0
  %v312 = vadd.f32 0.0, %v311
  %v313 = vpop.f32.mrb[0].mxu0
  %314 = vmatprep.mubr.f32.mxu0 0.0
  %315 = vmatmul.mubr.f32.gmra.mrb[0].mxu0 %v143
  %v316 = vpop.f32.mrb[0].mxu0
  %v317 = vadd.f32 0.0, %v316
  %v318 = vpop.f32.mrb[0].mxu0
  %319 = vmatprep.mubr.f32.mxu0 0.0
  %320 = vmatmul.mubr.f32.gmra.mrb[0].mxu0 %v146
  %v321 = vpop.f32.mrb[0].mxu0
  %v322 = vadd.f32 0.0, %v321
  %v323 = vpop.f32.mrb[0].mxu0
  %324 = vmatprep.mubr.f32.mxu0 0.0
  %325 = vmatmul.mubr.f32.gmra.mrb[0].mxu0 %v149
  %v326 = vpop.f32.mrb[0].mxu0
  %v327 = vadd.f32 0.0, %v326
  %v328 = vpop.f32.mrb[0].mxu0
  %329 = vmatprep.mubr.f32.mxu0 0.0
  %330 = vmatmul.mubr.f32.gmra.mrb[0].mxu0 %v152
  %v331 = vpop.f32.mrb[0].mxu0
  %v332 = vadd.f32 0.0, %v331
  %v333 = vpop.f32.mrb[0].mxu0
  %334 = vmatprep.mubr.f32.mxu0 0.0
  %335 = vmatmul.mubr.f32.gmra.mrb[0].mxu0 %v155
  %v336 = vpop.f32.mrb[0].mxu0
  %v337 = vadd.f32 0.0, %v336
  %v338 = vpop.f32.mrb[0].mxu0
  %339 = vmatprep.mubr.f32.mxu0 0.0
  %340 = vmatmul.mubr.f32.gmra.mrb[0].mxu0 %v158
  %v341 = vpop.f32.mrb[0].mxu0
  %v342 = vadd.f32 0.0, %v341
  %v343 = vpop.f32.mrb[0].mxu0
  %344 = vmatprep.mubr.f32.mxu0 0.0
  %345 = vmatmul.mubr.f32.gmra.mrb[0].mxu0 %v161
  %v346 = vpop.f32.mrb[0].mxu0
  %v347 = vadd.f32 0.0, %v346
  %v348 = vpop.f32.mrb[0].mxu0
  %349 = vmatprep.mubr.f32.mxu0 0.0
  %350 = vmatmul.mubr.f32.gmra.mrb[0].mxu0 %v164
  %v351 = vpop.f32.mrb[0].mxu0
  %v352 = vadd.f32 0.0, %v351
  %v353 = vpop.f32.mrb[0].mxu0
  %354 = vmatprep.mubr.f32.mxu0 0.0
  %355 = vmatmul.mubr.f32.gmra.mrb[0].mxu0 %v167
  %v356 = vpop.f32.mrb[0].mxu0
  %v357 = vadd.f32 0.0, %v356
  %v358 = vpop.f32.mrb[0].mxu0
  %359 = vmatprep.mubr.f32.mxu0 0.0
  %360 = vmatmul.mubr.f32.gmra.mrb[0].mxu0 %v170
  %v361 = vpop.f32.mrb[0].mxu0
  %v362 = vadd.f32 0.0, %v361
  %v363 = vpop.f32.mrb[0].mxu0
  %364 = vmatprep.mubr.f32.mxu0 0.0
  %365 = vmatmul.mubr.f32.gmra.mrb[0].mxu0 %v173
  %v366 = vpop.f32.mrb[0].mxu0
  %v367 = vadd.f32 0.0, %v366
  %v368 = vpop.f32.mrb[0].mxu0
  %369 = vmatprep.mubr.f32.mxu0 0.0
  %370 = vmatmul.mubr.f32.gmra.mrb[0].mxu0 %v176
  %v371 = vpop.f32.mrb[0].mxu0
  %v372 = vadd.f32 0.0, %v371
  %v373 = vpop.f32.mrb[0].mxu0
  %374 = vmatprep.mubr.f32.mxu0 0.0
  %375 = vmatmul.mubr.f32.gmra.mrb[0].mxu0 %v179
  %v376 = vpop.f32.mrb[0].mxu0
  %v377 = vadd.f32 0.0, %v376
  %v378 = vpop.f32.mrb[0].mxu0
  %379 = vmatprep.mubr.f32.mxu0 0.0
  %380 = vmatmul.mubr.f32.gmra.mrb[0].mxu0 %v182
  %v381 = vpop.f32.mrb[0].mxu0
  %v382 = vadd.f32 0.0, %v381
  %v383 = vpop.f32.mrb[0].mxu0
  %384 = vmatprep.mubr.f32.mxu0 0.0
  %385 = vmatmul.mubr.f32.gmra.mrb[0].mxu0 %v185
  %v386 = vpop.f32.mrb[0].mxu0
  %v387 = vadd.f32 0.0, %v386
  %v388 = vpop.f32.mrb[0].mxu0
  %389 = vmatprep.mubr.f32.mxu0 0.0
  %390 = vmatmul.mubr.f32.gmra.mrb[0].mxu0 %v188
  %v391 = vpop.f32.mrb[0].mxu0
  %v392 = vadd.f32 0.0, %v391
  %v393 = vpop.f32.mrb[0].mxu0
  %394 = vmatprep.mubr.f32.mxu0 0.0
  %395 = vmatmul.mubr.f32.gmra.mrb[0].mxu0 %v191
  %v396 = vpop.f32.mrb[0].mxu0
  %v397 = vadd.f32 0.0, %v396
  %v398 = vpop.f32.mrb[0].mxu0
  %399 = vmatprep.mubr.f32.mxu0 0.0
  %400 = vmatmul.mubr.f32.gmra.mrb[0].mxu0 %v194
  %v401 = vpop.f32.mrb[0].mxu0
  %v402 = vadd.f32 0.0, %v401
  %v403 = vpop.f32.mrb[0].mxu0
  %404 = vmatprep.mubr.f32.mxu0 0.0
  %405 = vmatmul.mubr.f32.gmra.mrb[0].mxu0 %v197
  %v406 = vpop.f32.mrb[0].mxu0
  %v407 = vadd.f32 0.0, %v406
  %v408 = vpop.f32.mrb[0].mxu0
  %409 = vmatprep.mubr.f32.mxu0 0.0
  %410 = vmatmul.mubr.f32.gmra.mrb[0].mxu0 %v200
  %v411 = vpop.f32.mrb[0].mxu0
  %v412 = vadd.f32 0.0, %v411
  %v413 = vpop.f32.mrb[0].mxu0
  %414 = vmatprep.mubr.f32.mxu0 0.0
  %415 = vmatmul.mubr.f32.gmra.mrb[0].mxu0 %v203
  %v416 = vpop.f32.mrb[0].mxu0
  %v417 = vadd.f32 0.0, %v416
  %v418 = vpop.f32.mrb[0].mxu0
  %419 = vmatprep.mubr.f32.mxu0 0.0
  %420 = vmatmul.mubr.f32.gmra.mrb[0].mxu0 %v206
  %v421 = vpop.f32.mrb[0].mxu0
  %v422 = vadd.f32 0.0, %v421
  %v423 = vpop.f32.mrb[0].mxu0
  %424 = vmatprep.mubr.f32.mxu0 0.0
  %425 = vmatmul.mubr.f32.gmra.mrb[0].mxu0 %v209
  %v426 = vpop.f32.mrb[0].mxu0
  %v427 = vadd.f32 0.0, %v426
  %v428 = vpop.f32.mrb[0].mxu0
  %429 = vmatprep.mubr.f32.mxu0 0.0
  %430 = vmatmul.mubr.f32.gmra.mrb[0].mxu0 %v212
  %v431 = vpop.f32.mrb[0].mxu0
  %v432 = vadd.f32 0.0, %v431
  %v433 = vpop.f32.mrb[0].mxu0
  %434 = vmatprep.mubr.f32.mxu0 0.0
  %435 = vmatmul.mubr.f32.gmra.mrb[0].mxu0 %v215
  %v436 = vpop.f32.mrb[0].mxu0
  %v437 = vadd.f32 0.0, %v436
  %v438 = vpop.f32.mrb[0].mxu0
  %439 = vmatprep.mubr.f32.mxu0 0.0
  %440 = vmatmul.mubr.f32.gmra.mrb[0].mxu0 %v218
  %v441 = vpop.f32.mrb[0].mxu0
  %v442 = vadd.f32 0.0, %v441
  %v443 = vpop.f32.mrb[0].mxu0
  %444 = vdwg.mxu0
  %v445 = vld [vmem:[%s2 + $0x20] sm:$0xff]
  %v446 = vld [vmem:[%s2 + $0x28] sm:$0xff]
  %v447 = vld [vmem:[%s2 + $0x30] sm:$0xff]
  %v448 = vld [vmem:[%s2 + $0x38] sm:$0xff]
  %449 = vmatprep.subr.mxu0 0.0
  %450 = vmatpush1.msra.mxu0 %v445
  %451 = vmatprep.subr.mxu0 0.0
  %452 = vmatpush1.msra.mxu0 %v446
  %453 = vmatprep.subr.mxu0 0.0
  %454 = vmatpush1.msra.mxu0 %v447
  %455 = vmatprep.subr.mxu0 0.0
  %456 = vmatpush1.msra.mxu0 %v448
  %457 = vmatprep.subr.mxu0 0.0
  %458 = vmatpush1.msra.mxu0 0.0
  %459 = vmatprep.subr.mxu0 0.0
  %460 = vmatpush1.msra.mxu0 0.0
  %461 = vmatprep.subr.mxu0 0.0
  %462 = vmatpush1.msra.mxu0 0.0
  %463 = vmatprep.subr.mxu0 0.0
  %464 = vmatpush1.msra.mxu0 0.0
  %465 = vmatprep.subr.mxu0 0.0
  %466 = vmatpush1.msra.mxu0 0.0
  %467 = vmatprep.subr.mxu0 0.0
  %468 = vmatpush1.msra.mxu0 0.0
  %469 = vmatprep.subr.mxu0 0.0
  %470 = vmatpush1.msra.mxu0 0.0
  %471 = vmatprep.subr.mxu0 0.0
  %472 = vmatpush1.msra.mxu0 0.0
  %473 = vmatprep.subr.mxu0 0.0
  %474 = vmatpush1.msra.mxu0 0.0
  %475 = vmatprep.subr.mxu0 0.0
  %476 = vmatpush1.msra.mxu0 0.0
  %477 = vmatprep.subr.mxu0 0.0
  %478 = vmatpush1.msra.mxu0 0.0
  %479 = vmatprep.subr.mxu0 0.0
  %480 = vmatpush1.msra.mxu0 0.0
  %481 = vmatprep.subr.mxu0 0.0
  %482 = vmatpush1.msra.mxu0 0.0
  %483 = vmatprep.subr.mxu0 0.0
  %484 = vmatpush1.msra.mxu0 0.0
  %485 = vmatprep.subr.mxu0 0.0
  %486 = vmatpush1.msra.mxu0 0.0
  %487 = vmatprep.subr.mxu0 0.0
  %488 = vmatpush1.msra.mxu0 0.0
  %489 = vmatprep.subr.mxu0 0.0
  %490 = vmatpush1.msra.mxu0 0.0
  %491 = vmatprep.subr.mxu0 0.0
  %492 = vmatpush1.msra.mxu0 0.0
  %493 = vmatprep.subr.mxu0 0.0
  %494 = vmatpush1.msra.mxu0 0.0
  %495 = vmatprep.subr.mxu0 0.0
  %496 = vmatpush1.msra.mxu0 0.0
  %497 = vmatprep.subr.mxu0 0.0
  %498 = vmatpush1.msra.mxu0 0.0
  %499 = vmatprep.subr.mxu0 0.0
  %500 = vmatpush1.msra.mxu0 0.0
  %501 = vmatprep.subr.mxu0 0.0
  %502 = vmatpush1.msra.mxu0 0.0
  %503 = vmatprep.subr.mxu0 0.0
  %504 = vmatpush1.msra.mxu0 0.0
  %505 = vmatprep.subr.mxu0 0.0
  %506 = vmatpush1.msra.mxu0 0.0
  %507 = vmatprep.subr.mxu0 0.0
  %508 = vmatpush1.msra.mxu0 0.0
  %509 = vmatprep.subr.mxu0 0.0
  %510 = vmatpush1.msra.mxu0 0.0
  %511 = vmatprep.subr.mxu0 0.0
  %512 = vmatpush1.msra.mxu0 0.0
  %513 = vmatprep.mubr.f32.mxu0 0.0
  %514 = vmatmul.mubr.f32.gmra.mrb[0].mxu0 %v125
  %v515 = vpop.f32.mrb[0].mxu0
  %v516 = vadd.f32 0.0, %v515
  %v517 = vpop.f32.mrb[0].mxu0
  %518 = vmatprep.mubr.f32.mxu0 0.0
  %519 = vmatmul.mubr.f32.gmra.mrb[0].mxu0 %v128
  %v520 = vpop.f32.mrb[0].mxu0
  %v521 = vadd.f32 0.0, %v520
  %v522 = vpop.f32.mrb[0].mxu0
  %523 = vmatprep.mubr.f32.mxu0 0.0
  %524 = vmatmul.mubr.f32.gmra.mrb[0].mxu0 %v131
  %v525 = vpop.f32.mrb[0].mxu0
  %v526 = vadd.f32 0.0, %v525
  %v527 = vpop.f32.mrb[0].mxu0
  %528 = vmatprep.mubr.f32.mxu0 0.0
  %529 = vmatmul.mubr.f32.gmra.mrb[0].mxu0 %v134
  %v530 = vpop.f32.mrb[0].mxu0
  %v531 = vadd.f32 0.0, %v530
  %v532 = vpop.f32.mrb[0].mxu0
  %533 = vmatprep.mubr.f32.mxu0 0.0
  %534 = vmatmul.mubr.f32.gmra.mrb[0].mxu0 %v137
  %v535 = vpop.f32.mrb[0].mxu0
  %v536 = vadd.f32 0.0, %v535
  %v537 = vpop.f32.mrb[0].mxu0
  %538 = vmatprep.mubr.f32.mxu0 0.0
  %539 = vmatmul.mubr.f32.gmra.mrb[0].mxu0 %v140
  %v540 = vpop.f32.mrb[0].mxu0
  %v541 = vadd.f32 0.0, %v540
  %v542 = vpop.f32.mrb[0].mxu0
  %543 = vmatprep.mubr.f32.mxu0 0.0
  %544 = vmatmul.mubr.f32.gmra.mrb[0].mxu0 %v143
  %v545 = vpop.f32.mrb[0].mxu0
  %v546 = vadd.f32 0.0, %v545
  %v547 = vpop.f32.mrb[0].mxu0
  %548 = vmatprep.mubr.f32.mxu0 0.0
  %549 = vmatmul.mubr.f32.gmra.mrb[0].mxu0 %v146
  %v550 = vpop.f32.mrb[0].mxu0
  %v551 = vadd.f32 0.0, %v550
  %v552 = vpop.f32.mrb[0].mxu0
  %553 = vmatprep.mubr.f32.mxu0 0.0
  %554 = vmatmul.mubr.f32.gmra.mrb[0].mxu0 %v149
  %v555 = vpop.f32.mrb[0].mxu0
  %v556 = vadd.f32 0.0, %v555
  %v557 = vpop.f32.mrb[0].mxu0
  %558 = vmatprep.mubr.f32.mxu0 0.0
  %559 = vmatmul.mubr.f32.gmra.mrb[0].mxu0 %v152
  %v560 = vpop.f32.mrb[0].mxu0
  %v561 = vadd.f32 0.0, %v560
  %v562 = vpop.f32.mrb[0].mxu0
  %563 = vmatprep.mubr.f32.mxu0 0.0
  %564 = vmatmul.mubr.f32.gmra.mrb[0].mxu0 %v155
  %v565 = vpop.f32.mrb[0].mxu0
  %v566 = vadd.f32 0.0, %v565
  %v567 = vpop.f32.mrb[0].mxu0
  %568 = vmatprep.mubr.f32.mxu0 0.0
  %569 = vmatmul.mubr.f32.gmra.mrb[0].mxu0 %v158
  %v570 = vpop.f32.mrb[0].mxu0
  %v571 = vadd.f32 0.0, %v570
  %v572 = vpop.f32.mrb[0].mxu0
  %573 = vmatprep.mubr.f32.mxu0 0.0
  %574 = vmatmul.mubr.f32.gmra.mrb[0].mxu0 %v161
  %v575 = vpop.f32.mrb[0].mxu0
  %v576 = vadd.f32 0.0, %v575
  %v577 = vpop.f32.mrb[0].mxu0
  %578 = vmatprep.mubr.f32.mxu0 0.0
  %579 = vmatmul.mubr.f32.gmra.mrb[0].mxu0 %v164
  %v580 = vpop.f32.mrb[0].mxu0
  %v581 = vadd.f32 0.0, %v580
  %v582 = vpop.f32.mrb[0].mxu0
  %583 = vmatprep.mubr.f32.mxu0 0.0
  %584 = vmatmul.mubr.f32.gmra.mrb[0].mxu0 %v167
  %v585 = vpop.f32.mrb[0].mxu0
  %v586 = vadd.f32 0.0, %v585
  %v587 = vpop.f32.mrb[0].mxu0
  %588 = vmatprep.mubr.f32.mxu0 0.0
  %589 = vmatmul.mubr.f32.gmra.mrb[0].mxu0 %v170
  %v590 = vpop.f32.mrb[0].mxu0
  %v591 = vadd.f32 0.0, %v590
  %v592 = vpop.f32.mrb[0].mxu0
  %593 = vmatprep.mubr.f32.mxu0 0.0
  %594 = vmatmul.mubr.f32.gmra.mrb[0].mxu0 %v173
  %v595 = vpop.f32.mrb[0].mxu0
  %v596 = vadd.f32 0.0, %v595
  %v597 = vpop.f32.mrb[0].mxu0
  %598 = vmatprep.mubr.f32.mxu0 0.0
  %599 = vmatmul.mubr.f32.gmra.mrb[0].mxu0 %v176
  %v600 = vpop.f32.mrb[0].mxu0
  %v601 = vadd.f32 0.0, %v600
  %v602 = vpop.f32.mrb[0].mxu0
  %603 = vmatprep.mubr.f32.mxu0 0.0
  %604 = vmatmul.mubr.f32.gmra.mrb[0].mxu0 %v179
  %v605 = vpop.f32.mrb[0].mxu0
  %v606 = vadd.f32 0.0, %v605
  %v607 = vpop.f32.mrb[0].mxu0
  %608 = vmatprep.mubr.f32.mxu0 0.0
  %609 = vmatmul.mubr.f32.gmra.mrb[0].mxu0 %v182
  %v610 = vpop.f32.mrb[0].mxu0
  %v611 = vadd.f32 0.0, %v610
  %v612 = vpop.f32.mrb[0].mxu0
  %613 = vmatprep.mubr.f32.mxu0 0.0
  %614 = vmatmul.mubr.f32.gmra.mrb[0].mxu0 %v185
  %v615 = vpop.f32.mrb[0].mxu0
  %v616 = vadd.f32 0.0, %v615
  %v617 = vpop.f32.mrb[0].mxu0
  %618 = vmatprep.mubr.f32.mxu0 0.0
  %619 = vmatmul.mubr.f32.gmra.mrb[0].mxu0 %v188
  %v620 = vpop.f32.mrb[0].mxu0
  %v621 = vadd.f32 0.0, %v620
  %v622 = vpop.f32.mrb[0].mxu0
  %623 = vmatprep.mubr.f32.mxu0 0.0
  %624 = vmatmul.mubr.f32.gmra.mrb[0].mxu0 %v191
  %v625 = vpop.f32.mrb[0].mxu0
  %v626 = vadd.f32 0.0, %v625
  %v627 = vpop.f32.mrb[0].mxu0
  %628 = vmatprep.mubr.f32.mxu0 0.0
  %629 = vmatmul.mubr.f32.gmra.mrb[0].mxu0 %v194
  %v630 = vpop.f32.mrb[0].mxu0
  %v631 = vadd.f32 0.0, %v630
  %v632 = vpop.f32.mrb[0].mxu0
  %633 = vmatprep.mubr.f32.mxu0 0.0
  %634 = vmatmul.mubr.f32.gmra.mrb[0].mxu0 %v197
  %v635 = vpop.f32.mrb[0].mxu0
  %v636 = vadd.f32 0.0, %v635
  %v637 = vpop.f32.mrb[0].mxu0
  %638 = vmatprep.mubr.f32.mxu0 0.0
  %639 = vmatmul.mubr.f32.gmra.mrb[0].mxu0 %v200
  %v640 = vpop.f32.mrb[0].mxu0
  %v641 = vadd.f32 0.0, %v640
  %v642 = vpop.f32.mrb[0].mxu0
  %643 = vmatprep.mubr.f32.mxu0 0.0
  %644 = vmatmul.mubr.f32.gmra.mrb[0].mxu0 %v203
  %v645 = vpop.f32.mrb[0].mxu0
  %v646 = vadd.f32 0.0, %v645
  %v647 = vpop.f32.mrb[0].mxu0
  %648 = vmatprep.mubr.f32.mxu0 0.0
  %649 = vmatmul.mubr.f32.gmra.mrb[0].mxu0 %v206
  %v650 = vpop.f32.mrb[0].mxu0
  %v651 = vadd.f32 0.0, %v650
  %v652 = vpop.f32.mrb[0].mxu0
  %653 = vmatprep.mubr.f32.mxu0 0.0
  %654 = vmatmul.mubr.f32.gmra.mrb[0].mxu0 %v209
  %v655 = vpop.f32.mrb[0].mxu0
  %v656 = vadd.f32 0.0, %v655
  %v657 = vpop.f32.mrb[0].mxu0
  %658 = vmatprep.mubr.f32.mxu0 0.0
  %659 = vmatmul.mubr.f32.gmra.mrb[0].mxu0 %v212
  %v660 = vpop.f32.mrb[0].mxu0
  %v661 = vadd.f32 0.0, %v660
  %v662 = vpop.f32.mrb[0].mxu0
  %663 = vmatprep.mubr.f32.mxu0 0.0
  %664 = vmatmul.mubr.f32.gmra.mrb[0].mxu0 %v215
  %v665 = vpop.f32.mrb[0].mxu0
  %v666 = vadd.f32 0.0, %v665
  %v667 = vpop.f32.mrb[0].mxu0
  %668 = vmatprep.mubr.f32.mxu0 0.0
  %669 = vmatmul.mubr.f32.gmra.mrb[0].mxu0 %v218
  %v670 = vpop.f32.mrb[0].mxu0
  %v671 = vadd.f32 0.0, %v670
  %v672 = vpop.f32.mrb[0].mxu0
  %673 = vdwg.mxu0
  %v675 = vsel %vm123, %v47, 0
  %v678 = vsel %vm123, %v48, 0
  %v681 = vsel %vm123, %v49, 0
  %v684 = vsel %vm123, %v50, 0
  %v687 = vsel %vm123, %v51, 0
  %v690 = vsel %vm123, %v52, 0
  %v693 = vsel %vm123, %v53, 0
  %v696 = vsel %vm123, %v54, 0
  %v699 = vsel %vm123, %v55, 0
  %v702 = vsel %vm123, %v56, 0
  %v705 = vsel %vm123, %v57, 0
  %v708 = vsel %vm123, %v58, 0
  %v711 = vsel %vm123, %v59, 0
  %v714 = vsel %vm123, %v60, 0
  %v717 = vsel %vm123, %v61, 0
  %v720 = vsel %vm123, %v62, 0
  %v723 = vsel %vm123, %v63, 0
  %v726 = vsel %vm123, %v64, 0
  %v729 = vsel %vm123, %v65, 0
  %v732 = vsel %vm123, %v66, 0
  %v735 = vsel %vm123, %v67, 0
  %v738 = vsel %vm123, %v68, 0
  %v741 = vsel %vm123, %v69, 0
  %v744 = vsel %vm123, %v70, 0
  %v747 = vsel %vm123, %v71, 0
  %v750 = vsel %vm123, %v72, 0
  %v753 = vsel %vm123, %v73, 0
  %v756 = vsel %vm123, %v74, 0
  %v759 = vsel %vm123, %v75, 0
  %v762 = vsel %vm123, %v76, 0
  %v765 = vsel %vm123, %v77, 0
  %v768 = vsel %vm123, %v78, 0
  %770 = vmatprep.subr.mxu0 0.0
  %771 = vmatpush1.msra.mxu0 %v79
  %772 = vmatprep.subr.mxu0 0.0
  %773 = vmatpush1.msra.mxu0 %v80
  %774 = vmatprep.subr.mxu0 0.0
  %775 = vmatpush1.msra.mxu0 %v81
  %776 = vmatprep.subr.mxu0 0.0
  %777 = vmatpush1.msra.mxu0 %v82
  %778 = vmatprep.subr.mxu0 0.0
  %779 = vmatpush1.msra.mxu0 0.0
  %780 = vmatprep.subr.mxu0 0.0
  %781 = vmatpush1.msra.mxu0 0.0
  %782 = vmatprep.subr.mxu0 0.0
  %783 = vmatpush1.msra.mxu0 0.0
  %784 = vmatprep.subr.mxu0 0.0
  %785 = vmatpush1.msra.mxu0 0.0
  %786 = vmatprep.subr.mxu0 0.0
  %787 = vmatpush1.msra.mxu0 0.0
  %788 = vmatprep.subr.mxu0 0.0
  %789 = vmatpush1.msra.mxu0 0.0
  %790 = vmatprep.subr.mxu0 0.0
  %791 = vmatpush1.msra.mxu0 0.0
  %792 = vmatprep.subr.mxu0 0.0
  %793 = vmatpush1.msra.mxu0 0.0
  %794 = vmatprep.subr.mxu0 0.0
  %795 = vmatpush1.msra.mxu0 0.0
  %796 = vmatprep.subr.mxu0 0.0
  %797 = vmatpush1.msra.mxu0 0.0
  %798 = vmatprep.subr.mxu0 0.0
  %799 = vmatpush1.msra.mxu0 0.0
  %800 = vmatprep.subr.mxu0 0.0
  %801 = vmatpush1.msra.mxu0 0.0
  %802 = vmatprep.subr.mxu0 0.0
  %803 = vmatpush1.msra.mxu0 0.0
  %804 = vmatprep.subr.mxu0 0.0
  %805 = vmatpush1.msra.mxu0 0.0
  %806 = vmatprep.subr.mxu0 0.0
  %807 = vmatpush1.msra.mxu0 0.0
  %808 = vmatprep.subr.mxu0 0.0
  %809 = vmatpush1.msra.mxu0 0.0
  %810 = vmatprep.subr.mxu0 0.0
  %811 = vmatpush1.msra.mxu0 0.0
  %812 = vmatprep.subr.mxu0 0.0
  %813 = vmatpush1.msra.mxu0 0.0
  %814 = vmatprep.subr.mxu0 0.0
  %815 = vmatpush1.msra.mxu0 0.0
  %816 = vmatprep.subr.mxu0 0.0
  %817 = vmatpush1.msra.mxu0 0.0
  %818 = vmatprep.subr.mxu0 0.0
  %819 = vmatpush1.msra.mxu0 0.0
  %820 = vmatprep.subr.mxu0 0.0
  %821 = vmatpush1.msra.mxu0 0.0
  %822 = vmatprep.subr.mxu0 0.0
  %823 = vmatpush1.msra.mxu0 0.0
  %824 = vmatprep.subr.mxu0 0.0
  %825 = vmatpush1.msra.mxu0 0.0
  %826 = vmatprep.subr.mxu0 0.0
  %827 = vmatpush1.msra.mxu0 0.0
  %828 = vmatprep.subr.mxu0 0.0
  %829 = vmatpush1.msra.mxu0 0.0
  %830 = vmatprep.subr.mxu0 0.0
  %831 = vmatpush1.msra.mxu0 0.0
  %832 = vmatprep.subr.mxu0 0.0
  %833 = vmatpush1.msra.mxu0 0.0
  %834 = vmatprep.mubr.f32.mxu0 0.0
  %835 = vmatmul.mubr.f32.gmra.mrb[0].mxu0 %v675
  %v836 = vpop.f32.mrb[0].mxu0
  %v837 = vadd.f32 %v287, %v836
  %v838 = vpop.f32.mrb[0].mxu0
  %839 = vmatprep.mubr.f32.mxu0 0.0
  %840 = vmatmul.mubr.f32.gmra.mrb[0].mxu0 %v678
  %v841 = vpop.f32.mrb[0].mxu0
  %v842 = vadd.f32 %v292, %v841
  %v843 = vpop.f32.mrb[0].mxu0
  %844 = vmatprep.mubr.f32.mxu0 0.0
  %845 = vmatmul.mubr.f32.gmra.mrb[0].mxu0 %v681
  %v846 = vpop.f32.mrb[0].mxu0
  %v847 = vadd.f32 %v297, %v846
  %v848 = vpop.f32.mrb[0].mxu0
  %849 = vmatprep.mubr.f32.mxu0 0.0
  %850 = vmatmul.mubr.f32.gmra.mrb[0].mxu0 %v684
  %v851 = vpop.f32.mrb[0].mxu0
  %v852 = vadd.f32 %v302, %v851
  %v853 = vpop.f32.mrb[0].mxu0
  %854 = vmatprep.mubr.f32.mxu0 0.0
  %855 = vmatmul.mubr.f32.gmra.mrb[0].mxu0 %v687
  %v856 = vpop.f32.mrb[0].mxu0
  %v857 = vadd.f32 %v307, %v856
  %v858 = vpop.f32.mrb[0].mxu0
  %859 = vmatprep.mubr.f32.mxu0 0.0
  %860 = vmatmul.mubr.f32.gmra.mrb[0].mxu0 %v690
  %v861 = vpop.f32.mrb[0].mxu0
  %v862 = vadd.f32 %v312, %v861
  %v863 = vpop.f32.mrb[0].mxu0
  %864 = vmatprep.mubr.f32.mxu0 0.0
  %865 = vmatmul.mubr.f32.gmra.mrb[0].mxu0 %v693
  %v866 = vpop.f32.mrb[0].mxu0
  %v867 = vadd.f32 %v317, %v866
  %v868 = vpop.f32.mrb[0].mxu0
  %869 = vmatprep.mubr.f32.mxu0 0.0
  %870 = vmatmul.mubr.f32.gmra.mrb[0].mxu0 %v696
  %v871 = vpop.f32.mrb[0].mxu0
  %v872 = vadd.f32 %v322, %v871
  %v873 = vpop.f32.mrb[0].mxu0
  %874 = vmatprep.mubr.f32.mxu0 0.0
  %875 = vmatmul.mubr.f32.gmra.mrb[0].mxu0 %v699
  %v876 = vpop.f32.mrb[0].mxu0
  %v877 = vadd.f32 %v327, %v876
  %v878 = vpop.f32.mrb[0].mxu0
  %879 = vmatprep.mubr.f32.mxu0 0.0
  %880 = vmatmul.mubr.f32.gmra.mrb[0].mxu0 %v702
  %v881 = vpop.f32.mrb[0].mxu0
  %v882 = vadd.f32 %v332, %v881
  %v883 = vpop.f32.mrb[0].mxu0
  %884 = vmatprep.mubr.f32.mxu0 0.0
  %885 = vmatmul.mubr.f32.gmra.mrb[0].mxu0 %v705
  %v886 = vpop.f32.mrb[0].mxu0
  %v887 = vadd.f32 %v337, %v886
  %v888 = vpop.f32.mrb[0].mxu0
  %889 = vmatprep.mubr.f32.mxu0 0.0
  %890 = vmatmul.mubr.f32.gmra.mrb[0].mxu0 %v708
  %v891 = vpop.f32.mrb[0].mxu0
  %v892 = vadd.f32 %v342, %v891
  %v893 = vpop.f32.mrb[0].mxu0
  %894 = vmatprep.mubr.f32.mxu0 0.0
  %895 = vmatmul.mubr.f32.gmra.mrb[0].mxu0 %v711
  %v896 = vpop.f32.mrb[0].mxu0
  %v897 = vadd.f32 %v347, %v896
  %v898 = vpop.f32.mrb[0].mxu0
  %899 = vmatprep.mubr.f32.mxu0 0.0
  %900 = vmatmul.mubr.f32.gmra.mrb[0].mxu0 %v714
  %v901 = vpop.f32.mrb[0].mxu0
  %v902 = vadd.f32 %v352, %v901
  %v903 = vpop.f32.mrb[0].mxu0
  %904 = vmatprep.mubr.f32.mxu0 0.0
  %905 = vmatmul.mubr.f32.gmra.mrb[0].mxu0 %v717
  %v906 = vpop.f32.mrb[0].mxu0
  %v907 = vadd.f32 %v357, %v906
  %v908 = vpop.f32.mrb[0].mxu0
  %909 = vmatprep.mubr.f32.mxu0 0.0
  %910 = vmatmul.mubr.f32.gmra.mrb[0].mxu0 %v720
  %v911 = vpop.f32.mrb[0].mxu0
  %v912 = vadd.f32 %v362, %v911
  %v913 = vpop.f32.mrb[0].mxu0
  %914 = vmatprep.mubr.f32.mxu0 0.0
  %915 = vmatmul.mubr.f32.gmra.mrb[0].mxu0 %v723
  %v916 = vpop.f32.mrb[0].mxu0
  %v917 = vadd.f32 %v367, %v916
  %v918 = vpop.f32.mrb[0].mxu0
  %919 = vmatprep.mubr.f32.mxu0 0.0
  %920 = vmatmul.mubr.f32.gmra.mrb[0].mxu0 %v726
  %v921 = vpop.f32.mrb[0].mxu0
  %v922 = vadd.f32 %v372, %v921
  %v923 = vpop.f32.mrb[0].mxu0
  %924 = vmatprep.mubr.f32.mxu0 0.0
  %925 = vmatmul.mubr.f32.gmra.mrb[0].mxu0 %v729
  %v926 = vpop.f32.mrb[0].mxu0
  %v927 = vadd.f32 %v377, %v926
  %v928 = vpop.f32.mrb[0].mxu0
  %929 = vmatprep.mubr.f32.mxu0 0.0
  %930 = vmatmul.mubr.f32.gmra.mrb[0].mxu0 %v732
  %v931 = vpop.f32.mrb[0].mxu0
  %v932 = vadd.f32 %v382, %v931
  %v933 = vpop.f32.mrb[0].mxu0
  %934 = vmatprep.mubr.f32.mxu0 0.0
  %935 = vmatmul.mubr.f32.gmra.mrb[0].mxu0 %v735
  %v936 = vpop.f32.mrb[0].mxu0
  %v937 = vadd.f32 %v387, %v936
  %v938 = vpop.f32.mrb[0].mxu0
  %939 = vmatprep.mubr.f32.mxu0 0.0
  %940 = vmatmul.mubr.f32.gmra.mrb[0].mxu0 %v738
  %v941 = vpop.f32.mrb[0].mxu0
  %v942 = vadd.f32 %v392, %v941
  %v943 = vpop.f32.mrb[0].mxu0
  %944 = vmatprep.mubr.f32.mxu0 0.0
  %945 = vmatmul.mubr.f32.gmra.mrb[0].mxu0 %v741
  %v946 = vpop.f32.mrb[0].mxu0
  %v947 = vadd.f32 %v397, %v946
  %v948 = vpop.f32.mrb[0].mxu0
  %949 = vmatprep.mubr.f32.mxu0 0.0
  %950 = vmatmul.mubr.f32.gmra.mrb[0].mxu0 %v744
  %v951 = vpop.f32.mrb[0].mxu0
  %v952 = vadd.f32 %v402, %v951
  %v953 = vpop.f32.mrb[0].mxu0
  %954 = vmatprep.mubr.f32.mxu0 0.0
  %955 = vmatmul.mubr.f32.gmra.mrb[0].mxu0 %v747
  %v956 = vpop.f32.mrb[0].mxu0
  %v957 = vadd.f32 %v407, %v956
  %v958 = vpop.f32.mrb[0].mxu0
  %959 = vmatprep.mubr.f32.mxu0 0.0
  %960 = vmatmul.mubr.f32.gmra.mrb[0].mxu0 %v750
  %v961 = vpop.f32.mrb[0].mxu0
  %v962 = vadd.f32 %v412, %v961
  %v963 = vpop.f32.mrb[0].mxu0
  %964 = vmatprep.mubr.f32.mxu0 0.0
  %965 = vmatmul.mubr.f32.gmra.mrb[0].mxu0 %v753
  %v966 = vpop.f32.mrb[0].mxu0
  %v967 = vadd.f32 %v417, %v966
  %v968 = vpop.f32.mrb[0].mxu0
  %969 = vmatprep.mubr.f32.mxu0 0.0
  %970 = vmatmul.mubr.f32.gmra.mrb[0].mxu0 %v756
  %v971 = vpop.f32.mrb[0].mxu0
  %v972 = vadd.f32 %v422, %v971
  %v973 = vpop.f32.mrb[0].mxu0
  %974 = vmatprep.mubr.f32.mxu0 0.0
  %975 = vmatmul.mubr.f32.gmra.mrb[0].mxu0 %v759
  %v976 = vpop.f32.mrb[0].mxu0
  %v977 = vadd.f32 %v427, %v976
  %v978 = vpop.f32.mrb[0].mxu0
  %979 = vmatprep.mubr.f32.mxu0 0.0
  %980 = vmatmul.mubr.f32.gmra.mrb[0].mxu0 %v762
  %v981 = vpop.f32.mrb[0].mxu0
  %v982 = vadd.f32 %v432, %v981
  %v983 = vpop.f32.mrb[0].mxu0
  %984 = vmatprep.mubr.f32.mxu0 0.0
  %985 = vmatmul.mubr.f32.gmra.mrb[0].mxu0 %v765
  %v986 = vpop.f32.mrb[0].mxu0
  %v987 = vadd.f32 %v437, %v986
  %v988 = vpop.f32.mrb[0].mxu0
  %989 = vmatprep.mubr.f32.mxu0 0.0
  %990 = vmatmul.mubr.f32.gmra.mrb[0].mxu0 %v768
  %v991 = vpop.f32.mrb[0].mxu0
  %v992 = vadd.f32 %v442, %v991
  %v993 = vpop.f32.mrb[0].mxu0
  %994 = vdwg.mxu0
  %995 = vmatprep.subr.mxu0 0.0
  %996 = vmatpush1.msra.mxu0 %v83
  %997 = vmatprep.subr.mxu0 0.0
  %998 = vmatpush1.msra.mxu0 %v84
  %999 = vmatprep.subr.mxu0 0.0
  %1000 = vmatpush1.msra.mxu0 %v85
  %1001 = vmatprep.subr.mxu0 0.0
  %1002 = vmatpush1.msra.mxu0 %v86
  %1003 = vmatprep.subr.mxu0 0.0
  %1004 = vmatpush1.msra.mxu0 0.0
  %1005 = vmatprep.subr.mxu0 0.0
  %1006 = vmatpush1.msra.mxu0 0.0
  %1007 = vmatprep.subr.mxu0 0.0
  %1008 = vmatpush1.msra.mxu0 0.0
  %1009 = vmatprep.subr.mxu0 0.0
  %1010 = vmatpush1.msra.mxu0 0.0
  %1011 = vmatprep.subr.mxu0 0.0
  %1012 = vmatpush1.msra.mxu0 0.0
  %1013 = vmatprep.subr.mxu0 0.0
  %1014 = vmatpush1.msra.mxu0 0.0
  %1015 = vmatprep.subr.mxu0 0.0
  %1016 = vmatpush1.msra.mxu0 0.0
  %1017 = vmatprep.subr.mxu0 0.0
  %1018 = vmatpush1.msra.mxu0 0.0
  %1019 = vmatprep.subr.mxu0 0.0
  %1020 = vmatpush1.msra.mxu0 0.0
  %1021 = vmatprep.subr.mxu0 0.0
  %1022 = vmatpush1.msra.mxu0 0.0
  %1023 = vmatprep.subr.mxu0 0.0
  %1024 = vmatpush1.msra.mxu0 0.0
  %1025 = vmatprep.subr.mxu0 0.0
  %1026 = vmatpush1.msra.mxu0 0.0
  %1027 = vmatprep.subr.mxu0 0.0
  %1028 = vmatpush1.msra.mxu0 0.0
  %1029 = vmatprep.subr.mxu0 0.0
  %1030 = vmatpush1.msra.mxu0 0.0
  %1031 = vmatprep.subr.mxu0 0.0
  %1032 = vmatpush1.msra.mxu0 0.0
  %1033 = vmatprep.subr.mxu0 0.0
  %1034 = vmatpush1.msra.mxu0 0.0
  %1035 = vmatprep.subr.mxu0 0.0
  %1036 = vmatpush1.msra.mxu0 0.0
  %1037 = vmatprep.subr.mxu0 0.0
  %1038 = vmatpush1.msra.mxu0 0.0
  %1039 = vmatprep.subr.mxu0 0.0
  %1040 = vmatpush1.msra.mxu0 0.0
  %1041 = vmatprep.subr.mxu0 0.0
  %1042 = vmatpush1.msra.mxu0 0.0
  %1043 = vmatprep.subr.mxu0 0.0
  %1044 = vmatpush1.msra.mxu0 0.0
  %1045 = vmatprep.subr.mxu0 0.0
  %1046 = vmatpush1.msra.mxu0 0.0
  %1047 = vmatprep.subr.mxu0 0.0
  %1048 = vmatpush1.msra.mxu0 0.0
  %1049 = vmatprep.subr.mxu0 0.0
  %1050 = vmatpush1.msra.mxu0 0.0
  %1051 = vmatprep.subr.mxu0 0.0
  %1052 = vmatpush1.msra.mxu0 0.0
  %1053 = vmatprep.subr.mxu0 0.0
  %1054 = vmatpush1.msra.mxu0 0.0
  %1055 = vmatprep.subr.mxu0 0.0
  %1056 = vmatpush1.msra.mxu0 0.0
  %1057 = vmatprep.subr.mxu0 0.0
  %1058 = vmatpush1.msra.mxu0 0.0
  %1059 = vmatprep.mubr.f32.mxu0 0.0
  %1060 = vmatmul.mubr.f32.gmra.mrb[0].mxu0 %v675
  %v1061 = vpop.f32.mrb[0].mxu0
  %v1062 = vadd.f32 %v516, %v1061
  %v1063 = vpop.f32.mrb[0].mxu0
  %1064 = vmatprep.mubr.f32.mxu0 0.0
  %1065 = vmatmul.mubr.f32.gmra.mrb[0].mxu0 %v678
  %v1066 = vpop.f32.mrb[0].mxu0
  %v1067 = vadd.f32 %v521, %v1066
  %v1068 = vpop.f32.mrb[0].mxu0
  %1069 = vmatprep.mubr.f32.mxu0 0.0
  %1070 = vmatmul.mubr.f32.gmra.mrb[0].mxu0 %v681
  %v1071 = vpop.f32.mrb[0].mxu0
  %v1072 = vadd.f32 %v526, %v1071
  %v1073 = vpop.f32.mrb[0].mxu0
  %1074 = vmatprep.mubr.f32.mxu0 0.0
  %1075 = vmatmul.mubr.f32.gmra.mrb[0].mxu0 %v684
  %v1076 = vpop.f32.mrb[0].mxu0
  %v1077 = vadd.f32 %v531, %v1076
  %v1078 = vpop.f32.mrb[0].mxu0
  %1079 = vmatprep.mubr.f32.mxu0 0.0
  %1080 = vmatmul.mubr.f32.gmra.mrb[0].mxu0 %v687
  %v1081 = vpop.f32.mrb[0].mxu0
  %v1082 = vadd.f32 %v536, %v1081
  %v1083 = vpop.f32.mrb[0].mxu0
  %1084 = vmatprep.mubr.f32.mxu0 0.0
  %1085 = vmatmul.mubr.f32.gmra.mrb[0].mxu0 %v690
  %v1086 = vpop.f32.mrb[0].mxu0
  %v1087 = vadd.f32 %v541, %v1086
  %v1088 = vpop.f32.mrb[0].mxu0
  %1089 = vmatprep.mubr.f32.mxu0 0.0
  %1090 = vmatmul.mubr.f32.gmra.mrb[0].mxu0 %v693
  %v1091 = vpop.f32.mrb[0].mxu0
  %v1092 = vadd.f32 %v546, %v1091
  %v1093 = vpop.f32.mrb[0].mxu0
  %1094 = vmatprep.mubr.f32.mxu0 0.0
  %1095 = vmatmul.mubr.f32.gmra.mrb[0].mxu0 %v696
  %v1096 = vpop.f32.mrb[0].mxu0
  %v1097 = vadd.f32 %v551, %v1096
  %v1098 = vpop.f32.mrb[0].mxu0
  %1099 = vmatprep.mubr.f32.mxu0 0.0
  %1100 = vmatmul.mubr.f32.gmra.mrb[0].mxu0 %v699
  %v1101 = vpop.f32.mrb[0].mxu0
  %v1102 = vadd.f32 %v556, %v1101
  %v1103 = vpop.f32.mrb[0].mxu0
  %1104 = vmatprep.mubr.f32.mxu0 0.0
  %1105 = vmatmul.mubr.f32.gmra.mrb[0].mxu0 %v702
  %v1106 = vpop.f32.mrb[0].mxu0
  %v1107 = vadd.f32 %v561, %v1106
  %v1108 = vpop.f32.mrb[0].mxu0
  %1109 = vmatprep.mubr.f32.mxu0 0.0
  %1110 = vmatmul.mubr.f32.gmra.mrb[0].mxu0 %v705
  %v1111 = vpop.f32.mrb[0].mxu0
  %v1112 = vadd.f32 %v566, %v1111
  %v1113 = vpop.f32.mrb[0].mxu0
  %1114 = vmatprep.mubr.f32.mxu0 0.0
  %1115 = vmatmul.mubr.f32.gmra.mrb[0].mxu0 %v708
  %v1116 = vpop.f32.mrb[0].mxu0
  %v1117 = vadd.f32 %v571, %v1116
  %v1118 = vpop.f32.mrb[0].mxu0
  %1119 = vmatprep.mubr.f32.mxu0 0.0
  %1120 = vmatmul.mubr.f32.gmra.mrb[0].mxu0 %v711
  %v1121 = vpop.f32.mrb[0].mxu0
  %v1122 = vadd.f32 %v576, %v1121
  %v1123 = vpop.f32.mrb[0].mxu0
  %1124 = vmatprep.mubr.f32.mxu0 0.0
  %1125 = vmatmul.mubr.f32.gmra.mrb[0].mxu0 %v714
  %v1126 = vpop.f32.mrb[0].mxu0
  %v1127 = vadd.f32 %v581, %v1126
  %v1128 = vpop.f32.mrb[0].mxu0
  %1129 = vmatprep.mubr.f32.mxu0 0.0
  %1130 = vmatmul.mubr.f32.gmra.mrb[0].mxu0 %v717
  %v1131 = vpop.f32.mrb[0].mxu0
  %v1132 = vadd.f32 %v586, %v1131
  %v1133 = vpop.f32.mrb[0].mxu0
  %1134 = vmatprep.mubr.f32.mxu0 0.0
  %1135 = vmatmul.mubr.f32.gmra.mrb[0].mxu0 %v720
  %v1136 = vpop.f32.mrb[0].mxu0
  %v1137 = vadd.f32 %v591, %v1136
  %v1138 = vpop.f32.mrb[0].mxu0
  %1139 = vmatprep.mubr.f32.mxu0 0.0
  %1140 = vmatmul.mubr.f32.gmra.mrb[0].mxu0 %v723
  %v1141 = vpop.f32.mrb[0].mxu0
  %v1142 = vadd.f32 %v596, %v1141
  %v1143 = vpop.f32.mrb[0].mxu0
  %1144 = vmatprep.mubr.f32.mxu0 0.0
  %1145 = vmatmul.mubr.f32.gmra.mrb[0].mxu0 %v726
  %v1146 = vpop.f32.mrb[0].mxu0
  %v1147 = vadd.f32 %v601, %v1146
  %v1148 = vpop.f32.mrb[0].mxu0
  %1149 = vmatprep.mubr.f32.mxu0 0.0
  %1150 = vmatmul.mubr.f32.gmra.mrb[0].mxu0 %v729
  %v1151 = vpop.f32.mrb[0].mxu0
  %v1152 = vadd.f32 %v606, %v1151
  %v1153 = vpop.f32.mrb[0].mxu0
  %1154 = vmatprep.mubr.f32.mxu0 0.0
  %1155 = vmatmul.mubr.f32.gmra.mrb[0].mxu0 %v732
  %v1156 = vpop.f32.mrb[0].mxu0
  %v1157 = vadd.f32 %v611, %v1156
  %v1158 = vpop.f32.mrb[0].mxu0
  %1159 = vmatprep.mubr.f32.mxu0 0.0
  %1160 = vmatmul.mubr.f32.gmra.mrb[0].mxu0 %v735
  %v1161 = vpop.f32.mrb[0].mxu0
  %v1162 = vadd.f32 %v616, %v1161
  %v1163 = vpop.f32.mrb[0].mxu0
  %1164 = vmatprep.mubr.f32.mxu0 0.0
  %1165 = vmatmul.mubr.f32.gmra.mrb[0].mxu0 %v738
  %v1166 = vpop.f32.mrb[0].mxu0
  %v1167 = vadd.f32 %v621, %v1166
  %v1168 = vpop.f32.mrb[0].mxu0
  %1169 = vmatprep.mubr.f32.mxu0 0.0
  %1170 = vmatmul.mubr.f32.gmra.mrb[0].mxu0 %v741
  %v1171 = vpop.f32.mrb[0].mxu0
  %v1172 = vadd.f32 %v626, %v1171
  %v1173 = vpop.f32.mrb[0].mxu0
  %1174 = vmatprep.mubr.f32.mxu0 0.0
  %1175 = vmatmul.mubr.f32.gmra.mrb[0].mxu0 %v744
  %v1176 = vpop.f32.mrb[0].mxu0
  %v1177 = vadd.f32 %v631, %v1176
  %v1178 = vpop.f32.mrb[0].mxu0
  %1179 = vmatprep.mubr.f32.mxu0 0.0
  %1180 = vmatmul.mubr.f32.gmra.mrb[0].mxu0 %v747
  %v1181 = vpop.f32.mrb[0].mxu0
  %v1182 = vadd.f32 %v636, %v1181
  %v1183 = vpop.f32.mrb[0].mxu0
  %1184 = vmatprep.mubr.f32.mxu0 0.0
  %1185 = vmatmul.mubr.f32.gmra.mrb[0].mxu0 %v750
  %v1186 = vpop.f32.mrb[0].mxu0
  %v1187 = vadd.f32 %v641, %v1186
  %v1188 = vpop.f32.mrb[0].mxu0
  %1189 = vmatprep.mubr.f32.mxu0 0.0
  %1190 = vmatmul.mubr.f32.gmra.mrb[0].mxu0 %v753
  %v1191 = vpop.f32.mrb[0].mxu0
  %v1192 = vadd.f32 %v646, %v1191
  %v1193 = vpop.f32.mrb[0].mxu0
  %1194 = vmatprep.mubr.f32.mxu0 0.0
  %1195 = vmatmul.mubr.f32.gmra.mrb[0].mxu0 %v756
  %v1196 = vpop.f32.mrb[0].mxu0
  %v1197 = vadd.f32 %v651, %v1196
  %v1198 = vpop.f32.mrb[0].mxu0
  %1199 = vmatprep.mubr.f32.mxu0 0.0
  %1200 = vmatmul.mubr.f32.gmra.mrb[0].mxu0 %v759
  %v1201 = vpop.f32.mrb[0].mxu0
  %v1202 = vadd.f32 %v656, %v1201
  %v1203 = vpop.f32.mrb[0].mxu0
  %1204 = vmatprep.mubr.f32.mxu0 0.0
  %1205 = vmatmul.mubr.f32.gmra.mrb[0].mxu0 %v762
  %v1206 = vpop.f32.mrb[0].mxu0
  %v1207 = vadd.f32 %v661, %v1206
  %v1208 = vpop.f32.mrb[0].mxu0
  %1209 = vmatprep.mubr.f32.mxu0 0.0
  %1210 = vmatmul.mubr.f32.gmra.mrb[0].mxu0 %v765
  %v1211 = vpop.f32.mrb[0].mxu0
  %v1212 = vadd.f32 %v666, %v1211
  %v1213 = vpop.f32.mrb[0].mxu0
  %1214 = vmatprep.mubr.f32.mxu0 0.0
  %1215 = vmatmul.mubr.f32.gmra.mrb[0].mxu0 %v768
  %v1216 = vpop.f32.mrb[0].mxu0
  %v1217 = vadd.f32 %v671, %v1216
  %v1218 = vpop.f32.mrb[0].mxu0
  %1219 = vdwg.mxu0
  %v1220 = vld [vmem:[%s0 + $0x2] sm:$0xff]
  %v1221 = vld [vmem:[%s0 + $0xa] sm:$0xff]
  %v1222 = vld [vmem:[%s0 + $0x12] sm:$0xff]
  %v1223 = vld [vmem:[%s0 + $0x1a] sm:$0xff]
  %v1224 = vld [vmem:[%s0 + $0x22] sm:$0xff]
  %v1225 = vld [vmem:[%s0 + $0x2a] sm:$0xff]
  %v1226 = vld [vmem:[%s0 + $0x32] sm:$0xff]
  %v1227 = vld [vmem:[%s0 + $0x3a] sm:$0xff]
  %v1228 = vld [vmem:[%s0 + $0x42] sm:$0xff]
  %v1229 = vld [vmem:[%s0 + $0x4a] sm:$0xff]
  %v1230 = vld [vmem:[%s0 + $0x52] sm:$0xff]
  %v1231 = vld [vmem:[%s0 + $0x5a] sm:$0xff]
  %v1232 = vld [vmem:[%s0 + $0x62] sm:$0xff]
  %v1233 = vld [vmem:[%s0 + $0x6a] sm:$0xff]
  %v1234 = vld [vmem:[%s0 + $0x72] sm:$0xff]
  %v1235 = vld [vmem:[%s0 + $0x7a] sm:$0xff]
  %v1236 = vld [vmem:[%s0 + $0x82] sm:$0xff]
  %v1237 = vld [vmem:[%s0 + $0x8a] sm:$0xff]
  %v1238 = vld [vmem:[%s0 + $0x92] sm:$0xff]
  %v1239 = vld [vmem:[%s0 + $0x9a] sm:$0xff]
  %v1240 = vld [vmem:[%s0 + $0xa2] sm:$0xff]
  %v1241 = vld [vmem:[%s0 + $0xaa] sm:$0xff]
  %v1242 = vld [vmem:[%s0 + $0xb2] sm:$0xff]
  %v1243 = vld [vmem:[%s0 + $0xba] sm:$0xff]
  %v1244 = vld [vmem:[%s0 + $0xc2] sm:$0xff]
  %v1245 = vld [vmem:[%s0 + $0xca] sm:$0xff]
  %v1246 = vld [vmem:[%s0 + $0xd2] sm:$0xff]
  %v1247 = vld [vmem:[%s0 + $0xda] sm:$0xff]
  %v1248 = vld [vmem:[%s0 + $0xe2] sm:$0xff]
  %v1249 = vld [vmem:[%s0 + $0xea] sm:$0xff]
  %v1250 = vld [vmem:[%s0 + $0xf2] sm:$0xff]
  %v1251 = vld [vmem:[%s0 + $0xfa] sm:$0xf]
  %v1252 = vld [vmem:[%s1 + $0x40] sm:$0xff]
  %v1253 = vld [vmem:[%s1 + $0x48] sm:$0xff]
  %v1254 = vld [vmem:[%s1 + $0x50] sm:$0xff]
  %v1255 = vld [vmem:[%s1 + $0x58] sm:$0xff]
  %v1257 = vsel %vm123, %v1220, 0
  %v1260 = vsel %vm123, %v1221, 0
  %v1263 = vsel %vm123, %v1222, 0
  %v1266 = vsel %vm123, %v1223, 0
  %v1269 = vsel %vm123, %v1224, 0
  %v1272 = vsel %vm123, %v1225, 0
  %v1275 = vsel %vm123, %v1226, 0
  %v1278 = vsel %vm123, %v1227, 0
  %v1281 = vsel %vm123, %v1228, 0
  %v1284 = vsel %vm123, %v1229, 0
  %v1287 = vsel %vm123, %v1230, 0
  %v1290 = vsel %vm123, %v1231, 0
  %v1293 = vsel %vm123, %v1232, 0
  %v1296 = vsel %vm123, %v1233, 0
  %v1299 = vsel %vm123, %v1234, 0
  %v1302 = vsel %vm123, %v1235, 0
  %v1305 = vsel %vm123, %v1236, 0
  %v1308 = vsel %vm123, %v1237, 0
  %v1311 = vsel %vm123, %v1238, 0
  %v1314 = vsel %vm123, %v1239, 0
  %v1317 = vsel %vm123, %v1240, 0
  %v1320 = vsel %vm123, %v1241, 0
  %v1323 = vsel %vm123, %v1242, 0
  %v1326 = vsel %vm123, %v1243, 0
  %v1329 = vsel %vm123, %v1244, 0
  %v1332 = vsel %vm123, %v1245, 0
  %v1335 = vsel %vm123, %v1246, 0
  %v1338 = vsel %vm123, %v1247, 0
  %v1341 = vsel %vm123, %v1248, 0
  %v1344 = vsel %vm123, %v1249, 0
  %v1347 = vsel %vm123, %v1250, 0
  %v1350 = vsel %vm123, %v1251, 0
  %1352 = vmatprep.subr.mxu0 0.0
  %1353 = vmatpush1.msra.mxu0 %v1252
  %1354 = vmatprep.subr.mxu0 0.0
  %1355 = vmatpush1.msra.mxu0 %v1253
  %1356 = vmatprep.subr.mxu0 0.0
  %1357 = vmatpush1.msra.mxu0 %v1254
  %1358 = vmatprep.subr.mxu0 0.0
  %1359 = vmatpush1.msra.mxu0 %v1255
  %1360 = vmatprep.subr.mxu0 0.0
  %1361 = vmatpush1.msra.mxu0 0.0
  %1362 = vmatprep.subr.mxu0 0.0
  %1363 = vmatpush1.msra.mxu0 0.0
  %1364 = vmatprep.subr.mxu0 0.0
  %1365 = vmatpush1.msra.mxu0 0.0
  %1366 = vmatprep.subr.mxu0 0.0
  %1367 = vmatpush1.msra.mxu0 0.0
  %1368 = vmatprep.subr.mxu0 0.0
  %1369 = vmatpush1.msra.mxu0 0.0
  %1370 = vmatprep.subr.mxu0 0.0
  %1371 = vmatpush1.msra.mxu0 0.0
  %1372 = vmatprep.subr.mxu0 0.0
  %1373 = vmatpush1.msra.mxu0 0.0
  %1374 = vmatprep.subr.mxu0 0.0
  %1375 = vmatpush1.msra.mxu0 0.0
  %1376 = vmatprep.subr.mxu0 0.0
  %1377 = vmatpush1.msra.mxu0 0.0
  %1378 = vmatprep.subr.mxu0 0.0
  %1379 = vmatpush1.msra.mxu0 0.0
  %1380 = vmatprep.subr.mxu0 0.0
  %1381 = vmatpush1.msra.mxu0 0.0
  %1382 = vmatprep.subr.mxu0 0.0
  %1383 = vmatpush1.msra.mxu0 0.0
  %1384 = vmatprep.subr.mxu0 0.0
  %1385 = vmatpush1.msra.mxu0 0.0
  %1386 = vmatprep.subr.mxu0 0.0
  %1387 = vmatpush1.msra.mxu0 0.0
  %1388 = vmatprep.subr.mxu0 0.0
  %1389 = vmatpush1.msra.mxu0 0.0
  %1390 = vmatprep.subr.mxu0 0.0
  %1391 = vmatpush1.msra.mxu0 0.0
  %1392 = vmatprep.subr.mxu0 0.0
  %1393 = vmatpush1.msra.mxu0 0.0
  %1394 = vmatprep.subr.mxu0 0.0
  %1395 = vmatpush1.msra.mxu0 0.0
  %1396 = vmatprep.subr.mxu0 0.0
  %1397 = vmatpush1.msra.mxu0 0.0
  %1398 = vmatprep.subr.mxu0 0.0
  %1399 = vmatpush1.msra.mxu0 0.0
  %1400 = vmatprep.subr.mxu0 0.0
  %1401 = vmatpush1.msra.mxu0 0.0
  %1402 = vmatprep.subr.mxu0 0.0
  %1403 = vmatpush1.msra.mxu0 0.0
  %1404 = vmatprep.subr.mxu0 0.0
  %1405 = vmatpush1.msra.mxu0 0.0
  %1406 = vmatprep.subr.mxu0 0.0
  %1407 = vmatpush1.msra.mxu0 0.0
  %1408 = vmatprep.subr.mxu0 0.0
  %1409 = vmatpush1.msra.mxu0 0.0
  %1410 = vmatprep.subr.mxu0 0.0
  %1411 = vmatpush1.msra.mxu0 0.0
  %1412 = vmatprep.subr.mxu0 0.0
  %1413 = vmatpush1.msra.mxu0 0.0
  %1414 = vmatprep.subr.mxu0 0.0
  %1415 = vmatpush1.msra.mxu0 0.0
  %1416 = vmatprep.mubr.f32.mxu0 0.0
  %1417 = vmatmul.mubr.f32.gmra.mrb[0].mxu0 %v1257
  %v1418 = vpop.f32.mrb[0].mxu0
  %v1419 = vadd.f32 0.0, %v1418
  %v1420 = vpop.f32.mrb[0].mxu0
  %1421 = vmatprep.mubr.f32.mxu0 0.0
  %1422 = vmatmul.mubr.f32.gmra.mrb[0].mxu0 %v1260
  %v1423 = vpop.f32.mrb[0].mxu0
  %v1424 = vadd.f32 0.0, %v1423
  %v1425 = vpop.f32.mrb[0].mxu0
  %1426 = vmatprep.mubr.f32.mxu0 0.0
  %1427 = vmatmul.mubr.f32.gmra.mrb[0].mxu0 %v1263
  %v1428 = vpop.f32.mrb[0].mxu0
  %v1429 = vadd.f32 0.0, %v1428
  %v1430 = vpop.f32.mrb[0].mxu0
  %1431 = vmatprep.mubr.f32.mxu0 0.0
  %1432 = vmatmul.mubr.f32.gmra.mrb[0].mxu0 %v1266
  %v1433 = vpop.f32.mrb[0].mxu0
  %v1434 = vadd.f32 0.0, %v1433
  %v1435 = vpop.f32.mrb[0].mxu0
  %1436 = vmatprep.mubr.f32.mxu0 0.0
  %1437 = vmatmul.mubr.f32.gmra.mrb[0].mxu0 %v1269
  %v1438 = vpop.f32.mrb[0].mxu0
  %v1439 = vadd.f32 0.0, %v1438
  %v1440 = vpop.f32.mrb[0].mxu0
  %1441 = vmatprep.mubr.f32.mxu0 0.0
  %1442 = vmatmul.mubr.f32.gmra.mrb[0].mxu0 %v1272
  %v1443 = vpop.f32.mrb[0].mxu0
  %v1444 = vadd.f32 0.0, %v1443
  %v1445 = vpop.f32.mrb[0].mxu0
  %1446 = vmatprep.mubr.f32.mxu0 0.0
  %1447 = vmatmul.mubr.f32.gmra.mrb[0].mxu0 %v1275
  %v1448 = vpop.f32.mrb[0].mxu0
  %v1449 = vadd.f32 0.0, %v1448
  %v1450 = vpop.f32.mrb[0].mxu0
  %1451 = vmatprep.mubr.f32.mxu0 0.0
  %1452 = vmatmul.mubr.f32.gmra.mrb[0].mxu0 %v1278
  %v1453 = vpop.f32.mrb[0].mxu0
  %v1454 = vadd.f32 0.0, %v1453
  %v1455 = vpop.f32.mrb[0].mxu0
  %1456 = vmatprep.mubr.f32.mxu0 0.0
  %1457 = vmatmul.mubr.f32.gmra.mrb[0].mxu0 %v1281
  %v1458 = vpop.f32.mrb[0].mxu0
  %v1459 = vadd.f32 0.0, %v1458
  %v1460 = vpop.f32.mrb[0].mxu0
  %1461 = vmatprep.mubr.f32.mxu0 0.0
  %1462 = vmatmul.mubr.f32.gmra.mrb[0].mxu0 %v1284
  %v1463 = vpop.f32.mrb[0].mxu0
  %v1464 = vadd.f32 0.0, %v1463
  %v1465 = vpop.f32.mrb[0].mxu0
  %1466 = vmatprep.mubr.f32.mxu0 0.0
  %1467 = vmatmul.mubr.f32.gmra.mrb[0].mxu0 %v1287
  %v1468 = vpop.f32.mrb[0].mxu0
  %v1469 = vadd.f32 0.0, %v1468
  %v1470 = vpop.f32.mrb[0].mxu0
  %1471 = vmatprep.mubr.f32.mxu0 0.0
  %1472 = vmatmul.mubr.f32.gmra.mrb[0].mxu0 %v1290
  %v1473 = vpop.f32.mrb[0].mxu0
  %v1474 = vadd.f32 0.0, %v1473
  %v1475 = vpop.f32.mrb[0].mxu0
  %1476 = vmatprep.mubr.f32.mxu0 0.0
  %1477 = vmatmul.mubr.f32.gmra.mrb[0].mxu0 %v1293
  %v1478 = vpop.f32.mrb[0].mxu0
  %v1479 = vadd.f32 0.0, %v1478
  %v1480 = vpop.f32.mrb[0].mxu0
  %1481 = vmatprep.mubr.f32.mxu0 0.0
  %1482 = vmatmul.mubr.f32.gmra.mrb[0].mxu0 %v1296
  %v1483 = vpop.f32.mrb[0].mxu0
  %v1484 = vadd.f32 0.0, %v1483
  %v1485 = vpop.f32.mrb[0].mxu0
  %1486 = vmatprep.mubr.f32.mxu0 0.0
  %1487 = vmatmul.mubr.f32.gmra.mrb[0].mxu0 %v1299
  %v1488 = vpop.f32.mrb[0].mxu0
  %v1489 = vadd.f32 0.0, %v1488
  %v1490 = vpop.f32.mrb[0].mxu0
  %1491 = vmatprep.mubr.f32.mxu0 0.0
  %1492 = vmatmul.mubr.f32.gmra.mrb[0].mxu0 %v1302
  %v1493 = vpop.f32.mrb[0].mxu0
  %v1494 = vadd.f32 0.0, %v1493
  %v1495 = vpop.f32.mrb[0].mxu0
  %1496 = vmatprep.mubr.f32.mxu0 0.0
  %1497 = vmatmul.mubr.f32.gmra.mrb[0].mxu0 %v1305
  %v1498 = vpop.f32.mrb[0].mxu0
  %v1499 = vadd.f32 0.0, %v1498
  %v1500 = vpop.f32.mrb[0].mxu0
  %1501 = vmatprep.mubr.f32.mxu0 0.0
  %1502 = vmatmul.mubr.f32.gmra.mrb[0].mxu0 %v1308
  %v1503 = vpop.f32.mrb[0].mxu0
  %v1504 = vadd.f32 0.0, %v1503
  %v1505 = vpop.f32.mrb[0].mxu0
  %1506 = vmatprep.mubr.f32.mxu0 0.0
  %1507 = vmatmul.mubr.f32.gmra.mrb[0].mxu0 %v1311
  %v1508 = vpop.f32.mrb[0].mxu0
  %v1509 = vadd.f32 0.0, %v1508
  %v1510 = vpop.f32.mrb[0].mxu0
  %1511 = vmatprep.mubr.f32.mxu0 0.0
  %1512 = vmatmul.mubr.f32.gmra.mrb[0].mxu0 %v1314
  %v1513 = vpop.f32.mrb[0].mxu0
  %v1514 = vadd.f32 0.0, %v1513
  %v1515 = vpop.f32.mrb[0].mxu0
  %1516 = vmatprep.mubr.f32.mxu0 0.0
  %1517 = vmatmul.mubr.f32.gmra.mrb[0].mxu0 %v1317
  %v1518 = vpop.f32.mrb[0].mxu0
  %v1519 = vadd.f32 0.0, %v1518
  %v1520 = vpop.f32.mrb[0].mxu0
  %1521 = vmatprep.mubr.f32.mxu0 0.0
  %1522 = vmatmul.mubr.f32.gmra.mrb[0].mxu0 %v1320
  %v1523 = vpop.f32.mrb[0].mxu0
  %v1524 = vadd.f32 0.0, %v1523
  %v1525 = vpop.f32.mrb[0].mxu0
  %1526 = vmatprep.mubr.f32.mxu0 0.0
  %1527 = vmatmul.mubr.f32.gmra.mrb[0].mxu0 %v1323
  %v1528 = vpop.f32.mrb[0].mxu0
  %v1529 = vadd.f32 0.0, %v1528
  %v1530 = vpop.f32.mrb[0].mxu0
  %1531 = vmatprep.mubr.f32.mxu0 0.0
  %1532 = vmatmul.mubr.f32.gmra.mrb[0].mxu0 %v1326
  %v1533 = vpop.f32.mrb[0].mxu0
  %v1534 = vadd.f32 0.0, %v1533
  %v1535 = vpop.f32.mrb[0].mxu0
  %1536 = vmatprep.mubr.f32.mxu0 0.0
  %1537 = vmatmul.mubr.f32.gmra.mrb[0].mxu0 %v1329
  %v1538 = vpop.f32.mrb[0].mxu0
  %v1539 = vadd.f32 0.0, %v1538
  %v1540 = vpop.f32.mrb[0].mxu0
  %1541 = vmatprep.mubr.f32.mxu0 0.0
  %1542 = vmatmul.mubr.f32.gmra.mrb[0].mxu0 %v1332
  %v1543 = vpop.f32.mrb[0].mxu0
  %v1544 = vadd.f32 0.0, %v1543
  %v1545 = vpop.f32.mrb[0].mxu0
  %1546 = vmatprep.mubr.f32.mxu0 0.0
  %1547 = vmatmul.mubr.f32.gmra.mrb[0].mxu0 %v1335
  %v1548 = vpop.f32.mrb[0].mxu0
  %v1549 = vadd.f32 0.0, %v1548
  %v1550 = vpop.f32.mrb[0].mxu0
  %1551 = vmatprep.mubr.f32.mxu0 0.0
  %1552 = vmatmul.mubr.f32.gmra.mrb[0].mxu0 %v1338
  %v1553 = vpop.f32.mrb[0].mxu0
  %v1554 = vadd.f32 0.0, %v1553
  %v1555 = vpop.f32.mrb[0].mxu0
  %1556 = vmatprep.mubr.f32.mxu0 0.0
  %1557 = vmatmul.mubr.f32.gmra.mrb[0].mxu0 %v1341
  %v1558 = vpop.f32.mrb[0].mxu0
  %v1559 = vadd.f32 0.0, %v1558
  %v1560 = vpop.f32.mrb[0].mxu0
  %1561 = vmatprep.mubr.f32.mxu0 0.0
  %1562 = vmatmul.mubr.f32.gmra.mrb[0].mxu0 %v1344
  %v1563 = vpop.f32.mrb[0].mxu0
  %v1564 = vadd.f32 0.0, %v1563
  %v1565 = vpop.f32.mrb[0].mxu0
  %1566 = vmatprep.mubr.f32.mxu0 0.0
  %1567 = vmatmul.mubr.f32.gmra.mrb[0].mxu0 %v1347
  %v1568 = vpop.f32.mrb[0].mxu0
  %v1569 = vadd.f32 0.0, %v1568
  %v1570 = vpop.f32.mrb[0].mxu0
  %1571 = vmatprep.mubr.f32.mxu0 0.0
  %1572 = vmatmul.mubr.f32.gmra.mrb[0].mxu0 %v1350
  %v1573 = vpop.f32.mrb[0].mxu0
  %v1574 = vadd.f32 0.0, %v1573
  %v1575 = vpop.f32.mrb[0].mxu0
  %1576 = vdwg.mxu0
  %v1577 = vld [vmem:[%s2 + $0x40] sm:$0xff]
  %v1578 = vld [vmem:[%s2 + $0x48] sm:$0xff]
  %v1579 = vld [vmem:[%s2 + $0x50] sm:$0xff]
  %v1580 = vld [vmem:[%s2 + $0x58] sm:$0xff]
  %1581 = vmatprep.subr.mxu0 0.0
  %1582 = vmatpush1.msra.mxu0 %v1577
  %1583 = vmatprep.subr.mxu0 0.0
  %1584 = vmatpush1.msra.mxu0 %v1578
  %1585 = vmatprep.subr.mxu0 0.0
  %1586 = vmatpush1.msra.mxu0 %v1579
  %1587 = vmatprep.subr.mxu0 0.0
  %1588 = vmatpush1.msra.mxu0 %v1580
  %1589 = vmatprep.subr.mxu0 0.0
  %1590 = vmatpush1.msra.mxu0 0.0
  %1591 = vmatprep.subr.mxu0 0.0
  %1592 = vmatpush1.msra.mxu0 0.0
  %1593 = vmatprep.subr.mxu0 0.0
  %1594 = vmatpush1.msra.mxu0 0.0
  %1595 = vmatprep.subr.mxu0 0.0
  %1596 = vmatpush1.msra.mxu0 0.0
  %1597 = vmatprep.subr.mxu0 0.0
  %1598 = vmatpush1.msra.mxu0 0.0
  %1599 = vmatprep.subr.mxu0 0.0
  %1600 = vmatpush1.msra.mxu0 0.0
  %1601 = vmatprep.subr.mxu0 0.0
  %1602 = vmatpush1.msra.mxu0 0.0
  %1603 = vmatprep.subr.mxu0 0.0
  %1604 = vmatpush1.msra.mxu0 0.0
  %1605 = vmatprep.subr.mxu0 0.0
  %1606 = vmatpush1.msra.mxu0 0.0
  %1607 = vmatprep.subr.mxu0 0.0
  %1608 = vmatpush1.msra.mxu0 0.0
  %1609 = vmatprep.subr.mxu0 0.0
  %1610 = vmatpush1.msra.mxu0 0.0
  %1611 = vmatprep.subr.mxu0 0.0
  %1612 = vmatpush1.msra.mxu0 0.0
  %1613 = vmatprep.subr.mxu0 0.0
  %1614 = vmatpush1.msra.mxu0 0.0
  %1615 = vmatprep.subr.mxu0 0.0
  %1616 = vmatpush1.msra.mxu0 0.0
  %1617 = vmatprep.subr.mxu0 0.0
  %1618 = vmatpush1.msra.mxu0 0.0
  %1619 = vmatprep.subr.mxu0 0.0
  %1620 = vmatpush1.msra.mxu0 0.0
  %1621 = vmatprep.subr.mxu0 0.0
  %1622 = vmatpush1.msra.mxu0 0.0
  %1623 = vmatprep.subr.mxu0 0.0
  %1624 = vmatpush1.msra.mxu0 0.0
  %1625 = vmatprep.subr.mxu0 0.0
  %1626 = vmatpush1.msra.mxu0 0.0
  %1627 = vmatprep.subr.mxu0 0.0
  %1628 = vmatpush1.msra.mxu0 0.0
  %1629 = vmatprep.subr.mxu0 0.0
  %1630 = vmatpush1.msra.mxu0 0.0
  %1631 = vmatprep.subr.mxu0 0.0
  %1632 = vmatpush1.msra.mxu0 0.0
  %1633 = vmatprep.subr.mxu0 0.0
  %1634 = vmatpush1.msra.mxu0 0.0
  %1635 = vmatprep.subr.mxu0 0.0
  %1636 = vmatpush1.msra.mxu0 0.0
  %1637 = vmatprep.subr.mxu0 0.0
  %1638 = vmatpush1.msra.mxu0 0.0
  %1639 = vmatprep.subr.mxu0 0.0
  %1640 = vmatpush1.msra.mxu0 0.0
  %1641 = vmatprep.subr.mxu0 0.0
  %1642 = vmatpush1.msra.mxu0 0.0
  %1643 = vmatprep.subr.mxu0 0.0
  %1644 = vmatpush1.msra.mxu0 0.0
  %1645 = vmatprep.mubr.f32.mxu0 0.0
  %1646 = vmatmul.mubr.f32.gmra.mrb[0].mxu0 %v1257
  %v1647 = vpop.f32.mrb[0].mxu0
  %v1648 = vadd.f32 0.0, %v1647
  %v1649 = vpop.f32.mrb[0].mxu0
  %1650 = vmatprep.mubr.f32.mxu0 0.0
  %1651 = vmatmul.mubr.f32.gmra.mrb[0].mxu0 %v1260
  %v1652 = vpop.f32.mrb[0].mxu0
  %v1653 = vadd.f32 0.0, %v1652
  %v1654 = vpop.f32.mrb[0].mxu0
  %1655 = vmatprep.mubr.f32.mxu0 0.0
  %1656 = vmatmul.mubr.f32.gmra.mrb[0].mxu0 %v1263
  %v1657 = vpop.f32.mrb[0].mxu0
  %v1658 = vadd.f32 0.0, %v1657
  %v1659 = vpop.f32.mrb[0].mxu0
  %1660 = vmatprep.mubr.f32.mxu0 0.0
  %1661 = vmatmul.mubr.f32.gmra.mrb[0].mxu0 %v1266
  %v1662 = vpop.f32.mrb[0].mxu0
  %v1663 = vadd.f32 0.0, %v1662
  %v1664 = vpop.f32.mrb[0].mxu0
  %1665 = vmatprep.mubr.f32.mxu0 0.0
  %1666 = vmatmul.mubr.f32.gmra.mrb[0].mxu0 %v1269
  %v1667 = vpop.f32.mrb[0].mxu0
  %v1668 = vadd.f32 0.0, %v1667
  %v1669 = vpop.f32.mrb[0].mxu0
  %1670 = vmatprep.mubr.f32.mxu0 0.0
  %1671 = vmatmul.mubr.f32.gmra.mrb[0].mxu0 %v1272
  %v1672 = vpop.f32.mrb[0].mxu0
  %v1673 = vadd.f32 0.0, %v1672
  %v1674 = vpop.f32.mrb[0].mxu0
  %1675 = vmatprep.mubr.f32.mxu0 0.0
  %1676 = vmatmul.mubr.f32.gmra.mrb[0].mxu0 %v1275
  %v1677 = vpop.f32.mrb[0].mxu0
  %v1678 = vadd.f32 0.0, %v1677
  %v1679 = vpop.f32.mrb[0].mxu0
  %1680 = vmatprep.mubr.f32.mxu0 0.0
  %1681 = vmatmul.mubr.f32.gmra.mrb[0].mxu0 %v1278
  %v1682 = vpop.f32.mrb[0].mxu0
  %v1683 = vadd.f32 0.0, %v1682
  %v1684 = vpop.f32.mrb[0].mxu0
  %1685 = vmatprep.mubr.f32.mxu0 0.0
  %1686 = vmatmul.mubr.f32.gmra.mrb[0].mxu0 %v1281
  %v1687 = vpop.f32.mrb[0].mxu0
  %v1688 = vadd.f32 0.0, %v1687
  %v1689 = vpop.f32.mrb[0].mxu0
  %1690 = vmatprep.mubr.f32.mxu0 0.0
  %1691 = vmatmul.mubr.f32.gmra.mrb[0].mxu0 %v1284
  %v1692 = vpop.f32.mrb[0].mxu0
  %v1693 = vadd.f32 0.0, %v1692
  %v1694 = vpop.f32.mrb[0].mxu0
  %1695 = vmatprep.mubr.f32.mxu0 0.0
  %1696 = vmatmul.mubr.f32.gmra.mrb[0].mxu0 %v1287
  %v1697 = vpop.f32.mrb[0].mxu0
  %v1698 = vadd.f32 0.0, %v1697
  %v1699 = vpop.f32.mrb[0].mxu0
  %1700 = vmatprep.mubr.f32.mxu0 0.0
  %1701 = vmatmul.mubr.f32.gmra.mrb[0].mxu0 %v1290
  %v1702 = vpop.f32.mrb[0].mxu0
  %v1703 = vadd.f32 0.0, %v1702
  %v1704 = vpop.f32.mrb[0].mxu0
  %1705 = vmatprep.mubr.f32.mxu0 0.0
  %1706 = vmatmul.mubr.f32.gmra.mrb[0].mxu0 %v1293
  %v1707 = vpop.f32.mrb[0].mxu0
  %v1708 = vadd.f32 0.0, %v1707
  %v1709 = vpop.f32.mrb[0].mxu0
  %1710 = vmatprep.mubr.f32.mxu0 0.0
  %1711 = vmatmul.mubr.f32.gmra.mrb[0].mxu0 %v1296
  %v1712 = vpop.f32.mrb[0].mxu0
  %v1713 = vadd.f32 0.0, %v1712
  %v1714 = vpop.f32.mrb[0].mxu0
  %1715 = vmatprep.mubr.f32.mxu0 0.0
  %1716 = vmatmul.mubr.f32.gmra.mrb[0].mxu0 %v1299
  %v1717 = vpop.f32.mrb[0].mxu0
  %v1718 = vadd.f32 0.0, %v1717
  %v1719 = vpop.f32.mrb[0].mxu0
  %1720 = vmatprep.mubr.f32.mxu0 0.0
  %1721 = vmatmul.mubr.f32.gmra.mrb[0].mxu0 %v1302
  %v1722 = vpop.f32.mrb[0].mxu0
  %v1723 = vadd.f32 0.0, %v1722
  %v1724 = vpop.f32.mrb[0].mxu0
  %1725 = vmatprep.mubr.f32.mxu0 0.0
  %1726 = vmatmul.mubr.f32.gmra.mrb[0].mxu0 %v1305
  %v1727 = vpop.f32.mrb[0].mxu0
  %v1728 = vadd.f32 0.0, %v1727
  %v1729 = vpop.f32.mrb[0].mxu0
  %1730 = vmatprep.mubr.f32.mxu0 0.0
  %1731 = vmatmul.mubr.f32.gmra.mrb[0].mxu0 %v1308
  %v1732 = vpop.f32.mrb[0].mxu0
  %v1733 = vadd.f32 0.0, %v1732
  %v1734 = vpop.f32.mrb[0].mxu0
  %1735 = vmatprep.mubr.f32.mxu0 0.0
  %1736 = vmatmul.mubr.f32.gmra.mrb[0].mxu0 %v1311
  %v1737 = vpop.f32.mrb[0].mxu0
  %v1738 = vadd.f32 0.0, %v1737
  %v1739 = vpop.f32.mrb[0].mxu0
  %1740 = vmatprep.mubr.f32.mxu0 0.0
  %1741 = vmatmul.mubr.f32.gmra.mrb[0].mxu0 %v1314
  %v1742 = vpop.f32.mrb[0].mxu0
  %v1743 = vadd.f32 0.0, %v1742
  %v1744 = vpop.f32.mrb[0].mxu0
  %1745 = vmatprep.mubr.f32.mxu0 0.0
  %1746 = vmatmul.mubr.f32.gmra.mrb[0].mxu0 %v1317
  %v1747 = vpop.f32.mrb[0].mxu0
  %v1748 = vadd.f32 0.0, %v1747
  %v1749 = vpop.f32.mrb[0].mxu0
  %1750 = vmatprep.mubr.f32.mxu0 0.0
  %1751 = vmatmul.mubr.f32.gmra.mrb[0].mxu0 %v1320
  %v1752 = vpop.f32.mrb[0].mxu0
  %v1753 = vadd.f32 0.0, %v1752
  %v1754 = vpop.f32.mrb[0].mxu0
  %1755 = vmatprep.mubr.f32.mxu0 0.0
  %1756 = vmatmul.mubr.f32.gmra.mrb[0].mxu0 %v1323
  %v1757 = vpop.f32.mrb[0].mxu0
  %v1758 = vadd.f32 0.0, %v1757
  %v1759 = vpop.f32.mrb[0].mxu0
  %1760 = vmatprep.mubr.f32.mxu0 0.0
  %1761 = vmatmul.mubr.f32.gmra.mrb[0].mxu0 %v1326
  %v1762 = vpop.f32.mrb[0].mxu0
  %v1763 = vadd.f32 0.0, %v1762
  %v1764 = vpop.f32.mrb[0].mxu0
  %1765 = vmatprep.mubr.f32.mxu0 0.0
  %1766 = vmatmul.mubr.f32.gmra.mrb[0].mxu0 %v1329
  %v1767 = vpop.f32.mrb[0].mxu0
  %v1768 = vadd.f32 0.0, %v1767
  %v1769 = vpop.f32.mrb[0].mxu0
  %1770 = vmatprep.mubr.f32.mxu0 0.0
  %1771 = vmatmul.mubr.f32.gmra.mrb[0].mxu0 %v1332
  %v1772 = vpop.f32.mrb[0].mxu0
  %v1773 = vadd.f32 0.0, %v1772
  %v1774 = vpop.f32.mrb[0].mxu0
  %1775 = vmatprep.mubr.f32.mxu0 0.0
  %1776 = vmatmul.mubr.f32.gmra.mrb[0].mxu0 %v1335
  %v1777 = vpop.f32.mrb[0].mxu0
  %v1778 = vadd.f32 0.0, %v1777
  %v1779 = vpop.f32.mrb[0].mxu0
  %1780 = vmatprep.mubr.f32.mxu0 0.0
  %1781 = vmatmul.mubr.f32.gmra.mrb[0].mxu0 %v1338
  %v1782 = vpop.f32.mrb[0].mxu0
  %v1783 = vadd.f32 0.0, %v1782
  %v1784 = vpop.f32.mrb[0].mxu0
  %1785 = vmatprep.mubr.f32.mxu0 0.0
  %1786 = vmatmul.mubr.f32.gmra.mrb[0].mxu0 %v1341
  %v1787 = vpop.f32.mrb[0].mxu0
  %v1788 = vadd.f32 0.0, %v1787
  %v1789 = vpop.f32.mrb[0].mxu0
  %1790 = vmatprep.mubr.f32.mxu0 0.0
  %1791 = vmatmul.mubr.f32.gmra.mrb[0].mxu0 %v1344
  %v1792 = vpop.f32.mrb[0].mxu0
  %v1793 = vadd.f32 0.0, %v1792
  %v1794 = vpop.f32.mrb[0].mxu0
  %1795 = vmatprep.mubr.f32.mxu0 0.0
  %1796 = vmatmul.mubr.f32.gmra.mrb[0].mxu0 %v1347
  %v1797 = vpop.f32.mrb[0].mxu0
  %v1798 = vadd.f32 0.0, %v1797
  %v1799 = vpop.f32.mrb[0].mxu0
  %1800 = vmatprep.mubr.f32.mxu0 0.0
  %1801 = vmatmul.mubr.f32.gmra.mrb[0].mxu0 %v1350
  %v1802 = vpop.f32.mrb[0].mxu0
  %v1803 = vadd.f32 0.0, %v1802
  %v1804 = vpop.f32.mrb[0].mxu0
  %1805 = vdwg.mxu0
  %v1806 = vadd.f32 %v837, %v1419
  %v1807 = vadd.f32 %v842, %v1424
  %v1808 = vadd.f32 %v847, %v1429
  %v1809 = vadd.f32 %v852, %v1434
  %v1810 = vadd.f32 %v857, %v1439
  %v1811 = vadd.f32 %v862, %v1444
  %v1812 = vadd.f32 %v867, %v1449
  %v1813 = vadd.f32 %v872, %v1454
  %v1814 = vadd.f32 %v877, %v1459
  %v1815 = vadd.f32 %v882, %v1464
  %v1816 = vadd.f32 %v887, %v1469
  %v1817 = vadd.f32 %v892, %v1474
  %v1818 = vadd.f32 %v897, %v1479
  %v1819 = vadd.f32 %v902, %v1484
  %v1820 = vadd.f32 %v907, %v1489
  %v1821 = vadd.f32 %v912, %v1494
  %v1822 = vadd.f32 %v917, %v1499
  %v1823 = vadd.f32 %v922, %v1504
  %v1824 = vadd.f32 %v927, %v1509
  %v1825 = vadd.f32 %v932, %v1514
  %v1826 = vadd.f32 %v937, %v1519
  %v1827 = vadd.f32 %v942, %v1524
  %v1828 = vadd.f32 %v947, %v1529
  %v1829 = vadd.f32 %v952, %v1534
  %v1830 = vadd.f32 %v957, %v1539
  %v1831 = vadd.f32 %v962, %v1544
  %v1832 = vadd.f32 %v967, %v1549
  %v1833 = vadd.f32 %v972, %v1554
  %v1834 = vadd.f32 %v977, %v1559
  %v1835 = vadd.f32 %v982, %v1564
  %v1836 = vadd.f32 %v987, %v1569
  %v1837 = vadd.f32 %v992, %v1574
  %v1838 = vadd.f32 %v1062, %v1648
  %v1839 = vadd.f32 %v1067, %v1653
  %v1840 = vadd.f32 %v1072, %v1658
  %v1841 = vadd.f32 %v1077, %v1663
  %v1842 = vadd.f32 %v1082, %v1668
  %v1843 = vadd.f32 %v1087, %v1673
  %v1844 = vadd.f32 %v1092, %v1678
  %v1845 = vadd.f32 %v1097, %v1683
  %v1846 = vadd.f32 %v1102, %v1688
  %v1847 = vadd.f32 %v1107, %v1693
  %v1848 = vadd.f32 %v1112, %v1698
  %v1849 = vadd.f32 %v1117, %v1703
  %v1850 = vadd.f32 %v1122, %v1708
  %v1851 = vadd.f32 %v1127, %v1713
  %v1852 = vadd.f32 %v1132, %v1718
  %v1853 = vadd.f32 %v1137, %v1723
  %v1854 = vadd.f32 %v1142, %v1728
  %v1855 = vadd.f32 %v1147, %v1733
  %v1856 = vadd.f32 %v1152, %v1738
  %v1857 = vadd.f32 %v1157, %v1743
  %v1858 = vadd.f32 %v1162, %v1748
  %v1859 = vadd.f32 %v1167, %v1753
  %v1860 = vadd.f32 %v1172, %v1758
  %v1861 = vadd.f32 %v1177, %v1763
  %v1862 = vadd.f32 %v1182, %v1768
  %v1863 = vadd.f32 %v1187, %v1773
  %v1864 = vadd.f32 %v1192, %v1778
  %v1865 = vadd.f32 %v1197, %v1783
  %v1866 = vadd.f32 %v1202, %v1788
  %v1867 = vadd.f32 %v1207, %v1793
  %v1868 = vadd.f32 %v1212, %v1798
  %v1869 = vadd.f32 %v1217, %v1803
  %v1870 = vld [vmem:[%s0 + $0x3] sm:$0xff]
  %v1871 = vld [vmem:[%s0 + $0xb] sm:$0xff]
  %v1872 = vld [vmem:[%s0 + $0x13] sm:$0xff]
  %v1873 = vld [vmem:[%s0 + $0x1b] sm:$0xff]
  %v1874 = vld [vmem:[%s0 + $0x23] sm:$0xff]
  %v1875 = vld [vmem:[%s0 + $0x2b] sm:$0xff]
  %v1876 = vld [vmem:[%s0 + $0x33] sm:$0xff]
  %v1877 = vld [vmem:[%s0 + $0x3b] sm:$0xff]
  %v1878 = vld [vmem:[%s0 + $0x43] sm:$0xff]
  %v1879 = vld [vmem:[%s0 + $0x4b] sm:$0xff]
  %v1880 = vld [vmem:[%s0 + $0x53] sm:$0xff]
  %v1881 = vld [vmem:[%s0 + $0x5b] sm:$0xff]
  %v1882 = vld [vmem:[%s0 + $0x63] sm:$0xff]
  %v1883 = vld [vmem:[%s0 + $0x6b] sm:$0xff]
  %v1884 = vld [vmem:[%s0 + $0x73] sm:$0xff]
  %v1885 = vld [vmem:[%s0 + $0x7b] sm:$0xff]
  %v1886 = vld [vmem:[%s0 + $0x83] sm:$0xff]
  %v1887 = vld [vmem:[%s0 + $0x8b] sm:$0xff]
  %v1888 = vld [vmem:[%s0 + $0x93] sm:$0xff]
  %v1889 = vld [vmem:[%s0 + $0x9b] sm:$0xff]
  %v1890 = vld [vmem:[%s0 + $0xa3] sm:$0xff]
  %v1891 = vld [vmem:[%s0 + $0xab] sm:$0xff]
  %v1892 = vld [vmem:[%s0 + $0xb3] sm:$0xff]
  %v1893 = vld [vmem:[%s0 + $0xbb] sm:$0xff]
  %v1894 = vld [vmem:[%s0 + $0xc3] sm:$0xff]
  %v1895 = vld [vmem:[%s0 + $0xcb] sm:$0xff]
  %v1896 = vld [vmem:[%s0 + $0xd3] sm:$0xff]
  %v1897 = vld [vmem:[%s0 + $0xdb] sm:$0xff]
  %v1898 = vld [vmem:[%s0 + $0xe3] sm:$0xff]
  %v1899 = vld [vmem:[%s0 + $0xeb] sm:$0xff]
  %v1900 = vld [vmem:[%s0 + $0xf3] sm:$0xff]
  %v1901 = vld [vmem:[%s0 + $0xfb] sm:$0xf]
  %v1902 = vld [vmem:[%s1 + $0x60] sm:$0xff]
  %v1903 = vld [vmem:[%s1 + $0x68] sm:$0xff]
  %v1904 = vld [vmem:[%s1 + $0x70] sm:$0xff]
  %v1905 = vld [vmem:[%s1 + $0x78] sm:$0xff]
  %v1907 = vsel %vm123, %v1870, 0
  %v1910 = vsel %vm123, %v1871, 0
  %v1913 = vsel %vm123, %v1872, 0
  %v1916 = vsel %vm123, %v1873, 0
  %v1919 = vsel %vm123, %v1874, 0
  %v1922 = vsel %vm123, %v1875, 0
  %v1925 = vsel %vm123, %v1876, 0
  %v1928 = vsel %vm123, %v1877, 0
  %v1931 = vsel %vm123, %v1878, 0
  %v1934 = vsel %vm123, %v1879, 0
  %v1937 = vsel %vm123, %v1880, 0
  %v1940 = vsel %vm123, %v1881, 0
  %v1943 = vsel %vm123, %v1882, 0
  %v1946 = vsel %vm123, %v1883, 0
  %v1949 = vsel %vm123, %v1884, 0
  %v1952 = vsel %vm123, %v1885, 0
  %v1955 = vsel %vm123, %v1886, 0
  %v1958 = vsel %vm123, %v1887, 0
  %v1961 = vsel %vm123, %v1888, 0
  %v1964 = vsel %vm123, %v1889, 0
  %v1967 = vsel %vm123, %v1890, 0
  %v1970 = vsel %vm123, %v1891, 0
  %v1973 = vsel %vm123, %v1892, 0
  %v1976 = vsel %vm123, %v1893, 0
  %v1979 = vsel %vm123, %v1894, 0
  %v1982 = vsel %vm123, %v1895, 0
  %v1985 = vsel %vm123, %v1896, 0
  %v1988 = vsel %vm123, %v1897, 0
  %v1991 = vsel %vm123, %v1898, 0
  %v1994 = vsel %vm123, %v1899, 0
  %v1997 = vsel %vm123, %v1900, 0
  %v2000 = vsel %vm123, %v1901, 0
  %2002 = vmatprep.subr.mxu0 0.0
  %2003 = vmatpush1.msra.mxu0 %v1902
  %2004 = vmatprep.subr.mxu0 0.0
  %2005 = vmatpush1.msra.mxu0 %v1903
  %2006 = vmatprep.subr.mxu0 0.0
  %2007 = vmatpush1.msra.mxu0 %v1904
  %2008 = vmatprep.subr.mxu0 0.0
  %2009 = vmatpush1.msra.mxu0 %v1905
  %2010 = vmatprep.subr.mxu0 0.0
  %2011 = vmatpush1.msra.mxu0 0.0
  %2012 = vmatprep.subr.mxu0 0.0
  %2013 = vmatpush1.msra.mxu0 0.0
  %2014 = vmatprep.subr.mxu0 0.0
  %2015 = vmatpush1.msra.mxu0 0.0
  %2016 = vmatprep.subr.mxu0 0.0
  %2017 = vmatpush1.msra.mxu0 0.0
  %2018 = vmatprep.subr.mxu0 0.0
  %2019 = vmatpush1.msra.mxu0 0.0
  %2020 = vmatprep.subr.mxu0 0.0
  %2021 = vmatpush1.msra.mxu0 0.0
  %2022 = vmatprep.subr.mxu0 0.0
  %2023 = vmatpush1.msra.mxu0 0.0
  %2024 = vmatprep.subr.mxu0 0.0
  %2025 = vmatpush1.msra.mxu0 0.0
  %2026 = vmatprep.subr.mxu0 0.0
  %2027 = vmatpush1.msra.mxu0 0.0
  %2028 = vmatprep.subr.mxu0 0.0
  %2029 = vmatpush1.msra.mxu0 0.0
  %2030 = vmatprep.subr.mxu0 0.0
  %2031 = vmatpush1.msra.mxu0 0.0
  %2032 = vmatprep.subr.mxu0 0.0
  %2033 = vmatpush1.msra.mxu0 0.0
  %2034 = vmatprep.subr.mxu0 0.0
  %2035 = vmatpush1.msra.mxu0 0.0
  %2036 = vmatprep.subr.mxu0 0.0
  %2037 = vmatpush1.msra.mxu0 0.0
  %2038 = vmatprep.subr.mxu0 0.0
  %2039 = vmatpush1.msra.mxu0 0.0
  %2040 = vmatprep.subr.mxu0 0.0
  %2041 = vmatpush1.msra.mxu0 0.0
  %2042 = vmatprep.subr.mxu0 0.0
  %2043 = vmatpush1.msra.mxu0 0.0
  %2044 = vmatprep.subr.mxu0 0.0
  %2045 = vmatpush1.msra.mxu0 0.0
  %2046 = vmatprep.subr.mxu0 0.0
  %2047 = vmatpush1.msra.mxu0 0.0
  %2048 = vmatprep.subr.mxu0 0.0
  %2049 = vmatpush1.msra.mxu0 0.0
  %2050 = vmatprep.subr.mxu0 0.0
  %2051 = vmatpush1.msra.mxu0 0.0
  %2052 = vmatprep.subr.mxu0 0.0
  %2053 = vmatpush1.msra.mxu0 0.0
  %2054 = vmatprep.subr.mxu0 0.0
  %2055 = vmatpush1.msra.mxu0 0.0
  %2056 = vmatprep.subr.mxu0 0.0
  %2057 = vmatpush1.msra.mxu0 0.0
  %2058 = vmatprep.subr.mxu0 0.0
  %2059 = vmatpush1.msra.mxu0 0.0
  %2060 = vmatprep.subr.mxu0 0.0
  %2061 = vmatpush1.msra.mxu0 0.0
  %2062 = vmatprep.subr.mxu0 0.0
  %2063 = vmatpush1.msra.mxu0 0.0
  %2064 = vmatprep.subr.mxu0 0.0
  %2065 = vmatpush1.msra.mxu0 0.0
  %2066 = vmatprep.mubr.f32.mxu0 0.0
  %2067 = vmatmul.mubr.f32.gmra.mrb[0].mxu0 %v1907
  %v2068 = vpop.f32.mrb[0].mxu0
  %v2069 = vadd.f32 0.0, %v2068
  %v2070 = vpop.f32.mrb[0].mxu0
  %2071 = vmatprep.mubr.f32.mxu0 0.0
  %2072 = vmatmul.mubr.f32.gmra.mrb[0].mxu0 %v1910
  %v2073 = vpop.f32.mrb[0].mxu0
  %v2074 = vadd.f32 0.0, %v2073
  %v2075 = vpop.f32.mrb[0].mxu0
  %2076 = vmatprep.mubr.f32.mxu0 0.0
  %2077 = vmatmul.mubr.f32.gmra.mrb[0].mxu0 %v1913
  %v2078 = vpop.f32.mrb[0].mxu0
  %v2079 = vadd.f32 0.0, %v2078
  %v2080 = vpop.f32.mrb[0].mxu0
  %2081 = vmatprep.mubr.f32.mxu0 0.0
  %2082 = vmatmul.mubr.f32.gmra.mrb[0].mxu0 %v1916
  %v2083 = vpop.f32.mrb[0].mxu0
  %v2084 = vadd.f32 0.0, %v2083
  %v2085 = vpop.f32.mrb[0].mxu0
  %2086 = vmatprep.mubr.f32.mxu0 0.0
  %2087 = vmatmul.mubr.f32.gmra.mrb[0].mxu0 %v1919
  %v2088 = vpop.f32.mrb[0].mxu0
  %v2089 = vadd.f32 0.0, %v2088
  %v2090 = vpop.f32.mrb[0].mxu0
  %2091 = vmatprep.mubr.f32.mxu0 0.0
  %2092 = vmatmul.mubr.f32.gmra.mrb[0].mxu0 %v1922
  %v2093 = vpop.f32.mrb[0].mxu0
  %v2094 = vadd.f32 0.0, %v2093
  %v2095 = vpop.f32.mrb[0].mxu0
  %2096 = vmatprep.mubr.f32.mxu0 0.0
  %2097 = vmatmul.mubr.f32.gmra.mrb[0].mxu0 %v1925
  %v2098 = vpop.f32.mrb[0].mxu0
  %v2099 = vadd.f32 0.0, %v2098
  %v2100 = vpop.f32.mrb[0].mxu0
  %2101 = vmatprep.mubr.f32.mxu0 0.0
  %2102 = vmatmul.mubr.f32.gmra.mrb[0].mxu0 %v1928
  %v2103 = vpop.f32.mrb[0].mxu0
  %v2104 = vadd.f32 0.0, %v2103
  %v2105 = vpop.f32.mrb[0].mxu0
  %2106 = vmatprep.mubr.f32.mxu0 0.0
  %2107 = vmatmul.mubr.f32.gmra.mrb[0].mxu0 %v1931
  %v2108 = vpop.f32.mrb[0].mxu0
  %v2109 = vadd.f32 0.0, %v2108
  %v2110 = vpop.f32.mrb[0].mxu0
  %2111 = vmatprep.mubr.f32.mxu0 0.0
  %2112 = vmatmul.mubr.f32.gmra.mrb[0].mxu0 %v1934
  %v2113 = vpop.f32.mrb[0].mxu0
  %v2114 = vadd.f32 0.0, %v2113
  %v2115 = vpop.f32.mrb[0].mxu0
  %2116 = vmatprep.mubr.f32.mxu0 0.0
  %2117 = vmatmul.mubr.f32.gmra.mrb[0].mxu0 %v1937
  %v2118 = vpop.f32.mrb[0].mxu0
  %v2119 = vadd.f32 0.0, %v2118
  %v2120 = vpop.f32.mrb[0].mxu0
  %2121 = vmatprep.mubr.f32.mxu0 0.0
  %2122 = vmatmul.mubr.f32.gmra.mrb[0].mxu0 %v1940
  %v2123 = vpop.f32.mrb[0].mxu0
  %v2124 = vadd.f32 0.0, %v2123
  %v2125 = vpop.f32.mrb[0].mxu0
  %2126 = vmatprep.mubr.f32.mxu0 0.0
  %2127 = vmatmul.mubr.f32.gmra.mrb[0].mxu0 %v1943
  %v2128 = vpop.f32.mrb[0].mxu0
  %v2129 = vadd.f32 0.0, %v2128
  %v2130 = vpop.f32.mrb[0].mxu0
  %2131 = vmatprep.mubr.f32.mxu0 0.0
  %2132 = vmatmul.mubr.f32.gmra.mrb[0].mxu0 %v1946
  %v2133 = vpop.f32.mrb[0].mxu0
  %v2134 = vadd.f32 0.0, %v2133
  %v2135 = vpop.f32.mrb[0].mxu0
  %2136 = vmatprep.mubr.f32.mxu0 0.0
  %2137 = vmatmul.mubr.f32.gmra.mrb[0].mxu0 %v1949
  %v2138 = vpop.f32.mrb[0].mxu0
  %v2139 = vadd.f32 0.0, %v2138
  %v2140 = vpop.f32.mrb[0].mxu0
  %2141 = vmatprep.mubr.f32.mxu0 0.0
  %2142 = vmatmul.mubr.f32.gmra.mrb[0].mxu0 %v1952
  %v2143 = vpop.f32.mrb[0].mxu0
  %v2144 = vadd.f32 0.0, %v2143
  %v2145 = vpop.f32.mrb[0].mxu0
  %2146 = vmatprep.mubr.f32.mxu0 0.0
  %2147 = vmatmul.mubr.f32.gmra.mrb[0].mxu0 %v1955
  %v2148 = vpop.f32.mrb[0].mxu0
  %v2149 = vadd.f32 0.0, %v2148
  %v2150 = vpop.f32.mrb[0].mxu0
  %2151 = vmatprep.mubr.f32.mxu0 0.0
  %2152 = vmatmul.mubr.f32.gmra.mrb[0].mxu0 %v1958
  %v2153 = vpop.f32.mrb[0].mxu0
  %v2154 = vadd.f32 0.0, %v2153
  %v2155 = vpop.f32.mrb[0].mxu0
  %2156 = vmatprep.mubr.f32.mxu0 0.0
  %2157 = vmatmul.mubr.f32.gmra.mrb[0].mxu0 %v1961
  %v2158 = vpop.f32.mrb[0].mxu0
  %v2159 = vadd.f32 0.0, %v2158
  %v2160 = vpop.f32.mrb[0].mxu0
  %2161 = vmatprep.mubr.f32.mxu0 0.0
  %2162 = vmatmul.mubr.f32.gmra.mrb[0].mxu0 %v1964
  %v2163 = vpop.f32.mrb[0].mxu0
  %v2164 = vadd.f32 0.0, %v2163
  %v2165 = vpop.f32.mrb[0].mxu0
  %2166 = vmatprep.mubr.f32.mxu0 0.0
  %2167 = vmatmul.mubr.f32.gmra.mrb[0].mxu0 %v1967
  %v2168 = vpop.f32.mrb[0].mxu0
  %v2169 = vadd.f32 0.0, %v2168
  %v2170 = vpop.f32.mrb[0].mxu0
  %2171 = vmatprep.mubr.f32.mxu0 0.0
  %2172 = vmatmul.mubr.f32.gmra.mrb[0].mxu0 %v1970
  %v2173 = vpop.f32.mrb[0].mxu0
  %v2174 = vadd.f32 0.0, %v2173
  %v2175 = vpop.f32.mrb[0].mxu0
  %2176 = vmatprep.mubr.f32.mxu0 0.0
  %2177 = vmatmul.mubr.f32.gmra.mrb[0].mxu0 %v1973
  %v2178 = vpop.f32.mrb[0].mxu0
  %v2179 = vadd.f32 0.0, %v2178
  %v2180 = vpop.f32.mrb[0].mxu0
  %2181 = vmatprep.mubr.f32.mxu0 0.0
  %2182 = vmatmul.mubr.f32.gmra.mrb[0].mxu0 %v1976
  %v2183 = vpop.f32.mrb[0].mxu0
  %v2184 = vadd.f32 0.0, %v2183
  %v2185 = vpop.f32.mrb[0].mxu0
  %2186 = vmatprep.mubr.f32.mxu0 0.0
  %2187 = vmatmul.mubr.f32.gmra.mrb[0].mxu0 %v1979
  %v2188 = vpop.f32.mrb[0].mxu0
  %v2189 = vadd.f32 0.0, %v2188
  %v2190 = vpop.f32.mrb[0].mxu0
  %2191 = vmatprep.mubr.f32.mxu0 0.0
  %2192 = vmatmul.mubr.f32.gmra.mrb[0].mxu0 %v1982
  %v2193 = vpop.f32.mrb[0].mxu0
  %v2194 = vadd.f32 0.0, %v2193
  %v2195 = vpop.f32.mrb[0].mxu0
  %2196 = vmatprep.mubr.f32.mxu0 0.0
  %2197 = vmatmul.mubr.f32.gmra.mrb[0].mxu0 %v1985
  %v2198 = vpop.f32.mrb[0].mxu0
  %v2199 = vadd.f32 0.0, %v2198
  %v2200 = vpop.f32.mrb[0].mxu0
  %2201 = vmatprep.mubr.f32.mxu0 0.0
  %2202 = vmatmul.mubr.f32.gmra.mrb[0].mxu0 %v1988
  %v2203 = vpop.f32.mrb[0].mxu0
  %v2204 = vadd.f32 0.0, %v2203
  %v2205 = vpop.f32.mrb[0].mxu0
  %2206 = vmatprep.mubr.f32.mxu0 0.0
  %2207 = vmatmul.mubr.f32.gmra.mrb[0].mxu0 %v1991
  %v2208 = vpop.f32.mrb[0].mxu0
  %v2209 = vadd.f32 0.0, %v2208
  %v2210 = vpop.f32.mrb[0].mxu0
  %2211 = vmatprep.mubr.f32.mxu0 0.0
  %2212 = vmatmul.mubr.f32.gmra.mrb[0].mxu0 %v1994
  %v2213 = vpop.f32.mrb[0].mxu0
  %v2214 = vadd.f32 0.0, %v2213
  %v2215 = vpop.f32.mrb[0].mxu0
  %2216 = vmatprep.mubr.f32.mxu0 0.0
  %2217 = vmatmul.mubr.f32.gmra.mrb[0].mxu0 %v1997
  %v2218 = vpop.f32.mrb[0].mxu0
  %v2219 = vadd.f32 0.0, %v2218
  %v2220 = vpop.f32.mrb[0].mxu0
  %2221 = vmatprep.mubr.f32.mxu0 0.0
  %2222 = vmatmul.mubr.f32.gmra.mrb[0].mxu0 %v2000
  %v2223 = vpop.f32.mrb[0].mxu0
  %v2224 = vadd.f32 0.0, %v2223
  %v2225 = vpop.f32.mrb[0].mxu0
  %2226 = vdwg.mxu0
  %v2227 = vld [vmem:[%s2 + $0x60] sm:$0xff]
  %v2228 = vld [vmem:[%s2 + $0x68] sm:$0xff]
  %v2229 = vld [vmem:[%s2 + $0x70] sm:$0xff]
  %v2230 = vld [vmem:[%s2 + $0x78] sm:$0xff]
  %2231 = vmatprep.subr.mxu0 0.0
  %2232 = vmatpush1.msra.mxu0 %v2227
  %2233 = vmatprep.subr.mxu0 0.0
  %2234 = vmatpush1.msra.mxu0 %v2228
  %2235 = vmatprep.subr.mxu0 0.0
  %2236 = vmatpush1.msra.mxu0 %v2229
  %2237 = vmatprep.subr.mxu0 0.0
  %2238 = vmatpush1.msra.mxu0 %v2230
  %2239 = vmatprep.subr.mxu0 0.0
  %2240 = vmatpush1.msra.mxu0 0.0
  %2241 = vmatprep.subr.mxu0 0.0
  %2242 = vmatpush1.msra.mxu0 0.0
  %2243 = vmatprep.subr.mxu0 0.0
  %2244 = vmatpush1.msra.mxu0 0.0
  %2245 = vmatprep.subr.mxu0 0.0
  %2246 = vmatpush1.msra.mxu0 0.0
  %2247 = vmatprep.subr.mxu0 0.0
  %2248 = vmatpush1.msra.mxu0 0.0
  %2249 = vmatprep.subr.mxu0 0.0
  %2250 = vmatpush1.msra.mxu0 0.0
  %2251 = vmatprep.subr.mxu0 0.0
  %2252 = vmatpush1.msra.mxu0 0.0
  %2253 = vmatprep.subr.mxu0 0.0
  %2254 = vmatpush1.msra.mxu0 0.0
  %2255 = vmatprep.subr.mxu0 0.0
  %2256 = vmatpush1.msra.mxu0 0.0
  %2257 = vmatprep.subr.mxu0 0.0
  %2258 = vmatpush1.msra.mxu0 0.0
  %2259 = vmatprep.subr.mxu0 0.0
  %2260 = vmatpush1.msra.mxu0 0.0
  %2261 = vmatprep.subr.mxu0 0.0
  %2262 = vmatpush1.msra.mxu0 0.0
  %2263 = vmatprep.subr.mxu0 0.0
  %2264 = vmatpush1.msra.mxu0 0.0
  %2265 = vmatprep.subr.mxu0 0.0
  %2266 = vmatpush1.msra.mxu0 0.0
  %2267 = vmatprep.subr.mxu0 0.0
  %2268 = vmatpush1.msra.mxu0 0.0
  %2269 = vmatprep.subr.mxu0 0.0
  %2270 = vmatpush1.msra.mxu0 0.0
  %2271 = vmatprep.subr.mxu0 0.0
  %2272 = vmatpush1.msra.mxu0 0.0
  %2273 = vmatprep.subr.mxu0 0.0
  %2274 = vmatpush1.msra.mxu0 0.0
  %2275 = vmatprep.subr.mxu0 0.0
  %2276 = vmatpush1.msra.mxu0 0.0
  %2277 = vmatprep.subr.mxu0 0.0
  %2278 = vmatpush1.msra.mxu0 0.0
  %2279 = vmatprep.subr.mxu0 0.0
  %2280 = vmatpush1.msra.mxu0 0.0
  %2281 = vmatprep.subr.mxu0 0.0
  %2282 = vmatpush1.msra.mxu0 0.0
  %2283 = vmatprep.subr.mxu0 0.0
  %2284 = vmatpush1.msra.mxu0 0.0
  %2285 = vmatprep.subr.mxu0 0.0
  %2286 = vmatpush1.msra.mxu0 0.0
  %2287 = vmatprep.subr.mxu0 0.0
  %2288 = vmatpush1.msra.mxu0 0.0
  %2289 = vmatprep.subr.mxu0 0.0
  %2290 = vmatpush1.msra.mxu0 0.0
  %2291 = vmatprep.subr.mxu0 0.0
  %2292 = vmatpush1.msra.mxu0 0.0
  %2293 = vmatprep.subr.mxu0 0.0
  %2294 = vmatpush1.msra.mxu0 0.0
  %2295 = vmatprep.mubr.f32.mxu0 0.0
  %2296 = vmatmul.mubr.f32.gmra.mrb[0].mxu0 %v1907
  %v2297 = vpop.f32.mrb[0].mxu0
  %v2298 = vadd.f32 0.0, %v2297
  %v2299 = vpop.f32.mrb[0].mxu0
  %2300 = vmatprep.mubr.f32.mxu0 0.0
  %2301 = vmatmul.mubr.f32.gmra.mrb[0].mxu0 %v1910
  %v2302 = vpop.f32.mrb[0].mxu0
  %v2303 = vadd.f32 0.0, %v2302
  %v2304 = vpop.f32.mrb[0].mxu0
  %2305 = vmatprep.mubr.f32.mxu0 0.0
  %2306 = vmatmul.mubr.f32.gmra.mrb[0].mxu0 %v1913
  %v2307 = vpop.f32.mrb[0].mxu0
  %v2308 = vadd.f32 0.0, %v2307
  %v2309 = vpop.f32.mrb[0].mxu0
  %2310 = vmatprep.mubr.f32.mxu0 0.0
  %2311 = vmatmul.mubr.f32.gmra.mrb[0].mxu0 %v1916
  %v2312 = vpop.f32.mrb[0].mxu0
  %v2313 = vadd.f32 0.0, %v2312
  %v2314 = vpop.f32.mrb[0].mxu0
  %2315 = vmatprep.mubr.f32.mxu0 0.0
  %2316 = vmatmul.mubr.f32.gmra.mrb[0].mxu0 %v1919
  %v2317 = vpop.f32.mrb[0].mxu0
  %v2318 = vadd.f32 0.0, %v2317
  %v2319 = vpop.f32.mrb[0].mxu0
  %2320 = vmatprep.mubr.f32.mxu0 0.0
  %2321 = vmatmul.mubr.f32.gmra.mrb[0].mxu0 %v1922
  %v2322 = vpop.f32.mrb[0].mxu0
  %v2323 = vadd.f32 0.0, %v2322
  %v2324 = vpop.f32.mrb[0].mxu0
  %2325 = vmatprep.mubr.f32.mxu0 0.0
  %2326 = vmatmul.mubr.f32.gmra.mrb[0].mxu0 %v1925
  %v2327 = vpop.f32.mrb[0].mxu0
  %v2328 = vadd.f32 0.0, %v2327
  %v2329 = vpop.f32.mrb[0].mxu0
  %2330 = vmatprep.mubr.f32.mxu0 0.0
  %2331 = vmatmul.mubr.f32.gmra.mrb[0].mxu0 %v1928
  %v2332 = vpop.f32.mrb[0].mxu0
  %v2333 = vadd.f32 0.0, %v2332
  %v2334 = vpop.f32.mrb[0].mxu0
  %2335 = vmatprep.mubr.f32.mxu0 0.0
  %2336 = vmatmul.mubr.f32.gmra.mrb[0].mxu0 %v1931
  %v2337 = vpop.f32.mrb[0].mxu0
  %v2338 = vadd.f32 0.0, %v2337
  %v2339 = vpop.f32.mrb[0].mxu0
  %2340 = vmatprep.mubr.f32.mxu0 0.0
  %2341 = vmatmul.mubr.f32.gmra.mrb[0].mxu0 %v1934
  %v2342 = vpop.f32.mrb[0].mxu0
  %v2343 = vadd.f32 0.0, %v2342
  %v2344 = vpop.f32.mrb[0].mxu0
  %2345 = vmatprep.mubr.f32.mxu0 0.0
  %2346 = vmatmul.mubr.f32.gmra.mrb[0].mxu0 %v1937
  %v2347 = vpop.f32.mrb[0].mxu0
  %v2348 = vadd.f32 0.0, %v2347
  %v2349 = vpop.f32.mrb[0].mxu0
  %2350 = vmatprep.mubr.f32.mxu0 0.0
  %2351 = vmatmul.mubr.f32.gmra.mrb[0].mxu0 %v1940
  %v2352 = vpop.f32.mrb[0].mxu0
  %v2353 = vadd.f32 0.0, %v2352
  %v2354 = vpop.f32.mrb[0].mxu0
  %2355 = vmatprep.mubr.f32.mxu0 0.0
  %2356 = vmatmul.mubr.f32.gmra.mrb[0].mxu0 %v1943
  %v2357 = vpop.f32.mrb[0].mxu0
  %v2358 = vadd.f32 0.0, %v2357
  %v2359 = vpop.f32.mrb[0].mxu0
  %2360 = vmatprep.mubr.f32.mxu0 0.0
  %2361 = vmatmul.mubr.f32.gmra.mrb[0].mxu0 %v1946
  %v2362 = vpop.f32.mrb[0].mxu0
  %v2363 = vadd.f32 0.0, %v2362
  %v2364 = vpop.f32.mrb[0].mxu0
  %2365 = vmatprep.mubr.f32.mxu0 0.0
  %2366 = vmatmul.mubr.f32.gmra.mrb[0].mxu0 %v1949
  %v2367 = vpop.f32.mrb[0].mxu0
  %v2368 = vadd.f32 0.0, %v2367
  %v2369 = vpop.f32.mrb[0].mxu0
  %2370 = vmatprep.mubr.f32.mxu0 0.0
  %2371 = vmatmul.mubr.f32.gmra.mrb[0].mxu0 %v1952
  %v2372 = vpop.f32.mrb[0].mxu0
  %v2373 = vadd.f32 0.0, %v2372
  %v2374 = vpop.f32.mrb[0].mxu0
  %2375 = vmatprep.mubr.f32.mxu0 0.0
  %2376 = vmatmul.mubr.f32.gmra.mrb[0].mxu0 %v1955
  %v2377 = vpop.f32.mrb[0].mxu0
  %v2378 = vadd.f32 0.0, %v2377
  %v2379 = vpop.f32.mrb[0].mxu0
  %2380 = vmatprep.mubr.f32.mxu0 0.0
  %2381 = vmatmul.mubr.f32.gmra.mrb[0].mxu0 %v1958
  %v2382 = vpop.f32.mrb[0].mxu0
  %v2383 = vadd.f32 0.0, %v2382
  %v2384 = vpop.f32.mrb[0].mxu0
  %2385 = vmatprep.mubr.f32.mxu0 0.0
  %2386 = vmatmul.mubr.f32.gmra.mrb[0].mxu0 %v1961
  %v2387 = vpop.f32.mrb[0].mxu0
  %v2388 = vadd.f32 0.0, %v2387
  %v2389 = vpop.f32.mrb[0].mxu0
  %2390 = vmatprep.mubr.f32.mxu0 0.0
  %2391 = vmatmul.mubr.f32.gmra.mrb[0].mxu0 %v1964
  %v2392 = vpop.f32.mrb[0].mxu0
  %v2393 = vadd.f32 0.0, %v2392
  %v2394 = vpop.f32.mrb[0].mxu0
  %2395 = vmatprep.mubr.f32.mxu0 0.0
  %2396 = vmatmul.mubr.f32.gmra.mrb[0].mxu0 %v1967
  %v2397 = vpop.f32.mrb[0].mxu0
  %v2398 = vadd.f32 0.0, %v2397
  %v2399 = vpop.f32.mrb[0].mxu0
  %2400 = vmatprep.mubr.f32.mxu0 0.0
  %2401 = vmatmul.mubr.f32.gmra.mrb[0].mxu0 %v1970
  %v2402 = vpop.f32.mrb[0].mxu0
  %v2403 = vadd.f32 0.0, %v2402
  %v2404 = vpop.f32.mrb[0].mxu0
  %2405 = vmatprep.mubr.f32.mxu0 0.0
  %2406 = vmatmul.mubr.f32.gmra.mrb[0].mxu0 %v1973
  %v2407 = vpop.f32.mrb[0].mxu0
  %v2408 = vadd.f32 0.0, %v2407
  %v2409 = vpop.f32.mrb[0].mxu0
  %2410 = vmatprep.mubr.f32.mxu0 0.0
  %2411 = vmatmul.mubr.f32.gmra.mrb[0].mxu0 %v1976
  %v2412 = vpop.f32.mrb[0].mxu0
  %v2413 = vadd.f32 0.0, %v2412
  %v2414 = vpop.f32.mrb[0].mxu0
  %2415 = vmatprep.mubr.f32.mxu0 0.0
  %2416 = vmatmul.mubr.f32.gmra.mrb[0].mxu0 %v1979
  %v2417 = vpop.f32.mrb[0].mxu0
  %v2418 = vadd.f32 0.0, %v2417
  %v2419 = vpop.f32.mrb[0].mxu0
  %2420 = vmatprep.mubr.f32.mxu0 0.0
  %2421 = vmatmul.mubr.f32.gmra.mrb[0].mxu0 %v1982
  %v2422 = vpop.f32.mrb[0].mxu0
  %v2423 = vadd.f32 0.0, %v2422
  %v2424 = vpop.f32.mrb[0].mxu0
  %2425 = vmatprep.mubr.f32.mxu0 0.0
  %2426 = vmatmul.mubr.f32.gmra.mrb[0].mxu0 %v1985
  %v2427 = vpop.f32.mrb[0].mxu0
  %v2428 = vadd.f32 0.0, %v2427
  %v2429 = vpop.f32.mrb[0].mxu0
  %2430 = vmatprep.mubr.f32.mxu0 0.0
  %2431 = vmatmul.mubr.f32.gmra.mrb[0].mxu0 %v1988
  %v2432 = vpop.f32.mrb[0].mxu0
  %v2433 = vadd.f32 0.0, %v2432
  %v2434 = vpop.f32.mrb[0].mxu0
  %2435 = vmatprep.mubr.f32.mxu0 0.0
  %2436 = vmatmul.mubr.f32.gmra.mrb[0].mxu0 %v1991
  %v2437 = vpop.f32.mrb[0].mxu0
  %v2438 = vadd.f32 0.0, %v2437
  %v2439 = vpop.f32.mrb[0].mxu0
  %2440 = vmatprep.mubr.f32.mxu0 0.0
  %2441 = vmatmul.mubr.f32.gmra.mrb[0].mxu0 %v1994
  %v2442 = vpop.f32.mrb[0].mxu0
  %v2443 = vadd.f32 0.0, %v2442
  %v2444 = vpop.f32.mrb[0].mxu0
  %2445 = vmatprep.mubr.f32.mxu0 0.0
  %2446 = vmatmul.mubr.f32.gmra.mrb[0].mxu0 %v1997
  %v2447 = vpop.f32.mrb[0].mxu0
  %v2448 = vadd.f32 0.0, %v2447
  %v2449 = vpop.f32.mrb[0].mxu0
  %2450 = vmatprep.mubr.f32.mxu0 0.0
  %2451 = vmatmul.mubr.f32.gmra.mrb[0].mxu0 %v2000
  %v2452 = vpop.f32.mrb[0].mxu0
  %v2453 = vadd.f32 0.0, %v2452
  %v2454 = vpop.f32.mrb[0].mxu0
  %2455 = vdwg.mxu0
  %v2456 = vadd.f32 %v1806, %v2069
  %v2457 = vadd.f32 %v1807, %v2074
  %v2458 = vadd.f32 %v1808, %v2079
  %v2459 = vadd.f32 %v1809, %v2084
  %v2460 = vadd.f32 %v1810, %v2089
  %v2461 = vadd.f32 %v1811, %v2094
  %v2462 = vadd.f32 %v1812, %v2099
  %v2463 = vadd.f32 %v1813, %v2104
  %v2464 = vadd.f32 %v1814, %v2109
  %v2465 = vadd.f32 %v1815, %v2114
  %v2466 = vadd.f32 %v1816, %v2119
  %v2467 = vadd.f32 %v1817, %v2124
  %v2468 = vadd.f32 %v1818, %v2129
  %v2469 = vadd.f32 %v1819, %v2134
  %v2470 = vadd.f32 %v1820, %v2139
  %v2471 = vadd.f32 %v1821, %v2144
  %v2472 = vadd.f32 %v1822, %v2149
  %v2473 = vadd.f32 %v1823, %v2154
  %v2474 = vadd.f32 %v1824, %v2159
  %v2475 = vadd.f32 %v1825, %v2164
  %v2476 = vadd.f32 %v1826, %v2169
  %v2477 = vadd.f32 %v1827, %v2174
  %v2478 = vadd.f32 %v1828, %v2179
  %v2479 = vadd.f32 %v1829, %v2184
  %v2480 = vadd.f32 %v1830, %v2189
  %v2481 = vadd.f32 %v1831, %v2194
  %v2482 = vadd.f32 %v1832, %v2199
  %v2483 = vadd.f32 %v1833, %v2204
  %v2484 = vadd.f32 %v1834, %v2209
  %v2485 = vadd.f32 %v1835, %v2214
  %v2486 = vadd.f32 %v1836, %v2219
  %v2487 = vadd.f32 %v1837, %v2224
  %v2488 = vadd.f32 %v1838, %v2298
  %v2489 = vadd.f32 %v1839, %v2303
  %v2490 = vadd.f32 %v1840, %v2308
  %v2491 = vadd.f32 %v1841, %v2313
  %v2492 = vadd.f32 %v1842, %v2318
  %v2493 = vadd.f32 %v1843, %v2323
  %v2494 = vadd.f32 %v1844, %v2328
  %v2495 = vadd.f32 %v1845, %v2333
  %v2496 = vadd.f32 %v1846, %v2338
  %v2497 = vadd.f32 %v1847, %v2343
  %v2498 = vadd.f32 %v1848, %v2348
  %v2499 = vadd.f32 %v1849, %v2353
  %v2500 = vadd.f32 %v1850, %v2358
  %v2501 = vadd.f32 %v1851, %v2363
  %v2502 = vadd.f32 %v1852, %v2368
  %v2503 = vadd.f32 %v1853, %v2373
  %v2504 = vadd.f32 %v1854, %v2378
  %v2505 = vadd.f32 %v1855, %v2383
  %v2506 = vadd.f32 %v1856, %v2388
  %v2507 = vadd.f32 %v1857, %v2393
  %v2508 = vadd.f32 %v1858, %v2398
  %v2509 = vadd.f32 %v1859, %v2403
  %v2510 = vadd.f32 %v1860, %v2408
  %v2511 = vadd.f32 %v1861, %v2413
  %v2512 = vadd.f32 %v1862, %v2418
  %v2513 = vadd.f32 %v1863, %v2423
  %v2514 = vadd.f32 %v1864, %v2428
  %v2515 = vadd.f32 %v1865, %v2433
  %v2516 = vadd.f32 %v1866, %v2438
  %v2517 = vadd.f32 %v1867, %v2443
  %v2518 = vadd.f32 %v1868, %v2448
  %v2519 = vadd.f32 %v1869, %v2453
  %v2520 = vld [vmem:[%s0 + $0x4] sm:$0xff]
  %v2521 = vld [vmem:[%s0 + $0xc] sm:$0xff]
  %v2522 = vld [vmem:[%s0 + $0x14] sm:$0xff]
  %v2523 = vld [vmem:[%s0 + $0x1c] sm:$0xff]
  %v2524 = vld [vmem:[%s0 + $0x24] sm:$0xff]
  %v2525 = vld [vmem:[%s0 + $0x2c] sm:$0xff]
  %v2526 = vld [vmem:[%s0 + $0x34] sm:$0xff]
  %v2527 = vld [vmem:[%s0 + $0x3c] sm:$0xff]
  %v2528 = vld [vmem:[%s0 + $0x44] sm:$0xff]
  %v2529 = vld [vmem:[%s0 + $0x4c] sm:$0xff]
  %v2530 = vld [vmem:[%s0 + $0x54] sm:$0xff]
  %v2531 = vld [vmem:[%s0 + $0x5c] sm:$0xff]
  %v2532 = vld [vmem:[%s0 + $0x64] sm:$0xff]
  %v2533 = vld [vmem:[%s0 + $0x6c] sm:$0xff]
  %v2534 = vld [vmem:[%s0 + $0x74] sm:$0xff]
  %v2535 = vld [vmem:[%s0 + $0x7c] sm:$0xff]
  %v2536 = vld [vmem:[%s0 + $0x84] sm:$0xff]
  %v2537 = vld [vmem:[%s0 + $0x8c] sm:$0xff]
  %v2538 = vld [vmem:[%s0 + $0x94] sm:$0xff]
  %v2539 = vld [vmem:[%s0 + $0x9c] sm:$0xff]
  %v2540 = vld [vmem:[%s0 + $0xa4] sm:$0xff]
  %v2541 = vld [vmem:[%s0 + $0xac] sm:$0xff]
  %v2542 = vld [vmem:[%s0 + $0xb4] sm:$0xff]
  %v2543 = vld [vmem:[%s0 + $0xbc] sm:$0xff]
  %v2544 = vld [vmem:[%s0 + $0xc4] sm:$0xff]
  %v2545 = vld [vmem:[%s0 + $0xcc] sm:$0xff]
  %v2546 = vld [vmem:[%s0 + $0xd4] sm:$0xff]
  %v2547 = vld [vmem:[%s0 + $0xdc] sm:$0xff]
  %v2548 = vld [vmem:[%s0 + $0xe4] sm:$0xff]
  %v2549 = vld [vmem:[%s0 + $0xec] sm:$0xff]
  %v2550 = vld [vmem:[%s0 + $0xf4] sm:$0xff]
  %v2551 = vld [vmem:[%s0 + $0xfc] sm:$0xf]
  %v2552 = vld [vmem:[%s1 + $0x80] sm:$0xff]
  %v2553 = vld [vmem:[%s1 + $0x88] sm:$0xff]
  %v2554 = vld [vmem:[%s1 + $0x90] sm:$0xff]
  %v2555 = vld [vmem:[%s1 + $0x98] sm:$0xff]
  %v2557 = vsel %vm123, %v2520, 0
  %v2560 = vsel %vm123, %v2521, 0
  %v2563 = vsel %vm123, %v2522, 0
  %v2566 = vsel %vm123, %v2523, 0
  %v2569 = vsel %vm123, %v2524, 0
  %v2572 = vsel %vm123, %v2525, 0
  %v2575 = vsel %vm123, %v2526, 0
  %v2578 = vsel %vm123, %v2527, 0
  %v2581 = vsel %vm123, %v2528, 0
  %v2584 = vsel %vm123, %v2529, 0
  %v2587 = vsel %vm123, %v2530, 0
  %v2590 = vsel %vm123, %v2531, 0
  %v2593 = vsel %vm123, %v2532, 0
  %v2596 = vsel %vm123, %v2533, 0
  %v2599 = vsel %vm123, %v2534, 0
  %v2602 = vsel %vm123, %v2535, 0
  %v2605 = vsel %vm123, %v2536, 0
  %v2608 = vsel %vm123, %v2537, 0
  %v2611 = vsel %vm123, %v2538, 0
  %v2614 = vsel %vm123, %v2539, 0
  %v2617 = vsel %vm123, %v2540, 0
  %v2620 = vsel %vm123, %v2541, 0
  %v2623 = vsel %vm123, %v2542, 0
  %v2626 = vsel %vm123, %v2543, 0
  %v2629 = vsel %vm123, %v2544, 0
  %v2632 = vsel %vm123, %v2545, 0
  %v2635 = vsel %vm123, %v2546, 0
  %v2638 = vsel %vm123, %v2547, 0
  %v2641 = vsel %vm123, %v2548, 0
  %v2644 = vsel %vm123, %v2549, 0
  %v2647 = vsel %vm123, %v2550, 0
  %v2650 = vsel %vm123, %v2551, 0
  %2652 = vmatprep.subr.mxu0 0.0
  %2653 = vmatpush1.msra.mxu0 %v2552
  %2654 = vmatprep.subr.mxu0 0.0
  %2655 = vmatpush1.msra.mxu0 %v2553
  %2656 = vmatprep.subr.mxu0 0.0
  %2657 = vmatpush1.msra.mxu0 %v2554
  %2658 = vmatprep.subr.mxu0 0.0
  %2659 = vmatpush1.msra.mxu0 %v2555
  %2660 = vmatprep.subr.mxu0 0.0
  %2661 = vmatpush1.msra.mxu0 0.0
  %2662 = vmatprep.subr.mxu0 0.0
  %2663 = vmatpush1.msra.mxu0 0.0
  %2664 = vmatprep.subr.mxu0 0.0
  %2665 = vmatpush1.msra.mxu0 0.0
  %2666 = vmatprep.subr.mxu0 0.0
  %2667 = vmatpush1.msra.mxu0 0.0
  %2668 = vmatprep.subr.mxu0 0.0
  %2669 = vmatpush1.msra.mxu0 0.0
  %2670 = vmatprep.subr.mxu0 0.0
  %2671 = vmatpush1.msra.mxu0 0.0
  %2672 = vmatprep.subr.mxu0 0.0
  %2673 = vmatpush1.msra.mxu0 0.0
  %2674 = vmatprep.subr.mxu0 0.0
  %2675 = vmatpush1.msra.mxu0 0.0
  %2676 = vmatprep.subr.mxu0 0.0
  %2677 = vmatpush1.msra.mxu0 0.0
  %2678 = vmatprep.subr.mxu0 0.0
  %2679 = vmatpush1.msra.mxu0 0.0
  %2680 = vmatprep.subr.mxu0 0.0
  %2681 = vmatpush1.msra.mxu0 0.0
  %2682 = vmatprep.subr.mxu0 0.0
  %2683 = vmatpush1.msra.mxu0 0.0
  %2684 = vmatprep.subr.mxu0 0.0
  %2685 = vmatpush1.msra.mxu0 0.0
  %2686 = vmatprep.subr.mxu0 0.0
  %2687 = vmatpush1.msra.mxu0 0.0
  %2688 = vmatprep.subr.mxu0 0.0
  %2689 = vmatpush1.msra.mxu0 0.0
  %2690 = vmatprep.subr.mxu0 0.0
  %2691 = vmatpush1.msra.mxu0 0.0
  %2692 = vmatprep.subr.mxu0 0.0
  %2693 = vmatpush1.msra.mxu0 0.0
  %2694 = vmatprep.subr.mxu0 0.0
  %2695 = vmatpush1.msra.mxu0 0.0
  %2696 = vmatprep.subr.mxu0 0.0
  %2697 = vmatpush1.msra.mxu0 0.0
  %2698 = vmatprep.subr.mxu0 0.0
  %2699 = vmatpush1.msra.mxu0 0.0
  %2700 = vmatprep.subr.mxu0 0.0
  %2701 = vmatpush1.msra.mxu0 0.0
  %2702 = vmatprep.subr.mxu0 0.0
  %2703 = vmatpush1.msra.mxu0 0.0
  %2704 = vmatprep.subr.mxu0 0.0
  %2705 = vmatpush1.msra.mxu0 0.0
  %2706 = vmatprep.subr.mxu0 0.0
  %2707 = vmatpush1.msra.mxu0 0.0
  %2708 = vmatprep.subr.mxu0 0.0
  %2709 = vmatpush1.msra.mxu0 0.0
  %2710 = vmatprep.subr.mxu0 0.0
  %2711 = vmatpush1.msra.mxu0 0.0
  %2712 = vmatprep.subr.mxu0 0.0
  %2713 = vmatpush1.msra.mxu0 0.0
  %2714 = vmatprep.subr.mxu0 0.0
  %2715 = vmatpush1.msra.mxu0 0.0
  %2716 = vmatprep.mubr.f32.mxu0 0.0
  %2717 = vmatmul.mubr.f32.gmra.mrb[0].mxu0 %v2557
  %v2718 = vpop.f32.mrb[0].mxu0
  %v2719 = vadd.f32 0.0, %v2718
  %v2720 = vpop.f32.mrb[0].mxu0
  %2721 = vmatprep.mubr.f32.mxu0 0.0
  %2722 = vmatmul.mubr.f32.gmra.mrb[0].mxu0 %v2560
  %v2723 = vpop.f32.mrb[0].mxu0
  %v2724 = vadd.f32 0.0, %v2723
  %v2725 = vpop.f32.mrb[0].mxu0
  %2726 = vmatprep.mubr.f32.mxu0 0.0
  %2727 = vmatmul.mubr.f32.gmra.mrb[0].mxu0 %v2563
  %v2728 = vpop.f32.mrb[0].mxu0
  %v2729 = vadd.f32 0.0, %v2728
  %v2730 = vpop.f32.mrb[0].mxu0
  %2731 = vmatprep.mubr.f32.mxu0 0.0
  %2732 = vmatmul.mubr.f32.gmra.mrb[0].mxu0 %v2566
  %v2733 = vpop.f32.mrb[0].mxu0
  %v2734 = vadd.f32 0.0, %v2733
  %v2735 = vpop.f32.mrb[0].mxu0
  %2736 = vmatprep.mubr.f32.mxu0 0.0
  %2737 = vmatmul.mubr.f32.gmra.mrb[0].mxu0 %v2569
  %v2738 = vpop.f32.mrb[0].mxu0
  %v2739 = vadd.f32 0.0, %v2738
  %v2740 = vpop.f32.mrb[0].mxu0
  %2741 = vmatprep.mubr.f32.mxu0 0.0
  %2742 = vmatmul.mubr.f32.gmra.mrb[0].mxu0 %v2572
  %v2743 = vpop.f32.mrb[0].mxu0
  %v2744 = vadd.f32 0.0, %v2743
  %v2745 = vpop.f32.mrb[0].mxu0
  %2746 = vmatprep.mubr.f32.mxu0 0.0
  %2747 = vmatmul.mubr.f32.gmra.mrb[0].mxu0 %v2575
  %v2748 = vpop.f32.mrb[0].mxu0
  %v2749 = vadd.f32 0.0, %v2748
  %v2750 = vpop.f32.mrb[0].mxu0
  %2751 = vmatprep.mubr.f32.mxu0 0.0
  %2752 = vmatmul.mubr.f32.gmra.mrb[0].mxu0 %v2578
  %v2753 = vpop.f32.mrb[0].mxu0
  %v2754 = vadd.f32 0.0, %v2753
  %v2755 = vpop.f32.mrb[0].mxu0
  %2756 = vmatprep.mubr.f32.mxu0 0.0
  %2757 = vmatmul.mubr.f32.gmra.mrb[0].mxu0 %v2581
  %v2758 = vpop.f32.mrb[0].mxu0
  %v2759 = vadd.f32 0.0, %v2758
  %v2760 = vpop.f32.mrb[0].mxu0
  %2761 = vmatprep.mubr.f32.mxu0 0.0
  %2762 = vmatmul.mubr.f32.gmra.mrb[0].mxu0 %v2584
  %v2763 = vpop.f32.mrb[0].mxu0
  %v2764 = vadd.f32 0.0, %v2763
  %v2765 = vpop.f32.mrb[0].mxu0
  %2766 = vmatprep.mubr.f32.mxu0 0.0
  %2767 = vmatmul.mubr.f32.gmra.mrb[0].mxu0 %v2587
  %v2768 = vpop.f32.mrb[0].mxu0
  %v2769 = vadd.f32 0.0, %v2768
  %v2770 = vpop.f32.mrb[0].mxu0
  %2771 = vmatprep.mubr.f32.mxu0 0.0
  %2772 = vmatmul.mubr.f32.gmra.mrb[0].mxu0 %v2590
  %v2773 = vpop.f32.mrb[0].mxu0
  %v2774 = vadd.f32 0.0, %v2773
  %v2775 = vpop.f32.mrb[0].mxu0
  %2776 = vmatprep.mubr.f32.mxu0 0.0
  %2777 = vmatmul.mubr.f32.gmra.mrb[0].mxu0 %v2593
  %v2778 = vpop.f32.mrb[0].mxu0
  %v2779 = vadd.f32 0.0, %v2778
  %v2780 = vpop.f32.mrb[0].mxu0
  %2781 = vmatprep.mubr.f32.mxu0 0.0
  %2782 = vmatmul.mubr.f32.gmra.mrb[0].mxu0 %v2596
  %v2783 = vpop.f32.mrb[0].mxu0
  %v2784 = vadd.f32 0.0, %v2783
  %v2785 = vpop.f32.mrb[0].mxu0
  %2786 = vmatprep.mubr.f32.mxu0 0.0
  %2787 = vmatmul.mubr.f32.gmra.mrb[0].mxu0 %v2599
  %v2788 = vpop.f32.mrb[0].mxu0
  %v2789 = vadd.f32 0.0, %v2788
  %v2790 = vpop.f32.mrb[0].mxu0
  %2791 = vmatprep.mubr.f32.mxu0 0.0
  %2792 = vmatmul.mubr.f32.gmra.mrb[0].mxu0 %v2602
  %v2793 = vpop.f32.mrb[0].mxu0
  %v2794 = vadd.f32 0.0, %v2793
  %v2795 = vpop.f32.mrb[0].mxu0
  %2796 = vmatprep.mubr.f32.mxu0 0.0
  %2797 = vmatmul.mubr.f32.gmra.mrb[0].mxu0 %v2605
  %v2798 = vpop.f32.mrb[0].mxu0
  %v2799 = vadd.f32 0.0, %v2798
  %v2800 = vpop.f32.mrb[0].mxu0
  %2801 = vmatprep.mubr.f32.mxu0 0.0
  %2802 = vmatmul.mubr.f32.gmra.mrb[0].mxu0 %v2608
  %v2803 = vpop.f32.mrb[0].mxu0
  %v2804 = vadd.f32 0.0, %v2803
  %v2805 = vpop.f32.mrb[0].mxu0
  %2806 = vmatprep.mubr.f32.mxu0 0.0
  %2807 = vmatmul.mubr.f32.gmra.mrb[0].mxu0 %v2611
  %v2808 = vpop.f32.mrb[0].mxu0
  %v2809 = vadd.f32 0.0, %v2808
  %v2810 = vpop.f32.mrb[0].mxu0
  %2811 = vmatprep.mubr.f32.mxu0 0.0
  %2812 = vmatmul.mubr.f32.gmra.mrb[0].mxu0 %v2614
  %v2813 = vpop.f32.mrb[0].mxu0
  %v2814 = vadd.f32 0.0, %v2813
  %v2815 = vpop.f32.mrb[0].mxu0
  %2816 = vmatprep.mubr.f32.mxu0 0.0
  %2817 = vmatmul.mubr.f32.gmra.mrb[0].mxu0 %v2617
  %v2818 = vpop.f32.mrb[0].mxu0
  %v2819 = vadd.f32 0.0, %v2818
  %v2820 = vpop.f32.mrb[0].mxu0
  %2821 = vmatprep.mubr.f32.mxu0 0.0
  %2822 = vmatmul.mubr.f32.gmra.mrb[0].mxu0 %v2620
  %v2823 = vpop.f32.mrb[0].mxu0
  %v2824 = vadd.f32 0.0, %v2823
  %v2825 = vpop.f32.mrb[0].mxu0
  %2826 = vmatprep.mubr.f32.mxu0 0.0
  %2827 = vmatmul.mubr.f32.gmra.mrb[0].mxu0 %v2623
  %v2828 = vpop.f32.mrb[0].mxu0
  %v2829 = vadd.f32 0.0, %v2828
  %v2830 = vpop.f32.mrb[0].mxu0
  %2831 = vmatprep.mubr.f32.mxu0 0.0
  %2832 = vmatmul.mubr.f32.gmra.mrb[0].mxu0 %v2626
  %v2833 = vpop.f32.mrb[0].mxu0
  %v2834 = vadd.f32 0.0, %v2833
  %v2835 = vpop.f32.mrb[0].mxu0
  %2836 = vmatprep.mubr.f32.mxu0 0.0
  %2837 = vmatmul.mubr.f32.gmra.mrb[0].mxu0 %v2629
  %v2838 = vpop.f32.mrb[0].mxu0
  %v2839 = vadd.f32 0.0, %v2838
  %v2840 = vpop.f32.mrb[0].mxu0
  %2841 = vmatprep.mubr.f32.mxu0 0.0
  %2842 = vmatmul.mubr.f32.gmra.mrb[0].mxu0 %v2632
  %v2843 = vpop.f32.mrb[0].mxu0
  %v2844 = vadd.f32 0.0, %v2843
  %v2845 = vpop.f32.mrb[0].mxu0
  %2846 = vmatprep.mubr.f32.mxu0 0.0
  %2847 = vmatmul.mubr.f32.gmra.mrb[0].mxu0 %v2635
  %v2848 = vpop.f32.mrb[0].mxu0
  %v2849 = vadd.f32 0.0, %v2848
  %v2850 = vpop.f32.mrb[0].mxu0
  %2851 = vmatprep.mubr.f32.mxu0 0.0
  %2852 = vmatmul.mubr.f32.gmra.mrb[0].mxu0 %v2638
  %v2853 = vpop.f32.mrb[0].mxu0
  %v2854 = vadd.f32 0.0, %v2853
  %v2855 = vpop.f32.mrb[0].mxu0
  %2856 = vmatprep.mubr.f32.mxu0 0.0
  %2857 = vmatmul.mubr.f32.gmra.mrb[0].mxu0 %v2641
  %v2858 = vpop.f32.mrb[0].mxu0
  %v2859 = vadd.f32 0.0, %v2858
  %v2860 = vpop.f32.mrb[0].mxu0
  %2861 = vmatprep.mubr.f32.mxu0 0.0
  %2862 = vmatmul.mubr.f32.gmra.mrb[0].mxu0 %v2644
  %v2863 = vpop.f32.mrb[0].mxu0
  %v2864 = vadd.f32 0.0, %v2863
  %v2865 = vpop.f32.mrb[0].mxu0
  %2866 = vmatprep.mubr.f32.mxu0 0.0
  %2867 = vmatmul.mubr.f32.gmra.mrb[0].mxu0 %v2647
  %v2868 = vpop.f32.mrb[0].mxu0
  %v2869 = vadd.f32 0.0, %v2868
  %v2870 = vpop.f32.mrb[0].mxu0
  %2871 = vmatprep.mubr.f32.mxu0 0.0
  %2872 = vmatmul.mubr.f32.gmra.mrb[0].mxu0 %v2650
  %v2873 = vpop.f32.mrb[0].mxu0
  %v2874 = vadd.f32 0.0, %v2873
  %v2875 = vpop.f32.mrb[0].mxu0
  %2876 = vdwg.mxu0
  %v2877 = vld [vmem:[%s2 + $0x80] sm:$0xff]
  %v2878 = vld [vmem:[%s2 + $0x88] sm:$0xff]
  %v2879 = vld [vmem:[%s2 + $0x90] sm:$0xff]
  %v2880 = vld [vmem:[%s2 + $0x98] sm:$0xff]
  %2881 = vmatprep.subr.mxu0 0.0
  %2882 = vmatpush1.msra.mxu0 %v2877
  %2883 = vmatprep.subr.mxu0 0.0
  %2884 = vmatpush1.msra.mxu0 %v2878
  %2885 = vmatprep.subr.mxu0 0.0
  %2886 = vmatpush1.msra.mxu0 %v2879
  %2887 = vmatprep.subr.mxu0 0.0
  %2888 = vmatpush1.msra.mxu0 %v2880
  %2889 = vmatprep.subr.mxu0 0.0
  %2890 = vmatpush1.msra.mxu0 0.0
  %2891 = vmatprep.subr.mxu0 0.0
  %2892 = vmatpush1.msra.mxu0 0.0
  %2893 = vmatprep.subr.mxu0 0.0
  %2894 = vmatpush1.msra.mxu0 0.0
  %2895 = vmatprep.subr.mxu0 0.0
  %2896 = vmatpush1.msra.mxu0 0.0
  %2897 = vmatprep.subr.mxu0 0.0
  %2898 = vmatpush1.msra.mxu0 0.0
  %2899 = vmatprep.subr.mxu0 0.0
  %2900 = vmatpush1.msra.mxu0 0.0
  %2901 = vmatprep.subr.mxu0 0.0
  %2902 = vmatpush1.msra.mxu0 0.0
  %2903 = vmatprep.subr.mxu0 0.0
  %2904 = vmatpush1.msra.mxu0 0.0
  %2905 = vmatprep.subr.mxu0 0.0
  %2906 = vmatpush1.msra.mxu0 0.0
  %2907 = vmatprep.subr.mxu0 0.0
  %2908 = vmatpush1.msra.mxu0 0.0
  %2909 = vmatprep.subr.mxu0 0.0
  %2910 = vmatpush1.msra.mxu0 0.0
  %2911 = vmatprep.subr.mxu0 0.0
  %2912 = vmatpush1.msra.mxu0 0.0
  %2913 = vmatprep.subr.mxu0 0.0
  %2914 = vmatpush1.msra.mxu0 0.0
  %2915 = vmatprep.subr.mxu0 0.0
  %2916 = vmatpush1.msra.mxu0 0.0
  %2917 = vmatprep.subr.mxu0 0.0
  %2918 = vmatpush1.msra.mxu0 0.0
  %2919 = vmatprep.subr.mxu0 0.0
  %2920 = vmatpush1.msra.mxu0 0.0
  %2921 = vmatprep.subr.mxu0 0.0
  %2922 = vmatpush1.msra.mxu0 0.0
  %2923 = vmatprep.subr.mxu0 0.0
  %2924 = vmatpush1.msra.mxu0 0.0
  %2925 = vmatprep.subr.mxu0 0.0
  %2926 = vmatpush1.msra.mxu0 0.0
  %2927 = vmatprep.subr.mxu0 0.0
  %2928 = vmatpush1.msra.mxu0 0.0
  %2929 = vmatprep.subr.mxu0 0.0
  %2930 = vmatpush1.msra.mxu0 0.0
  %2931 = vmatprep.subr.mxu0 0.0
  %2932 = vmatpush1.msra.mxu0 0.0
  %2933 = vmatprep.subr.mxu0 0.0
  %2934 = vmatpush1.msra.mxu0 0.0
  %2935 = vmatprep.subr.mxu0 0.0
  %2936 = vmatpush1.msra.mxu0 0.0
  %2937 = vmatprep.subr.mxu0 0.0
  %2938 = vmatpush1.msra.mxu0 0.0
  %2939 = vmatprep.subr.mxu0 0.0
  %2940 = vmatpush1.msra.mxu0 0.0
  %2941 = vmatprep.subr.mxu0 0.0
  %2942 = vmatpush1.msra.mxu0 0.0
  %2943 = vmatprep.subr.mxu0 0.0
  %2944 = vmatpush1.msra.mxu0 0.0
  %2945 = vmatprep.mubr.f32.mxu0 0.0
  %2946 = vmatmul.mubr.f32.gmra.mrb[0].mxu0 %v2557
  %v2947 = vpop.f32.mrb[0].mxu0
  %v2948 = vadd.f32 0.0, %v2947
  %v2949 = vpop.f32.mrb[0].mxu0
  %2950 = vmatprep.mubr.f32.mxu0 0.0
  %2951 = vmatmul.mubr.f32.gmra.mrb[0].mxu0 %v2560
  %v2952 = vpop.f32.mrb[0].mxu0
  %v2953 = vadd.f32 0.0, %v2952
  %v2954 = vpop.f32.mrb[0].mxu0
  %2955 = vmatprep.mubr.f32.mxu0 0.0
  %2956 = vmatmul.mubr.f32.gmra.mrb[0].mxu0 %v2563
  %v2957 = vpop.f32.mrb[0].mxu0
  %v2958 = vadd.f32 0.0, %v2957
  %v2959 = vpop.f32.mrb[0].mxu0
  %2960 = vmatprep.mubr.f32.mxu0 0.0
  %2961 = vmatmul.mubr.f32.gmra.mrb[0].mxu0 %v2566
  %v2962 = vpop.f32.mrb[0].mxu0
  %v2963 = vadd.f32 0.0, %v2962
  %v2964 = vpop.f32.mrb[0].mxu0
  %2965 = vmatprep.mubr.f32.mxu0 0.0
  %2966 = vmatmul.mubr.f32.gmra.mrb[0].mxu0 %v2569
  %v2967 = vpop.f32.mrb[0].mxu0
  %v2968 = vadd.f32 0.0, %v2967
  %v2969 = vpop.f32.mrb[0].mxu0
  %2970 = vmatprep.mubr.f32.mxu0 0.0
  %2971 = vmatmul.mubr.f32.gmra.mrb[0].mxu0 %v2572
  %v2972 = vpop.f32.mrb[0].mxu0
  %v2973 = vadd.f32 0.0, %v2972
  %v2974 = vpop.f32.mrb[0].mxu0
  %2975 = vmatprep.mubr.f32.mxu0 0.0
  %2976 = vmatmul.mubr.f32.gmra.mrb[0].mxu0 %v2575
  %v2977 = vpop.f32.mrb[0].mxu0
  %v2978 = vadd.f32 0.0, %v2977
  %v2979 = vpop.f32.mrb[0].mxu0
  %2980 = vmatprep.mubr.f32.mxu0 0.0
  %2981 = vmatmul.mubr.f32.gmra.mrb[0].mxu0 %v2578
  %v2982 = vpop.f32.mrb[0].mxu0
  %v2983 = vadd.f32 0.0, %v2982
  %v2984 = vpop.f32.mrb[0].mxu0
  %2985 = vmatprep.mubr.f32.mxu0 0.0
  %2986 = vmatmul.mubr.f32.gmra.mrb[0].mxu0 %v2581
  %v2987 = vpop.f32.mrb[0].mxu0
  %v2988 = vadd.f32 0.0, %v2987
  %v2989 = vpop.f32.mrb[0].mxu0
  %2990 = vmatprep.mubr.f32.mxu0 0.0
  %2991 = vmatmul.mubr.f32.gmra.mrb[0].mxu0 %v2584
  %v2992 = vpop.f32.mrb[0].mxu0
  %v2993 = vadd.f32 0.0, %v2992
  %v2994 = vpop.f32.mrb[0].mxu0
  %2995 = vmatprep.mubr.f32.mxu0 0.0
  %2996 = vmatmul.mubr.f32.gmra.mrb[0].mxu0 %v2587
  %v2997 = vpop.f32.mrb[0].mxu0
  %v2998 = vadd.f32 0.0, %v2997
  %v2999 = vpop.f32.mrb[0].mxu0
  %3000 = vmatprep.mubr.f32.mxu0 0.0
  %3001 = vmatmul.mubr.f32.gmra.mrb[0].mxu0 %v2590
  %v3002 = vpop.f32.mrb[0].mxu0
  %v3003 = vadd.f32 0.0, %v3002
  %v3004 = vpop.f32.mrb[0].mxu0
  %3005 = vmatprep.mubr.f32.mxu0 0.0
  %3006 = vmatmul.mubr.f32.gmra.mrb[0].mxu0 %v2593
  %v3007 = vpop.f32.mrb[0].mxu0
  %v3008 = vadd.f32 0.0, %v3007
  %v3009 = vpop.f32.mrb[0].mxu0
  %3010 = vmatprep.mubr.f32.mxu0 0.0
  %3011 = vmatmul.mubr.f32.gmra.mrb[0].mxu0 %v2596
  %v3012 = vpop.f32.mrb[0].mxu0
  %v3013 = vadd.f32 0.0, %v3012
  %v3014 = vpop.f32.mrb[0].mxu0
  %3015 = vmatprep.mubr.f32.mxu0 0.0
  %3016 = vmatmul.mubr.f32.gmra.mrb[0].mxu0 %v2599
  %v3017 = vpop.f32.mrb[0].mxu0
  %v3018 = vadd.f32 0.0, %v3017
  %v3019 = vpop.f32.mrb[0].mxu0
  %3020 = vmatprep.mubr.f32.mxu0 0.0
  %3021 = vmatmul.mubr.f32.gmra.mrb[0].mxu0 %v2602
  %v3022 = vpop.f32.mrb[0].mxu0
  %v3023 = vadd.f32 0.0, %v3022
  %v3024 = vpop.f32.mrb[0].mxu0
  %3025 = vmatprep.mubr.f32.mxu0 0.0
  %3026 = vmatmul.mubr.f32.gmra.mrb[0].mxu0 %v2605
  %v3027 = vpop.f32.mrb[0].mxu0
  %v3028 = vadd.f32 0.0, %v3027
  %v3029 = vpop.f32.mrb[0].mxu0
  %3030 = vmatprep.mubr.f32.mxu0 0.0
  %3031 = vmatmul.mubr.f32.gmra.mrb[0].mxu0 %v2608
  %v3032 = vpop.f32.mrb[0].mxu0
  %v3033 = vadd.f32 0.0, %v3032
  %v3034 = vpop.f32.mrb[0].mxu0
  %3035 = vmatprep.mubr.f32.mxu0 0.0
  %3036 = vmatmul.mubr.f32.gmra.mrb[0].mxu0 %v2611
  %v3037 = vpop.f32.mrb[0].mxu0
  %v3038 = vadd.f32 0.0, %v3037
  %v3039 = vpop.f32.mrb[0].mxu0
  %3040 = vmatprep.mubr.f32.mxu0 0.0
  %3041 = vmatmul.mubr.f32.gmra.mrb[0].mxu0 %v2614
  %v3042 = vpop.f32.mrb[0].mxu0
  %v3043 = vadd.f32 0.0, %v3042
  %v3044 = vpop.f32.mrb[0].mxu0
  %3045 = vmatprep.mubr.f32.mxu0 0.0
  %3046 = vmatmul.mubr.f32.gmra.mrb[0].mxu0 %v2617
  %v3047 = vpop.f32.mrb[0].mxu0
  %v3048 = vadd.f32 0.0, %v3047
  %v3049 = vpop.f32.mrb[0].mxu0
  %3050 = vmatprep.mubr.f32.mxu0 0.0
  %3051 = vmatmul.mubr.f32.gmra.mrb[0].mxu0 %v2620
  %v3052 = vpop.f32.mrb[0].mxu0
  %v3053 = vadd.f32 0.0, %v3052
  %v3054 = vpop.f32.mrb[0].mxu0
  %3055 = vmatprep.mubr.f32.mxu0 0.0
  %3056 = vmatmul.mubr.f32.gmra.mrb[0].mxu0 %v2623
  %v3057 = vpop.f32.mrb[0].mxu0
  %v3058 = vadd.f32 0.0, %v3057
  %v3059 = vpop.f32.mrb[0].mxu0
  %3060 = vmatprep.mubr.f32.mxu0 0.0
  %3061 = vmatmul.mubr.f32.gmra.mrb[0].mxu0 %v2626
  %v3062 = vpop.f32.mrb[0].mxu0
  %v3063 = vadd.f32 0.0, %v3062
  %v3064 = vpop.f32.mrb[0].mxu0
  %3065 = vmatprep.mubr.f32.mxu0 0.0
  %3066 = vmatmul.mubr.f32.gmra.mrb[0].mxu0 %v2629
  %v3067 = vpop.f32.mrb[0].mxu0
  %v3068 = vadd.f32 0.0, %v3067
  %v3069 = vpop.f32.mrb[0].mxu0
  %3070 = vmatprep.mubr.f32.mxu0 0.0
  %3071 = vmatmul.mubr.f32.gmra.mrb[0].mxu0 %v2632
  %v3072 = vpop.f32.mrb[0].mxu0
  %v3073 = vadd.f32 0.0, %v3072
  %v3074 = vpop.f32.mrb[0].mxu0
  %3075 = vmatprep.mubr.f32.mxu0 0.0
  %3076 = vmatmul.mubr.f32.gmra.mrb[0].mxu0 %v2635
  %v3077 = vpop.f32.mrb[0].mxu0
  %v3078 = vadd.f32 0.0, %v3077
  %v3079 = vpop.f32.mrb[0].mxu0
  %3080 = vmatprep.mubr.f32.mxu0 0.0
  %3081 = vmatmul.mubr.f32.gmra.mrb[0].mxu0 %v2638
  %v3082 = vpop.f32.mrb[0].mxu0
  %v3083 = vadd.f32 0.0, %v3082
  %v3084 = vpop.f32.mrb[0].mxu0
  %3085 = vmatprep.mubr.f32.mxu0 0.0
  %3086 = vmatmul.mubr.f32.gmra.mrb[0].mxu0 %v2641
  %v3087 = vpop.f32.mrb[0].mxu0
  %v3088 = vadd.f32 0.0, %v3087
  %v3089 = vpop.f32.mrb[0].mxu0
  %3090 = vmatprep.mubr.f32.mxu0 0.0
  %3091 = vmatmul.mubr.f32.gmra.mrb[0].mxu0 %v2644
  %v3092 = vpop.f32.mrb[0].mxu0
  %v3093 = vadd.f32 0.0, %v3092
  %v3094 = vpop.f32.mrb[0].mxu0
  %3095 = vmatprep.mubr.f32.mxu0 0.0
  %3096 = vmatmul.mubr.f32.gmra.mrb[0].mxu0 %v2647
  %v3097 = vpop.f32.mrb[0].mxu0
  %v3098 = vadd.f32 0.0, %v3097
  %v3099 = vpop.f32.mrb[0].mxu0
  %3100 = vmatprep.mubr.f32.mxu0 0.0
  %3101 = vmatmul.mubr.f32.gmra.mrb[0].mxu0 %v2650
  %v3102 = vpop.f32.mrb[0].mxu0
  %v3103 = vadd.f32 0.0, %v3102
  %v3104 = vpop.f32.mrb[0].mxu0
  %3105 = vdwg.mxu0
  %v3106 = vadd.f32 %v2456, %v2719
  %v3107 = vadd.f32 %v2457, %v2724
  %v3108 = vadd.f32 %v2458, %v2729
  %v3109 = vadd.f32 %v2459, %v2734
  %v3110 = vadd.f32 %v2460, %v2739
  %v3111 = vadd.f32 %v2461, %v2744
  %v3112 = vadd.f32 %v2462, %v2749
  %v3113 = vadd.f32 %v2463, %v2754
  %v3114 = vadd.f32 %v2464, %v2759
  %v3115 = vadd.f32 %v2465, %v2764
  %v3116 = vadd.f32 %v2466, %v2769
  %v3117 = vadd.f32 %v2467, %v2774
  %v3118 = vadd.f32 %v2468, %v2779
  %v3119 = vadd.f32 %v2469, %v2784
  %v3120 = vadd.f32 %v2470, %v2789
  %v3121 = vadd.f32 %v2471, %v2794
  %v3122 = vadd.f32 %v2472, %v2799
  %v3123 = vadd.f32 %v2473, %v2804
  %v3124 = vadd.f32 %v2474, %v2809
  %v3125 = vadd.f32 %v2475, %v2814
  %v3126 = vadd.f32 %v2476, %v2819
  %v3127 = vadd.f32 %v2477, %v2824
  %v3128 = vadd.f32 %v2478, %v2829
  %v3129 = vadd.f32 %v2479, %v2834
  %v3130 = vadd.f32 %v2480, %v2839
  %v3131 = vadd.f32 %v2481, %v2844
  %v3132 = vadd.f32 %v2482, %v2849
  %v3133 = vadd.f32 %v2483, %v2854
  %v3134 = vadd.f32 %v2484, %v2859
  %v3135 = vadd.f32 %v2485, %v2864
  %v3136 = vadd.f32 %v2486, %v2869
  %v3137 = vadd.f32 %v2487, %v2874
  %v3138 = vadd.f32 %v2488, %v2948
  %v3139 = vadd.f32 %v2489, %v2953
  %v3140 = vadd.f32 %v2490, %v2958
  %v3141 = vadd.f32 %v2491, %v2963
  %v3142 = vadd.f32 %v2492, %v2968
  %v3143 = vadd.f32 %v2493, %v2973
  %v3144 = vadd.f32 %v2494, %v2978
  %v3145 = vadd.f32 %v2495, %v2983
  %v3146 = vadd.f32 %v2496, %v2988
  %v3147 = vadd.f32 %v2497, %v2993
  %v3148 = vadd.f32 %v2498, %v2998
  %v3149 = vadd.f32 %v2499, %v3003
  %v3150 = vadd.f32 %v2500, %v3008
  %v3151 = vadd.f32 %v2501, %v3013
  %v3152 = vadd.f32 %v2502, %v3018
  %v3153 = vadd.f32 %v2503, %v3023
  %v3154 = vadd.f32 %v2504, %v3028
  %v3155 = vadd.f32 %v2505, %v3033
  %v3156 = vadd.f32 %v2506, %v3038
  %v3157 = vadd.f32 %v2507, %v3043
  %v3158 = vadd.f32 %v2508, %v3048
  %v3159 = vadd.f32 %v2509, %v3053
  %v3160 = vadd.f32 %v2510, %v3058
  %v3161 = vadd.f32 %v2511, %v3063
  %v3162 = vadd.f32 %v2512, %v3068
  %v3163 = vadd.f32 %v2513, %v3073
  %v3164 = vadd.f32 %v2514, %v3078
  %v3165 = vadd.f32 %v2515, %v3083
  %v3166 = vadd.f32 %v2516, %v3088
  %v3167 = vadd.f32 %v2517, %v3093
  %v3168 = vadd.f32 %v2518, %v3098
  %v3169 = vadd.f32 %v2519, %v3103
  %v3170 = vmax.f32 %v3106, %v3138
  %v3171 = vmax.f32 %v3107, %v3139
  %v3172 = vmax.f32 %v3108, %v3140
  %v3173 = vmax.f32 %v3109, %v3141
  %v3174 = vmax.f32 %v3110, %v3142
  %v3175 = vmax.f32 %v3111, %v3143
  %v3176 = vmax.f32 %v3112, %v3144
  %v3177 = vmax.f32 %v3113, %v3145
  %v3178 = vmax.f32 %v3114, %v3146
  %v3179 = vmax.f32 %v3115, %v3147
  %v3180 = vmax.f32 %v3116, %v3148
  %v3181 = vmax.f32 %v3117, %v3149
  %v3182 = vmax.f32 %v3118, %v3150
  %v3183 = vmax.f32 %v3119, %v3151
  %v3184 = vmax.f32 %v3120, %v3152
  %v3185 = vmax.f32 %v3121, %v3153
  %v3186 = vmax.f32 %v3122, %v3154
  %v3187 = vmax.f32 %v3123, %v3155
  %v3188 = vmax.f32 %v3124, %v3156
  %v3189 = vmax.f32 %v3125, %v3157
  %v3190 = vmax.f32 %v3126, %v3158
  %v3191 = vmax.f32 %v3127, %v3159
  %v3192 = vmax.f32 %v3128, %v3160
  %v3193 = vmax.f32 %v3129, %v3161
  %v3194 = vmax.f32 %v3130, %v3162
  %v3195 = vmax.f32 %v3131, %v3163
  %v3196 = vmax.f32 %v3132, %v3164
  %v3197 = vmax.f32 %v3133, %v3165
  %v3198 = vmax.f32 %v3134, %v3166
  %v3199 = vmax.f32 %v3135, %v3167
  %v3200 = vmax.f32 %v3136, %v3168
  %v3201 = vmax.f32 %v3137, %v3169
  %vm3234 = vcmask 1046528
  %v3235 = vrot.slane %v3170, 1
  %v3236 = vrot.slane %v3171, 1
  %v3237 = vsel %vm3234, %v3235, %v3236
  %v3238 = vrot.slane %v3172, 1
  %v3239 = vsel %vm3234, %v3236, %v3238
  %v3240 = vrot.slane %v3173, 1
  %v3241 = vsel %vm3234, %v3238, %v3240
  %v3242 = vrot.slane %v3174, 1
  %v3243 = vsel %vm3234, %v3240, %v3242
  %v3244 = vrot.slane %v3175, 1
  %v3245 = vsel %vm3234, %v3242, %v3244
  %v3246 = vrot.slane %v3176, 1
  %v3247 = vsel %vm3234, %v3244, %v3246
  %v3248 = vrot.slane %v3177, 1
  %v3249 = vsel %vm3234, %v3246, %v3248
  %v3250 = vrot.slane %v3178, 1
  %v3251 = vsel %vm3234, %v3248, %v3250
  %v3252 = vrot.slane %v3179, 1
  %v3253 = vsel %vm3234, %v3250, %v3252
  %v3254 = vrot.slane %v3180, 1
  %v3255 = vsel %vm3234, %v3252, %v3254
  %v3256 = vrot.slane %v3181, 1
  %v3257 = vsel %vm3234, %v3254, %v3256
  %v3258 = vrot.slane %v3182, 1
  %v3259 = vsel %vm3234, %v3256, %v3258
  %v3260 = vrot.slane %v3183, 1
  %v3261 = vsel %vm3234, %v3258, %v3260
  %v3262 = vrot.slane %v3184, 1
  %v3263 = vsel %vm3234, %v3260, %v3262
  %v3264 = vrot.slane %v3185, 1
  %v3265 = vsel %vm3234, %v3262, %v3264
  %v3266 = vrot.slane %v3186, 1
  %v3267 = vsel %vm3234, %v3264, %v3266
  %v3268 = vrot.slane %v3187, 1
  %v3269 = vsel %vm3234, %v3266, %v3268
  %v3270 = vrot.slane %v3188, 1
  %v3271 = vsel %vm3234, %v3268, %v3270
  %v3272 = vrot.slane %v3189, 1
  %v3273 = vsel %vm3234, %v3270, %v3272
  %v3274 = vrot.slane %v3190, 1
  %v3275 = vsel %vm3234, %v3272, %v3274
  %v3276 = vrot.slane %v3191, 1
  %v3277 = vsel %vm3234, %v3274, %v3276
  %v3278 = vrot.slane %v3192, 1
  %v3279 = vsel %vm3234, %v3276, %v3278
  %v3280 = vrot.slane %v3193, 1
  %v3281 = vsel %vm3234, %v3278, %v3280
  %v3282 = vrot.slane %v3194, 1
  %v3283 = vsel %vm3234, %v3280, %v3282
  %v3284 = vrot.slane %v3195, 1
  %v3285 = vsel %vm3234, %v3282, %v3284
  %v3286 = vrot.slane %v3196, 1
  %v3287 = vsel %vm3234, %v3284, %v3286
  %v3288 = vrot.slane %v3197, 1
  %v3289 = vsel %vm3234, %v3286, %v3288
  %v3290 = vrot.slane %v3198, 1
  %v3291 = vsel %vm3234, %v3288, %v3290
  %v3292 = vrot.slane %v3199, 1
  %v3293 = vsel %vm3234, %v3290, %v3292
  %v3294 = vrot.slane %v3200, 1
  %v3295 = vsel %vm3234, %v3292, %v3294
  %v3296 = vrot.slane %v3201, 1
  %v3297 = vsel %vm3234, %v3294, %v3296
  %v3330 = vmax.f32 %v3170, %v3237
  %v3331 = vmax.f32 %v3171, %v3239
  %v3332 = vmax.f32 %v3172, %v3241
  %v3333 = vmax.f32 %v3173, %v3243
  %v3334 = vmax.f32 %v3174, %v3245
  %v3335 = vmax.f32 %v3175, %v3247
  %v3336 = vmax.f32 %v3176, %v3249
  %v3337 = vmax.f32 %v3177, %v3251
  %v3338 = vmax.f32 %v3178, %v3253
  %v3339 = vmax.f32 %v3179, %v3255
  %v3340 = vmax.f32 %v3180, %v3257
  %v3341 = vmax.f32 %v3181, %v3259
  %v3342 = vmax.f32 %v3182, %v3261
  %v3343 = vmax.f32 %v3183, %v3263
  %v3344 = vmax.f32 %v3184, %v3265
  %v3345 = vmax.f32 %v3185, %v3267
  %v3346 = vmax.f32 %v3186, %v3269
  %v3347 = vmax.f32 %v3187, %v3271
  %v3348 = vmax.f32 %v3188, %v3273
  %v3349 = vmax.f32 %v3189, %v3275
  %v3350 = vmax.f32 %v3190, %v3277
  %v3351 = vmax.f32 %v3191, %v3279
  %v3352 = vmax.f32 %v3192, %v3281
  %v3353 = vmax.f32 %v3193, %v3283
  %v3354 = vmax.f32 %v3194, %v3285
  %v3355 = vmax.f32 %v3195, %v3287
  %v3356 = vmax.f32 %v3196, %v3289
  %v3357 = vmax.f32 %v3197, %v3291
  %v3358 = vmax.f32 %v3198, %v3293
  %v3359 = vmax.f32 %v3199, %v3295
  %v3360 = vmax.f32 %v3200, %v3297
  %v3361 = vmax.f32 %v3201, %v3296
  %v3362 = vld [vmem:[%s3] sm:$0x1]
  %v3364 = vlaneseq
  %v3365 = vshrl.u32 %v3364, 7
  %v3366 = vsub.s32 0, %v3365
  %v3367 = vrot.slane %v3362, %v3366
  %v3369 = vadd.f32 %v3330, %v3367
  %v3370 = vadd.f32 %v3331, %v3367
  %v3371 = vadd.f32 %v3332, %v3367
  %v3372 = vadd.f32 %v3333, %v3367
  %v3373 = vadd.f32 %v3334, %v3367
  %v3374 = vadd.f32 %v3335, %v3367
  %v3375 = vadd.f32 %v3336, %v3367
  %v3376 = vadd.f32 %v3337, %v3367
  %v3377 = vadd.f32 %v3338, %v3367
  %v3378 = vadd.f32 %v3339, %v3367
  %v3379 = vadd.f32 %v3340, %v3367
  %v3380 = vadd.f32 %v3341, %v3367
  %v3381 = vadd.f32 %v3342, %v3367
  %v3382 = vadd.f32 %v3343, %v3367
  %v3383 = vadd.f32 %v3344, %v3367
  %v3384 = vadd.f32 %v3345, %v3367
  %v3385 = vadd.f32 %v3346, %v3367
  %v3386 = vadd.f32 %v3347, %v3367
  %v3387 = vadd.f32 %v3348, %v3367
  %v3388 = vadd.f32 %v3349, %v3367
  %v3389 = vadd.f32 %v3350, %v3367
  %v3390 = vadd.f32 %v3351, %v3367
  %v3391 = vadd.f32 %v3352, %v3367
  %v3392 = vadd.f32 %v3353, %v3367
  %v3393 = vadd.f32 %v3354, %v3367
  %v3394 = vadd.f32 %v3355, %v3367
  %v3395 = vadd.f32 %v3356, %v3367
  %v3396 = vadd.f32 %v3357, %v3367
  %v3397 = vadd.f32 %v3358, %v3367
  %v3398 = vadd.f32 %v3359, %v3367
  %v3399 = vadd.f32 %v3360, %v3367
  %v3400 = vadd.f32 %v3361, %v3367
  %v3401 = vmax.f32 %v3369, 0.0
  %v3402 = vmax.f32 %v3370, 0.0
  %v3403 = vmax.f32 %v3371, 0.0
  %v3404 = vmax.f32 %v3372, 0.0
  %v3405 = vmax.f32 %v3373, 0.0
  %v3406 = vmax.f32 %v3374, 0.0
  %v3407 = vmax.f32 %v3375, 0.0
  %v3408 = vmax.f32 %v3376, 0.0
  %v3409 = vmax.f32 %v3377, 0.0
  %v3410 = vmax.f32 %v3378, 0.0
  %v3411 = vmax.f32 %v3379, 0.0
  %v3412 = vmax.f32 %v3380, 0.0
  %v3413 = vmax.f32 %v3381, 0.0
  %v3414 = vmax.f32 %v3382, 0.0
  %v3415 = vmax.f32 %v3383, 0.0
  %v3416 = vmax.f32 %v3384, 0.0
  %v3417 = vmax.f32 %v3385, 0.0
  %v3418 = vmax.f32 %v3386, 0.0
  %v3419 = vmax.f32 %v3387, 0.0
  %v3420 = vmax.f32 %v3388, 0.0
  %v3421 = vmax.f32 %v3389, 0.0
  %v3422 = vmax.f32 %v3390, 0.0
  %v3423 = vmax.f32 %v3391, 0.0
  %v3424 = vmax.f32 %v3392, 0.0
  %v3425 = vmax.f32 %v3393, 0.0
  %v3426 = vmax.f32 %v3394, 0.0
  %v3427 = vmax.f32 %v3395, 0.0
  %v3428 = vmax.f32 %v3396, 0.0
  %v3429 = vmax.f32 %v3397, 0.0
  %v3430 = vmax.f32 %v3398, 0.0
  %v3431 = vmax.f32 %v3399, 0.0
  %v3432 = vmax.f32 %v3400, 0.0
  %v3433 = vld [vmem:[%s4] sm:$0xff]
  %v3434 = vld [vmem:[%s4 + $0x8] sm:$0xff]
  %v3435 = vld [vmem:[%s4 + $0x10] sm:$0xff]
  %v3436 = vld [vmem:[%s4 + $0x18] sm:$0xff]
  %v3437 = vld [vmem:[%s4 + $0x20] sm:$0xff]
  %v3438 = vld [vmem:[%s4 + $0x28] sm:$0xff]
  %v3439 = vld [vmem:[%s4 + $0x30] sm:$0xff]
  %v3440 = vld [vmem:[%s4 + $0x38] sm:$0xff]
  %v3441 = vld [vmem:[%s4 + $0x40] sm:$0xff]
  %v3442 = vld [vmem:[%s4 + $0x48] sm:$0xff]
  %v3443 = vld [vmem:[%s4 + $0x50] sm:$0xf]
  %v3444 = vld [vmem:[%s5] sm:$0xff]
  %v3445 = vld [vmem:[%s5 + $0x8] sm:$0xff]
  %v3446 = vld [vmem:[%s5 + $0x10] sm:$0xff]
  %v3447 = vld [vmem:[%s5 + $0x18] sm:$0xff]
  %v3448 = vld [vmem:[%s5 + $0x20] sm:$0xff]
  %v3449 = vld [vmem:[%s5 + $0x28] sm:$0xff]
  %v3450 = vld [vmem:[%s5 + $0x30] sm:$0xff]
  %v3451 = vld [vmem:[%s5 + $0x38] sm:$0xff]
  %v3452 = vld [vmem:[%s5 + $0x40] sm:$0xff]
  %v3453 = vld [vmem:[%s5 + $0x48] sm:$0xff]
  %v3454 = vld [vmem:[%s5 + $0x50] sm:$0xf]
  %v3455 = vld [vmem:[%s4 + $0x54] sm:$0xff]
  %v3456 = vld [vmem:[%s4 + $0x5c] sm:$0xff]
  %v3457 = vld [vmem:[%s4 + $0x64] sm:$0xff]
  %v3458 = vld [vmem:[%s4 + $0x6c] sm:$0xff]
  %v3459 = vld [vmem:[%s4 + $0x74] sm:$0xff]
  %v3460 = vld [vmem:[%s4 + $0x7c] sm:$0xff]
  %v3461 = vld [vmem:[%s4 + $0x84] sm:$0xff]
  %v3462 = vld [vmem:[%s4 + $0x8c] sm:$0xff]
  %v3463 = vld [vmem:[%s4 + $0x94] sm:$0xff]
  %v3464 = vld [vmem:[%s4 + $0x9c] sm:$0xff]
  %v3465 = vld [vmem:[%s4 + $0xa4] sm:$0xf]
  %vm3497 = vcmask 1045504
  %v3498 = vrot.slane %v3401, 2
  %v3499 = vrot.slane %v3402, 2
  %v3500 = vsel %vm3497, %v3498, %v3499
  %v3501 = vrot.slane %v3403, 2
  %v3502 = vsel %vm3497, %v3499, %v3501
  %v3503 = vrot.slane %v3404, 2
  %v3504 = vsel %vm3497, %v3501, %v3503
  %v3505 = vrot.slane %v3405, 2
  %v3506 = vsel %vm3497, %v3503, %v3505
  %v3507 = vrot.slane %v3406, 2
  %v3508 = vsel %vm3497, %v3505, %v3507
  %v3509 = vrot.slane %v3407, 2
  %v3510 = vsel %vm3497, %v3507, %v3509
  %v3511 = vrot.slane %v3408, 2
  %v3512 = vsel %vm3497, %v3509, %v3511
  %v3513 = vrot.slane %v3409, 2
  %v3514 = vsel %vm3497, %v3511, %v3513
  %v3515 = vrot.slane %v3410, 2
  %v3516 = vsel %vm3497, %v3513, %v3515
  %v3517 = vrot.slane %v3411, 2
  %v3518 = vsel %vm3497, %v3515, %v3517
  %v3519 = vrot.slane %v3412, 2
  %v3520 = vsel %vm3497, %v3517, %v3519
  %v3521 = vrot.slane %v3413, 2
  %v3522 = vsel %vm3497, %v3519, %v3521
  %v3523 = vrot.slane %v3414, 2
  %v3524 = vsel %vm3497, %v3521, %v3523
  %v3525 = vrot.slane %v3415, 2
  %v3526 = vsel %vm3497, %v3523, %v3525
  %v3527 = vrot.slane %v3416, 2
  %v3528 = vsel %vm3497, %v3525, %v3527
  %v3529 = vrot.slane %v3417, 2
  %v3530 = vsel %vm3497, %v3527, %v3529
  %v3531 = vrot.slane %v3418, 2
  %v3532 = vsel %vm3497, %v3529, %v3531
  %v3533 = vrot.slane %v3419, 2
  %v3534 = vsel %vm3497, %v3531, %v3533
  %v3535 = vrot.slane %v3420, 2
  %v3536 = vsel %vm3497, %v3533, %v3535
  %v3537 = vrot.slane %v3421, 2
  %v3538 = vsel %vm3497, %v3535, %v3537
  %v3539 = vrot.slane %v3422, 2
  %v3540 = vsel %vm3497, %v3537, %v3539
  %v3541 = vrot.slane %v3423, 2
  %v3542 = vsel %vm3497, %v3539, %v3541
  %v3543 = vrot.slane %v3424, 2
  %v3544 = vsel %vm3497, %v3541, %v3543
  %v3545 = vrot.slane %v3425, 2
  %v3546 = vsel %vm3497, %v3543, %v3545
  %v3547 = vrot.slane %v3426, 2
  %v3548 = vsel %vm3497, %v3545, %v3547
  %v3549 = vrot.slane %v3427, 2
  %v3550 = vsel %vm3497, %v3547, %v3549
  %v3551 = vrot.slane %v3428, 2
  %v3552 = vsel %vm3497, %v3549, %v3551
  %v3553 = vrot.slane %v3429, 2
  %v3554 = vsel %vm3497, %v3551, %v3553
  %v3555 = vrot.slane %v3430, 2
  %v3556 = vsel %vm3497, %v3553, %v3555
  %v3557 = vrot.slane %v3431, 2
  %v3558 = vsel %vm3497, %v3555, %v3557
  %vm3559 = vcmask 687104
  %v3560 = vsel %vm3559, %v3500, 0
  %v3562 = vsel %vm3559, %v3502, 0
  %v3564 = vsel %vm3559, %v3504, 0
  %v3566 = vsel %vm3559, %v3506, 0
  %v3568 = vsel %vm3559, %v3508, 0
  %v3570 = vsel %vm3559, %v3510, 0
  %v3572 = vsel %vm3559, %v3512, 0
  %v3574 = vsel %vm3559, %v3514, 0
  %v3576 = vsel %vm3559, %v3516, 0
  %v3578 = vsel %vm3559, %v3518, 0
  %v3580 = vsel %vm3559, %v3520, 0
  %v3582 = vsel %vm3559, %v3522, 0
  %v3584 = vsel %vm3559, %v3524, 0
  %v3586 = vsel %vm3559, %v3526, 0
  %v3588 = vsel %vm3559, %v3528, 0
  %v3590 = vsel %vm3559, %v3530, 0
  %v3592 = vsel %vm3559, %v3532, 0
  %v3594 = vsel %vm3559, %v3534, 0
  %v3596 = vsel %vm3559, %v3536, 0
  %v3598 = vsel %vm3559, %v3538, 0
  %v3600 = vsel %vm3559, %v3540, 0
  %v3602 = vsel %vm3559, %v3542, 0
  %v3604 = vsel %vm3559, %v3544, 0
  %v3606 = vsel %vm3559, %v3546, 0
  %v3608 = vsel %vm3559, %v3548, 0
  %v3610 = vsel %vm3559, %v3550, 0
  %v3612 = vsel %vm3559, %v3552, 0
  %v3614 = vsel %vm3559, %v3554, 0
  %v3616 = vsel %vm3559, %v3556, 0
  %v3618 = vsel %vm3559, %v3558, 0
  %v3620 = vsel %vm3559, %v3557, 0
  %vm3622 = vcmask 1043456
  %v3624 = vsel %vm3622, %v3465, 0
  %3626 = vmatprep.subr.mxu0 0.0
  %3627 = vmatpush1.msra.mxu0 %v3455
  %3628 = vmatprep.subr.mxu0 0.0
  %3629 = vmatpush1.msra.mxu0 %v3456
  %3630 = vmatprep.subr.mxu0 0.0
  %3631 = vmatpush1.msra.mxu0 %v3457
  %3632 = vmatprep.subr.mxu0 0.0
  %3633 = vmatpush1.msra.mxu0 %v3458
  %3634 = vmatprep.subr.mxu0 0.0
  %3635 = vmatpush1.msra.mxu0 %v3459
  %3636 = vmatprep.subr.mxu0 0.0
  %3637 = vmatpush1.msra.mxu0 %v3460
  %3638 = vmatprep.subr.mxu0 0.0
  %3639 = vmatpush1.msra.mxu0 %v3461
  %3640 = vmatprep.subr.mxu0 0.0
  %3641 = vmatpush1.msra.mxu0 %v3462
  %3642 = vmatprep.subr.mxu0 0.0
  %3643 = vmatpush1.msra.mxu0 %v3463
  %3644 = vmatprep.subr.mxu0 0.0
  %3645 = vmatpush1.msra.mxu0 %v3464
  %3646 = vmatprep.subr.mxu0 0.0
  %3647 = vmatpush1.msra.mxu0 %v3624
  %3648 = vmatprep.subr.mxu0 0.0
  %3649 = vmatpush1.msra.mxu0 0.0
  %3650 = vmatprep.subr.mxu0 0.0
  %3651 = vmatpush1.msra.mxu0 0.0
  %3652 = vmatprep.subr.mxu0 0.0
  %3653 = vmatpush1.msra.mxu0 0.0
  %3654 = vmatprep.subr.mxu0 0.0
  %3655 = vmatpush1.msra.mxu0 0.0
  %3656 = vmatprep.subr.mxu0 0.0
  %3657 = vmatpush1.msra.mxu0 0.0
  %3658 = vmatprep.subr.mxu0 0.0
  %3659 = vmatpush1.msra.mxu0 0.0
  %3660 = vmatprep.subr.mxu0 0.0
  %3661 = vmatpush1.msra.mxu0 0.0
  %3662 = vmatprep.subr.mxu0 0.0
  %3663 = vmatpush1.msra.mxu0 0.0
  %3664 = vmatprep.subr.mxu0 0.0
  %3665 = vmatpush1.msra.mxu0 0.0
  %3666 = vmatprep.subr.mxu0 0.0
  %3667 = vmatpush1.msra.mxu0 0.0
  %3668 = vmatprep.subr.mxu0 0.0
  %3669 = vmatpush1.msra.mxu0 0.0
  %3670 = vmatprep.subr.mxu0 0.0
  %3671 = vmatpush1.msra.mxu0 0.0
  %3672 = vmatprep.subr.mxu0 0.0
  %3673 = vmatpush1.msra.mxu0 0.0
  %3674 = vmatprep.subr.mxu0 0.0
  %3675 = vmatpush1.msra.mxu0 0.0
  %3676 = vmatprep.subr.mxu0 0.0
  %3677 = vmatpush1.msra.mxu0 0.0
  %3678 = vmatprep.subr.mxu0 0.0
  %3679 = vmatpush1.msra.mxu0 0.0
  %3680 = vmatprep.subr.mxu0 0.0
  %3681 = vmatpush1.msra.mxu0 0.0
  %3682 = vmatprep.subr.mxu0 0.0
  %3683 = vmatpush1.msra.mxu0 0.0
  %3684 = vmatprep.subr.mxu0 0.0
  %3685 = vmatpush1.msra.mxu0 0.0
  %3686 = vmatprep.subr.mxu0 0.0
  %3687 = vmatpush1.msra.mxu0 0.0
  %3688 = vmatprep.subr.mxu0 0.0
  %3689 = vmatpush1.msra.mxu0 0.0
  %3690 = vmatprep.mubr.f32.mxu0 0.0
  %3691 = vmatmul.mubr.f32.gmra.mrb[0].mxu0 %v3560
  %v3692 = vpop.f32.mrb[0].mxu0
  %v3693 = vadd.f32 0.0, %v3692
  %v3694 = vpop.f32.mrb[0].mxu0
  %3695 = vmatprep.mubr.f32.mxu0 0.0
  %3696 = vmatmul.mubr.f32.gmra.mrb[0].mxu0 %v3562
  %v3697 = vpop.f32.mrb[0].mxu0
  %v3698 = vadd.f32 0.0, %v3697
  %v3699 = vpop.f32.mrb[0].mxu0
  %3700 = vmatprep.mubr.f32.mxu0 0.0
  %3701 = vmatmul.mubr.f32.gmra.mrb[0].mxu0 %v3564
  %v3702 = vpop.f32.mrb[0].mxu0
  %v3703 = vadd.f32 0.0, %v3702
  %v3704 = vpop.f32.mrb[0].mxu0
  %3705 = vmatprep.mubr.f32.mxu0 0.0
  %3706 = vmatmul.mubr.f32.gmra.mrb[0].mxu0 %v3566
  %v3707 = vpop.f32.mrb[0].mxu0
  %v3708 = vadd.f32 0.0, %v3707
  %v3709 = vpop.f32.mrb[0].mxu0
  %3710 = vmatprep.mubr.f32.mxu0 0.0
  %3711 = vmatmul.mubr.f32.gmra.mrb[0].mxu0 %v3568
  %v3712 = vpop.f32.mrb[0].mxu0
  %v3713 = vadd.f32 0.0, %v3712
  %v3714 = vpop.f32.mrb[0].mxu0
  %3715 = vmatprep.mubr.f32.mxu0 0.0
  %3716 = vmatmul.mubr.f32.gmra.mrb[0].mxu0 %v3570
  %v3717 = vpop.f32.mrb[0].mxu0
  %v3718 = vadd.f32 0.0, %v3717
  %v3719 = vpop.f32.mrb[0].mxu0
  %3720 = vmatprep.mubr.f32.mxu0 0.0
  %3721 = vmatmul.mubr.f32.gmra.mrb[0].mxu0 %v3572
  %v3722 = vpop.f32.mrb[0].mxu0
  %v3723 = vadd.f32 0.0, %v3722
  %v3724 = vpop.f32.mrb[0].mxu0
  %3725 = vmatprep.mubr.f32.mxu0 0.0
  %3726 = vmatmul.mubr.f32.gmra.mrb[0].mxu0 %v3574
  %v3727 = vpop.f32.mrb[0].mxu0
  %v3728 = vadd.f32 0.0, %v3727
  %v3729 = vpop.f32.mrb[0].mxu0
  %3730 = vmatprep.mubr.f32.mxu0 0.0
  %3731 = vmatmul.mubr.f32.gmra.mrb[0].mxu0 %v3576
  %v3732 = vpop.f32.mrb[0].mxu0
  %v3733 = vadd.f32 0.0, %v3732
  %v3734 = vpop.f32.mrb[0].mxu0
  %3735 = vmatprep.mubr.f32.mxu0 0.0
  %3736 = vmatmul.mubr.f32.gmra.mrb[0].mxu0 %v3578
  %v3737 = vpop.f32.mrb[0].mxu0
  %v3738 = vadd.f32 0.0, %v3737
  %v3739 = vpop.f32.mrb[0].mxu0
  %3740 = vmatprep.mubr.f32.mxu0 0.0
  %3741 = vmatmul.mubr.f32.gmra.mrb[0].mxu0 %v3580
  %v3742 = vpop.f32.mrb[0].mxu0
  %v3743 = vadd.f32 0.0, %v3742
  %v3744 = vpop.f32.mrb[0].mxu0
  %3745 = vmatprep.mubr.f32.mxu0 0.0
  %3746 = vmatmul.mubr.f32.gmra.mrb[0].mxu0 %v3582
  %v3747 = vpop.f32.mrb[0].mxu0
  %v3748 = vadd.f32 0.0, %v3747
  %v3749 = vpop.f32.mrb[0].mxu0
  %3750 = vmatprep.mubr.f32.mxu0 0.0
  %3751 = vmatmul.mubr.f32.gmra.mrb[0].mxu0 %v3584
  %v3752 = vpop.f32.mrb[0].mxu0
  %v3753 = vadd.f32 0.0, %v3752
  %v3754 = vpop.f32.mrb[0].mxu0
  %3755 = vmatprep.mubr.f32.mxu0 0.0
  %3756 = vmatmul.mubr.f32.gmra.mrb[0].mxu0 %v3586
  %v3757 = vpop.f32.mrb[0].mxu0
  %v3758 = vadd.f32 0.0, %v3757
  %v3759 = vpop.f32.mrb[0].mxu0
  %3760 = vmatprep.mubr.f32.mxu0 0.0
  %3761 = vmatmul.mubr.f32.gmra.mrb[0].mxu0 %v3588
  %v3762 = vpop.f32.mrb[0].mxu0
  %v3763 = vadd.f32 0.0, %v3762
  %v3764 = vpop.f32.mrb[0].mxu0
  %3765 = vmatprep.mubr.f32.mxu0 0.0
  %3766 = vmatmul.mubr.f32.gmra.mrb[0].mxu0 %v3590
  %v3767 = vpop.f32.mrb[0].mxu0
  %v3768 = vadd.f32 0.0, %v3767
  %v3769 = vpop.f32.mrb[0].mxu0
  %3770 = vmatprep.mubr.f32.mxu0 0.0
  %3771 = vmatmul.mubr.f32.gmra.mrb[0].mxu0 %v3592
  %v3772 = vpop.f32.mrb[0].mxu0
  %v3773 = vadd.f32 0.0, %v3772
  %v3774 = vpop.f32.mrb[0].mxu0
  %3775 = vmatprep.mubr.f32.mxu0 0.0
  %3776 = vmatmul.mubr.f32.gmra.mrb[0].mxu0 %v3594
  %v3777 = vpop.f32.mrb[0].mxu0
  %v3778 = vadd.f32 0.0, %v3777
  %v3779 = vpop.f32.mrb[0].mxu0
  %3780 = vmatprep.mubr.f32.mxu0 0.0
  %3781 = vmatmul.mubr.f32.gmra.mrb[0].mxu0 %v3596
  %v3782 = vpop.f32.mrb[0].mxu0
  %v3783 = vadd.f32 0.0, %v3782
  %v3784 = vpop.f32.mrb[0].mxu0
  %3785 = vmatprep.mubr.f32.mxu0 0.0
  %3786 = vmatmul.mubr.f32.gmra.mrb[0].mxu0 %v3598
  %v3787 = vpop.f32.mrb[0].mxu0
  %v3788 = vadd.f32 0.0, %v3787
  %v3789 = vpop.f32.mrb[0].mxu0
  %3790 = vmatprep.mubr.f32.mxu0 0.0
  %3791 = vmatmul.mubr.f32.gmra.mrb[0].mxu0 %v3600
  %v3792 = vpop.f32.mrb[0].mxu0
  %v3793 = vadd.f32 0.0, %v3792
  %v3794 = vpop.f32.mrb[0].mxu0
  %3795 = vmatprep.mubr.f32.mxu0 0.0
  %3796 = vmatmul.mubr.f32.gmra.mrb[0].mxu0 %v3602
  %v3797 = vpop.f32.mrb[0].mxu0
  %v3798 = vadd.f32 0.0, %v3797
  %v3799 = vpop.f32.mrb[0].mxu0
  %3800 = vmatprep.mubr.f32.mxu0 0.0
  %3801 = vmatmul.mubr.f32.gmra.mrb[0].mxu0 %v3604
  %v3802 = vpop.f32.mrb[0].mxu0
  %v3803 = vadd.f32 0.0, %v3802
  %v3804 = vpop.f32.mrb[0].mxu0
  %3805 = vmatprep.mubr.f32.mxu0 0.0
  %3806 = vmatmul.mubr.f32.gmra.mrb[0].mxu0 %v3606
  %v3807 = vpop.f32.mrb[0].mxu0
  %v3808 = vadd.f32 0.0, %v3807
  %v3809 = vpop.f32.mrb[0].mxu0
  %3810 = vmatprep.mubr.f32.mxu0 0.0
  %3811 = vmatmul.mubr.f32.gmra.mrb[0].mxu0 %v3608
  %v3812 = vpop.f32.mrb[0].mxu0
  %v3813 = vadd.f32 0.0, %v3812
  %v3814 = vpop.f32.mrb[0].mxu0
  %3815 = vmatprep.mubr.f32.mxu0 0.0
  %3816 = vmatmul.mubr.f32.gmra.mrb[0].mxu0 %v3610
  %v3817 = vpop.f32.mrb[0].mxu0
  %v3818 = vadd.f32 0.0, %v3817
  %v3819 = vpop.f32.mrb[0].mxu0
  %3820 = vmatprep.mubr.f32.mxu0 0.0
  %3821 = vmatmul.mubr.f32.gmra.mrb[0].mxu0 %v3612
  %v3822 = vpop.f32.mrb[0].mxu0
  %v3823 = vadd.f32 0.0, %v3822
  %v3824 = vpop.f32.mrb[0].mxu0
  %3825 = vmatprep.mubr.f32.mxu0 0.0
  %3826 = vmatmul.mubr.f32.gmra.mrb[0].mxu0 %v3614
  %v3827 = vpop.f32.mrb[0].mxu0
  %v3828 = vadd.f32 0.0, %v3827
  %v3829 = vpop.f32.mrb[0].mxu0
  %3830 = vmatprep.mubr.f32.mxu0 0.0
  %3831 = vmatmul.mubr.f32.gmra.mrb[0].mxu0 %v3616
  %v3832 = vpop.f32.mrb[0].mxu0
  %v3833 = vadd.f32 0.0, %v3832
  %v3834 = vpop.f32.mrb[0].mxu0
  %3835 = vmatprep.mubr.f32.mxu0 0.0
  %3836 = vmatmul.mubr.f32.gmra.mrb[0].mxu0 %v3618
  %v3837 = vpop.f32.mrb[0].mxu0
  %v3838 = vadd.f32 0.0, %v3837
  %v3839 = vpop.f32.mrb[0].mxu0
  %3840 = vmatprep.mubr.f32.mxu0 0.0
  %3841 = vmatmul.mubr.f32.gmra.mrb[0].mxu0 %v3620
  %v3842 = vpop.f32.mrb[0].mxu0
  %v3843 = vadd.f32 0.0, %v3842
  %v3844 = vpop.f32.mrb[0].mxu0
  %3845 = vdwg.mxu0
  %v3846 = vld [vmem:[%s5 + $0x54] sm:$0xff]
  %v3847 = vld [vmem:[%s5 + $0x5c] sm:$0xff]
  %v3848 = vld [vmem:[%s5 + $0x64] sm:$0xff]
  %v3849 = vld [vmem:[%s5 + $0x6c] sm:$0xff]
  %v3850 = vld [vmem:[%s5 + $0x74] sm:$0xff]
  %v3851 = vld [vmem:[%s5 + $0x7c] sm:$0xff]
  %v3852 = vld [vmem:[%s5 + $0x84] sm:$0xff]
  %v3853 = vld [vmem:[%s5 + $0x8c] sm:$0xff]
  %v3854 = vld [vmem:[%s5 + $0x94] sm:$0xff]
  %v3855 = vld [vmem:[%s5 + $0x9c] sm:$0xff]
  %v3856 = vld [vmem:[%s5 + $0xa4] sm:$0xf]
  %v3858 = vsel %vm3622, %v3856, 0
  %3860 = vmatprep.subr.mxu0 0.0
  %3861 = vmatpush1.msra.mxu0 %v3846
  %3862 = vmatprep.subr.mxu0 0.0
  %3863 = vmatpush1.msra.mxu0 %v3847
  %3864 = vmatprep.subr.mxu0 0.0
  %3865 = vmatpush1.msra.mxu0 %v3848
  %3866 = vmatprep.subr.mxu0 0.0
  %3867 = vmatpush1.msra.mxu0 %v3849
  %3868 = vmatprep.subr.mxu0 0.0
  %3869 = vmatpush1.msra.mxu0 %v3850
  %3870 = vmatprep.subr.mxu0 0.0
  %3871 = vmatpush1.msra.mxu0 %v3851
  %3872 = vmatprep.subr.mxu0 0.0
  %3873 = vmatpush1.msra.mxu0 %v3852
  %3874 = vmatprep.subr.mxu0 0.0
  %3875 = vmatpush1.msra.mxu0 %v3853
  %3876 = vmatprep.subr.mxu0 0.0
  %3877 = vmatpush1.msra.mxu0 %v3854
  %3878 = vmatprep.subr.mxu0 0.0
  %3879 = vmatpush1.msra.mxu0 %v3855
  %3880 = vmatprep.subr.mxu0 0.0
  %3881 = vmatpush1.msra.mxu0 %v3858
  %3882 = vmatprep.subr.mxu0 0.0
  %3883 = vmatpush1.msra.mxu0 0.0
  %3884 = vmatprep.subr.mxu0 0.0
  %3885 = vmatpush1.msra.mxu0 0.0
  %3886 = vmatprep.subr.mxu0 0.0
  %3887 = vmatpush1.msra.mxu0 0.0
  %3888 = vmatprep.subr.mxu0 0.0
  %3889 = vmatpush1.msra.mxu0 0.0
  %3890 = vmatprep.subr.mxu0 0.0
  %3891 = vmatpush1.msra.mxu0 0.0
  %3892 = vmatprep.subr.mxu0 0.0
  %3893 = vmatpush1.msra.mxu0 0.0
  %3894 = vmatprep.subr.mxu0 0.0
  %3895 = vmatpush1.msra.mxu0 0.0
  %3896 = vmatprep.subr.mxu0 0.0
  %3897 = vmatpush1.msra.mxu0 0.0
  %3898 = vmatprep.subr.mxu0 0.0
  %3899 = vmatpush1.msra.mxu0 0.0
  %3900 = vmatprep.subr.mxu0 0.0
  %3901 = vmatpush1.msra.mxu0 0.0
  %3902 = vmatprep.subr.mxu0 0.0
  %3903 = vmatpush1.msra.mxu0 0.0
  %3904 = vmatprep.subr.mxu0 0.0
  %3905 = vmatpush1.msra.mxu0 0.0
  %3906 = vmatprep.subr.mxu0 0.0
  %3907 = vmatpush1.msra.mxu0 0.0
  %3908 = vmatprep.subr.mxu0 0.0
  %3909 = vmatpush1.msra.mxu0 0.0
  %3910 = vmatprep.subr.mxu0 0.0
  %3911 = vmatpush1.msra.mxu0 0.0
  %3912 = vmatprep.subr.mxu0 0.0
  %3913 = vmatpush1.msra.mxu0 0.0
  %3914 = vmatprep.subr.mxu0 0.0
  %3915 = vmatpush1.msra.mxu0 0.0
  %3916 = vmatprep.subr.mxu0 0.0
  %3917 = vmatpush1.msra.mxu0 0.0
  %3918 = vmatprep.subr.mxu0 0.0
  %3919 = vmatpush1.msra.mxu0 0.0
  %3920 = vmatprep.subr.mxu0 0.0
  %3921 = vmatpush1.msra.mxu0 0.0
  %3922 = vmatprep.subr.mxu0 0.0
  %3923 = vmatpush1.msra.mxu0 0.0
  %3924 = vmatprep.mubr.f32.mxu0 0.0
  %3925 = vmatmul.mubr.f32.gmra.mrb[0].mxu0 %v3560
  %v3926 = vpop.f32.mrb[0].mxu0
  %v3927 = vadd.f32 0.0, %v3926
  %v3928 = vpop.f32.mrb[0].mxu0
  %3929 = vmatprep.mubr.f32.mxu0 0.0
  %3930 = vmatmul.mubr.f32.gmra.mrb[0].mxu0 %v3562
  %v3931 = vpop.f32.mrb[0].mxu0
  %v3932 = vadd.f32 0.0, %v3931
  %v3933 = vpop.f32.mrb[0].mxu0
  %3934 = vmatprep.mubr.f32.mxu0 0.0
  %3935 = vmatmul.mubr.f32.gmra.mrb[0].mxu0 %v3564
  %v3936 = vpop.f32.mrb[0].mxu0
  %v3937 = vadd.f32 0.0, %v3936
  %v3938 = vpop.f32.mrb[0].mxu0
  %3939 = vmatprep.mubr.f32.mxu0 0.0
  %3940 = vmatmul.mubr.f32.gmra.mrb[0].mxu0 %v3566
  %v3941 = vpop.f32.mrb[0].mxu0
  %v3942 = vadd.f32 0.0, %v3941
  %v3943 = vpop.f32.mrb[0].mxu0
  %3944 = vmatprep.mubr.f32.mxu0 0.0
  %3945 = vmatmul.mubr.f32.gmra.mrb[0].mxu0 %v3568
  %v3946 = vpop.f32.mrb[0].mxu0
  %v3947 = vadd.f32 0.0, %v3946
  %v3948 = vpop.f32.mrb[0].mxu0
  %3949 = vmatprep.mubr.f32.mxu0 0.0
  %3950 = vmatmul.mubr.f32.gmra.mrb[0].mxu0 %v3570
  %v3951 = vpop.f32.mrb[0].mxu0
  %v3952 = vadd.f32 0.0, %v3951
  %v3953 = vpop.f32.mrb[0].mxu0
  %3954 = vmatprep.mubr.f32.mxu0 0.0
  %3955 = vmatmul.mubr.f32.gmra.mrb[0].mxu0 %v3572
  %v3956 = vpop.f32.mrb[0].mxu0
  %v3957 = vadd.f32 0.0, %v3956
  %v3958 = vpop.f32.mrb[0].mxu0
  %3959 = vmatprep.mubr.f32.mxu0 0.0
  %3960 = vmatmul.mubr.f32.gmra.mrb[0].mxu0 %v3574
  %v3961 = vpop.f32.mrb[0].mxu0
  %v3962 = vadd.f32 0.0, %v3961
  %v3963 = vpop.f32.mrb[0].mxu0
  %3964 = vmatprep.mubr.f32.mxu0 0.0
  %3965 = vmatmul.mubr.f32.gmra.mrb[0].mxu0 %v3576
  %v3966 = vpop.f32.mrb[0].mxu0
  %v3967 = vadd.f32 0.0, %v3966
  %v3968 = vpop.f32.mrb[0].mxu0
  %3969 = vmatprep.mubr.f32.mxu0 0.0
  %3970 = vmatmul.mubr.f32.gmra.mrb[0].mxu0 %v3578
  %v3971 = vpop.f32.mrb[0].mxu0
  %v3972 = vadd.f32 0.0, %v3971
  %v3973 = vpop.f32.mrb[0].mxu0
  %3974 = vmatprep.mubr.f32.mxu0 0.0
  %3975 = vmatmul.mubr.f32.gmra.mrb[0].mxu0 %v3580
  %v3976 = vpop.f32.mrb[0].mxu0
  %v3977 = vadd.f32 0.0, %v3976
  %v3978 = vpop.f32.mrb[0].mxu0
  %3979 = vmatprep.mubr.f32.mxu0 0.0
  %3980 = vmatmul.mubr.f32.gmra.mrb[0].mxu0 %v3582
  %v3981 = vpop.f32.mrb[0].mxu0
  %v3982 = vadd.f32 0.0, %v3981
  %v3983 = vpop.f32.mrb[0].mxu0
  %3984 = vmatprep.mubr.f32.mxu0 0.0
  %3985 = vmatmul.mubr.f32.gmra.mrb[0].mxu0 %v3584
  %v3986 = vpop.f32.mrb[0].mxu0
  %v3987 = vadd.f32 0.0, %v3986
  %v3988 = vpop.f32.mrb[0].mxu0
  %3989 = vmatprep.mubr.f32.mxu0 0.0
  %3990 = vmatmul.mubr.f32.gmra.mrb[0].mxu0 %v3586
  %v3991 = vpop.f32.mrb[0].mxu0
  %v3992 = vadd.f32 0.0, %v3991
  %v3993 = vpop.f32.mrb[0].mxu0
  %3994 = vmatprep.mubr.f32.mxu0 0.0
  %3995 = vmatmul.mubr.f32.gmra.mrb[0].mxu0 %v3588
  %v3996 = vpop.f32.mrb[0].mxu0
  %v3997 = vadd.f32 0.0, %v3996
  %v3998 = vpop.f32.mrb[0].mxu0
  %3999 = vmatprep.mubr.f32.mxu0 0.0
  %4000 = vmatmul.mubr.f32.gmra.mrb[0].mxu0 %v3590
  %v4001 = vpop.f32.mrb[0].mxu0
  %v4002 = vadd.f32 0.0, %v4001
  %v4003 = vpop.f32.mrb[0].mxu0
  %4004 = vmatprep.mubr.f32.mxu0 0.0
  %4005 = vmatmul.mubr.f32.gmra.mrb[0].mxu0 %v3592
  %v4006 = vpop.f32.mrb[0].mxu0
  %v4007 = vadd.f32 0.0, %v4006
  %v4008 = vpop.f32.mrb[0].mxu0
  %4009 = vmatprep.mubr.f32.mxu0 0.0
  %4010 = vmatmul.mubr.f32.gmra.mrb[0].mxu0 %v3594
  %v4011 = vpop.f32.mrb[0].mxu0
  %v4012 = vadd.f32 0.0, %v4011
  %v4013 = vpop.f32.mrb[0].mxu0
  %4014 = vmatprep.mubr.f32.mxu0 0.0
  %4015 = vmatmul.mubr.f32.gmra.mrb[0].mxu0 %v3596
  %v4016 = vpop.f32.mrb[0].mxu0
  %v4017 = vadd.f32 0.0, %v4016
  %v4018 = vpop.f32.mrb[0].mxu0
  %4019 = vmatprep.mubr.f32.mxu0 0.0
  %4020 = vmatmul.mubr.f32.gmra.mrb[0].mxu0 %v3598
  %v4021 = vpop.f32.mrb[0].mxu0
  %v4022 = vadd.f32 0.0, %v4021
  %v4023 = vpop.f32.mrb[0].mxu0
  %4024 = vmatprep.mubr.f32.mxu0 0.0
  %4025 = vmatmul.mubr.f32.gmra.mrb[0].mxu0 %v3600
  %v4026 = vpop.f32.mrb[0].mxu0
  %v4027 = vadd.f32 0.0, %v4026
  %v4028 = vpop.f32.mrb[0].mxu0
  %4029 = vmatprep.mubr.f32.mxu0 0.0
  %4030 = vmatmul.mubr.f32.gmra.mrb[0].mxu0 %v3602
  %v4031 = vpop.f32.mrb[0].mxu0
  %v4032 = vadd.f32 0.0, %v4031
  %v4033 = vpop.f32.mrb[0].mxu0
  %4034 = vmatprep.mubr.f32.mxu0 0.0
  %4035 = vmatmul.mubr.f32.gmra.mrb[0].mxu0 %v3604
  %v4036 = vpop.f32.mrb[0].mxu0
  %v4037 = vadd.f32 0.0, %v4036
  %v4038 = vpop.f32.mrb[0].mxu0
  %4039 = vmatprep.mubr.f32.mxu0 0.0
  %4040 = vmatmul.mubr.f32.gmra.mrb[0].mxu0 %v3606
  %v4041 = vpop.f32.mrb[0].mxu0
  %v4042 = vadd.f32 0.0, %v4041
  %v4043 = vpop.f32.mrb[0].mxu0
  %4044 = vmatprep.mubr.f32.mxu0 0.0
  %4045 = vmatmul.mubr.f32.gmra.mrb[0].mxu0 %v3608
  %v4046 = vpop.f32.mrb[0].mxu0
  %v4047 = vadd.f32 0.0, %v4046
  %v4048 = vpop.f32.mrb[0].mxu0
  %4049 = vmatprep.mubr.f32.mxu0 0.0
  %4050 = vmatmul.mubr.f32.gmra.mrb[0].mxu0 %v3610
  %v4051 = vpop.f32.mrb[0].mxu0
  %v4052 = vadd.f32 0.0, %v4051
  %v4053 = vpop.f32.mrb[0].mxu0
  %4054 = vmatprep.mubr.f32.mxu0 0.0
  %4055 = vmatmul.mubr.f32.gmra.mrb[0].mxu0 %v3612
  %v4056 = vpop.f32.mrb[0].mxu0
  %v4057 = vadd.f32 0.0, %v4056
  %v4058 = vpop.f32.mrb[0].mxu0
  %4059 = vmatprep.mubr.f32.mxu0 0.0
  %4060 = vmatmul.mubr.f32.gmra.mrb[0].mxu0 %v3614
  %v4061 = vpop.f32.mrb[0].mxu0
  %v4062 = vadd.f32 0.0, %v4061
  %v4063 = vpop.f32.mrb[0].mxu0
  %4064 = vmatprep.mubr.f32.mxu0 0.0
  %4065 = vmatmul.mubr.f32.gmra.mrb[0].mxu0 %v3616
  %v4066 = vpop.f32.mrb[0].mxu0
  %v4067 = vadd.f32 0.0, %v4066
  %v4068 = vpop.f32.mrb[0].mxu0
  %4069 = vmatprep.mubr.f32.mxu0 0.0
  %4070 = vmatmul.mubr.f32.gmra.mrb[0].mxu0 %v3618
  %v4071 = vpop.f32.mrb[0].mxu0
  %v4072 = vadd.f32 0.0, %v4071
  %v4073 = vpop.f32.mrb[0].mxu0
  %4074 = vmatprep.mubr.f32.mxu0 0.0
  %4075 = vmatmul.mubr.f32.gmra.mrb[0].mxu0 %v3620
  %v4076 = vpop.f32.mrb[0].mxu0
  %v4077 = vadd.f32 0.0, %v4076
  %v4078 = vpop.f32.mrb[0].mxu0
  %4079 = vdwg.mxu0
  %v4080 = vsel %vm3559, %v3401, 0
  %v4082 = vsel %vm3559, %v3402, 0
  %v4084 = vsel %vm3559, %v3403, 0
  %v4086 = vsel %vm3559, %v3404, 0
  %v4088 = vsel %vm3559, %v3405, 0
  %v4090 = vsel %vm3559, %v3406, 0
  %v4092 = vsel %vm3559, %v3407, 0
  %v4094 = vsel %vm3559, %v3408, 0
  %v4096 = vsel %vm3559, %v3409, 0
  %v4098 = vsel %vm3559, %v3410, 0
  %v4100 = vsel %vm3559, %v3411, 0
  %v4102 = vsel %vm3559, %v3412, 0
  %v4104 = vsel %vm3559, %v3413, 0
  %v4106 = vsel %vm3559, %v3414, 0
  %v4108 = vsel %vm3559, %v3415, 0
  %v4110 = vsel %vm3559, %v3416, 0
  %v4112 = vsel %vm3559, %v3417, 0
  %v4114 = vsel %vm3559, %v3418, 0
  %v4116 = vsel %vm3559, %v3419, 0
  %v4118 = vsel %vm3559, %v3420, 0
  %v4120 = vsel %vm3559, %v3421, 0
  %v4122 = vsel %vm3559, %v3422, 0
  %v4124 = vsel %vm3559, %v3423, 0
  %v4126 = vsel %vm3559, %v3424, 0
  %v4128 = vsel %vm3559, %v3425, 0
  %v4130 = vsel %vm3559, %v3426, 0
  %v4132 = vsel %vm3559, %v3427, 0
  %v4134 = vsel %vm3559, %v3428, 0
  %v4136 = vsel %vm3559, %v3429, 0
  %v4138 = vsel %vm3559, %v3430, 0
  %v4140 = vsel %vm3559, %v3431, 0
  %v4143 = vsel %vm3622, %v3443, 0
  %4145 = vmatprep.subr.mxu0 0.0
  %4146 = vmatpush1.msra.mxu0 %v3433
  %4147 = vmatprep.subr.mxu0 0.0
  %4148 = vmatpush1.msra.mxu0 %v3434
  %4149 = vmatprep.subr.mxu0 0.0
  %4150 = vmatpush1.msra.mxu0 %v3435
  %4151 = vmatprep.subr.mxu0 0.0
  %4152 = vmatpush1.msra.mxu0 %v3436
  %4153 = vmatprep.subr.mxu0 0.0
  %4154 = vmatpush1.msra.mxu0 %v3437
  %4155 = vmatprep.subr.mxu0 0.0
  %4156 = vmatpush1.msra.mxu0 %v3438
  %4157 = vmatprep.subr.mxu0 0.0
  %4158 = vmatpush1.msra.mxu0 %v3439
  %4159 = vmatprep.subr.mxu0 0.0
  %4160 = vmatpush1.msra.mxu0 %v3440
  %4161 = vmatprep.subr.mxu0 0.0
  %4162 = vmatpush1.msra.mxu0 %v3441
  %4163 = vmatprep.subr.mxu0 0.0
  %4164 = vmatpush1.msra.mxu0 %v3442
  %4165 = vmatprep.subr.mxu0 0.0
  %4166 = vmatpush1.msra.mxu0 %v4143
  %4167 = vmatprep.subr.mxu0 0.0
  %4168 = vmatpush1.msra.mxu0 0.0
  %4169 = vmatprep.subr.mxu0 0.0
  %4170 = vmatpush1.msra.mxu0 0.0
  %4171 = vmatprep.subr.mxu0 0.0
  %4172 = vmatpush1.msra.mxu0 0.0
  %4173 = vmatprep.subr.mxu0 0.0
  %4174 = vmatpush1.msra.mxu0 0.0
  %4175 = vmatprep.subr.mxu0 0.0
  %4176 = vmatpush1.msra.mxu0 0.0
  %4177 = vmatprep.subr.mxu0 0.0
  %4178 = vmatpush1.msra.mxu0 0.0
  %4179 = vmatprep.subr.mxu0 0.0
  %4180 = vmatpush1.msra.mxu0 0.0
  %4181 = vmatprep.subr.mxu0 0.0
  %4182 = vmatpush1.msra.mxu0 0.0
  %4183 = vmatprep.subr.mxu0 0.0
  %4184 = vmatpush1.msra.mxu0 0.0
  %4185 = vmatprep.subr.mxu0 0.0
  %4186 = vmatpush1.msra.mxu0 0.0
  %4187 = vmatprep.subr.mxu0 0.0
  %4188 = vmatpush1.msra.mxu0 0.0
  %4189 = vmatprep.subr.mxu0 0.0
  %4190 = vmatpush1.msra.mxu0 0.0
  %4191 = vmatprep.subr.mxu0 0.0
  %4192 = vmatpush1.msra.mxu0 0.0
  %4193 = vmatprep.subr.mxu0 0.0
  %4194 = vmatpush1.msra.mxu0 0.0
  %4195 = vmatprep.subr.mxu0 0.0
  %4196 = vmatpush1.msra.mxu0 0.0
  %4197 = vmatprep.subr.mxu0 0.0
  %4198 = vmatpush1.msra.mxu0 0.0
  %4199 = vmatprep.subr.mxu0 0.0
  %4200 = vmatpush1.msra.mxu0 0.0
  %4201 = vmatprep.subr.mxu0 0.0
  %4202 = vmatpush1.msra.mxu0 0.0
  %4203 = vmatprep.subr.mxu0 0.0
  %4204 = vmatpush1.msra.mxu0 0.0
  %4205 = vmatprep.subr.mxu0 0.0
  %4206 = vmatpush1.msra.mxu0 0.0
  %4207 = vmatprep.subr.mxu0 0.0
  %4208 = vmatpush1.msra.mxu0 0.0
  %4209 = vmatprep.mubr.f32.mxu0 0.0
  %4210 = vmatmul.mubr.f32.gmra.mrb[0].mxu0 %v4080
  %v4211 = vpop.f32.mrb[0].mxu0
  %v4212 = vadd.f32 %v3693, %v4211
  %v4213 = vpop.f32.mrb[0].mxu0
  %4214 = vmatprep.mubr.f32.mxu0 0.0
  %4215 = vmatmul.mubr.f32.gmra.mrb[0].mxu0 %v4082
  %v4216 = vpop.f32.mrb[0].mxu0
  %v4217 = vadd.f32 %v3698, %v4216
  %v4218 = vpop.f32.mrb[0].mxu0
  %4219 = vmatprep.mubr.f32.mxu0 0.0
  %4220 = vmatmul.mubr.f32.gmra.mrb[0].mxu0 %v4084
  %v4221 = vpop.f32.mrb[0].mxu0
  %v4222 = vadd.f32 %v3703, %v4221
  %v4223 = vpop.f32.mrb[0].mxu0
  %4224 = vmatprep.mubr.f32.mxu0 0.0
  %4225 = vmatmul.mubr.f32.gmra.mrb[0].mxu0 %v4086
  %v4226 = vpop.f32.mrb[0].mxu0
  %v4227 = vadd.f32 %v3708, %v4226
  %v4228 = vpop.f32.mrb[0].mxu0
  %4229 = vmatprep.mubr.f32.mxu0 0.0
  %4230 = vmatmul.mubr.f32.gmra.mrb[0].mxu0 %v4088
  %v4231 = vpop.f32.mrb[0].mxu0
  %v4232 = vadd.f32 %v3713, %v4231
  %v4233 = vpop.f32.mrb[0].mxu0
  %4234 = vmatprep.mubr.f32.mxu0 0.0
  %4235 = vmatmul.mubr.f32.gmra.mrb[0].mxu0 %v4090
  %v4236 = vpop.f32.mrb[0].mxu0
  %v4237 = vadd.f32 %v3718, %v4236
  %v4238 = vpop.f32.mrb[0].mxu0
  %4239 = vmatprep.mubr.f32.mxu0 0.0
  %4240 = vmatmul.mubr.f32.gmra.mrb[0].mxu0 %v4092
  %v4241 = vpop.f32.mrb[0].mxu0
  %v4242 = vadd.f32 %v3723, %v4241
  %v4243 = vpop.f32.mrb[0].mxu0
  %4244 = vmatprep.mubr.f32.mxu0 0.0
  %4245 = vmatmul.mubr.f32.gmra.mrb[0].mxu0 %v4094
  %v4246 = vpop.f32.mrb[0].mxu0
  %v4247 = vadd.f32 %v3728, %v4246
  %v4248 = vpop.f32.mrb[0].mxu0
  %4249 = vmatprep.mubr.f32.mxu0 0.0
  %4250 = vmatmul.mubr.f32.gmra.mrb[0].mxu0 %v4096
  %v4251 = vpop.f32.mrb[0].mxu0
  %v4252 = vadd.f32 %v3733, %v4251
  %v4253 = vpop.f32.mrb[0].mxu0
  %4254 = vmatprep.mubr.f32.mxu0 0.0
  %4255 = vmatmul.mubr.f32.gmra.mrb[0].mxu0 %v4098
  %v4256 = vpop.f32.mrb[0].mxu0
  %v4257 = vadd.f32 %v3738, %v4256
  %v4258 = vpop.f32.mrb[0].mxu0
  %4259 = vmatprep.mubr.f32.mxu0 0.0
  %4260 = vmatmul.mubr.f32.gmra.mrb[0].mxu0 %v4100
  %v4261 = vpop.f32.mrb[0].mxu0
  %v4262 = vadd.f32 %v3743, %v4261
  %v4263 = vpop.f32.mrb[0].mxu0
  %4264 = vmatprep.mubr.f32.mxu0 0.0
  %4265 = vmatmul.mubr.f32.gmra.mrb[0].mxu0 %v4102
  %v4266 = vpop.f32.mrb[0].mxu0
  %v4267 = vadd.f32 %v3748, %v4266
  %v4268 = vpop.f32.mrb[0].mxu0
  %4269 = vmatprep.mubr.f32.mxu0 0.0
  %4270 = vmatmul.mubr.f32.gmra.mrb[0].mxu0 %v4104
  %v4271 = vpop.f32.mrb[0].mxu0
  %v4272 = vadd.f32 %v3753, %v4271
  %v4273 = vpop.f32.mrb[0].mxu0
  %4274 = vmatprep.mubr.f32.mxu0 0.0
  %4275 = vmatmul.mubr.f32.gmra.mrb[0].mxu0 %v4106
  %v4276 = vpop.f32.mrb[0].mxu0
  %v4277 = vadd.f32 %v3758, %v4276
  %v4278 = vpop.f32.mrb[0].mxu0
  %4279 = vmatprep.mubr.f32.mxu0 0.0
  %4280 = vmatmul.mubr.f32.gmra.mrb[0].mxu0 %v4108
  %v4281 = vpop.f32.mrb[0].mxu0
  %v4282 = vadd.f32 %v3763, %v4281
  %v4283 = vpop.f32.mrb[0].mxu0
  %4284 = vmatprep.mubr.f32.mxu0 0.0
  %4285 = vmatmul.mubr.f32.gmra.mrb[0].mxu0 %v4110
  %v4286 = vpop.f32.mrb[0].mxu0
  %v4287 = vadd.f32 %v3768, %v4286
  %v4288 = vpop.f32.mrb[0].mxu0
  %4289 = vmatprep.mubr.f32.mxu0 0.0
  %4290 = vmatmul.mubr.f32.gmra.mrb[0].mxu0 %v4112
  %v4291 = vpop.f32.mrb[0].mxu0
  %v4292 = vadd.f32 %v3773, %v4291
  %v4293 = vpop.f32.mrb[0].mxu0
  %4294 = vmatprep.mubr.f32.mxu0 0.0
  %4295 = vmatmul.mubr.f32.gmra.mrb[0].mxu0 %v4114
  %v4296 = vpop.f32.mrb[0].mxu0
  %v4297 = vadd.f32 %v3778, %v4296
  %v4298 = vpop.f32.mrb[0].mxu0
  %4299 = vmatprep.mubr.f32.mxu0 0.0
  %4300 = vmatmul.mubr.f32.gmra.mrb[0].mxu0 %v4116
  %v4301 = vpop.f32.mrb[0].mxu0
  %v4302 = vadd.f32 %v3783, %v4301
  %v4303 = vpop.f32.mrb[0].mxu0
  %4304 = vmatprep.mubr.f32.mxu0 0.0
  %4305 = vmatmul.mubr.f32.gmra.mrb[0].mxu0 %v4118
  %v4306 = vpop.f32.mrb[0].mxu0
  %v4307 = vadd.f32 %v3788, %v4306
  %v4308 = vpop.f32.mrb[0].mxu0
  %4309 = vmatprep.mubr.f32.mxu0 0.0
  %4310 = vmatmul.mubr.f32.gmra.mrb[0].mxu0 %v4120
  %v4311 = vpop.f32.mrb[0].mxu0
  %v4312 = vadd.f32 %v3793, %v4311
  %v4313 = vpop.f32.mrb[0].mxu0
  %4314 = vmatprep.mubr.f32.mxu0 0.0
  %4315 = vmatmul.mubr.f32.gmra.mrb[0].mxu0 %v4122
  %v4316 = vpop.f32.mrb[0].mxu0
  %v4317 = vadd.f32 %v3798, %v4316
  %v4318 = vpop.f32.mrb[0].mxu0
  %4319 = vmatprep.mubr.f32.mxu0 0.0
  %4320 = vmatmul.mubr.f32.gmra.mrb[0].mxu0 %v4124
  %v4321 = vpop.f32.mrb[0].mxu0
  %v4322 = vadd.f32 %v3803, %v4321
  %v4323 = vpop.f32.mrb[0].mxu0
  %4324 = vmatprep.mubr.f32.mxu0 0.0
  %4325 = vmatmul.mubr.f32.gmra.mrb[0].mxu0 %v4126
  %v4326 = vpop.f32.mrb[0].mxu0
  %v4327 = vadd.f32 %v3808, %v4326
  %v4328 = vpop.f32.mrb[0].mxu0
  %4329 = vmatprep.mubr.f32.mxu0 0.0
  %4330 = vmatmul.mubr.f32.gmra.mrb[0].mxu0 %v4128
  %v4331 = vpop.f32.mrb[0].mxu0
  %v4332 = vadd.f32 %v3813, %v4331
  %v4333 = vpop.f32.mrb[0].mxu0
  %4334 = vmatprep.mubr.f32.mxu0 0.0
  %4335 = vmatmul.mubr.f32.gmra.mrb[0].mxu0 %v4130
  %v4336 = vpop.f32.mrb[0].mxu0
  %v4337 = vadd.f32 %v3818, %v4336
  %v4338 = vpop.f32.mrb[0].mxu0
  %4339 = vmatprep.mubr.f32.mxu0 0.0
  %4340 = vmatmul.mubr.f32.gmra.mrb[0].mxu0 %v4132
  %v4341 = vpop.f32.mrb[0].mxu0
  %v4342 = vadd.f32 %v3823, %v4341
  %v4343 = vpop.f32.mrb[0].mxu0
  %4344 = vmatprep.mubr.f32.mxu0 0.0
  %4345 = vmatmul.mubr.f32.gmra.mrb[0].mxu0 %v4134
  %v4346 = vpop.f32.mrb[0].mxu0
  %v4347 = vadd.f32 %v3828, %v4346
  %v4348 = vpop.f32.mrb[0].mxu0
  %4349 = vmatprep.mubr.f32.mxu0 0.0
  %4350 = vmatmul.mubr.f32.gmra.mrb[0].mxu0 %v4136
  %v4351 = vpop.f32.mrb[0].mxu0
  %v4352 = vadd.f32 %v3833, %v4351
  %v4353 = vpop.f32.mrb[0].mxu0
  %4354 = vmatprep.mubr.f32.mxu0 0.0
  %4355 = vmatmul.mubr.f32.gmra.mrb[0].mxu0 %v4138
  %v4356 = vpop.f32.mrb[0].mxu0
  %v4357 = vadd.f32 %v3838, %v4356
  %v4358 = vpop.f32.mrb[0].mxu0
  %4359 = vmatprep.mubr.f32.mxu0 0.0
  %4360 = vmatmul.mubr.f32.gmra.mrb[0].mxu0 %v4140
  %v4361 = vpop.f32.mrb[0].mxu0
  %v4362 = vadd.f32 %v3843, %v4361
  %v4363 = vpop.f32.mrb[0].mxu0
  %4364 = vdwg.mxu0
  %v4366 = vsel %vm3622, %v3454, 0
  %4368 = vmatprep.subr.mxu0 0.0
  %4369 = vmatpush1.msra.mxu0 %v3444
  %4370 = vmatprep.subr.mxu0 0.0
  %4371 = vmatpush1.msra.mxu0 %v3445
  %4372 = vmatprep.subr.mxu0 0.0
  %4373 = vmatpush1.msra.mxu0 %v3446
  %4374 = vmatprep.subr.mxu0 0.0
  %4375 = vmatpush1.msra.mxu0 %v3447
  %4376 = vmatprep.subr.mxu0 0.0
  %4377 = vmatpush1.msra.mxu0 %v3448
  %4378 = vmatprep.subr.mxu0 0.0
  %4379 = vmatpush1.msra.mxu0 %v3449
  %4380 = vmatprep.subr.mxu0 0.0
  %4381 = vmatpush1.msra.mxu0 %v3450
  %4382 = vmatprep.subr.mxu0 0.0
  %4383 = vmatpush1.msra.mxu0 %v3451
  %4384 = vmatprep.subr.mxu0 0.0
  %4385 = vmatpush1.msra.mxu0 %v3452
  %4386 = vmatprep.subr.mxu0 0.0
  %4387 = vmatpush1.msra.mxu0 %v3453
  %4388 = vmatprep.subr.mxu0 0.0
  %4389 = vmatpush1.msra.mxu0 %v4366
  %4390 = vmatprep.subr.mxu0 0.0
  %4391 = vmatpush1.msra.mxu0 0.0
  %4392 = vmatprep.subr.mxu0 0.0
  %4393 = vmatpush1.msra.mxu0 0.0
  %4394 = vmatprep.subr.mxu0 0.0
  %4395 = vmatpush1.msra.mxu0 0.0
  %4396 = vmatprep.subr.mxu0 0.0
  %4397 = vmatpush1.msra.mxu0 0.0
  %4398 = vmatprep.subr.mxu0 0.0
  %4399 = vmatpush1.msra.mxu0 0.0
  %4400 = vmatprep.subr.mxu0 0.0
  %4401 = vmatpush1.msra.mxu0 0.0
  %4402 = vmatprep.subr.mxu0 0.0
  %4403 = vmatpush1.msra.mxu0 0.0
  %4404 = vmatprep.subr.mxu0 0.0
  %4405 = vmatpush1.msra.mxu0 0.0
  %4406 = vmatprep.subr.mxu0 0.0
  %4407 = vmatpush1.msra.mxu0 0.0
  %4408 = vmatprep.subr.mxu0 0.0
  %4409 = vmatpush1.msra.mxu0 0.0
  %4410 = vmatprep.subr.mxu0 0.0
  %4411 = vmatpush1.msra.mxu0 0.0
  %4412 = vmatprep.subr.mxu0 0.0
  %4413 = vmatpush1.msra.mxu0 0.0
  %4414 = vmatprep.subr.mxu0 0.0
  %4415 = vmatpush1.msra.mxu0 0.0
  %4416 = vmatprep.subr.mxu0 0.0
  %4417 = vmatpush1.msra.mxu0 0.0
  %4418 = vmatprep.subr.mxu0 0.0
  %4419 = vmatpush1.msra.mxu0 0.0
  %4420 = vmatprep.subr.mxu0 0.0
  %4421 = vmatpush1.msra.mxu0 0.0
  %4422 = vmatprep.subr.mxu0 0.0
  %4423 = vmatpush1.msra.mxu0 0.0
  %4424 = vmatprep.subr.mxu0 0.0
  %4425 = vmatpush1.msra.mxu0 0.0
  %4426 = vmatprep.subr.mxu0 0.0
  %4427 = vmatpush1.msra.mxu0 0.0
  %4428 = vmatprep.subr.mxu0 0.0
  %4429 = vmatpush1.msra.mxu0 0.0
  %4430 = vmatprep.subr.mxu0 0.0
  %4431 = vmatpush1.msra.mxu0 0.0
  %4432 = vmatprep.mubr.f32.mxu0 0.0
  %4433 = vmatmul.mubr.f32.gmra.mrb[0].mxu0 %v4080
  %v4434 = vpop.f32.mrb[0].mxu0
  %v4435 = vadd.f32 %v3927, %v4434
  %v4436 = vpop.f32.mrb[0].mxu0
  %4437 = vmatprep.mubr.f32.mxu0 0.0
  %4438 = vmatmul.mubr.f32.gmra.mrb[0].mxu0 %v4082
  %v4439 = vpop.f32.mrb[0].mxu0
  %v4440 = vadd.f32 %v3932, %v4439
  %v4441 = vpop.f32.mrb[0].mxu0
  %4442 = vmatprep.mubr.f32.mxu0 0.0
  %4443 = vmatmul.mubr.f32.gmra.mrb[0].mxu0 %v4084
  %v4444 = vpop.f32.mrb[0].mxu0
  %v4445 = vadd.f32 %v3937, %v4444
  %v4446 = vpop.f32.mrb[0].mxu0
  %4447 = vmatprep.mubr.f32.mxu0 0.0
  %4448 = vmatmul.mubr.f32.gmra.mrb[0].mxu0 %v4086
  %v4449 = vpop.f32.mrb[0].mxu0
  %v4450 = vadd.f32 %v3942, %v4449
  %v4451 = vpop.f32.mrb[0].mxu0
  %4452 = vmatprep.mubr.f32.mxu0 0.0
  %4453 = vmatmul.mubr.f32.gmra.mrb[0].mxu0 %v4088
  %v4454 = vpop.f32.mrb[0].mxu0
  %v4455 = vadd.f32 %v3947, %v4454
  %v4456 = vpop.f32.mrb[0].mxu0
  %4457 = vmatprep.mubr.f32.mxu0 0.0
  %4458 = vmatmul.mubr.f32.gmra.mrb[0].mxu0 %v4090
  %v4459 = vpop.f32.mrb[0].mxu0
  %v4460 = vadd.f32 %v3952, %v4459
  %v4461 = vpop.f32.mrb[0].mxu0
  %4462 = vmatprep.mubr.f32.mxu0 0.0
  %4463 = vmatmul.mubr.f32.gmra.mrb[0].mxu0 %v4092
  %v4464 = vpop.f32.mrb[0].mxu0
  %v4465 = vadd.f32 %v3957, %v4464
  %v4466 = vpop.f32.mrb[0].mxu0
  %4467 = vmatprep.mubr.f32.mxu0 0.0
  %4468 = vmatmul.mubr.f32.gmra.mrb[0].mxu0 %v4094
  %v4469 = vpop.f32.mrb[0].mxu0
  %v4470 = vadd.f32 %v3962, %v4469
  %v4471 = vpop.f32.mrb[0].mxu0
  %4472 = vmatprep.mubr.f32.mxu0 0.0
  %4473 = vmatmul.mubr.f32.gmra.mrb[0].mxu0 %v4096
  %v4474 = vpop.f32.mrb[0].mxu0
  %v4475 = vadd.f32 %v3967, %v4474
  %v4476 = vpop.f32.mrb[0].mxu0
  %4477 = vmatprep.mubr.f32.mxu0 0.0
  %4478 = vmatmul.mubr.f32.gmra.mrb[0].mxu0 %v4098
  %v4479 = vpop.f32.mrb[0].mxu0
  %v4480 = vadd.f32 %v3972, %v4479
  %v4481 = vpop.f32.mrb[0].mxu0
  %4482 = vmatprep.mubr.f32.mxu0 0.0
  %4483 = vmatmul.mubr.f32.gmra.mrb[0].mxu0 %v4100
  %v4484 = vpop.f32.mrb[0].mxu0
  %v4485 = vadd.f32 %v3977, %v4484
  %v4486 = vpop.f32.mrb[0].mxu0
  %4487 = vmatprep.mubr.f32.mxu0 0.0
  %4488 = vmatmul.mubr.f32.gmra.mrb[0].mxu0 %v4102
  %v4489 = vpop.f32.mrb[0].mxu0
  %v4490 = vadd.f32 %v3982, %v4489
  %v4491 = vpop.f32.mrb[0].mxu0
  %4492 = vmatprep.mubr.f32.mxu0 0.0
  %4493 = vmatmul.mubr.f32.gmra.mrb[0].mxu0 %v4104
  %v4494 = vpop.f32.mrb[0].mxu0
  %v4495 = vadd.f32 %v3987, %v4494
  %v4496 = vpop.f32.mrb[0].mxu0
  %4497 = vmatprep.mubr.f32.mxu0 0.0
  %4498 = vmatmul.mubr.f32.gmra.mrb[0].mxu0 %v4106
  %v4499 = vpop.f32.mrb[0].mxu0
  %v4500 = vadd.f32 %v3992, %v4499
  %v4501 = vpop.f32.mrb[0].mxu0
  %4502 = vmatprep.mubr.f32.mxu0 0.0
  %4503 = vmatmul.mubr.f32.gmra.mrb[0].mxu0 %v4108
  %v4504 = vpop.f32.mrb[0].mxu0
  %v4505 = vadd.f32 %v3997, %v4504
  %v4506 = vpop.f32.mrb[0].mxu0
  %4507 = vmatprep.mubr.f32.mxu0 0.0
  %4508 = vmatmul.mubr.f32.gmra.mrb[0].mxu0 %v4110
  %v4509 = vpop.f32.mrb[0].mxu0
  %v4510 = vadd.f32 %v4002, %v4509
  %v4511 = vpop.f32.mrb[0].mxu0
  %4512 = vmatprep.mubr.f32.mxu0 0.0
  %4513 = vmatmul.mubr.f32.gmra.mrb[0].mxu0 %v4112
  %v4514 = vpop.f32.mrb[0].mxu0
  %v4515 = vadd.f32 %v4007, %v4514
  %v4516 = vpop.f32.mrb[0].mxu0
  %4517 = vmatprep.mubr.f32.mxu0 0.0
  %4518 = vmatmul.mubr.f32.gmra.mrb[0].mxu0 %v4114
  %v4519 = vpop.f32.mrb[0].mxu0
  %v4520 = vadd.f32 %v4012, %v4519
  %v4521 = vpop.f32.mrb[0].mxu0
  %4522 = vmatprep.mubr.f32.mxu0 0.0
  %4523 = vmatmul.mubr.f32.gmra.mrb[0].mxu0 %v4116
  %v4524 = vpop.f32.mrb[0].mxu0
  %v4525 = vadd.f32 %v4017, %v4524
  %v4526 = vpop.f32.mrb[0].mxu0
  %4527 = vmatprep.mubr.f32.mxu0 0.0
  %4528 = vmatmul.mubr.f32.gmra.mrb[0].mxu0 %v4118
  %v4529 = vpop.f32.mrb[0].mxu0
  %v4530 = vadd.f32 %v4022, %v4529
  %v4531 = vpop.f32.mrb[0].mxu0
  %4532 = vmatprep.mubr.f32.mxu0 0.0
  %4533 = vmatmul.mubr.f32.gmra.mrb[0].mxu0 %v4120
  %v4534 = vpop.f32.mrb[0].mxu0
  %v4535 = vadd.f32 %v4027, %v4534
  %v4536 = vpop.f32.mrb[0].mxu0
  %4537 = vmatprep.mubr.f32.mxu0 0.0
  %4538 = vmatmul.mubr.f32.gmra.mrb[0].mxu0 %v4122
  %v4539 = vpop.f32.mrb[0].mxu0
  %v4540 = vadd.f32 %v4032, %v4539
  %v4541 = vpop.f32.mrb[0].mxu0
  %4542 = vmatprep.mubr.f32.mxu0 0.0
  %4543 = vmatmul.mubr.f32.gmra.mrb[0].mxu0 %v4124
  %v4544 = vpop.f32.mrb[0].mxu0
  %v4545 = vadd.f32 %v4037, %v4544
  %v4546 = vpop.f32.mrb[0].mxu0
  %4547 = vmatprep.mubr.f32.mxu0 0.0
  %4548 = vmatmul.mubr.f32.gmra.mrb[0].mxu0 %v4126
  %v4549 = vpop.f32.mrb[0].mxu0
  %v4550 = vadd.f32 %v4042, %v4549
  %v4551 = vpop.f32.mrb[0].mxu0
  %4552 = vmatprep.mubr.f32.mxu0 0.0
  %4553 = vmatmul.mubr.f32.gmra.mrb[0].mxu0 %v4128
  %v4554 = vpop.f32.mrb[0].mxu0
  %v4555 = vadd.f32 %v4047, %v4554
  %v4556 = vpop.f32.mrb[0].mxu0
  %4557 = vmatprep.mubr.f32.mxu0 0.0
  %4558 = vmatmul.mubr.f32.gmra.mrb[0].mxu0 %v4130
  %v4559 = vpop.f32.mrb[0].mxu0
  %v4560 = vadd.f32 %v4052, %v4559
  %v4561 = vpop.f32.mrb[0].mxu0
  %4562 = vmatprep.mubr.f32.mxu0 0.0
  %4563 = vmatmul.mubr.f32.gmra.mrb[0].mxu0 %v4132
  %v4564 = vpop.f32.mrb[0].mxu0
  %v4565 = vadd.f32 %v4057, %v4564
  %v4566 = vpop.f32.mrb[0].mxu0
  %4567 = vmatprep.mubr.f32.mxu0 0.0
  %4568 = vmatmul.mubr.f32.gmra.mrb[0].mxu0 %v4134
  %v4569 = vpop.f32.mrb[0].mxu0
  %v4570 = vadd.f32 %v4062, %v4569
  %v4571 = vpop.f32.mrb[0].mxu0
  %4572 = vmatprep.mubr.f32.mxu0 0.0
  %4573 = vmatmul.mubr.f32.gmra.mrb[0].mxu0 %v4136
  %v4574 = vpop.f32.mrb[0].mxu0
  %v4575 = vadd.f32 %v4067, %v4574
  %v4576 = vpop.f32.mrb[0].mxu0
  %4577 = vmatprep.mubr.f32.mxu0 0.0
  %4578 = vmatmul.mubr.f32.gmra.mrb[0].mxu0 %v4138
  %v4579 = vpop.f32.mrb[0].mxu0
  %v4580 = vadd.f32 %v4072, %v4579
  %v4581 = vpop.f32.mrb[0].mxu0
  %4582 = vmatprep.mubr.f32.mxu0 0.0
  %4583 = vmatmul.mubr.f32.gmra.mrb[0].mxu0 %v4140
  %v4584 = vpop.f32.mrb[0].mxu0
  %v4585 = vadd.f32 %v4077, %v4584
  %v4586 = vpop.f32.mrb[0].mxu0
  %4587 = vdwg.mxu0
  %v4588 = vld [vmem:[%s4 + $0xa8] sm:$0xff]
  %v4589 = vld [vmem:[%s4 + $0xb0] sm:$0xff]
  %v4590 = vld [vmem:[%s4 + $0xb8] sm:$0xff]
  %v4591 = vld [vmem:[%s4 + $0xc0] sm:$0xff]
  %v4592 = vld [vmem:[%s4 + $0xc8] sm:$0xff]
  %v4593 = vld [vmem:[%s4 + $0xd0] sm:$0xff]
  %v4594 = vld [vmem:[%s4 + $0xd8] sm:$0xff]
  %v4595 = vld [vmem:[%s4 + $0xe0] sm:$0xff]
  %v4596 = vld [vmem:[%s4 + $0xe8] sm:$0xff]
  %v4597 = vld [vmem:[%s4 + $0xf0] sm:$0xff]
  %v4598 = vld [vmem:[%s4 + $0xf8] sm:$0xf]
  %v4599 = vrot.slane %v3401, 4
  %v4600 = vrot.slane %v3402, 4
  %v4601 = vsel %vm3622, %v4599, %v4600
  %v4602 = vrot.slane %v3403, 4
  %v4603 = vsel %vm3622, %v4600, %v4602
  %v4604 = vrot.slane %v3404, 4
  %v4605 = vsel %vm3622, %v4602, %v4604
  %v4606 = vrot.slane %v3405, 4
  %v4607 = vsel %vm3622, %v4604, %v4606
  %v4608 = vrot.slane %v3406, 4
  %v4609 = vsel %vm3622, %v4606, %v4608
  %v4610 = vrot.slane %v3407, 4
  %v4611 = vsel %vm3622, %v4608, %v4610
  %v4612 = vrot.slane %v3408, 4
  %v4613 = vsel %vm3622, %v4610, %v4612
  %v4614 = vrot.slane %v3409, 4
  %v4615 = vsel %vm3622, %v4612, %v4614
  %v4616 = vrot.slane %v3410, 4
  %v4617 = vsel %vm3622, %v4614, %v4616
  %v4618 = vrot.slane %v3411, 4
  %v4619 = vsel %vm3622, %v4616, %v4618
  %v4620 = vrot.slane %v3412, 4
  %v4621 = vsel %vm3622, %v4618, %v4620
  %v4622 = vrot.slane %v3413, 4
  %v4623 = vsel %vm3622, %v4620, %v4622
  %v4624 = vrot.slane %v3414, 4
  %v4625 = vsel %vm3622, %v4622, %v4624
  %v4626 = vrot.slane %v3415, 4
  %v4627 = vsel %vm3622, %v4624, %v4626
  %v4628 = vrot.slane %v3416, 4
  %v4629 = vsel %vm3622, %v4626, %v4628
  %v4630 = vrot.slane %v3417, 4
  %v4631 = vsel %vm3622, %v4628, %v4630
  %v4632 = vrot.slane %v3418, 4
  %v4633 = vsel %vm3622, %v4630, %v4632
  %v4634 = vrot.slane %v3419, 4
  %v4635 = vsel %vm3622, %v4632, %v4634
  %v4636 = vrot.slane %v3420, 4
  %v4637 = vsel %vm3622, %v4634, %v4636
  %v4638 = vrot.slane %v3421, 4
  %v4639 = vsel %vm3622, %v4636, %v4638
  %v4640 = vrot.slane %v3422, 4
  %v4641 = vsel %vm3622, %v4638, %v4640
  %v4642 = vrot.slane %v3423, 4
  %v4643 = vsel %vm3622, %v4640, %v4642
  %v4644 = vrot.slane %v3424, 4
  %v4645 = vsel %vm3622, %v4642, %v4644
  %v4646 = vrot.slane %v3425, 4
  %v4647 = vsel %vm3622, %v4644, %v4646
  %v4648 = vrot.slane %v3426, 4
  %v4649 = vsel %vm3622, %v4646, %v4648
  %v4650 = vrot.slane %v3427, 4
  %v4651 = vsel %vm3622, %v4648, %v4650
  %v4652 = vrot.slane %v3428, 4
  %v4653 = vsel %vm3622, %v4650, %v4652
  %v4654 = vrot.slane %v3429, 4
  %v4655 = vsel %vm3622, %v4652, %v4654
  %v4656 = vrot.slane %v3430, 4
  %v4657 = vsel %vm3622, %v4654, %v4656
  %v4658 = vrot.slane %v3431, 4
  %v4659 = vsel %vm3622, %v4656, %v4658
  %v4660 = vsel %vm3559, %v4601, 0
  %v4662 = vsel %vm3559, %v4603, 0
  %v4664 = vsel %vm3559, %v4605, 0
  %v4666 = vsel %vm3559, %v4607, 0
  %v4668 = vsel %vm3559, %v4609, 0
  %v4670 = vsel %vm3559, %v4611, 0
  %v4672 = vsel %vm3559, %v4613, 0
  %v4674 = vsel %vm3559, %v4615, 0
  %v4676 = vsel %vm3559, %v4617, 0
  %v4678 = vsel %vm3559, %v4619, 0
  %v4680 = vsel %vm3559, %v4621, 0
  %v4682 = vsel %vm3559, %v4623, 0
  %v4684 = vsel %vm3559, %v4625, 0
  %v4686 = vsel %vm3559, %v4627, 0
  %v4688 = vsel %vm3559, %v4629, 0
  %v4690 = vsel %vm3559, %v4631, 0
  %v4692 = vsel %vm3559, %v4633, 0
  %v4694 = vsel %vm3559, %v4635, 0
  %v4696 = vsel %vm3559, %v4637, 0
  %v4698 = vsel %vm3559, %v4639, 0
  %v4700 = vsel %vm3559, %v4641, 0
  %v4702 = vsel %vm3559, %v4643, 0
  %v4704 = vsel %vm3559, %v4645, 0
  %v4706 = vsel %vm3559, %v4647, 0
  %v4708 = vsel %vm3559, %v4649, 0
  %v4710 = vsel %vm3559, %v4651, 0
  %v4712 = vsel %vm3559, %v4653, 0
  %v4714 = vsel %vm3559, %v4655, 0
  %v4716 = vsel %vm3559, %v4657, 0
  %v4718 = vsel %vm3559, %v4659, 0
  %v4720 = vsel %vm3559, %v4658, 0
  %v4723 = vsel %vm3622, %v4598, 0
  %4725 = vmatprep.subr.mxu0 0.0
  %4726 = vmatpush1.msra.mxu0 %v4588
  %4727 = vmatprep.subr.mxu0 0.0
  %4728 = vmatpush1.msra.mxu0 %v4589
  %4729 = vmatprep.subr.mxu0 0.0
  %4730 = vmatpush1.msra.mxu0 %v4590
  %4731 = vmatprep.subr.mxu0 0.0
  %4732 = vmatpush1.msra.mxu0 %v4591
  %4733 = vmatprep.subr.mxu0 0.0
  %4734 = vmatpush1.msra.mxu0 %v4592
  %4735 = vmatprep.subr.mxu0 0.0
  %4736 = vmatpush1.msra.mxu0 %v4593
  %4737 = vmatprep.subr.mxu0 0.0
  %4738 = vmatpush1.msra.mxu0 %v4594
  %4739 = vmatprep.subr.mxu0 0.0
  %4740 = vmatpush1.msra.mxu0 %v4595
  %4741 = vmatprep.subr.mxu0 0.0
  %4742 = vmatpush1.msra.mxu0 %v4596
  %4743 = vmatprep.subr.mxu0 0.0
  %4744 = vmatpush1.msra.mxu0 %v4597
  %4745 = vmatprep.subr.mxu0 0.0
  %4746 = vmatpush1.msra.mxu0 %v4723
  %4747 = vmatprep.subr.mxu0 0.0
  %4748 = vmatpush1.msra.mxu0 0.0
  %4749 = vmatprep.subr.mxu0 0.0
  %4750 = vmatpush1.msra.mxu0 0.0
  %4751 = vmatprep.subr.mxu0 0.0
  %4752 = vmatpush1.msra.mxu0 0.0
  %4753 = vmatprep.subr.mxu0 0.0
  %4754 = vmatpush1.msra.mxu0 0.0
  %4755 = vmatprep.subr.mxu0 0.0
  %4756 = vmatpush1.msra.mxu0 0.0
  %4757 = vmatprep.subr.mxu0 0.0
  %4758 = vmatpush1.msra.mxu0 0.0
  %4759 = vmatprep.subr.mxu0 0.0
  %4760 = vmatpush1.msra.mxu0 0.0
  %4761 = vmatprep.subr.mxu0 0.0
  %4762 = vmatpush1.msra.mxu0 0.0
  %4763 = vmatprep.subr.mxu0 0.0
  %4764 = vmatpush1.msra.mxu0 0.0
  %4765 = vmatprep.subr.mxu0 0.0
  %4766 = vmatpush1.msra.mxu0 0.0
  %4767 = vmatprep.subr.mxu0 0.0
  %4768 = vmatpush1.msra.mxu0 0.0
  %4769 = vmatprep.subr.mxu0 0.0
  %4770 = vmatpush1.msra.mxu0 0.0
  %4771 = vmatprep.subr.mxu0 0.0
  %4772 = vmatpush1.msra.mxu0 0.0
  %4773 = vmatprep.subr.mxu0 0.0
  %4774 = vmatpush1.msra.mxu0 0.0
  %4775 = vmatprep.subr.mxu0 0.0
  %4776 = vmatpush1.msra.mxu0 0.0
  %4777 = vmatprep.subr.mxu0 0.0
  %4778 = vmatpush1.msra.mxu0 0.0
  %4779 = vmatprep.subr.mxu0 0.0
  %4780 = vmatpush1.msra.mxu0 0.0
  %4781 = vmatprep.subr.mxu0 0.0
  %4782 = vmatpush1.msra.mxu0 0.0
  %4783 = vmatprep.subr.mxu0 0.0
  %4784 = vmatpush1.msra.mxu0 0.0
  %4785 = vmatprep.subr.mxu0 0.0
  %4786 = vmatpush1.msra.mxu0 0.0
  %4787 = vmatprep.subr.mxu0 0.0
  %4788 = vmatpush1.msra.mxu0 0.0
  %4789 = vmatprep.mubr.f32.mxu0 0.0
  %4790 = vmatmul.mubr.f32.gmra.mrb[0].mxu0 %v4660
  %v4791 = vpop.f32.mrb[0].mxu0
  %v4792 = vadd.f32 0.0, %v4791
  %v4793 = vpop.f32.mrb[0].mxu0
  %4794 = vmatprep.mubr.f32.mxu0 0.0
  %4795 = vmatmul.mubr.f32.gmra.mrb[0].mxu0 %v4662
  %v4796 = vpop.f32.mrb[0].mxu0
  %v4797 = vadd.f32 0.0, %v4796
  %v4798 = vpop.f32.mrb[0].mxu0
  %4799 = vmatprep.mubr.f32.mxu0 0.0
  %4800 = vmatmul.mubr.f32.gmra.mrb[0].mxu0 %v4664
  %v4801 = vpop.f32.mrb[0].mxu0
  %v4802 = vadd.f32 0.0, %v4801
  %v4803 = vpop.f32.mrb[0].mxu0
  %4804 = vmatprep.mubr.f32.mxu0 0.0
  %4805 = vmatmul.mubr.f32.gmra.mrb[0].mxu0 %v4666
  %v4806 = vpop.f32.mrb[0].mxu0
  %v4807 = vadd.f32 0.0, %v4806
  %v4808 = vpop.f32.mrb[0].mxu0
  %4809 = vmatprep.mubr.f32.mxu0 0.0
  %4810 = vmatmul.mubr.f32.gmra.mrb[0].mxu0 %v4668
  %v4811 = vpop.f32.mrb[0].mxu0
  %v4812 = vadd.f32 0.0, %v4811
  %v4813 = vpop.f32.mrb[0].mxu0
  %4814 = vmatprep.mubr.f32.mxu0 0.0
  %4815 = vmatmul.mubr.f32.gmra.mrb[0].mxu0 %v4670
  %v4816 = vpop.f32.mrb[0].mxu0
  %v4817 = vadd.f32 0.0, %v4816
  %v4818 = vpop.f32.mrb[0].mxu0
  %4819 = vmatprep.mubr.f32.mxu0 0.0
  %4820 = vmatmul.mubr.f32.gmra.mrb[0].mxu0 %v4672
  %v4821 = vpop.f32.mrb[0].mxu0
  %v4822 = vadd.f32 0.0, %v4821
  %v4823 = vpop.f32.mrb[0].mxu0
  %4824 = vmatprep.mubr.f32.mxu0 0.0
  %4825 = vmatmul.mubr.f32.gmra.mrb[0].mxu0 %v4674
  %v4826 = vpop.f32.mrb[0].mxu0
  %v4827 = vadd.f32 0.0, %v4826
  %v4828 = vpop.f32.mrb[0].mxu0
  %4829 = vmatprep.mubr.f32.mxu0 0.0
  %4830 = vmatmul.mubr.f32.gmra.mrb[0].mxu0 %v4676
  %v4831 = vpop.f32.mrb[0].mxu0
  %v4832 = vadd.f32 0.0, %v4831
  %v4833 = vpop.f32.mrb[0].mxu0
  %4834 = vmatprep.mubr.f32.mxu0 0.0
  %4835 = vmatmul.mubr.f32.gmra.mrb[0].mxu0 %v4678
  %v4836 = vpop.f32.mrb[0].mxu0
  %v4837 = vadd.f32 0.0, %v4836
  %v4838 = vpop.f32.mrb[0].mxu0
  %4839 = vmatprep.mubr.f32.mxu0 0.0
  %4840 = vmatmul.mubr.f32.gmra.mrb[0].mxu0 %v4680
  %v4841 = vpop.f32.mrb[0].mxu0
  %v4842 = vadd.f32 0.0, %v4841
  %v4843 = vpop.f32.mrb[0].mxu0
  %4844 = vmatprep.mubr.f32.mxu0 0.0
  %4845 = vmatmul.mubr.f32.gmra.mrb[0].mxu0 %v4682
  %v4846 = vpop.f32.mrb[0].mxu0
  %v4847 = vadd.f32 0.0, %v4846
  %v4848 = vpop.f32.mrb[0].mxu0
  %4849 = vmatprep.mubr.f32.mxu0 0.0
  %4850 = vmatmul.mubr.f32.gmra.mrb[0].mxu0 %v4684
  %v4851 = vpop.f32.mrb[0].mxu0
  %v4852 = vadd.f32 0.0, %v4851
  %v4853 = vpop.f32.mrb[0].mxu0
  %4854 = vmatprep.mubr.f32.mxu0 0.0
  %4855 = vmatmul.mubr.f32.gmra.mrb[0].mxu0 %v4686
  %v4856 = vpop.f32.mrb[0].mxu0
  %v4857 = vadd.f32 0.0, %v4856
  %v4858 = vpop.f32.mrb[0].mxu0
  %4859 = vmatprep.mubr.f32.mxu0 0.0
  %4860 = vmatmul.mubr.f32.gmra.mrb[0].mxu0 %v4688
  %v4861 = vpop.f32.mrb[0].mxu0
  %v4862 = vadd.f32 0.0, %v4861
  %v4863 = vpop.f32.mrb[0].mxu0
  %4864 = vmatprep.mubr.f32.mxu0 0.0
  %4865 = vmatmul.mubr.f32.gmra.mrb[0].mxu0 %v4690
  %v4866 = vpop.f32.mrb[0].mxu0
  %v4867 = vadd.f32 0.0, %v4866
  %v4868 = vpop.f32.mrb[0].mxu0
  %4869 = vmatprep.mubr.f32.mxu0 0.0
  %4870 = vmatmul.mubr.f32.gmra.mrb[0].mxu0 %v4692
  %v4871 = vpop.f32.mrb[0].mxu0
  %v4872 = vadd.f32 0.0, %v4871
  %v4873 = vpop.f32.mrb[0].mxu0
  %4874 = vmatprep.mubr.f32.mxu0 0.0
  %4875 = vmatmul.mubr.f32.gmra.mrb[0].mxu0 %v4694
  %v4876 = vpop.f32.mrb[0].mxu0
  %v4877 = vadd.f32 0.0, %v4876
  %v4878 = vpop.f32.mrb[0].mxu0
  %4879 = vmatprep.mubr.f32.mxu0 0.0
  %4880 = vmatmul.mubr.f32.gmra.mrb[0].mxu0 %v4696
  %v4881 = vpop.f32.mrb[0].mxu0
  %v4882 = vadd.f32 0.0, %v4881
  %v4883 = vpop.f32.mrb[0].mxu0
  %4884 = vmatprep.mubr.f32.mxu0 0.0
  %4885 = vmatmul.mubr.f32.gmra.mrb[0].mxu0 %v4698
  %v4886 = vpop.f32.mrb[0].mxu0
  %v4887 = vadd.f32 0.0, %v4886
  %v4888 = vpop.f32.mrb[0].mxu0
  %4889 = vmatprep.mubr.f32.mxu0 0.0
  %4890 = vmatmul.mubr.f32.gmra.mrb[0].mxu0 %v4700
  %v4891 = vpop.f32.mrb[0].mxu0
  %v4892 = vadd.f32 0.0, %v4891
  %v4893 = vpop.f32.mrb[0].mxu0
  %4894 = vmatprep.mubr.f32.mxu0 0.0
  %4895 = vmatmul.mubr.f32.gmra.mrb[0].mxu0 %v4702
  %v4896 = vpop.f32.mrb[0].mxu0
  %v4897 = vadd.f32 0.0, %v4896
  %v4898 = vpop.f32.mrb[0].mxu0
  %4899 = vmatprep.mubr.f32.mxu0 0.0
  %4900 = vmatmul.mubr.f32.gmra.mrb[0].mxu0 %v4704
  %v4901 = vpop.f32.mrb[0].mxu0
  %v4902 = vadd.f32 0.0, %v4901
  %v4903 = vpop.f32.mrb[0].mxu0
  %4904 = vmatprep.mubr.f32.mxu0 0.0
  %4905 = vmatmul.mubr.f32.gmra.mrb[0].mxu0 %v4706
  %v4906 = vpop.f32.mrb[0].mxu0
  %v4907 = vadd.f32 0.0, %v4906
  %v4908 = vpop.f32.mrb[0].mxu0
  %4909 = vmatprep.mubr.f32.mxu0 0.0
  %4910 = vmatmul.mubr.f32.gmra.mrb[0].mxu0 %v4708
  %v4911 = vpop.f32.mrb[0].mxu0
  %v4912 = vadd.f32 0.0, %v4911
  %v4913 = vpop.f32.mrb[0].mxu0
  %4914 = vmatprep.mubr.f32.mxu0 0.0
  %4915 = vmatmul.mubr.f32.gmra.mrb[0].mxu0 %v4710
  %v4916 = vpop.f32.mrb[0].mxu0
  %v4917 = vadd.f32 0.0, %v4916
  %v4918 = vpop.f32.mrb[0].mxu0
  %4919 = vmatprep.mubr.f32.mxu0 0.0
  %4920 = vmatmul.mubr.f32.gmra.mrb[0].mxu0 %v4712
  %v4921 = vpop.f32.mrb[0].mxu0
  %v4922 = vadd.f32 0.0, %v4921
  %v4923 = vpop.f32.mrb[0].mxu0
  %4924 = vmatprep.mubr.f32.mxu0 0.0
  %4925 = vmatmul.mubr.f32.gmra.mrb[0].mxu0 %v4714
  %v4926 = vpop.f32.mrb[0].mxu0
  %v4927 = vadd.f32 0.0, %v4926
  %v4928 = vpop.f32.mrb[0].mxu0
  %4929 = vmatprep.mubr.f32.mxu0 0.0
  %4930 = vmatmul.mubr.f32.gmra.mrb[0].mxu0 %v4716
  %v4931 = vpop.f32.mrb[0].mxu0
  %v4932 = vadd.f32 0.0, %v4931
  %v4933 = vpop.f32.mrb[0].mxu0
  %4934 = vmatprep.mubr.f32.mxu0 0.0
  %4935 = vmatmul.mubr.f32.gmra.mrb[0].mxu0 %v4718
  %v4936 = vpop.f32.mrb[0].mxu0
  %v4937 = vadd.f32 0.0, %v4936
  %v4938 = vpop.f32.mrb[0].mxu0
  %4939 = vmatprep.mubr.f32.mxu0 0.0
  %4940 = vmatmul.mubr.f32.gmra.mrb[0].mxu0 %v4720
  %v4941 = vpop.f32.mrb[0].mxu0
  %v4942 = vadd.f32 0.0, %v4941
  %v4943 = vpop.f32.mrb[0].mxu0
  %4944 = vdwg.mxu0
  %v4945 = vld [vmem:[%s5 + $0xa8] sm:$0xff]
  %v4946 = vld [vmem:[%s5 + $0xb0] sm:$0xff]
  %v4947 = vld [vmem:[%s5 + $0xb8] sm:$0xff]
  %v4948 = vld [vmem:[%s5 + $0xc0] sm:$0xff]
  %v4949 = vld [vmem:[%s5 + $0xc8] sm:$0xff]
  %v4950 = vld [vmem:[%s5 + $0xd0] sm:$0xff]
  %v4951 = vld [vmem:[%s5 + $0xd8] sm:$0xff]
  %v4952 = vld [vmem:[%s5 + $0xe0] sm:$0xff]
  %v4953 = vld [vmem:[%s5 + $0xe8] sm:$0xff]
  %v4954 = vld [vmem:[%s5 + $0xf0] sm:$0xff]
  %v4955 = vld [vmem:[%s5 + $0xf8] sm:$0xf]
  %v4957 = vsel %vm3622, %v4955, 0
  %4959 = vmatprep.subr.mxu0 0.0
  %4960 = vmatpush1.msra.mxu0 %v4945
  %4961 = vmatprep.subr.mxu0 0.0
  %4962 = vmatpush1.msra.mxu0 %v4946
  %4963 = vmatprep.subr.mxu0 0.0
  %4964 = vmatpush1.msra.mxu0 %v4947
  %4965 = vmatprep.subr.mxu0 0.0
  %4966 = vmatpush1.msra.mxu0 %v4948
  %4967 = vmatprep.subr.mxu0 0.0
  %4968 = vmatpush1.msra.mxu0 %v4949
  %4969 = vmatprep.subr.mxu0 0.0
  %4970 = vmatpush1.msra.mxu0 %v4950
  %4971 = vmatprep.subr.mxu0 0.0
  %4972 = vmatpush1.msra.mxu0 %v4951
  %4973 = vmatprep.subr.mxu0 0.0
  %4974 = vmatpush1.msra.mxu0 %v4952
  %4975 = vmatprep.subr.mxu0 0.0
  %4976 = vmatpush1.msra.mxu0 %v4953
  %4977 = vmatprep.subr.mxu0 0.0
  %4978 = vmatpush1.msra.mxu0 %v4954
  %4979 = vmatprep.subr.mxu0 0.0
  %4980 = vmatpush1.msra.mxu0 %v4957
  %4981 = vmatprep.subr.mxu0 0.0
  %4982 = vmatpush1.msra.mxu0 0.0
  %4983 = vmatprep.subr.mxu0 0.0
  %4984 = vmatpush1.msra.mxu0 0.0
  %4985 = vmatprep.subr.mxu0 0.0
  %4986 = vmatpush1.msra.mxu0 0.0
  %4987 = vmatprep.subr.mxu0 0.0
  %4988 = vmatpush1.msra.mxu0 0.0
  %4989 = vmatprep.subr.mxu0 0.0
  %4990 = vmatpush1.msra.mxu0 0.0
  %4991 = vmatprep.subr.mxu0 0.0
  %4992 = vmatpush1.msra.mxu0 0.0
  %4993 = vmatprep.subr.mxu0 0.0
  %4994 = vmatpush1.msra.mxu0 0.0
  %4995 = vmatprep.subr.mxu0 0.0
  %4996 = vmatpush1.msra.mxu0 0.0
  %4997 = vmatprep.subr.mxu0 0.0
  %4998 = vmatpush1.msra.mxu0 0.0
  %4999 = vmatprep.subr.mxu0 0.0
  %5000 = vmatpush1.msra.mxu0 0.0
  %5001 = vmatprep.subr.mxu0 0.0
  %5002 = vmatpush1.msra.mxu0 0.0
  %5003 = vmatprep.subr.mxu0 0.0
  %5004 = vmatpush1.msra.mxu0 0.0
  %5005 = vmatprep.subr.mxu0 0.0
  %5006 = vmatpush1.msra.mxu0 0.0
  %5007 = vmatprep.subr.mxu0 0.0
  %5008 = vmatpush1.msra.mxu0 0.0
  %5009 = vmatprep.subr.mxu0 0.0
  %5010 = vmatpush1.msra.mxu0 0.0
  %5011 = vmatprep.subr.mxu0 0.0
  %5012 = vmatpush1.msra.mxu0 0.0
  %5013 = vmatprep.subr.mxu0 0.0
  %5014 = vmatpush1.msra.mxu0 0.0
  %5015 = vmatprep.subr.mxu0 0.0
  %5016 = vmatpush1.msra.mxu0 0.0
  %5017 = vmatprep.subr.mxu0 0.0
  %5018 = vmatpush1.msra.mxu0 0.0
  %5019 = vmatprep.subr.mxu0 0.0
  %5020 = vmatpush1.msra.mxu0 0.0
  %5021 = vmatprep.subr.mxu0 0.0
  %5022 = vmatpush1.msra.mxu0 0.0
  %5023 = vmatprep.mubr.f32.mxu0 0.0
  %5024 = vmatmul.mubr.f32.gmra.mrb[0].mxu0 %v4660
  %v5025 = vpop.f32.mrb[0].mxu0
  %v5026 = vadd.f32 0.0, %v5025
  %v5027 = vpop.f32.mrb[0].mxu0
  %5028 = vmatprep.mubr.f32.mxu0 0.0
  %5029 = vmatmul.mubr.f32.gmra.mrb[0].mxu0 %v4662
  %v5030 = vpop.f32.mrb[0].mxu0
  %v5031 = vadd.f32 0.0, %v5030
  %v5032 = vpop.f32.mrb[0].mxu0
  %5033 = vmatprep.mubr.f32.mxu0 0.0
  %5034 = vmatmul.mubr.f32.gmra.mrb[0].mxu0 %v4664
  %v5035 = vpop.f32.mrb[0].mxu0
  %v5036 = vadd.f32 0.0, %v5035
  %v5037 = vpop.f32.mrb[0].mxu0
  %5038 = vmatprep.mubr.f32.mxu0 0.0
  %5039 = vmatmul.mubr.f32.gmra.mrb[0].mxu0 %v4666
  %v5040 = vpop.f32.mrb[0].mxu0
  %v5041 = vadd.f32 0.0, %v5040
  %v5042 = vpop.f32.mrb[0].mxu0
  %5043 = vmatprep.mubr.f32.mxu0 0.0
  %5044 = vmatmul.mubr.f32.gmra.mrb[0].mxu0 %v4668
  %v5045 = vpop.f32.mrb[0].mxu0
  %v5046 = vadd.f32 0.0, %v5045
  %v5047 = vpop.f32.mrb[0].mxu0
  %5048 = vmatprep.mubr.f32.mxu0 0.0
  %5049 = vmatmul.mubr.f32.gmra.mrb[0].mxu0 %v4670
  %v5050 = vpop.f32.mrb[0].mxu0
  %v5051 = vadd.f32 0.0, %v5050
  %v5052 = vpop.f32.mrb[0].mxu0
  %5053 = vmatprep.mubr.f32.mxu0 0.0
  %5054 = vmatmul.mubr.f32.gmra.mrb[0].mxu0 %v4672
  %v5055 = vpop.f32.mrb[0].mxu0
  %v5056 = vadd.f32 0.0, %v5055
  %v5057 = vpop.f32.mrb[0].mxu0
  %5058 = vmatprep.mubr.f32.mxu0 0.0
  %5059 = vmatmul.mubr.f32.gmra.mrb[0].mxu0 %v4674
  %v5060 = vpop.f32.mrb[0].mxu0
  %v5061 = vadd.f32 0.0, %v5060
  %v5062 = vpop.f32.mrb[0].mxu0
  %5063 = vmatprep.mubr.f32.mxu0 0.0
  %5064 = vmatmul.mubr.f32.gmra.mrb[0].mxu0 %v4676
  %v5065 = vpop.f32.mrb[0].mxu0
  %v5066 = vadd.f32 0.0, %v5065
  %v5067 = vpop.f32.mrb[0].mxu0
  %5068 = vmatprep.mubr.f32.mxu0 0.0
  %5069 = vmatmul.mubr.f32.gmra.mrb[0].mxu0 %v4678
  %v5070 = vpop.f32.mrb[0].mxu0
  %v5071 = vadd.f32 0.0, %v5070
  %v5072 = vpop.f32.mrb[0].mxu0
  %5073 = vmatprep.mubr.f32.mxu0 0.0
  %5074 = vmatmul.mubr.f32.gmra.mrb[0].mxu0 %v4680
  %v5075 = vpop.f32.mrb[0].mxu0
  %v5076 = vadd.f32 0.0, %v5075
  %v5077 = vpop.f32.mrb[0].mxu0
  %5078 = vmatprep.mubr.f32.mxu0 0.0
  %5079 = vmatmul.mubr.f32.gmra.mrb[0].mxu0 %v4682
  %v5080 = vpop.f32.mrb[0].mxu0
  %v5081 = vadd.f32 0.0, %v5080
  %v5082 = vpop.f32.mrb[0].mxu0
  %5083 = vmatprep.mubr.f32.mxu0 0.0
  %5084 = vmatmul.mubr.f32.gmra.mrb[0].mxu0 %v4684
  %v5085 = vpop.f32.mrb[0].mxu0
  %v5086 = vadd.f32 0.0, %v5085
  %v5087 = vpop.f32.mrb[0].mxu0
  %5088 = vmatprep.mubr.f32.mxu0 0.0
  %5089 = vmatmul.mubr.f32.gmra.mrb[0].mxu0 %v4686
  %v5090 = vpop.f32.mrb[0].mxu0
  %v5091 = vadd.f32 0.0, %v5090
  %v5092 = vpop.f32.mrb[0].mxu0
  %5093 = vmatprep.mubr.f32.mxu0 0.0
  %5094 = vmatmul.mubr.f32.gmra.mrb[0].mxu0 %v4688
  %v5095 = vpop.f32.mrb[0].mxu0
  %v5096 = vadd.f32 0.0, %v5095
  %v5097 = vpop.f32.mrb[0].mxu0
  %5098 = vmatprep.mubr.f32.mxu0 0.0
  %5099 = vmatmul.mubr.f32.gmra.mrb[0].mxu0 %v4690
  %v5100 = vpop.f32.mrb[0].mxu0
  %v5101 = vadd.f32 0.0, %v5100
  %v5102 = vpop.f32.mrb[0].mxu0
  %5103 = vmatprep.mubr.f32.mxu0 0.0
  %5104 = vmatmul.mubr.f32.gmra.mrb[0].mxu0 %v4692
  %v5105 = vpop.f32.mrb[0].mxu0
  %v5106 = vadd.f32 0.0, %v5105
  %v5107 = vpop.f32.mrb[0].mxu0
  %5108 = vmatprep.mubr.f32.mxu0 0.0
  %5109 = vmatmul.mubr.f32.gmra.mrb[0].mxu0 %v4694
  %v5110 = vpop.f32.mrb[0].mxu0
  %v5111 = vadd.f32 0.0, %v5110
  %v5112 = vpop.f32.mrb[0].mxu0
  %5113 = vmatprep.mubr.f32.mxu0 0.0
  %5114 = vmatmul.mubr.f32.gmra.mrb[0].mxu0 %v4696
  %v5115 = vpop.f32.mrb[0].mxu0
  %v5116 = vadd.f32 0.0, %v5115
  %v5117 = vpop.f32.mrb[0].mxu0
  %5118 = vmatprep.mubr.f32.mxu0 0.0
  %5119 = vmatmul.mubr.f32.gmra.mrb[0].mxu0 %v4698
  %v5120 = vpop.f32.mrb[0].mxu0
  %v5121 = vadd.f32 0.0, %v5120
  %v5122 = vpop.f32.mrb[0].mxu0
  %5123 = vmatprep.mubr.f32.mxu0 0.0
  %5124 = vmatmul.mubr.f32.gmra.mrb[0].mxu0 %v4700
  %v5125 = vpop.f32.mrb[0].mxu0
  %v5126 = vadd.f32 0.0, %v5125
  %v5127 = vpop.f32.mrb[0].mxu0
  %5128 = vmatprep.mubr.f32.mxu0 0.0
  %5129 = vmatmul.mubr.f32.gmra.mrb[0].mxu0 %v4702
  %v5130 = vpop.f32.mrb[0].mxu0
  %v5131 = vadd.f32 0.0, %v5130
  %v5132 = vpop.f32.mrb[0].mxu0
  %5133 = vmatprep.mubr.f32.mxu0 0.0
  %5134 = vmatmul.mubr.f32.gmra.mrb[0].mxu0 %v4704
  %v5135 = vpop.f32.mrb[0].mxu0
  %v5136 = vadd.f32 0.0, %v5135
  %v5137 = vpop.f32.mrb[0].mxu0
  %5138 = vmatprep.mubr.f32.mxu0 0.0
  %5139 = vmatmul.mubr.f32.gmra.mrb[0].mxu0 %v4706
  %v5140 = vpop.f32.mrb[0].mxu0
  %v5141 = vadd.f32 0.0, %v5140
  %v5142 = vpop.f32.mrb[0].mxu0
  %5143 = vmatprep.mubr.f32.mxu0 0.0
  %5144 = vmatmul.mubr.f32.gmra.mrb[0].mxu0 %v4708
  %v5145 = vpop.f32.mrb[0].mxu0
  %v5146 = vadd.f32 0.0, %v5145
  %v5147 = vpop.f32.mrb[0].mxu0
  %5148 = vmatprep.mubr.f32.mxu0 0.0
  %5149 = vmatmul.mubr.f32.gmra.mrb[0].mxu0 %v4710
  %v5150 = vpop.f32.mrb[0].mxu0
  %v5151 = vadd.f32 0.0, %v5150
  %v5152 = vpop.f32.mrb[0].mxu0
  %5153 = vmatprep.mubr.f32.mxu0 0.0
  %5154 = vmatmul.mubr.f32.gmra.mrb[0].mxu0 %v4712
  %v5155 = vpop.f32.mrb[0].mxu0
  %v5156 = vadd.f32 0.0, %v5155
  %v5157 = vpop.f32.mrb[0].mxu0
  %5158 = vmatprep.mubr.f32.mxu0 0.0
  %5159 = vmatmul.mubr.f32.gmra.mrb[0].mxu0 %v4714
  %v5160 = vpop.f32.mrb[0].mxu0
  %v5161 = vadd.f32 0.0, %v5160
  %v5162 = vpop.f32.mrb[0].mxu0
  %5163 = vmatprep.mubr.f32.mxu0 0.0
  %5164 = vmatmul.mubr.f32.gmra.mrb[0].mxu0 %v4716
  %v5165 = vpop.f32.mrb[0].mxu0
  %v5166 = vadd.f32 0.0, %v5165
  %v5167 = vpop.f32.mrb[0].mxu0
  %5168 = vmatprep.mubr.f32.mxu0 0.0
  %5169 = vmatmul.mubr.f32.gmra.mrb[0].mxu0 %v4718
  %v5170 = vpop.f32.mrb[0].mxu0
  %v5171 = vadd.f32 0.0, %v5170
  %v5172 = vpop.f32.mrb[0].mxu0
  %5173 = vmatprep.mubr.f32.mxu0 0.0
  %5174 = vmatmul.mubr.f32.gmra.mrb[0].mxu0 %v4720
  %v5175 = vpop.f32.mrb[0].mxu0
  %v5176 = vadd.f32 0.0, %v5175
  %v5177 = vpop.f32.mrb[0].mxu0
  %5178 = vdwg.mxu0
  %v5179 = vadd.f32 %v4212, %v4792
  %v5180 = vadd.f32 %v4217, %v4797
  %v5181 = vadd.f32 %v4222, %v4802
  %v5182 = vadd.f32 %v4227, %v4807
  %v5183 = vadd.f32 %v4232, %v4812
  %v5184 = vadd.f32 %v4237, %v4817
  %v5185 = vadd.f32 %v4242, %v4822
  %v5186 = vadd.f32 %v4247, %v4827
  %v5187 = vadd.f32 %v4252, %v4832
  %v5188 = vadd.f32 %v4257, %v4837
  %v5189 = vadd.f32 %v4262, %v4842
  %v5190 = vadd.f32 %v4267, %v4847
  %v5191 = vadd.f32 %v4272, %v4852
  %v5192 = vadd.f32 %v4277, %v4857
  %v5193 = vadd.f32 %v4282, %v4862
  %v5194 = vadd.f32 %v4287, %v4867
  %v5195 = vadd.f32 %v4292, %v4872
  %v5196 = vadd.f32 %v4297, %v4877
  %v5197 = vadd.f32 %v4302, %v4882
  %v5198 = vadd.f32 %v4307, %v4887
  %v5199 = vadd.f32 %v4312, %v4892
  %v5200 = vadd.f32 %v4317, %v4897
  %v5201 = vadd.f32 %v4322, %v4902
  %v5202 = vadd.f32 %v4327, %v4907
  %v5203 = vadd.f32 %v4332, %v4912
  %v5204 = vadd.f32 %v4337, %v4917
  %v5205 = vadd.f32 %v4342, %v4922
  %v5206 = vadd.f32 %v4347, %v4927
  %v5207 = vadd.f32 %v4352, %v4932
  %v5208 = vadd.f32 %v4357, %v4937
  %v5209 = vadd.f32 %v4362, %v4942
  %v5210 = vadd.f32 %v4435, %v5026
  %v5211 = vadd.f32 %v4440, %v5031
  %v5212 = vadd.f32 %v4445, %v5036
  %v5213 = vadd.f32 %v4450, %v5041
  %v5214 = vadd.f32 %v4455, %v5046
  %v5215 = vadd.f32 %v4460, %v5051
  %v5216 = vadd.f32 %v4465, %v5056
  %v5217 = vadd.f32 %v4470, %v5061
  %v5218 = vadd.f32 %v4475, %v5066
  %v5219 = vadd.f32 %v4480, %v5071
  %v5220 = vadd.f32 %v4485, %v5076
  %v5221 = vadd.f32 %v4490, %v5081
  %v5222 = vadd.f32 %v4495, %v5086
  %v5223 = vadd.f32 %v4500, %v5091
  %v5224 = vadd.f32 %v4505, %v5096
  %v5225 = vadd.f32 %v4510, %v5101
  %v5226 = vadd.f32 %v4515, %v5106
  %v5227 = vadd.f32 %v4520, %v5111
  %v5228 = vadd.f32 %v4525, %v5116
  %v5229 = vadd.f32 %v4530, %v5121
  %v5230 = vadd.f32 %v4535, %v5126
  %v5231 = vadd.f32 %v4540, %v5131
  %v5232 = vadd.f32 %v4545, %v5136
  %v5233 = vadd.f32 %v4550, %v5141
  %v5234 = vadd.f32 %v4555, %v5146
  %v5235 = vadd.f32 %v4560, %v5151
  %v5236 = vadd.f32 %v4565, %v5156
  %v5237 = vadd.f32 %v4570, %v5161
  %v5238 = vadd.f32 %v4575, %v5166
  %v5239 = vadd.f32 %v4580, %v5171
  %v5240 = vadd.f32 %v4585, %v5176
  %v5241 = vld [vmem:[%s4 + $0xfc] sm:$0xff]
  %v5242 = vld [vmem:[%s4 + $0x104] sm:$0xff]
  %v5243 = vld [vmem:[%s4 + $0x10c] sm:$0xff]
  %v5244 = vld [vmem:[%s4 + $0x114] sm:$0xff]
  %v5245 = vld [vmem:[%s4 + $0x11c] sm:$0xff]
  %v5246 = vld [vmem:[%s4 + $0x124] sm:$0xff]
  %v5247 = vld [vmem:[%s4 + $0x12c] sm:$0xff]
  %v5248 = vld [vmem:[%s4 + $0x134] sm:$0xff]
  %v5249 = vld [vmem:[%s4 + $0x13c] sm:$0xff]
  %v5250 = vld [vmem:[%s4 + $0x144] sm:$0xff]
  %v5251 = vld [vmem:[%s4 + $0x14c] sm:$0xf]
  %vm5253 = vcmask 1041408
  %v5254 = vrot.slane %v3401, 6
  %v5255 = vrot.slane %v3402, 6
  %v5256 = vsel %vm5253, %v5254, %v5255
  %v5257 = vrot.slane %v3403, 6
  %v5258 = vsel %vm5253, %v5255, %v5257
  %v5259 = vrot.slane %v3404, 6
  %v5260 = vsel %vm5253, %v5257, %v5259
  %v5261 = vrot.slane %v3405, 6
  %v5262 = vsel %vm5253, %v5259, %v5261
  %v5263 = vrot.slane %v3406, 6
  %v5264 = vsel %vm5253, %v5261, %v5263
  %v5265 = vrot.slane %v3407, 6
  %v5266 = vsel %vm5253, %v5263, %v5265
  %v5267 = vrot.slane %v3408, 6
  %v5268 = vsel %vm5253, %v5265, %v5267
  %v5269 = vrot.slane %v3409, 6
  %v5270 = vsel %vm5253, %v5267, %v5269
  %v5271 = vrot.slane %v3410, 6
  %v5272 = vsel %vm5253, %v5269, %v5271
  %v5273 = vrot.slane %v3411, 6
  %v5274 = vsel %vm5253, %v5271, %v5273
  %v5275 = vrot.slane %v3412, 6
  %v5276 = vsel %vm5253, %v5273, %v5275
  %v5277 = vrot.slane %v3413, 6
  %v5278 = vsel %vm5253, %v5275, %v5277
  %v5279 = vrot.slane %v3414, 6
  %v5280 = vsel %vm5253, %v5277, %v5279
  %v5281 = vrot.slane %v3415, 6
  %v5282 = vsel %vm5253, %v5279, %v5281
  %v5283 = vrot.slane %v3416, 6
  %v5284 = vsel %vm5253, %v5281, %v5283
  %v5285 = vrot.slane %v3417, 6
  %v5286 = vsel %vm5253, %v5283, %v5285
  %v5287 = vrot.slane %v3418, 6
  %v5288 = vsel %vm5253, %v5285, %v5287
  %v5289 = vrot.slane %v3419, 6
  %v5290 = vsel %vm5253, %v5287, %v5289
  %v5291 = vrot.slane %v3420, 6
  %v5292 = vsel %vm5253, %v5289, %v5291
  %v5293 = vrot.slane %v3421, 6
  %v5294 = vsel %vm5253, %v5291, %v5293
  %v5295 = vrot.slane %v3422, 6
  %v5296 = vsel %vm5253, %v5293, %v5295
  %v5297 = vrot.slane %v3423, 6
  %v5298 = vsel %vm5253, %v5295, %v5297
  %v5299 = vrot.slane %v3424, 6
  %v5300 = vsel %vm5253, %v5297, %v5299
  %v5301 = vrot.slane %v3425, 6
  %v5302 = vsel %vm5253, %v5299, %v5301
  %v5303 = vrot.slane %v3426, 6
  %v5304 = vsel %vm5253, %v5301, %v5303
  %v5305 = vrot.slane %v3427, 6
  %v5306 = vsel %vm5253, %v5303, %v5305
  %v5307 = vrot.slane %v3428, 6
  %v5308 = vsel %vm5253, %v5305, %v5307
  %v5309 = vrot.slane %v3429, 6
  %v5310 = vsel %vm5253, %v5307, %v5309
  %v5311 = vrot.slane %v3430, 6
  %v5312 = vsel %vm5253, %v5309, %v5311
  %v5313 = vrot.slane %v3431, 6
  %v5314 = vsel %vm5253, %v5311, %v5313
  %v5315 = vrot.slane %v3432, 6
  %v5316 = vsel %vm5253, %v5313, %v5315
  %v5317 = vsel %vm3559, %v5256, 0
  %v5319 = vsel %vm3559, %v5258, 0
  %v5321 = vsel %vm3559, %v5260, 0
  %v5323 = vsel %vm3559, %v5262, 0
  %v5325 = vsel %vm3559, %v5264, 0
  %v5327 = vsel %vm3559, %v5266, 0
  %v5329 = vsel %vm3559, %v5268, 0
  %v5331 = vsel %vm3559, %v5270, 0
  %v5333 = vsel %vm3559, %v5272, 0
  %v5335 = vsel %vm3559, %v5274, 0
  %v5337 = vsel %vm3559, %v5276, 0
  %v5339 = vsel %vm3559, %v5278, 0
  %v5341 = vsel %vm3559, %v5280, 0
  %v5343 = vsel %vm3559, %v5282, 0
  %v5345 = vsel %vm3559, %v5284, 0
  %v5347 = vsel %vm3559, %v5286, 0
  %v5349 = vsel %vm3559, %v5288, 0
  %v5351 = vsel %vm3559, %v5290, 0
  %v5353 = vsel %vm3559, %v5292, 0
  %v5355 = vsel %vm3559, %v5294, 0
  %v5357 = vsel %vm3559, %v5296, 0
  %v5359 = vsel %vm3559, %v5298, 0
  %v5361 = vsel %vm3559, %v5300, 0
  %v5363 = vsel %vm3559, %v5302, 0
  %v5365 = vsel %vm3559, %v5304, 0
  %v5367 = vsel %vm3559, %v5306, 0
  %v5369 = vsel %vm3559, %v5308, 0
  %v5371 = vsel %vm3559, %v5310, 0
  %v5373 = vsel %vm3559, %v5312, 0
  %v5375 = vsel %vm3559, %v5314, 0
  %v5377 = vsel %vm3559, %v5316, 0
  %v5380 = vsel %vm3622, %v5251, 0
  %5382 = vmatprep.subr.mxu0 0.0
  %5383 = vmatpush1.msra.mxu0 %v5241
  %5384 = vmatprep.subr.mxu0 0.0
  %5385 = vmatpush1.msra.mxu0 %v5242
  %5386 = vmatprep.subr.mxu0 0.0
  %5387 = vmatpush1.msra.mxu0 %v5243
  %5388 = vmatprep.subr.mxu0 0.0
  %5389 = vmatpush1.msra.mxu0 %v5244
  %5390 = vmatprep.subr.mxu0 0.0
  %5391 = vmatpush1.msra.mxu0 %v5245
  %5392 = vmatprep.subr.mxu0 0.0
  %5393 = vmatpush1.msra.mxu0 %v5246
  %5394 = vmatprep.subr.mxu0 0.0
  %5395 = vmatpush1.msra.mxu0 %v5247
  %5396 = vmatprep.subr.mxu0 0.0
  %5397 = vmatpush1.msra.mxu0 %v5248
  %5398 = vmatprep.subr.mxu0 0.0
  %5399 = vmatpush1.msra.mxu0 %v5249
  %5400 = vmatprep.subr.mxu0 0.0
  %5401 = vmatpush1.msra.mxu0 %v5250
  %5402 = vmatprep.subr.mxu0 0.0
  %5403 = vmatpush1.msra.mxu0 %v5380
  %5404 = vmatprep.subr.mxu0 0.0
  %5405 = vmatpush1.msra.mxu0 0.0
  %5406 = vmatprep.subr.mxu0 0.0
  %5407 = vmatpush1.msra.mxu0 0.0
  %5408 = vmatprep.subr.mxu0 0.0
  %5409 = vmatpush1.msra.mxu0 0.0
  %5410 = vmatprep.subr.mxu0 0.0
  %5411 = vmatpush1.msra.mxu0 0.0
  %5412 = vmatprep.subr.mxu0 0.0
  %5413 = vmatpush1.msra.mxu0 0.0
  %5414 = vmatprep.subr.mxu0 0.0
  %5415 = vmatpush1.msra.mxu0 0.0
  %5416 = vmatprep.subr.mxu0 0.0
  %5417 = vmatpush1.msra.mxu0 0.0
  %5418 = vmatprep.subr.mxu0 0.0
  %5419 = vmatpush1.msra.mxu0 0.0
  %5420 = vmatprep.subr.mxu0 0.0
  %5421 = vmatpush1.msra.mxu0 0.0
  %5422 = vmatprep.subr.mxu0 0.0
  %5423 = vmatpush1.msra.mxu0 0.0
  %5424 = vmatprep.subr.mxu0 0.0
  %5425 = vmatpush1.msra.mxu0 0.0
  %5426 = vmatprep.subr.mxu0 0.0
  %5427 = vmatpush1.msra.mxu0 0.0
  %5428 = vmatprep.subr.mxu0 0.0
  %5429 = vmatpush1.msra.mxu0 0.0
  %5430 = vmatprep.subr.mxu0 0.0
  %5431 = vmatpush1.msra.mxu0 0.0
  %5432 = vmatprep.subr.mxu0 0.0
  %5433 = vmatpush1.msra.mxu0 0.0
  %5434 = vmatprep.subr.mxu0 0.0
  %5435 = vmatpush1.msra.mxu0 0.0
  %5436 = vmatprep.subr.mxu0 0.0
  %5437 = vmatpush1.msra.mxu0 0.0
  %5438 = vmatprep.subr.mxu0 0.0
  %5439 = vmatpush1.msra.mxu0 0.0
  %5440 = vmatprep.subr.mxu0 0.0
  %5441 = vmatpush1.msra.mxu0 0.0
  %5442 = vmatprep.subr.mxu0 0.0
  %5443 = vmatpush1.msra.mxu0 0.0
  %5444 = vmatprep.subr.mxu0 0.0
  %5445 = vmatpush1.msra.mxu0 0.0
  %5446 = vmatprep.mubr.f32.mxu0 0.0
  %5447 = vmatmul.mubr.f32.gmra.mrb[0].mxu0 %v5317
  %v5448 = vpop.f32.mrb[0].mxu0
  %v5449 = vadd.f32 0.0, %v5448
  %v5450 = vpop.f32.mrb[0].mxu0
  %5451 = vmatprep.mubr.f32.mxu0 0.0
  %5452 = vmatmul.mubr.f32.gmra.mrb[0].mxu0 %v5319
  %v5453 = vpop.f32.mrb[0].mxu0
  %v5454 = vadd.f32 0.0, %v5453
  %v5455 = vpop.f32.mrb[0].mxu0
  %5456 = vmatprep.mubr.f32.mxu0 0.0
  %5457 = vmatmul.mubr.f32.gmra.mrb[0].mxu0 %v5321
  %v5458 = vpop.f32.mrb[0].mxu0
  %v5459 = vadd.f32 0.0, %v5458
  %v5460 = vpop.f32.mrb[0].mxu0
  %5461 = vmatprep.mubr.f32.mxu0 0.0
  %5462 = vmatmul.mubr.f32.gmra.mrb[0].mxu0 %v5323
  %v5463 = vpop.f32.mrb[0].mxu0
  %v5464 = vadd.f32 0.0, %v5463
  %v5465 = vpop.f32.mrb[0].mxu0
  %5466 = vmatprep.mubr.f32.mxu0 0.0
  %5467 = vmatmul.mubr.f32.gmra.mrb[0].mxu0 %v5325
  %v5468 = vpop.f32.mrb[0].mxu0
  %v5469 = vadd.f32 0.0, %v5468
  %v5470 = vpop.f32.mrb[0].mxu0
  %5471 = vmatprep.mubr.f32.mxu0 0.0
  %5472 = vmatmul.mubr.f32.gmra.mrb[0].mxu0 %v5327
  %v5473 = vpop.f32.mrb[0].mxu0
  %v5474 = vadd.f32 0.0, %v5473
  %v5475 = vpop.f32.mrb[0].mxu0
  %5476 = vmatprep.mubr.f32.mxu0 0.0
  %5477 = vmatmul.mubr.f32.gmra.mrb[0].mxu0 %v5329
  %v5478 = vpop.f32.mrb[0].mxu0
  %v5479 = vadd.f32 0.0, %v5478
  %v5480 = vpop.f32.mrb[0].mxu0
  %5481 = vmatprep.mubr.f32.mxu0 0.0
  %5482 = vmatmul.mubr.f32.gmra.mrb[0].mxu0 %v5331
  %v5483 = vpop.f32.mrb[0].mxu0
  %v5484 = vadd.f32 0.0, %v5483
  %v5485 = vpop.f32.mrb[0].mxu0
  %5486 = vmatprep.mubr.f32.mxu0 0.0
  %5487 = vmatmul.mubr.f32.gmra.mrb[0].mxu0 %v5333
  %v5488 = vpop.f32.mrb[0].mxu0
  %v5489 = vadd.f32 0.0, %v5488
  %v5490 = vpop.f32.mrb[0].mxu0
  %5491 = vmatprep.mubr.f32.mxu0 0.0
  %5492 = vmatmul.mubr.f32.gmra.mrb[0].mxu0 %v5335
  %v5493 = vpop.f32.mrb[0].mxu0
  %v5494 = vadd.f32 0.0, %v5493
  %v5495 = vpop.f32.mrb[0].mxu0
  %5496 = vmatprep.mubr.f32.mxu0 0.0
  %5497 = vmatmul.mubr.f32.gmra.mrb[0].mxu0 %v5337
  %v5498 = vpop.f32.mrb[0].mxu0
  %v5499 = vadd.f32 0.0, %v5498
  %v5500 = vpop.f32.mrb[0].mxu0
  %5501 = vmatprep.mubr.f32.mxu0 0.0
  %5502 = vmatmul.mubr.f32.gmra.mrb[0].mxu0 %v5339
  %v5503 = vpop.f32.mrb[0].mxu0
  %v5504 = vadd.f32 0.0, %v5503
  %v5505 = vpop.f32.mrb[0].mxu0
  %5506 = vmatprep.mubr.f32.mxu0 0.0
  %5507 = vmatmul.mubr.f32.gmra.mrb[0].mxu0 %v5341
  %v5508 = vpop.f32.mrb[0].mxu0
  %v5509 = vadd.f32 0.0, %v5508
  %v5510 = vpop.f32.mrb[0].mxu0
  %5511 = vmatprep.mubr.f32.mxu0 0.0
  %5512 = vmatmul.mubr.f32.gmra.mrb[0].mxu0 %v5343
  %v5513 = vpop.f32.mrb[0].mxu0
  %v5514 = vadd.f32 0.0, %v5513
  %v5515 = vpop.f32.mrb[0].mxu0
  %5516 = vmatprep.mubr.f32.mxu0 0.0
  %5517 = vmatmul.mubr.f32.gmra.mrb[0].mxu0 %v5345
  %v5518 = vpop.f32.mrb[0].mxu0
  %v5519 = vadd.f32 0.0, %v5518
  %v5520 = vpop.f32.mrb[0].mxu0
  %5521 = vmatprep.mubr.f32.mxu0 0.0
  %5522 = vmatmul.mubr.f32.gmra.mrb[0].mxu0 %v5347
  %v5523 = vpop.f32.mrb[0].mxu0
  %v5524 = vadd.f32 0.0, %v5523
  %v5525 = vpop.f32.mrb[0].mxu0
  %5526 = vmatprep.mubr.f32.mxu0 0.0
  %5527 = vmatmul.mubr.f32.gmra.mrb[0].mxu0 %v5349
  %v5528 = vpop.f32.mrb[0].mxu0
  %v5529 = vadd.f32 0.0, %v5528
  %v5530 = vpop.f32.mrb[0].mxu0
  %5531 = vmatprep.mubr.f32.mxu0 0.0
  %5532 = vmatmul.mubr.f32.gmra.mrb[0].mxu0 %v5351
  %v5533 = vpop.f32.mrb[0].mxu0
  %v5534 = vadd.f32 0.0, %v5533
  %v5535 = vpop.f32.mrb[0].mxu0
  %5536 = vmatprep.mubr.f32.mxu0 0.0
  %5537 = vmatmul.mubr.f32.gmra.mrb[0].mxu0 %v5353
  %v5538 = vpop.f32.mrb[0].mxu0
  %v5539 = vadd.f32 0.0, %v5538
  %v5540 = vpop.f32.mrb[0].mxu0
  %5541 = vmatprep.mubr.f32.mxu0 0.0
  %5542 = vmatmul.mubr.f32.gmra.mrb[0].mxu0 %v5355
  %v5543 = vpop.f32.mrb[0].mxu0
  %v5544 = vadd.f32 0.0, %v5543
  %v5545 = vpop.f32.mrb[0].mxu0
  %5546 = vmatprep.mubr.f32.mxu0 0.0
  %5547 = vmatmul.mubr.f32.gmra.mrb[0].mxu0 %v5357
  %v5548 = vpop.f32.mrb[0].mxu0
  %v5549 = vadd.f32 0.0, %v5548
  %v5550 = vpop.f32.mrb[0].mxu0
  %5551 = vmatprep.mubr.f32.mxu0 0.0
  %5552 = vmatmul.mubr.f32.gmra.mrb[0].mxu0 %v5359
  %v5553 = vpop.f32.mrb[0].mxu0
  %v5554 = vadd.f32 0.0, %v5553
  %v5555 = vpop.f32.mrb[0].mxu0
  %5556 = vmatprep.mubr.f32.mxu0 0.0
  %5557 = vmatmul.mubr.f32.gmra.mrb[0].mxu0 %v5361
  %v5558 = vpop.f32.mrb[0].mxu0
  %v5559 = vadd.f32 0.0, %v5558
  %v5560 = vpop.f32.mrb[0].mxu0
  %5561 = vmatprep.mubr.f32.mxu0 0.0
  %5562 = vmatmul.mubr.f32.gmra.mrb[0].mxu0 %v5363
  %v5563 = vpop.f32.mrb[0].mxu0
  %v5564 = vadd.f32 0.0, %v5563
  %v5565 = vpop.f32.mrb[0].mxu0
  %5566 = vmatprep.mubr.f32.mxu0 0.0
  %5567 = vmatmul.mubr.f32.gmra.mrb[0].mxu0 %v5365
  %v5568 = vpop.f32.mrb[0].mxu0
  %v5569 = vadd.f32 0.0, %v5568
  %v5570 = vpop.f32.mrb[0].mxu0
  %5571 = vmatprep.mubr.f32.mxu0 0.0
  %5572 = vmatmul.mubr.f32.gmra.mrb[0].mxu0 %v5367
  %v5573 = vpop.f32.mrb[0].mxu0
  %v5574 = vadd.f32 0.0, %v5573
  %v5575 = vpop.f32.mrb[0].mxu0
  %5576 = vmatprep.mubr.f32.mxu0 0.0
  %5577 = vmatmul.mubr.f32.gmra.mrb[0].mxu0 %v5369
  %v5578 = vpop.f32.mrb[0].mxu0
  %v5579 = vadd.f32 0.0, %v5578
  %v5580 = vpop.f32.mrb[0].mxu0
  %5581 = vmatprep.mubr.f32.mxu0 0.0
  %5582 = vmatmul.mubr.f32.gmra.mrb[0].mxu0 %v5371
  %v5583 = vpop.f32.mrb[0].mxu0
  %v5584 = vadd.f32 0.0, %v5583
  %v5585 = vpop.f32.mrb[0].mxu0
  %5586 = vmatprep.mubr.f32.mxu0 0.0
  %5587 = vmatmul.mubr.f32.gmra.mrb[0].mxu0 %v5373
  %v5588 = vpop.f32.mrb[0].mxu0
  %v5589 = vadd.f32 0.0, %v5588
  %v5590 = vpop.f32.mrb[0].mxu0
  %5591 = vmatprep.mubr.f32.mxu0 0.0
  %5592 = vmatmul.mubr.f32.gmra.mrb[0].mxu0 %v5375
  %v5593 = vpop.f32.mrb[0].mxu0
  %v5594 = vadd.f32 0.0, %v5593
  %v5595 = vpop.f32.mrb[0].mxu0
  %5596 = vmatprep.mubr.f32.mxu0 0.0
  %5597 = vmatmul.mubr.f32.gmra.mrb[0].mxu0 %v5377
  %v5598 = vpop.f32.mrb[0].mxu0
  %v5599 = vadd.f32 0.0, %v5598
  %v5600 = vpop.f32.mrb[0].mxu0
  %5601 = vdwg.mxu0
  %v5602 = vld [vmem:[%s5 + $0xfc] sm:$0xff]
  %v5603 = vld [vmem:[%s5 + $0x104] sm:$0xff]
  %v5604 = vld [vmem:[%s5 + $0x10c] sm:$0xff]
  %v5605 = vld [vmem:[%s5 + $0x114] sm:$0xff]
  %v5606 = vld [vmem:[%s5 + $0x11c] sm:$0xff]
  %v5607 = vld [vmem:[%s5 + $0x124] sm:$0xff]
  %v5608 = vld [vmem:[%s5 + $0x12c] sm:$0xff]
  %v5609 = vld [vmem:[%s5 + $0x134] sm:$0xff]
  %v5610 = vld [vmem:[%s5 + $0x13c] sm:$0xff]
  %v5611 = vld [vmem:[%s5 + $0x144] sm:$0xff]
  %v5612 = vld [vmem:[%s5 + $0x14c] sm:$0xf]
  %v5614 = vsel %vm3622, %v5612, 0
  %5616 = vmatprep.subr.mxu0 0.0
  %5617 = vmatpush1.msra.mxu0 %v5602
  %5618 = vmatprep.subr.mxu0 0.0
  %5619 = vmatpush1.msra.mxu0 %v5603
  %5620 = vmatprep.subr.mxu0 0.0
  %5621 = vmatpush1.msra.mxu0 %v5604
  %5622 = vmatprep.subr.mxu0 0.0
  %5623 = vmatpush1.msra.mxu0 %v5605
  %5624 = vmatprep.subr.mxu0 0.0
  %5625 = vmatpush1.msra.mxu0 %v5606
  %5626 = vmatprep.subr.mxu0 0.0
  %5627 = vmatpush1.msra.mxu0 %v5607
  %5628 = vmatprep.subr.mxu0 0.0
  %5629 = vmatpush1.msra.mxu0 %v5608
  %5630 = vmatprep.subr.mxu0 0.0
  %5631 = vmatpush1.msra.mxu0 %v5609
  %5632 = vmatprep.subr.mxu0 0.0
  %5633 = vmatpush1.msra.mxu0 %v5610
  %5634 = vmatprep.subr.mxu0 0.0
  %5635 = vmatpush1.msra.mxu0 %v5611
  %5636 = vmatprep.subr.mxu0 0.0
  %5637 = vmatpush1.msra.mxu0 %v5614
  %5638 = vmatprep.subr.mxu0 0.0
  %5639 = vmatpush1.msra.mxu0 0.0
  %5640 = vmatprep.subr.mxu0 0.0
  %5641 = vmatpush1.msra.mxu0 0.0
  %5642 = vmatprep.subr.mxu0 0.0
  %5643 = vmatpush1.msra.mxu0 0.0
  %5644 = vmatprep.subr.mxu0 0.0
  %5645 = vmatpush1.msra.mxu0 0.0
  %5646 = vmatprep.subr.mxu0 0.0
  %5647 = vmatpush1.msra.mxu0 0.0
  %5648 = vmatprep.subr.mxu0 0.0
  %5649 = vmatpush1.msra.mxu0 0.0
  %5650 = vmatprep.subr.mxu0 0.0
  %5651 = vmatpush1.msra.mxu0 0.0
  %5652 = vmatprep.subr.mxu0 0.0
  %5653 = vmatpush1.msra.mxu0 0.0
  %5654 = vmatprep.subr.mxu0 0.0
  %5655 = vmatpush1.msra.mxu0 0.0
  %5656 = vmatprep.subr.mxu0 0.0
  %5657 = vmatpush1.msra.mxu0 0.0
  %5658 = vmatprep.subr.mxu0 0.0
  %5659 = vmatpush1.msra.mxu0 0.0
  %5660 = vmatprep.subr.mxu0 0.0
  %5661 = vmatpush1.msra.mxu0 0.0
  %5662 = vmatprep.subr.mxu0 0.0
  %5663 = vmatpush1.msra.mxu0 0.0
  %5664 = vmatprep.subr.mxu0 0.0
  %5665 = vmatpush1.msra.mxu0 0.0
  %5666 = vmatprep.subr.mxu0 0.0
  %5667 = vmatpush1.msra.mxu0 0.0
  %5668 = vmatprep.subr.mxu0 0.0
  %5669 = vmatpush1.msra.mxu0 0.0
  %5670 = vmatprep.subr.mxu0 0.0
  %5671 = vmatpush1.msra.mxu0 0.0
  %5672 = vmatprep.subr.mxu0 0.0
  %5673 = vmatpush1.msra.mxu0 0.0
  %5674 = vmatprep.subr.mxu0 0.0
  %5675 = vmatpush1.msra.mxu0 0.0
  %5676 = vmatprep.subr.mxu0 0.0
  %5677 = vmatpush1.msra.mxu0 0.0
  %5678 = vmatprep.subr.mxu0 0.0
  %5679 = vmatpush1.msra.mxu0 0.0
  %5680 = vmatprep.mubr.f32.mxu0 0.0
  %5681 = vmatmul.mubr.f32.gmra.mrb[0].mxu0 %v5317
  %v5682 = vpop.f32.mrb[0].mxu0
  %v5683 = vadd.f32 0.0, %v5682
  %v5684 = vpop.f32.mrb[0].mxu0
  %5685 = vmatprep.mubr.f32.mxu0 0.0
  %5686 = vmatmul.mubr.f32.gmra.mrb[0].mxu0 %v5319
  %v5687 = vpop.f32.mrb[0].mxu0
  %v5688 = vadd.f32 0.0, %v5687
  %v5689 = vpop.f32.mrb[0].mxu0
  %5690 = vmatprep.mubr.f32.mxu0 0.0
  %5691 = vmatmul.mubr.f32.gmra.mrb[0].mxu0 %v5321
  %v5692 = vpop.f32.mrb[0].mxu0
  %v5693 = vadd.f32 0.0, %v5692
  %v5694 = vpop.f32.mrb[0].mxu0
  %5695 = vmatprep.mubr.f32.mxu0 0.0
  %5696 = vmatmul.mubr.f32.gmra.mrb[0].mxu0 %v5323
  %v5697 = vpop.f32.mrb[0].mxu0
  %v5698 = vadd.f32 0.0, %v5697
  %v5699 = vpop.f32.mrb[0].mxu0
  %5700 = vmatprep.mubr.f32.mxu0 0.0
  %5701 = vmatmul.mubr.f32.gmra.mrb[0].mxu0 %v5325
  %v5702 = vpop.f32.mrb[0].mxu0
  %v5703 = vadd.f32 0.0, %v5702
  %v5704 = vpop.f32.mrb[0].mxu0
  %5705 = vmatprep.mubr.f32.mxu0 0.0
  %5706 = vmatmul.mubr.f32.gmra.mrb[0].mxu0 %v5327
  %v5707 = vpop.f32.mrb[0].mxu0
  %v5708 = vadd.f32 0.0, %v5707
  %v5709 = vpop.f32.mrb[0].mxu0
  %5710 = vmatprep.mubr.f32.mxu0 0.0
  %5711 = vmatmul.mubr.f32.gmra.mrb[0].mxu0 %v5329
  %v5712 = vpop.f32.mrb[0].mxu0
  %v5713 = vadd.f32 0.0, %v5712
  %v5714 = vpop.f32.mrb[0].mxu0
  %5715 = vmatprep.mubr.f32.mxu0 0.0
  %5716 = vmatmul.mubr.f32.gmra.mrb[0].mxu0 %v5331
  %v5717 = vpop.f32.mrb[0].mxu0
  %v5718 = vadd.f32 0.0, %v5717
  %v5719 = vpop.f32.mrb[0].mxu0
  %5720 = vmatprep.mubr.f32.mxu0 0.0
  %5721 = vmatmul.mubr.f32.gmra.mrb[0].mxu0 %v5333
  %v5722 = vpop.f32.mrb[0].mxu0
  %v5723 = vadd.f32 0.0, %v5722
  %v5724 = vpop.f32.mrb[0].mxu0
  %5725 = vmatprep.mubr.f32.mxu0 0.0
  %5726 = vmatmul.mubr.f32.gmra.mrb[0].mxu0 %v5335
  %v5727 = vpop.f32.mrb[0].mxu0
  %v5728 = vadd.f32 0.0, %v5727
  %v5729 = vpop.f32.mrb[0].mxu0
  %5730 = vmatprep.mubr.f32.mxu0 0.0
  %5731 = vmatmul.mubr.f32.gmra.mrb[0].mxu0 %v5337
  %v5732 = vpop.f32.mrb[0].mxu0
  %v5733 = vadd.f32 0.0, %v5732
  %v5734 = vpop.f32.mrb[0].mxu0
  %5735 = vmatprep.mubr.f32.mxu0 0.0
  %5736 = vmatmul.mubr.f32.gmra.mrb[0].mxu0 %v5339
  %v5737 = vpop.f32.mrb[0].mxu0
  %v5738 = vadd.f32 0.0, %v5737
  %v5739 = vpop.f32.mrb[0].mxu0
  %5740 = vmatprep.mubr.f32.mxu0 0.0
  %5741 = vmatmul.mubr.f32.gmra.mrb[0].mxu0 %v5341
  %v5742 = vpop.f32.mrb[0].mxu0
  %v5743 = vadd.f32 0.0, %v5742
  %v5744 = vpop.f32.mrb[0].mxu0
  %5745 = vmatprep.mubr.f32.mxu0 0.0
  %5746 = vmatmul.mubr.f32.gmra.mrb[0].mxu0 %v5343
  %v5747 = vpop.f32.mrb[0].mxu0
  %v5748 = vadd.f32 0.0, %v5747
  %v5749 = vpop.f32.mrb[0].mxu0
  %5750 = vmatprep.mubr.f32.mxu0 0.0
  %5751 = vmatmul.mubr.f32.gmra.mrb[0].mxu0 %v5345
  %v5752 = vpop.f32.mrb[0].mxu0
  %v5753 = vadd.f32 0.0, %v5752
  %v5754 = vpop.f32.mrb[0].mxu0
  %5755 = vmatprep.mubr.f32.mxu0 0.0
  %5756 = vmatmul.mubr.f32.gmra.mrb[0].mxu0 %v5347
  %v5757 = vpop.f32.mrb[0].mxu0
  %v5758 = vadd.f32 0.0, %v5757
  %v5759 = vpop.f32.mrb[0].mxu0
  %5760 = vmatprep.mubr.f32.mxu0 0.0
  %5761 = vmatmul.mubr.f32.gmra.mrb[0].mxu0 %v5349
  %v5762 = vpop.f32.mrb[0].mxu0
  %v5763 = vadd.f32 0.0, %v5762
  %v5764 = vpop.f32.mrb[0].mxu0
  %5765 = vmatprep.mubr.f32.mxu0 0.0
  %5766 = vmatmul.mubr.f32.gmra.mrb[0].mxu0 %v5351
  %v5767 = vpop.f32.mrb[0].mxu0
  %v5768 = vadd.f32 0.0, %v5767
  %v5769 = vpop.f32.mrb[0].mxu0
  %5770 = vmatprep.mubr.f32.mxu0 0.0
  %5771 = vmatmul.mubr.f32.gmra.mrb[0].mxu0 %v5353
  %v5772 = vpop.f32.mrb[0].mxu0
  %v5773 = vadd.f32 0.0, %v5772
  %v5774 = vpop.f32.mrb[0].mxu0
  %5775 = vmatprep.mubr.f32.mxu0 0.0
  %5776 = vmatmul.mubr.f32.gmra.mrb[0].mxu0 %v5355
  %v5777 = vpop.f32.mrb[0].mxu0
  %v5778 = vadd.f32 0.0, %v5777
  %v5779 = vpop.f32.mrb[0].mxu0
  %5780 = vmatprep.mubr.f32.mxu0 0.0
  %5781 = vmatmul.mubr.f32.gmra.mrb[0].mxu0 %v5357
  %v5782 = vpop.f32.mrb[0].mxu0
  %v5783 = vadd.f32 0.0, %v5782
  %v5784 = vpop.f32.mrb[0].mxu0
  %5785 = vmatprep.mubr.f32.mxu0 0.0
  %5786 = vmatmul.mubr.f32.gmra.mrb[0].mxu0 %v5359
  %v5787 = vpop.f32.mrb[0].mxu0
  %v5788 = vadd.f32 0.0, %v5787
  %v5789 = vpop.f32.mrb[0].mxu0
  %5790 = vmatprep.mubr.f32.mxu0 0.0
  %5791 = vmatmul.mubr.f32.gmra.mrb[0].mxu0 %v5361
  %v5792 = vpop.f32.mrb[0].mxu0
  %v5793 = vadd.f32 0.0, %v5792
  %v5794 = vpop.f32.mrb[0].mxu0
  %5795 = vmatprep.mubr.f32.mxu0 0.0
  %5796 = vmatmul.mubr.f32.gmra.mrb[0].mxu0 %v5363
  %v5797 = vpop.f32.mrb[0].mxu0
  %v5798 = vadd.f32 0.0, %v5797
  %v5799 = vpop.f32.mrb[0].mxu0
  %5800 = vmatprep.mubr.f32.mxu0 0.0
  %5801 = vmatmul.mubr.f32.gmra.mrb[0].mxu0 %v5365
  %v5802 = vpop.f32.mrb[0].mxu0
  %v5803 = vadd.f32 0.0, %v5802
  %v5804 = vpop.f32.mrb[0].mxu0
  %5805 = vmatprep.mubr.f32.mxu0 0.0
  %5806 = vmatmul.mubr.f32.gmra.mrb[0].mxu0 %v5367
  %v5807 = vpop.f32.mrb[0].mxu0
  %v5808 = vadd.f32 0.0, %v5807
  %v5809 = vpop.f32.mrb[0].mxu0
  %5810 = vmatprep.mubr.f32.mxu0 0.0
  %5811 = vmatmul.mubr.f32.gmra.mrb[0].mxu0 %v5369
  %v5812 = vpop.f32.mrb[0].mxu0
  %v5813 = vadd.f32 0.0, %v5812
  %v5814 = vpop.f32.mrb[0].mxu0
  %5815 = vmatprep.mubr.f32.mxu0 0.0
  %5816 = vmatmul.mubr.f32.gmra.mrb[0].mxu0 %v5371
  %v5817 = vpop.f32.mrb[0].mxu0
  %v5818 = vadd.f32 0.0, %v5817
  %v5819 = vpop.f32.mrb[0].mxu0
  %5820 = vmatprep.mubr.f32.mxu0 0.0
  %5821 = vmatmul.mubr.f32.gmra.mrb[0].mxu0 %v5373
  %v5822 = vpop.f32.mrb[0].mxu0
  %v5823 = vadd.f32 0.0, %v5822
  %v5824 = vpop.f32.mrb[0].mxu0
  %5825 = vmatprep.mubr.f32.mxu0 0.0
  %5826 = vmatmul.mubr.f32.gmra.mrb[0].mxu0 %v5375
  %v5827 = vpop.f32.mrb[0].mxu0
  %v5828 = vadd.f32 0.0, %v5827
  %v5829 = vpop.f32.mrb[0].mxu0
  %5830 = vmatprep.mubr.f32.mxu0 0.0
  %5831 = vmatmul.mubr.f32.gmra.mrb[0].mxu0 %v5377
  %v5832 = vpop.f32.mrb[0].mxu0
  %v5833 = vadd.f32 0.0, %v5832
  %v5834 = vpop.f32.mrb[0].mxu0
  %5835 = vdwg.mxu0
  %v5836 = vadd.f32 %v5179, %v5449
  %v5837 = vadd.f32 %v5180, %v5454
  %v5838 = vadd.f32 %v5181, %v5459
  %v5839 = vadd.f32 %v5182, %v5464
  %v5840 = vadd.f32 %v5183, %v5469
  %v5841 = vadd.f32 %v5184, %v5474
  %v5842 = vadd.f32 %v5185, %v5479
  %v5843 = vadd.f32 %v5186, %v5484
  %v5844 = vadd.f32 %v5187, %v5489
  %v5845 = vadd.f32 %v5188, %v5494
  %v5846 = vadd.f32 %v5189, %v5499
  %v5847 = vadd.f32 %v5190, %v5504
  %v5848 = vadd.f32 %v5191, %v5509
  %v5849 = vadd.f32 %v5192, %v5514
  %v5850 = vadd.f32 %v5193, %v5519
  %v5851 = vadd.f32 %v5194, %v5524
  %v5852 = vadd.f32 %v5195, %v5529
  %v5853 = vadd.f32 %v5196, %v5534
  %v5854 = vadd.f32 %v5197, %v5539
  %v5855 = vadd.f32 %v5198, %v5544
  %v5856 = vadd.f32 %v5199, %v5549
  %v5857 = vadd.f32 %v5200, %v5554
  %v5858 = vadd.f32 %v5201, %v5559
  %v5859 = vadd.f32 %v5202, %v5564
  %v5860 = vadd.f32 %v5203, %v5569
  %v5861 = vadd.f32 %v5204, %v5574
  %v5862 = vadd.f32 %v5205, %v5579
  %v5863 = vadd.f32 %v5206, %v5584
  %v5864 = vadd.f32 %v5207, %v5589
  %v5865 = vadd.f32 %v5208, %v5594
  %v5866 = vadd.f32 %v5209, %v5599
  %v5867 = vadd.f32 %v5210, %v5683
  %v5868 = vadd.f32 %v5211, %v5688
  %v5869 = vadd.f32 %v5212, %v5693
  %v5870 = vadd.f32 %v5213, %v5698
  %v5871 = vadd.f32 %v5214, %v5703
  %v5872 = vadd.f32 %v5215, %v5708
  %v5873 = vadd.f32 %v5216, %v5713
  %v5874 = vadd.f32 %v5217, %v5718
  %v5875 = vadd.f32 %v5218, %v5723
  %v5876 = vadd.f32 %v5219, %v5728
  %v5877 = vadd.f32 %v5220, %v5733
  %v5878 = vadd.f32 %v5221, %v5738
  %v5879 = vadd.f32 %v5222, %v5743
  %v5880 = vadd.f32 %v5223, %v5748
  %v5881 = vadd.f32 %v5224, %v5753
  %v5882 = vadd.f32 %v5225, %v5758
  %v5883 = vadd.f32 %v5226, %v5763
  %v5884 = vadd.f32 %v5227, %v5768
  %v5885 = vadd.f32 %v5228, %v5773
  %v5886 = vadd.f32 %v5229, %v5778
  %v5887 = vadd.f32 %v5230, %v5783
  %v5888 = vadd.f32 %v5231, %v5788
  %v5889 = vadd.f32 %v5232, %v5793
  %v5890 = vadd.f32 %v5233, %v5798
  %v5891 = vadd.f32 %v5234, %v5803
  %v5892 = vadd.f32 %v5235, %v5808
  %v5893 = vadd.f32 %v5236, %v5813
  %v5894 = vadd.f32 %v5237, %v5818
  %v5895 = vadd.f32 %v5238, %v5823
  %v5896 = vadd.f32 %v5239, %v5828
  %v5897 = vadd.f32 %v5240, %v5833
  %v5898 = vld [vmem:[%s4 + $0x150] sm:$0xff]
  %v5899 = vld [vmem:[%s4 + $0x158] sm:$0xff]
  %v5900 = vld [vmem:[%s4 + $0x160] sm:$0xff]
  %v5901 = vld [vmem:[%s4 + $0x168] sm:$0xff]
  %v5902 = vld [vmem:[%s4 + $0x170] sm:$0xff]
  %v5903 = vld [vmem:[%s4 + $0x178] sm:$0xff]
  %v5904 = vld [vmem:[%s4 + $0x180] sm:$0xff]
  %v5905 = vld [vmem:[%s4 + $0x188] sm:$0xff]
  %v5906 = vld [vmem:[%s4 + $0x190] sm:$0xff]
  %v5907 = vld [vmem:[%s4 + $0x198] sm:$0xff]
  %v5908 = vld [vmem:[%s4 + $0x1a0] sm:$0xf]
  %v5909 = vsel %vm3559, %v3432, 0
  %v5912 = vsel %vm3622, %v5908, 0
  %5914 = vmatprep.subr.mxu0 0.0
  %5915 = vmatpush1.msra.mxu0 %v5898
  %5916 = vmatprep.subr.mxu0 0.0
  %5917 = vmatpush1.msra.mxu0 %v5899
  %5918 = vmatprep.subr.mxu0 0.0
  %5919 = vmatpush1.msra.mxu0 %v5900
  %5920 = vmatprep.subr.mxu0 0.0
  %5921 = vmatpush1.msra.mxu0 %v5901
  %5922 = vmatprep.subr.mxu0 0.0
  %5923 = vmatpush1.msra.mxu0 %v5902
  %5924 = vmatprep.subr.mxu0 0.0
  %5925 = vmatpush1.msra.mxu0 %v5903
  %5926 = vmatprep.subr.mxu0 0.0
  %5927 = vmatpush1.msra.mxu0 %v5904
  %5928 = vmatprep.subr.mxu0 0.0
  %5929 = vmatpush1.msra.mxu0 %v5905
  %5930 = vmatprep.subr.mxu0 0.0
  %5931 = vmatpush1.msra.mxu0 %v5906
  %5932 = vmatprep.subr.mxu0 0.0
  %5933 = vmatpush1.msra.mxu0 %v5907
  %5934 = vmatprep.subr.mxu0 0.0
  %5935 = vmatpush1.msra.mxu0 %v5912
  %5936 = vmatprep.subr.mxu0 0.0
  %5937 = vmatpush1.msra.mxu0 0.0
  %5938 = vmatprep.subr.mxu0 0.0
  %5939 = vmatpush1.msra.mxu0 0.0
  %5940 = vmatprep.subr.mxu0 0.0
  %5941 = vmatpush1.msra.mxu0 0.0
  %5942 = vmatprep.subr.mxu0 0.0
  %5943 = vmatpush1.msra.mxu0 0.0
  %5944 = vmatprep.subr.mxu0 0.0
  %5945 = vmatpush1.msra.mxu0 0.0
  %5946 = vmatprep.subr.mxu0 0.0
  %5947 = vmatpush1.msra.mxu0 0.0
  %5948 = vmatprep.subr.mxu0 0.0
  %5949 = vmatpush1.msra.mxu0 0.0
  %5950 = vmatprep.subr.mxu0 0.0
  %5951 = vmatpush1.msra.mxu0 0.0
  %5952 = vmatprep.subr.mxu0 0.0
  %5953 = vmatpush1.msra.mxu0 0.0
  %5954 = vmatprep.subr.mxu0 0.0
  %5955 = vmatpush1.msra.mxu0 0.0
  %5956 = vmatprep.subr.mxu0 0.0
  %5957 = vmatpush1.msra.mxu0 0.0
  %5958 = vmatprep.subr.mxu0 0.0
  %5959 = vmatpush1.msra.mxu0 0.0
  %5960 = vmatprep.subr.mxu0 0.0
  %5961 = vmatpush1.msra.mxu0 0.0
  %5962 = vmatprep.subr.mxu0 0.0
  %5963 = vmatpush1.msra.mxu0 0.0
  %5964 = vmatprep.subr.mxu0 0.0
  %5965 = vmatpush1.msra.mxu0 0.0
  %5966 = vmatprep.subr.mxu0 0.0
  %5967 = vmatpush1.msra.mxu0 0.0
  %5968 = vmatprep.subr.mxu0 0.0
  %5969 = vmatpush1.msra.mxu0 0.0
  %5970 = vmatprep.subr.mxu0 0.0
  %5971 = vmatpush1.msra.mxu0 0.0
  %5972 = vmatprep.subr.mxu0 0.0
  %5973 = vmatpush1.msra.mxu0 0.0
  %5974 = vmatprep.subr.mxu0 0.0
  %5975 = vmatpush1.msra.mxu0 0.0
  %5976 = vmatprep.subr.mxu0 0.0
  %5977 = vmatpush1.msra.mxu0 0.0
  %5978 = vmatprep.mubr.f32.mxu0 0.0
  %5979 = vmatmul.mubr.f32.gmra.mrb[0].mxu0 %v4082
  %v5980 = vpop.f32.mrb[0].mxu0
  %v5981 = vadd.f32 0.0, %v5980
  %v5982 = vpop.f32.mrb[0].mxu0
  %5983 = vmatprep.mubr.f32.mxu0 0.0
  %5984 = vmatmul.mubr.f32.gmra.mrb[0].mxu0 %v4084
  %v5985 = vpop.f32.mrb[0].mxu0
  %v5986 = vadd.f32 0.0, %v5985
  %v5987 = vpop.f32.mrb[0].mxu0
  %5988 = vmatprep.mubr.f32.mxu0 0.0
  %5989 = vmatmul.mubr.f32.gmra.mrb[0].mxu0 %v4086
  %v5990 = vpop.f32.mrb[0].mxu0
  %v5991 = vadd.f32 0.0, %v5990
  %v5992 = vpop.f32.mrb[0].mxu0
  %5993 = vmatprep.mubr.f32.mxu0 0.0
  %5994 = vmatmul.mubr.f32.gmra.mrb[0].mxu0 %v4088
  %v5995 = vpop.f32.mrb[0].mxu0
  %v5996 = vadd.f32 0.0, %v5995
  %v5997 = vpop.f32.mrb[0].mxu0
  %5998 = vmatprep.mubr.f32.mxu0 0.0
  %5999 = vmatmul.mubr.f32.gmra.mrb[0].mxu0 %v4090
  %v6000 = vpop.f32.mrb[0].mxu0
  %v6001 = vadd.f32 0.0, %v6000
  %v6002 = vpop.f32.mrb[0].mxu0
  %6003 = vmatprep.mubr.f32.mxu0 0.0
  %6004 = vmatmul.mubr.f32.gmra.mrb[0].mxu0 %v4092
  %v6005 = vpop.f32.mrb[0].mxu0
  %v6006 = vadd.f32 0.0, %v6005
  %v6007 = vpop.f32.mrb[0].mxu0
  %6008 = vmatprep.mubr.f32.mxu0 0.0
  %6009 = vmatmul.mubr.f32.gmra.mrb[0].mxu0 %v4094
  %v6010 = vpop.f32.mrb[0].mxu0
  %v6011 = vadd.f32 0.0, %v6010
  %v6012 = vpop.f32.mrb[0].mxu0
  %6013 = vmatprep.mubr.f32.mxu0 0.0
  %6014 = vmatmul.mubr.f32.gmra.mrb[0].mxu0 %v4096
  %v6015 = vpop.f32.mrb[0].mxu0
  %v6016 = vadd.f32 0.0, %v6015
  %v6017 = vpop.f32.mrb[0].mxu0
  %6018 = vmatprep.mubr.f32.mxu0 0.0
  %6019 = vmatmul.mubr.f32.gmra.mrb[0].mxu0 %v4098
  %v6020 = vpop.f32.mrb[0].mxu0
  %v6021 = vadd.f32 0.0, %v6020
  %v6022 = vpop.f32.mrb[0].mxu0
  %6023 = vmatprep.mubr.f32.mxu0 0.0
  %6024 = vmatmul.mubr.f32.gmra.mrb[0].mxu0 %v4100
  %v6025 = vpop.f32.mrb[0].mxu0
  %v6026 = vadd.f32 0.0, %v6025
  %v6027 = vpop.f32.mrb[0].mxu0
  %6028 = vmatprep.mubr.f32.mxu0 0.0
  %6029 = vmatmul.mubr.f32.gmra.mrb[0].mxu0 %v4102
  %v6030 = vpop.f32.mrb[0].mxu0
  %v6031 = vadd.f32 0.0, %v6030
  %v6032 = vpop.f32.mrb[0].mxu0
  %6033 = vmatprep.mubr.f32.mxu0 0.0
  %6034 = vmatmul.mubr.f32.gmra.mrb[0].mxu0 %v4104
  %v6035 = vpop.f32.mrb[0].mxu0
  %v6036 = vadd.f32 0.0, %v6035
  %v6037 = vpop.f32.mrb[0].mxu0
  %6038 = vmatprep.mubr.f32.mxu0 0.0
  %6039 = vmatmul.mubr.f32.gmra.mrb[0].mxu0 %v4106
  %v6040 = vpop.f32.mrb[0].mxu0
  %v6041 = vadd.f32 0.0, %v6040
  %v6042 = vpop.f32.mrb[0].mxu0
  %6043 = vmatprep.mubr.f32.mxu0 0.0
  %6044 = vmatmul.mubr.f32.gmra.mrb[0].mxu0 %v4108
  %v6045 = vpop.f32.mrb[0].mxu0
  %v6046 = vadd.f32 0.0, %v6045
  %v6047 = vpop.f32.mrb[0].mxu0
  %6048 = vmatprep.mubr.f32.mxu0 0.0
  %6049 = vmatmul.mubr.f32.gmra.mrb[0].mxu0 %v4110
  %v6050 = vpop.f32.mrb[0].mxu0
  %v6051 = vadd.f32 0.0, %v6050
  %v6052 = vpop.f32.mrb[0].mxu0
  %6053 = vmatprep.mubr.f32.mxu0 0.0
  %6054 = vmatmul.mubr.f32.gmra.mrb[0].mxu0 %v4112
  %v6055 = vpop.f32.mrb[0].mxu0
  %v6056 = vadd.f32 0.0, %v6055
  %v6057 = vpop.f32.mrb[0].mxu0
  %6058 = vmatprep.mubr.f32.mxu0 0.0
  %6059 = vmatmul.mubr.f32.gmra.mrb[0].mxu0 %v4114
  %v6060 = vpop.f32.mrb[0].mxu0
  %v6061 = vadd.f32 0.0, %v6060
  %v6062 = vpop.f32.mrb[0].mxu0
  %6063 = vmatprep.mubr.f32.mxu0 0.0
  %6064 = vmatmul.mubr.f32.gmra.mrb[0].mxu0 %v4116
  %v6065 = vpop.f32.mrb[0].mxu0
  %v6066 = vadd.f32 0.0, %v6065
  %v6067 = vpop.f32.mrb[0].mxu0
  %6068 = vmatprep.mubr.f32.mxu0 0.0
  %6069 = vmatmul.mubr.f32.gmra.mrb[0].mxu0 %v4118
  %v6070 = vpop.f32.mrb[0].mxu0
  %v6071 = vadd.f32 0.0, %v6070
  %v6072 = vpop.f32.mrb[0].mxu0
  %6073 = vmatprep.mubr.f32.mxu0 0.0
  %6074 = vmatmul.mubr.f32.gmra.mrb[0].mxu0 %v4120
  %v6075 = vpop.f32.mrb[0].mxu0
  %v6076 = vadd.f32 0.0, %v6075
  %v6077 = vpop.f32.mrb[0].mxu0
  %6078 = vmatprep.mubr.f32.mxu0 0.0
  %6079 = vmatmul.mubr.f32.gmra.mrb[0].mxu0 %v4122
  %v6080 = vpop.f32.mrb[0].mxu0
  %v6081 = vadd.f32 0.0, %v6080
  %v6082 = vpop.f32.mrb[0].mxu0
  %6083 = vmatprep.mubr.f32.mxu0 0.0
  %6084 = vmatmul.mubr.f32.gmra.mrb[0].mxu0 %v4124
  %v6085 = vpop.f32.mrb[0].mxu0
  %v6086 = vadd.f32 0.0, %v6085
  %v6087 = vpop.f32.mrb[0].mxu0
  %6088 = vmatprep.mubr.f32.mxu0 0.0
  %6089 = vmatmul.mubr.f32.gmra.mrb[0].mxu0 %v4126
  %v6090 = vpop.f32.mrb[0].mxu0
  %v6091 = vadd.f32 0.0, %v6090
  %v6092 = vpop.f32.mrb[0].mxu0
  %6093 = vmatprep.mubr.f32.mxu0 0.0
  %6094 = vmatmul.mubr.f32.gmra.mrb[0].mxu0 %v4128
  %v6095 = vpop.f32.mrb[0].mxu0
  %v6096 = vadd.f32 0.0, %v6095
  %v6097 = vpop.f32.mrb[0].mxu0
  %6098 = vmatprep.mubr.f32.mxu0 0.0
  %6099 = vmatmul.mubr.f32.gmra.mrb[0].mxu0 %v4130
  %v6100 = vpop.f32.mrb[0].mxu0
  %v6101 = vadd.f32 0.0, %v6100
  %v6102 = vpop.f32.mrb[0].mxu0
  %6103 = vmatprep.mubr.f32.mxu0 0.0
  %6104 = vmatmul.mubr.f32.gmra.mrb[0].mxu0 %v4132
  %v6105 = vpop.f32.mrb[0].mxu0
  %v6106 = vadd.f32 0.0, %v6105
  %v6107 = vpop.f32.mrb[0].mxu0
  %6108 = vmatprep.mubr.f32.mxu0 0.0
  %6109 = vmatmul.mubr.f32.gmra.mrb[0].mxu0 %v4134
  %v6110 = vpop.f32.mrb[0].mxu0
  %v6111 = vadd.f32 0.0, %v6110
  %v6112 = vpop.f32.mrb[0].mxu0
  %6113 = vmatprep.mubr.f32.mxu0 0.0
  %6114 = vmatmul.mubr.f32.gmra.mrb[0].mxu0 %v4136
  %v6115 = vpop.f32.mrb[0].mxu0
  %v6116 = vadd.f32 0.0, %v6115
  %v6117 = vpop.f32.mrb[0].mxu0
  %6118 = vmatprep.mubr.f32.mxu0 0.0
  %6119 = vmatmul.mubr.f32.gmra.mrb[0].mxu0 %v4138
  %v6120 = vpop.f32.mrb[0].mxu0
  %v6121 = vadd.f32 0.0, %v6120
  %v6122 = vpop.f32.mrb[0].mxu0
  %6123 = vmatprep.mubr.f32.mxu0 0.0
  %6124 = vmatmul.mubr.f32.gmra.mrb[0].mxu0 %v4140
  %v6125 = vpop.f32.mrb[0].mxu0
  %v6126 = vadd.f32 0.0, %v6125
  %v6127 = vpop.f32.mrb[0].mxu0
  %6128 = vmatprep.mubr.f32.mxu0 0.0
  %6129 = vmatmul.mubr.f32.gmra.mrb[0].mxu0 %v5909
  %v6130 = vpop.f32.mrb[0].mxu0
  %v6131 = vadd.f32 0.0, %v6130
  %v6132 = vpop.f32.mrb[0].mxu0
  %6133 = vdwg.mxu0
  %v6134 = vld [vmem:[%s5 + $0x150] sm:$0xff]
  %v6135 = vld [vmem:[%s5 + $0x158] sm:$0xff]
  %v6136 = vld [vmem:[%s5 + $0x160] sm:$0xff]
  %v6137 = vld [vmem:[%s5 + $0x168] sm:$0xff]
  %v6138 = vld [vmem:[%s5 + $0x170] sm:$0xff]
  %v6139 = vld [vmem:[%s5 + $0x178] sm:$0xff]
  %v6140 = vld [vmem:[%s5 + $0x180] sm:$0xff]
  %v6141 = vld [vmem:[%s5 + $0x188] sm:$0xff]
  %v6142 = vld [vmem:[%s5 + $0x190] sm:$0xff]
  %v6143 = vld [vmem:[%s5 + $0x198] sm:$0xff]
  %v6144 = vld [vmem:[%s5 + $0x1a0] sm:$0xf]
  %v6146 = vsel %vm3622, %v6144, 0
  %6148 = vmatprep.subr.mxu0 0.0
  %6149 = vmatpush1.msra.mxu0 %v6134
  %6150 = vmatprep.subr.mxu0 0.0
  %6151 = vmatpush1.msra.mxu0 %v6135
  %6152 = vmatprep.subr.mxu0 0.0
  %6153 = vmatpush1.msra.mxu0 %v6136
  %6154 = vmatprep.subr.mxu0 0.0
  %6155 = vmatpush1.msra.mxu0 %v6137
  %6156 = vmatprep.subr.mxu0 0.0
  %6157 = vmatpush1.msra.mxu0 %v6138
  %6158 = vmatprep.subr.mxu0 0.0
  %6159 = vmatpush1.msra.mxu0 %v6139
  %6160 = vmatprep.subr.mxu0 0.0
  %6161 = vmatpush1.msra.mxu0 %v6140
  %6162 = vmatprep.subr.mxu0 0.0
  %6163 = vmatpush1.msra.mxu0 %v6141
  %6164 = vmatprep.subr.mxu0 0.0
  %6165 = vmatpush1.msra.mxu0 %v6142
  %6166 = vmatprep.subr.mxu0 0.0
  %6167 = vmatpush1.msra.mxu0 %v6143
  %6168 = vmatprep.subr.mxu0 0.0
  %6169 = vmatpush1.msra.mxu0 %v6146
  %6170 = vmatprep.subr.mxu0 0.0
  %6171 = vmatpush1.msra.mxu0 0.0
  %6172 = vmatprep.subr.mxu0 0.0
  %6173 = vmatpush1.msra.mxu0 0.0
  %6174 = vmatprep.subr.mxu0 0.0
  %6175 = vmatpush1.msra.mxu0 0.0
  %6176 = vmatprep.subr.mxu0 0.0
  %6177 = vmatpush1.msra.mxu0 0.0
  %6178 = vmatprep.subr.mxu0 0.0
  %6179 = vmatpush1.msra.mxu0 0.0
  %6180 = vmatprep.subr.mxu0 0.0
  %6181 = vmatpush1.msra.mxu0 0.0
  %6182 = vmatprep.subr.mxu0 0.0
  %6183 = vmatpush1.msra.mxu0 0.0
  %6184 = vmatprep.subr.mxu0 0.0
  %6185 = vmatpush1.msra.mxu0 0.0
  %6186 = vmatprep.subr.mxu0 0.0
  %6187 = vmatpush1.msra.mxu0 0.0
  %6188 = vmatprep.subr.mxu0 0.0
  %6189 = vmatpush1.msra.mxu0 0.0
  %6190 = vmatprep.subr.mxu0 0.0
  %6191 = vmatpush1.msra.mxu0 0.0
  %6192 = vmatprep.subr.mxu0 0.0
  %6193 = vmatpush1.msra.mxu0 0.0
  %6194 = vmatprep.subr.mxu0 0.0
  %6195 = vmatpush1.msra.mxu0 0.0
  %6196 = vmatprep.subr.mxu0 0.0
  %6197 = vmatpush1.msra.mxu0 0.0
  %6198 = vmatprep.subr.mxu0 0.0
  %6199 = vmatpush1.msra.mxu0 0.0
  %6200 = vmatprep.subr.mxu0 0.0
  %6201 = vmatpush1.msra.mxu0 0.0
  %6202 = vmatprep.subr.mxu0 0.0
  %6203 = vmatpush1.msra.mxu0 0.0
  %6204 = vmatprep.subr.mxu0 0.0
  %6205 = vmatpush1.msra.mxu0 0.0
  %6206 = vmatprep.subr.mxu0 0.0
  %6207 = vmatpush1.msra.mxu0 0.0
  %6208 = vmatprep.subr.mxu0 0.0
  %6209 = vmatpush1.msra.mxu0 0.0
  %6210 = vmatprep.subr.mxu0 0.0
  %6211 = vmatpush1.msra.mxu0 0.0
  %6212 = vmatprep.mubr.f32.mxu0 0.0
  %6213 = vmatmul.mubr.f32.gmra.mrb[0].mxu0 %v4082
  %v6214 = vpop.f32.mrb[0].mxu0
  %v6215 = vadd.f32 0.0, %v6214
  %v6216 = vpop.f32.mrb[0].mxu0
  %6217 = vmatprep.mubr.f32.mxu0 0.0
  %6218 = vmatmul.mubr.f32.gmra.mrb[0].mxu0 %v4084
  %v6219 = vpop.f32.mrb[0].mxu0
  %v6220 = vadd.f32 0.0, %v6219
  %v6221 = vpop.f32.mrb[0].mxu0
  %6222 = vmatprep.mubr.f32.mxu0 0.0
  %6223 = vmatmul.mubr.f32.gmra.mrb[0].mxu0 %v4086
  %v6224 = vpop.f32.mrb[0].mxu0
  %v6225 = vadd.f32 0.0, %v6224
  %v6226 = vpop.f32.mrb[0].mxu0
  %6227 = vmatprep.mubr.f32.mxu0 0.0
  %6228 = vmatmul.mubr.f32.gmra.mrb[0].mxu0 %v4088
  %v6229 = vpop.f32.mrb[0].mxu0
  %v6230 = vadd.f32 0.0, %v6229
  %v6231 = vpop.f32.mrb[0].mxu0
  %6232 = vmatprep.mubr.f32.mxu0 0.0
  %6233 = vmatmul.mubr.f32.gmra.mrb[0].mxu0 %v4090
  %v6234 = vpop.f32.mrb[0].mxu0
  %v6235 = vadd.f32 0.0, %v6234
  %v6236 = vpop.f32.mrb[0].mxu0
  %6237 = vmatprep.mubr.f32.mxu0 0.0
  %6238 = vmatmul.mubr.f32.gmra.mrb[0].mxu0 %v4092
  %v6239 = vpop.f32.mrb[0].mxu0
  %v6240 = vadd.f32 0.0, %v6239
  %v6241 = vpop.f32.mrb[0].mxu0
  %6242 = vmatprep.mubr.f32.mxu0 0.0
  %6243 = vmatmul.mubr.f32.gmra.mrb[0].mxu0 %v4094
  %v6244 = vpop.f32.mrb[0].mxu0
  %v6245 = vadd.f32 0.0, %v6244
  %v6246 = vpop.f32.mrb[0].mxu0
  %6247 = vmatprep.mubr.f32.mxu0 0.0
  %6248 = vmatmul.mubr.f32.gmra.mrb[0].mxu0 %v4096
  %v6249 = vpop.f32.mrb[0].mxu0
  %v6250 = vadd.f32 0.0, %v6249
  %v6251 = vpop.f32.mrb[0].mxu0
  %6252 = vmatprep.mubr.f32.mxu0 0.0
  %6253 = vmatmul.mubr.f32.gmra.mrb[0].mxu0 %v4098
  %v6254 = vpop.f32.mrb[0].mxu0
  %v6255 = vadd.f32 0.0, %v6254
  %v6256 = vpop.f32.mrb[0].mxu0
  %6257 = vmatprep.mubr.f32.mxu0 0.0
  %6258 = vmatmul.mubr.f32.gmra.mrb[0].mxu0 %v4100
  %v6259 = vpop.f32.mrb[0].mxu0
  %v6260 = vadd.f32 0.0, %v6259
  %v6261 = vpop.f32.mrb[0].mxu0
  %6262 = vmatprep.mubr.f32.mxu0 0.0
  %6263 = vmatmul.mubr.f32.gmra.mrb[0].mxu0 %v4102
  %v6264 = vpop.f32.mrb[0].mxu0
  %v6265 = vadd.f32 0.0, %v6264
  %v6266 = vpop.f32.mrb[0].mxu0
  %6267 = vmatprep.mubr.f32.mxu0 0.0
  %6268 = vmatmul.mubr.f32.gmra.mrb[0].mxu0 %v4104
  %v6269 = vpop.f32.mrb[0].mxu0
  %v6270 = vadd.f32 0.0, %v6269
  %v6271 = vpop.f32.mrb[0].mxu0
  %6272 = vmatprep.mubr.f32.mxu0 0.0
  %6273 = vmatmul.mubr.f32.gmra.mrb[0].mxu0 %v4106
  %v6274 = vpop.f32.mrb[0].mxu0
  %v6275 = vadd.f32 0.0, %v6274
  %v6276 = vpop.f32.mrb[0].mxu0
  %6277 = vmatprep.mubr.f32.mxu0 0.0
  %6278 = vmatmul.mubr.f32.gmra.mrb[0].mxu0 %v4108
  %v6279 = vpop.f32.mrb[0].mxu0
  %v6280 = vadd.f32 0.0, %v6279
  %v6281 = vpop.f32.mrb[0].mxu0
  %6282 = vmatprep.mubr.f32.mxu0 0.0
  %6283 = vmatmul.mubr.f32.gmra.mrb[0].mxu0 %v4110
  %v6284 = vpop.f32.mrb[0].mxu0
  %v6285 = vadd.f32 0.0, %v6284
  %v6286 = vpop.f32.mrb[0].mxu0
  %6287 = vmatprep.mubr.f32.mxu0 0.0
  %6288 = vmatmul.mubr.f32.gmra.mrb[0].mxu0 %v4112
  %v6289 = vpop.f32.mrb[0].mxu0
  %v6290 = vadd.f32 0.0, %v6289
  %v6291 = vpop.f32.mrb[0].mxu0
  %6292 = vmatprep.mubr.f32.mxu0 0.0
  %6293 = vmatmul.mubr.f32.gmra.mrb[0].mxu0 %v4114
  %v6294 = vpop.f32.mrb[0].mxu0
  %v6295 = vadd.f32 0.0, %v6294
  %v6296 = vpop.f32.mrb[0].mxu0
  %6297 = vmatprep.mubr.f32.mxu0 0.0
  %6298 = vmatmul.mubr.f32.gmra.mrb[0].mxu0 %v4116
  %v6299 = vpop.f32.mrb[0].mxu0
  %v6300 = vadd.f32 0.0, %v6299
  %v6301 = vpop.f32.mrb[0].mxu0
  %6302 = vmatprep.mubr.f32.mxu0 0.0
  %6303 = vmatmul.mubr.f32.gmra.mrb[0].mxu0 %v4118
  %v6304 = vpop.f32.mrb[0].mxu0
  %v6305 = vadd.f32 0.0, %v6304
  %v6306 = vpop.f32.mrb[0].mxu0
  %6307 = vmatprep.mubr.f32.mxu0 0.0
  %6308 = vmatmul.mubr.f32.gmra.mrb[0].mxu0 %v4120
  %v6309 = vpop.f32.mrb[0].mxu0
  %v6310 = vadd.f32 0.0, %v6309
  %v6311 = vpop.f32.mrb[0].mxu0
  %6312 = vmatprep.mubr.f32.mxu0 0.0
  %6313 = vmatmul.mubr.f32.gmra.mrb[0].mxu0 %v4122
  %v6314 = vpop.f32.mrb[0].mxu0
  %v6315 = vadd.f32 0.0, %v6314
  %v6316 = vpop.f32.mrb[0].mxu0
  %6317 = vmatprep.mubr.f32.mxu0 0.0
  %6318 = vmatmul.mubr.f32.gmra.mrb[0].mxu0 %v4124
  %v6319 = vpop.f32.mrb[0].mxu0
  %v6320 = vadd.f32 0.0, %v6319
  %v6321 = vpop.f32.mrb[0].mxu0
  %6322 = vmatprep.mubr.f32.mxu0 0.0
  %6323 = vmatmul.mubr.f32.gmra.mrb[0].mxu0 %v4126
  %v6324 = vpop.f32.mrb[0].mxu0
  %v6325 = vadd.f32 0.0, %v6324
  %v6326 = vpop.f32.mrb[0].mxu0
  %6327 = vmatprep.mubr.f32.mxu0 0.0
  %6328 = vmatmul.mubr.f32.gmra.mrb[0].mxu0 %v4128
  %v6329 = vpop.f32.mrb[0].mxu0
  %v6330 = vadd.f32 0.0, %v6329
  %v6331 = vpop.f32.mrb[0].mxu0
  %6332 = vmatprep.mubr.f32.mxu0 0.0
  %6333 = vmatmul.mubr.f32.gmra.mrb[0].mxu0 %v4130
  %v6334 = vpop.f32.mrb[0].mxu0
  %v6335 = vadd.f32 0.0, %v6334
  %v6336 = vpop.f32.mrb[0].mxu0
  %6337 = vmatprep.mubr.f32.mxu0 0.0
  %6338 = vmatmul.mubr.f32.gmra.mrb[0].mxu0 %v4132
  %v6339 = vpop.f32.mrb[0].mxu0
  %v6340 = vadd.f32 0.0, %v6339
  %v6341 = vpop.f32.mrb[0].mxu0
  %6342 = vmatprep.mubr.f32.mxu0 0.0
  %6343 = vmatmul.mubr.f32.gmra.mrb[0].mxu0 %v4134
  %v6344 = vpop.f32.mrb[0].mxu0
  %v6345 = vadd.f32 0.0, %v6344
  %v6346 = vpop.f32.mrb[0].mxu0
  %6347 = vmatprep.mubr.f32.mxu0 0.0
  %6348 = vmatmul.mubr.f32.gmra.mrb[0].mxu0 %v4136
  %v6349 = vpop.f32.mrb[0].mxu0
  %v6350 = vadd.f32 0.0, %v6349
  %v6351 = vpop.f32.mrb[0].mxu0
  %6352 = vmatprep.mubr.f32.mxu0 0.0
  %6353 = vmatmul.mubr.f32.gmra.mrb[0].mxu0 %v4138
  %v6354 = vpop.f32.mrb[0].mxu0
  %v6355 = vadd.f32 0.0, %v6354
  %v6356 = vpop.f32.mrb[0].mxu0
  %6357 = vmatprep.mubr.f32.mxu0 0.0
  %6358 = vmatmul.mubr.f32.gmra.mrb[0].mxu0 %v4140
  %v6359 = vpop.f32.mrb[0].mxu0
  %v6360 = vadd.f32 0.0, %v6359
  %v6361 = vpop.f32.mrb[0].mxu0
  %6362 = vmatprep.mubr.f32.mxu0 0.0
  %6363 = vmatmul.mubr.f32.gmra.mrb[0].mxu0 %v5909
  %v6364 = vpop.f32.mrb[0].mxu0
  %v6365 = vadd.f32 0.0, %v6364
  %v6366 = vpop.f32.mrb[0].mxu0
  %6367 = vdwg.mxu0
  %v6368 = vadd.f32 %v5836, %v5981
  %v6369 = vadd.f32 %v5837, %v5986
  %v6370 = vadd.f32 %v5838, %v5991
  %v6371 = vadd.f32 %v5839, %v5996
  %v6372 = vadd.f32 %v5840, %v6001
  %v6373 = vadd.f32 %v5841, %v6006
  %v6374 = vadd.f32 %v5842, %v6011
  %v6375 = vadd.f32 %v5843, %v6016
  %v6376 = vadd.f32 %v5844, %v6021
  %v6377 = vadd.f32 %v5845, %v6026
  %v6378 = vadd.f32 %v5846, %v6031
  %v6379 = vadd.f32 %v5847, %v6036
  %v6380 = vadd.f32 %v5848, %v6041
  %v6381 = vadd.f32 %v5849, %v6046
  %v6382 = vadd.f32 %v5850, %v6051
  %v6383 = vadd.f32 %v5851, %v6056
  %v6384 = vadd.f32 %v5852, %v6061
  %v6385 = vadd.f32 %v5853, %v6066
  %v6386 = vadd.f32 %v5854, %v6071
  %v6387 = vadd.f32 %v5855, %v6076
  %v6388 = vadd.f32 %v5856, %v6081
  %v6389 = vadd.f32 %v5857, %v6086
  %v6390 = vadd.f32 %v5858, %v6091
  %v6391 = vadd.f32 %v5859, %v6096
  %v6392 = vadd.f32 %v5860, %v6101
  %v6393 = vadd.f32 %v5861, %v6106
  %v6394 = vadd.f32 %v5862, %v6111
  %v6395 = vadd.f32 %v5863, %v6116
  %v6396 = vadd.f32 %v5864, %v6121
  %v6397 = vadd.f32 %v5865, %v6126
  %v6398 = vadd.f32 %v5866, %v6131
  %v6399 = vadd.f32 %v5867, %v6215
  %v6400 = vadd.f32 %v5868, %v6220
  %v6401 = vadd.f32 %v5869, %v6225
  %v6402 = vadd.f32 %v5870, %v6230
  %v6403 = vadd.f32 %v5871, %v6235
  %v6404 = vadd.f32 %v5872, %v6240
  %v6405 = vadd.f32 %v5873, %v6245
  %v6406 = vadd.f32 %v5874, %v6250
  %v6407 = vadd.f32 %v5875, %v6255
  %v6408 = vadd.f32 %v5876, %v6260
  %v6409 = vadd.f32 %v5877, %v6265
  %v6410 = vadd.f32 %v5878, %v6270
  %v6411 = vadd.f32 %v5879, %v6275
  %v6412 = vadd.f32 %v5880, %v6280
  %v6413 = vadd.f32 %v5881, %v6285
  %v6414 = vadd.f32 %v5882, %v6290
  %v6415 = vadd.f32 %v5883, %v6295
  %v6416 = vadd.f32 %v5884, %v6300
  %v6417 = vadd.f32 %v5885, %v6305
  %v6418 = vadd.f32 %v5886, %v6310
  %v6419 = vadd.f32 %v5887, %v6315
  %v6420 = vadd.f32 %v5888, %v6320
  %v6421 = vadd.f32 %v5889, %v6325
  %v6422 = vadd.f32 %v5890, %v6330
  %v6423 = vadd.f32 %v5891, %v6335
  %v6424 = vadd.f32 %v5892, %v6340
  %v6425 = vadd.f32 %v5893, %v6345
  %v6426 = vadd.f32 %v5894, %v6350
  %v6427 = vadd.f32 %v5895, %v6355
  %v6428 = vadd.f32 %v5896, %v6360
  %v6429 = vadd.f32 %v5897, %v6365
  %v6430 = vmax.f32 %v6368, %v6399
  %v6431 = vmax.f32 %v6369, %v6400
  %v6432 = vmax.f32 %v6370, %v6401
  %v6433 = vmax.f32 %v6371, %v6402
  %v6434 = vmax.f32 %v6372, %v6403
  %v6435 = vmax.f32 %v6373, %v6404
  %v6436 = vmax.f32 %v6374, %v6405
  %v6437 = vmax.f32 %v6375, %v6406
  %v6438 = vmax.f32 %v6376, %v6407
  %v6439 = vmax.f32 %v6377, %v6408
  %v6440 = vmax.f32 %v6378, %v6409
  %v6441 = vmax.f32 %v6379, %v6410
  %v6442 = vmax.f32 %v6380, %v6411
  %v6443 = vmax.f32 %v6381, %v6412
  %v6444 = vmax.f32 %v6382, %v6413
  %v6445 = vmax.f32 %v6383, %v6414
  %v6446 = vmax.f32 %v6384, %v6415
  %v6447 = vmax.f32 %v6385, %v6416
  %v6448 = vmax.f32 %v6386, %v6417
  %v6449 = vmax.f32 %v6387, %v6418
  %v6450 = vmax.f32 %v6388, %v6419
  %v6451 = vmax.f32 %v6389, %v6420
  %v6452 = vmax.f32 %v6390, %v6421
  %v6453 = vmax.f32 %v6391, %v6422
  %v6454 = vmax.f32 %v6392, %v6423
  %v6455 = vmax.f32 %v6393, %v6424
  %v6456 = vmax.f32 %v6394, %v6425
  %v6457 = vmax.f32 %v6395, %v6426
  %v6458 = vmax.f32 %v6396, %v6427
  %v6459 = vmax.f32 %v6397, %v6428
  %v6460 = vmax.f32 %v6398, %v6429
  %v6492 = vrot.slane %v6430, 2
  %v6493 = vrot.slane %v6431, 2
  %v6494 = vsel %vm3497, %v6492, %v6493
  %v6495 = vrot.slane %v6432, 2
  %v6496 = vsel %vm3497, %v6493, %v6495
  %v6497 = vrot.slane %v6433, 2
  %v6498 = vsel %vm3497, %v6495, %v6497
  %v6499 = vrot.slane %v6434, 2
  %v6500 = vsel %vm3497, %v6497, %v6499
  %v6501 = vrot.slane %v6435, 2
  %v6502 = vsel %vm3497, %v6499, %v6501
  %v6503 = vrot.slane %v6436, 2
  %v6504 = vsel %vm3497, %v6501, %v6503
  %v6505 = vrot.slane %v6437, 2
  %v6506 = vsel %vm3497, %v6503, %v6505
  %v6507 = vrot.slane %v6438, 2
  %v6508 = vsel %vm3497, %v6505, %v6507
  %v6509 = vrot.slane %v6439, 2
  %v6510 = vsel %vm3497, %v6507, %v6509
  %v6511 = vrot.slane %v6440, 2
  %v6512 = vsel %vm3497, %v6509, %v6511
  %v6513 = vrot.slane %v6441, 2
  %v6514 = vsel %vm3497, %v6511, %v6513
  %v6515 = vrot.slane %v6442, 2
  %v6516 = vsel %vm3497, %v6513, %v6515
  %v6517 = vrot.slane %v6443, 2
  %v6518 = vsel %vm3497, %v6515, %v6517
  %v6519 = vrot.slane %v6444, 2
  %v6520 = vsel %vm3497, %v6517, %v6519
  %v6521 = vrot.slane %v6445, 2
  %v6522 = vsel %vm3497, %v6519, %v6521
  %v6523 = vrot.slane %v6446, 2
  %v6524 = vsel %vm3497, %v6521, %v6523
  %v6525 = vrot.slane %v6447, 2
  %v6526 = vsel %vm3497, %v6523, %v6525
  %v6527 = vrot.slane %v6448, 2
  %v6528 = vsel %vm3497, %v6525, %v6527
  %v6529 = vrot.slane %v6449, 2
  %v6530 = vsel %vm3497, %v6527, %v6529
  %v6531 = vrot.slane %v6450, 2
  %v6532 = vsel %vm3497, %v6529, %v6531
  %v6533 = vrot.slane %v6451, 2
  %v6534 = vsel %vm3497, %v6531, %v6533
  %v6535 = vrot.slane %v6452, 2
  %v6536 = vsel %vm3497, %v6533, %v6535
  %v6537 = vrot.slane %v6453, 2
  %v6538 = vsel %vm3497, %v6535, %v6537
  %v6539 = vrot.slane %v6454, 2
  %v6540 = vsel %vm3497, %v6537, %v6539
  %v6541 = vrot.slane %v6455, 2
  %v6542 = vsel %vm3497, %v6539, %v6541
  %v6543 = vrot.slane %v6456, 2
  %v6544 = vsel %vm3497, %v6541, %v6543
  %v6545 = vrot.slane %v6457, 2
  %v6546 = vsel %vm3497, %v6543, %v6545
  %v6547 = vrot.slane %v6458, 2
  %v6548 = vsel %vm3497, %v6545, %v6547
  %v6549 = vrot.slane %v6459, 2
  %v6550 = vsel %vm3497, %v6547, %v6549
  %v6551 = vrot.slane %v6460, 2
  %v6552 = vsel %vm3497, %v6549, %v6551
  %v6584 = vmax.f32 %v6430, %v6494
  %v6585 = vmax.f32 %v6431, %v6496
  %v6586 = vmax.f32 %v6432, %v6498
  %v6587 = vmax.f32 %v6433, %v6500
  %v6588 = vmax.f32 %v6434, %v6502
  %v6589 = vmax.f32 %v6435, %v6504
  %v6590 = vmax.f32 %v6436, %v6506
  %v6591 = vmax.f32 %v6437, %v6508
  %v6592 = vmax.f32 %v6438, %v6510
  %v6593 = vmax.f32 %v6439, %v6512
  %v6594 = vmax.f32 %v6440, %v6514
  %v6595 = vmax.f32 %v6441, %v6516
  %v6596 = vmax.f32 %v6442, %v6518
  %v6597 = vmax.f32 %v6443, %v6520
  %v6598 = vmax.f32 %v6444, %v6522
  %v6599 = vmax.f32 %v6445, %v6524
  %v6600 = vmax.f32 %v6446, %v6526
  %v6601 = vmax.f32 %v6447, %v6528
  %v6602 = vmax.f32 %v6448, %v6530
  %v6603 = vmax.f32 %v6449, %v6532
  %v6604 = vmax.f32 %v6450, %v6534
  %v6605 = vmax.f32 %v6451, %v6536
  %v6606 = vmax.f32 %v6452, %v6538
  %v6607 = vmax.f32 %v6453, %v6540
  %v6608 = vmax.f32 %v6454, %v6542
  %v6609 = vmax.f32 %v6455, %v6544
  %v6610 = vmax.f32 %v6456, %v6546
  %v6611 = vmax.f32 %v6457, %v6548
  %v6612 = vmax.f32 %v6458, %v6550
  %v6613 = vmax.f32 %v6459, %v6552
  %v6614 = vmax.f32 %v6460, %v6551
  %v6615 = vld [vmem:[%s6] sm:$0x1]
  %v6617 = vlaneseq
  %v6618 = vshrl.u32 %v6617, 7
  %v6619 = vsub.s32 0, %v6618
  %v6620 = vrot.slane %v6615, %v6619
  %v6622 = vadd.f32 %v6584, %v6620
  %v6623 = vadd.f32 %v6585, %v6620
  %v6624 = vadd.f32 %v6586, %v6620
  %v6625 = vadd.f32 %v6587, %v6620
  %v6626 = vadd.f32 %v6588, %v6620
  %v6627 = vadd.f32 %v6589, %v6620
  %v6628 = vadd.f32 %v6590, %v6620
  %v6629 = vadd.f32 %v6591, %v6620
  %v6630 = vadd.f32 %v6592, %v6620
  %v6631 = vadd.f32 %v6593, %v6620
  %v6632 = vadd.f32 %v6594, %v6620
  %v6633 = vadd.f32 %v6595, %v6620
  %v6634 = vadd.f32 %v6596, %v6620
  %v6635 = vadd.f32 %v6597, %v6620
  %v6636 = vadd.f32 %v6598, %v6620
  %v6637 = vadd.f32 %v6599, %v6620
  %v6638 = vadd.f32 %v6600, %v6620
  %v6639 = vadd.f32 %v6601, %v6620
  %v6640 = vadd.f32 %v6602, %v6620
  %v6641 = vadd.f32 %v6603, %v6620
  %v6642 = vadd.f32 %v6604, %v6620
  %v6643 = vadd.f32 %v6605, %v6620
  %v6644 = vadd.f32 %v6606, %v6620
  %v6645 = vadd.f32 %v6607, %v6620
  %v6646 = vadd.f32 %v6608, %v6620
  %v6647 = vadd.f32 %v6609, %v6620
  %v6648 = vadd.f32 %v6610, %v6620
  %v6649 = vadd.f32 %v6611, %v6620
  %v6650 = vadd.f32 %v6612, %v6620
  %v6651 = vadd.f32 %v6613, %v6620
  %v6652 = vadd.f32 %v6614, %v6620
  %v6653 = vmax.f32 %v6622, 0.0
  %v6654 = vmax.f32 %v6623, 0.0
  %v6655 = vmax.f32 %v6624, 0.0
  %v6656 = vmax.f32 %v6625, 0.0
  %v6657 = vmax.f32 %v6626, 0.0
  %v6658 = vmax.f32 %v6627, 0.0
  %v6659 = vmax.f32 %v6628, 0.0
  %v6660 = vmax.f32 %v6629, 0.0
  %v6661 = vmax.f32 %v6630, 0.0
  %v6662 = vmax.f32 %v6631, 0.0
  %v6663 = vmax.f32 %v6632, 0.0
  %v6664 = vmax.f32 %v6633, 0.0
  %v6665 = vmax.f32 %v6634, 0.0
  %v6666 = vmax.f32 %v6635, 0.0
  %v6667 = vmax.f32 %v6636, 0.0
  %v6668 = vmax.f32 %v6637, 0.0
  %v6669 = vmax.f32 %v6638, 0.0
  %v6670 = vmax.f32 %v6639, 0.0
  %v6671 = vmax.f32 %v6640, 0.0
  %v6672 = vmax.f32 %v6641, 0.0
  %v6673 = vmax.f32 %v6642, 0.0
  %v6674 = vmax.f32 %v6643, 0.0
  %v6675 = vmax.f32 %v6644, 0.0
  %v6676 = vmax.f32 %v6645, 0.0
  %v6677 = vmax.f32 %v6646, 0.0
  %v6678 = vmax.f32 %v6647, 0.0
  %v6679 = vmax.f32 %v6648, 0.0
  %v6680 = vmax.f32 %v6649, 0.0
  %v6681 = vmax.f32 %v6650, 0.0
  %v6682 = vmax.f32 %v6651, 0.0
  %v6683 = vmax.f32 %v6652, 0.0
  %v6684 = vld [vmem:[%s7] sm:$0xff]
  %v6685 = vld [vmem:[%s7 + $0x8] sm:$0xff]
  %v6686 = vld [vmem:[%s7 + $0x10] sm:$0xff]
  %v6687 = vld [vmem:[%s7 + $0x18] sm:$0xff]
  %v6688 = vld [vmem:[%s7 + $0x20] sm:$0xff]
  %v6689 = vld [vmem:[%s7 + $0x28] sm:$0xff]
  %v6690 = vld [vmem:[%s7 + $0x30] sm:$0xff]
  %v6691 = vld [vmem:[%s7 + $0x38] sm:$0xff]
  %v6692 = vld [vmem:[%s7 + $0x40] sm:$0xff]
  %v6693 = vld [vmem:[%s7 + $0x48] sm:$0xff]
  %v6694 = vld [vmem:[%s7 + $0x50] sm:$0xff]
  %v6695 = vld [vmem:[%s7 + $0x58] sm:$0xff]
  %v6696 = vld [vmem:[%s7 + $0x60] sm:$0xff]
  %v6697 = vld [vmem:[%s7 + $0x68] sm:$0xff]
  %v6698 = vld [vmem:[%s7 + $0x70] sm:$0xff]
  %v6699 = vld [vmem:[%s7 + $0x78] sm:$0xff]
  %v6700 = vld [vmem:[%s7 + $0x80] sm:$0xff]
  %v6701 = vld [vmem:[%s7 + $0x88] sm:$0xff]
  %v6702 = vld [vmem:[%s7 + $0x90] sm:$0xff]
  %v6703 = vld [vmem:[%s7 + $0x98] sm:$0xff]
  %v6733 = vrot.slane %v6653, 4
  %v6734 = vrot.slane %v6654, 4
  %v6735 = vsel %vm3622, %v6733, %v6734
  %v6736 = vrot.slane %v6655, 4
  %v6737 = vsel %vm3622, %v6734, %v6736
  %v6738 = vrot.slane %v6656, 4
  %v6739 = vsel %vm3622, %v6736, %v6738
  %v6740 = vrot.slane %v6657, 4
  %v6741 = vsel %vm3622, %v6738, %v6740
  %v6742 = vrot.slane %v6658, 4
  %v6743 = vsel %vm3622, %v6740, %v6742
  %v6744 = vrot.slane %v6659, 4
  %v6745 = vsel %vm3622, %v6742, %v6744
  %v6746 = vrot.slane %v6660, 4
  %v6747 = vsel %vm3622, %v6744, %v6746
  %v6748 = vrot.slane %v6661, 4
  %v6749 = vsel %vm3622, %v6746, %v6748
  %v6750 = vrot.slane %v6662, 4
  %v6751 = vsel %vm3622, %v6748, %v6750
  %v6752 = vrot.slane %v6663, 4
  %v6753 = vsel %vm3622, %v6750, %v6752
  %v6754 = vrot.slane %v6664, 4
  %v6755 = vsel %vm3622, %v6752, %v6754
  %v6756 = vrot.slane %v6665, 4
  %v6757 = vsel %vm3622, %v6754, %v6756
  %v6758 = vrot.slane %v6666, 4
  %v6759 = vsel %vm3622, %v6756, %v6758
  %v6760 = vrot.slane %v6667, 4
  %v6761 = vsel %vm3622, %v6758, %v6760
  %v6762 = vrot.slane %v6668, 4
  %v6763 = vsel %vm3622, %v6760, %v6762
  %v6764 = vrot.slane %v6669, 4
  %v6765 = vsel %vm3622, %v6762, %v6764
  %v6766 = vrot.slane %v6670, 4
  %v6767 = vsel %vm3622, %v6764, %v6766
  %v6768 = vrot.slane %v6671, 4
  %v6769 = vsel %vm3622, %v6766, %v6768
  %v6770 = vrot.slane %v6672, 4
  %v6771 = vsel %vm3622, %v6768, %v6770
  %v6772 = vrot.slane %v6673, 4
  %v6773 = vsel %vm3622, %v6770, %v6772
  %v6774 = vrot.slane %v6674, 4
  %v6775 = vsel %vm3622, %v6772, %v6774
  %v6776 = vrot.slane %v6675, 4
  %v6777 = vsel %vm3622, %v6774, %v6776
  %v6778 = vrot.slane %v6676, 4
  %v6779 = vsel %vm3622, %v6776, %v6778
  %v6780 = vrot.slane %v6677, 4
  %v6781 = vsel %vm3622, %v6778, %v6780
  %v6782 = vrot.slane %v6678, 4
  %v6783 = vsel %vm3622, %v6780, %v6782
  %v6784 = vrot.slane %v6679, 4
  %v6785 = vsel %vm3622, %v6782, %v6784
  %v6786 = vrot.slane %v6680, 4
  %v6787 = vsel %vm3622, %v6784, %v6786
  %v6788 = vrot.slane %v6681, 4
  %v6789 = vsel %vm3622, %v6786, %v6788
  %vm6790 = vcmask 654336
  %v6791 = vsel %vm6790, %v6735, 0
  %v6793 = vsel %vm6790, %v6737, 0
  %v6795 = vsel %vm6790, %v6739, 0
  %v6797 = vsel %vm6790, %v6741, 0
  %v6799 = vsel %vm6790, %v6743, 0
  %v6801 = vsel %vm6790, %v6745, 0
  %v6803 = vsel %vm6790, %v6747, 0
  %v6805 = vsel %vm6790, %v6749, 0
  %v6807 = vsel %vm6790, %v6751, 0
  %v6809 = vsel %vm6790, %v6753, 0
  %v6811 = vsel %vm6790, %v6755, 0
  %v6813 = vsel %vm6790, %v6757, 0
  %v6815 = vsel %vm6790, %v6759, 0
  %v6817 = vsel %vm6790, %v6761, 0
  %v6819 = vsel %vm6790, %v6763, 0
  %v6821 = vsel %vm6790, %v6765, 0
  %v6823 = vsel %vm6790, %v6767, 0
  %v6825 = vsel %vm6790, %v6769, 0
  %v6827 = vsel %vm6790, %v6771, 0
  %v6829 = vsel %vm6790, %v6773, 0
  %v6831 = vsel %vm6790, %v6775, 0
  %v6833 = vsel %vm6790, %v6777, 0
  %v6835 = vsel %vm6790, %v6779, 0
  %v6837 = vsel %vm6790, %v6781, 0
  %v6839 = vsel %vm6790, %v6783, 0
  %v6841 = vsel %vm6790, %v6785, 0
  %v6843 = vsel %vm6790, %v6787, 0
  %v6845 = vsel %vm6790, %v6789, 0
  %v6847 = vsel %vm6790, %v6788, 0
  %6849 = vmatprep.subr.mxu0 0.0
  %6850 = vmatpush1.msra.mxu0 %v6694
  %6851 = vmatprep.subr.mxu0 0.0
  %6852 = vmatpush1.msra.mxu0 %v6695
  %6853 = vmatprep.subr.mxu0 0.0
  %6854 = vmatpush1.msra.mxu0 %v6696
  %6855 = vmatprep.subr.mxu0 0.0
  %6856 = vmatpush1.msra.mxu0 %v6697
  %6857 = vmatprep.subr.mxu0 0.0
  %6858 = vmatpush1.msra.mxu0 %v6698
  %6859 = vmatprep.subr.mxu0 0.0
  %6860 = vmatpush1.msra.mxu0 %v6699
  %6861 = vmatprep.subr.mxu0 0.0
  %6862 = vmatpush1.msra.mxu0 %v6700
  %6863 = vmatprep.subr.mxu0 0.0
  %6864 = vmatpush1.msra.mxu0 %v6701
  %6865 = vmatprep.subr.mxu0 0.0
  %6866 = vmatpush1.msra.mxu0 %v6702
  %6867 = vmatprep.subr.mxu0 0.0
  %6868 = vmatpush1.msra.mxu0 %v6703
  %6869 = vmatprep.subr.mxu0 0.0
  %6870 = vmatpush1.msra.mxu0 0.0
  %6871 = vmatprep.subr.mxu0 0.0
  %6872 = vmatpush1.msra.mxu0 0.0
  %6873 = vmatprep.subr.mxu0 0.0
  %6874 = vmatpush1.msra.mxu0 0.0
  %6875 = vmatprep.subr.mxu0 0.0
  %6876 = vmatpush1.msra.mxu0 0.0
  %6877 = vmatprep.subr.mxu0 0.0
  %6878 = vmatpush1.msra.mxu0 0.0
  %6879 = vmatprep.subr.mxu0 0.0
  %6880 = vmatpush1.msra.mxu0 0.0
  %6881 = vmatprep.subr.mxu0 0.0
  %6882 = vmatpush1.msra.mxu0 0.0
  %6883 = vmatprep.subr.mxu0 0.0
  %6884 = vmatpush1.msra.mxu0 0.0
  %6885 = vmatprep.subr.mxu0 0.0
  %6886 = vmatpush1.msra.mxu0 0.0
  %6887 = vmatprep.subr.mxu0 0.0
  %6888 = vmatpush1.msra.mxu0 0.0
  %6889 = vmatprep.subr.mxu0 0.0
  %6890 = vmatpush1.msra.mxu0 0.0
  %6891 = vmatprep.subr.mxu0 0.0
  %6892 = vmatpush1.msra.mxu0 0.0
  %6893 = vmatprep.subr.mxu0 0.0
  %6894 = vmatpush1.msra.mxu0 0.0
  %6895 = vmatprep.subr.mxu0 0.0
  %6896 = vmatpush1.msra.mxu0 0.0
  %6897 = vmatprep.subr.mxu0 0.0
  %6898 = vmatpush1.msra.mxu0 0.0
  %6899 = vmatprep.subr.mxu0 0.0
  %6900 = vmatpush1.msra.mxu0 0.0
  %6901 = vmatprep.subr.mxu0 0.0
  %6902 = vmatpush1.msra.mxu0 0.0
  %6903 = vmatprep.subr.mxu0 0.0
  %6904 = vmatpush1.msra.mxu0 0.0
  %6905 = vmatprep.subr.mxu0 0.0
  %6906 = vmatpush1.msra.mxu0 0.0
  %6907 = vmatprep.subr.mxu0 0.0
  %6908 = vmatpush1.msra.mxu0 0.0
  %6909 = vmatprep.subr.mxu0 0.0
  %6910 = vmatpush1.msra.mxu0 0.0
  %6911 = vmatprep.subr.mxu0 0.0
  %6912 = vmatpush1.msra.mxu0 0.0
  %6913 = vmatprep.mubr.f32.mxu0 0.0
  %6914 = vmatmul.mubr.f32.gmra.mrb[0].mxu0 %v6791
  %v6915 = vpop.f32.mrb[0].mxu0
  %v6916 = vadd.f32 0.0, %v6915
  %v6917 = vpop.f32.mrb[0].mxu0
  %6918 = vmatprep.mubr.f32.mxu0 0.0
  %6919 = vmatmul.mubr.f32.gmra.mrb[0].mxu0 %v6793
  %v6920 = vpop.f32.mrb[0].mxu0
  %v6921 = vadd.f32 0.0, %v6920
  %v6922 = vpop.f32.mrb[0].mxu0
  %6923 = vmatprep.mubr.f32.mxu0 0.0
  %6924 = vmatmul.mubr.f32.gmra.mrb[0].mxu0 %v6795
  %v6925 = vpop.f32.mrb[0].mxu0
  %v6926 = vadd.f32 0.0, %v6925
  %v6927 = vpop.f32.mrb[0].mxu0
  %6928 = vmatprep.mubr.f32.mxu0 0.0
  %6929 = vmatmul.mubr.f32.gmra.mrb[0].mxu0 %v6797
  %v6930 = vpop.f32.mrb[0].mxu0
  %v6931 = vadd.f32 0.0, %v6930
  %v6932 = vpop.f32.mrb[0].mxu0
  %6933 = vmatprep.mubr.f32.mxu0 0.0
  %6934 = vmatmul.mubr.f32.gmra.mrb[0].mxu0 %v6799
  %v6935 = vpop.f32.mrb[0].mxu0
  %v6936 = vadd.f32 0.0, %v6935
  %v6937 = vpop.f32.mrb[0].mxu0
  %6938 = vmatprep.mubr.f32.mxu0 0.0
  %6939 = vmatmul.mubr.f32.gmra.mrb[0].mxu0 %v6801
  %v6940 = vpop.f32.mrb[0].mxu0
  %v6941 = vadd.f32 0.0, %v6940
  %v6942 = vpop.f32.mrb[0].mxu0
  %6943 = vmatprep.mubr.f32.mxu0 0.0
  %6944 = vmatmul.mubr.f32.gmra.mrb[0].mxu0 %v6803
  %v6945 = vpop.f32.mrb[0].mxu0
  %v6946 = vadd.f32 0.0, %v6945
  %v6947 = vpop.f32.mrb[0].mxu0
  %6948 = vmatprep.mubr.f32.mxu0 0.0
  %6949 = vmatmul.mubr.f32.gmra.mrb[0].mxu0 %v6805
  %v6950 = vpop.f32.mrb[0].mxu0
  %v6951 = vadd.f32 0.0, %v6950
  %v6952 = vpop.f32.mrb[0].mxu0
  %6953 = vmatprep.mubr.f32.mxu0 0.0
  %6954 = vmatmul.mubr.f32.gmra.mrb[0].mxu0 %v6807
  %v6955 = vpop.f32.mrb[0].mxu0
  %v6956 = vadd.f32 0.0, %v6955
  %v6957 = vpop.f32.mrb[0].mxu0
  %6958 = vmatprep.mubr.f32.mxu0 0.0
  %6959 = vmatmul.mubr.f32.gmra.mrb[0].mxu0 %v6809
  %v6960 = vpop.f32.mrb[0].mxu0
  %v6961 = vadd.f32 0.0, %v6960
  %v6962 = vpop.f32.mrb[0].mxu0
  %6963 = vmatprep.mubr.f32.mxu0 0.0
  %6964 = vmatmul.mubr.f32.gmra.mrb[0].mxu0 %v6811
  %v6965 = vpop.f32.mrb[0].mxu0
  %v6966 = vadd.f32 0.0, %v6965
  %v6967 = vpop.f32.mrb[0].mxu0
  %6968 = vmatprep.mubr.f32.mxu0 0.0
  %6969 = vmatmul.mubr.f32.gmra.mrb[0].mxu0 %v6813
  %v6970 = vpop.f32.mrb[0].mxu0
  %v6971 = vadd.f32 0.0, %v6970
  %v6972 = vpop.f32.mrb[0].mxu0
  %6973 = vmatprep.mubr.f32.mxu0 0.0
  %6974 = vmatmul.mubr.f32.gmra.mrb[0].mxu0 %v6815
  %v6975 = vpop.f32.mrb[0].mxu0
  %v6976 = vadd.f32 0.0, %v6975
  %v6977 = vpop.f32.mrb[0].mxu0
  %6978 = vmatprep.mubr.f32.mxu0 0.0
  %6979 = vmatmul.mubr.f32.gmra.mrb[0].mxu0 %v6817
  %v6980 = vpop.f32.mrb[0].mxu0
  %v6981 = vadd.f32 0.0, %v6980
  %v6982 = vpop.f32.mrb[0].mxu0
  %6983 = vmatprep.mubr.f32.mxu0 0.0
  %6984 = vmatmul.mubr.f32.gmra.mrb[0].mxu0 %v6819
  %v6985 = vpop.f32.mrb[0].mxu0
  %v6986 = vadd.f32 0.0, %v6985
  %v6987 = vpop.f32.mrb[0].mxu0
  %6988 = vmatprep.mubr.f32.mxu0 0.0
  %6989 = vmatmul.mubr.f32.gmra.mrb[0].mxu0 %v6821
  %v6990 = vpop.f32.mrb[0].mxu0
  %v6991 = vadd.f32 0.0, %v6990
  %v6992 = vpop.f32.mrb[0].mxu0
  %6993 = vmatprep.mubr.f32.mxu0 0.0
  %6994 = vmatmul.mubr.f32.gmra.mrb[0].mxu0 %v6823
  %v6995 = vpop.f32.mrb[0].mxu0
  %v6996 = vadd.f32 0.0, %v6995
  %v6997 = vpop.f32.mrb[0].mxu0
  %6998 = vmatprep.mubr.f32.mxu0 0.0
  %6999 = vmatmul.mubr.f32.gmra.mrb[0].mxu0 %v6825
  %v7000 = vpop.f32.mrb[0].mxu0
  %v7001 = vadd.f32 0.0, %v7000
  %v7002 = vpop.f32.mrb[0].mxu0
  %7003 = vmatprep.mubr.f32.mxu0 0.0
  %7004 = vmatmul.mubr.f32.gmra.mrb[0].mxu0 %v6827
  %v7005 = vpop.f32.mrb[0].mxu0
  %v7006 = vadd.f32 0.0, %v7005
  %v7007 = vpop.f32.mrb[0].mxu0
  %7008 = vmatprep.mubr.f32.mxu0 0.0
  %7009 = vmatmul.mubr.f32.gmra.mrb[0].mxu0 %v6829
  %v7010 = vpop.f32.mrb[0].mxu0
  %v7011 = vadd.f32 0.0, %v7010
  %v7012 = vpop.f32.mrb[0].mxu0
  %7013 = vmatprep.mubr.f32.mxu0 0.0
  %7014 = vmatmul.mubr.f32.gmra.mrb[0].mxu0 %v6831
  %v7015 = vpop.f32.mrb[0].mxu0
  %v7016 = vadd.f32 0.0, %v7015
  %v7017 = vpop.f32.mrb[0].mxu0
  %7018 = vmatprep.mubr.f32.mxu0 0.0
  %7019 = vmatmul.mubr.f32.gmra.mrb[0].mxu0 %v6833
  %v7020 = vpop.f32.mrb[0].mxu0
  %v7021 = vadd.f32 0.0, %v7020
  %v7022 = vpop.f32.mrb[0].mxu0
  %7023 = vmatprep.mubr.f32.mxu0 0.0
  %7024 = vmatmul.mubr.f32.gmra.mrb[0].mxu0 %v6835
  %v7025 = vpop.f32.mrb[0].mxu0
  %v7026 = vadd.f32 0.0, %v7025
  %v7027 = vpop.f32.mrb[0].mxu0
  %7028 = vmatprep.mubr.f32.mxu0 0.0
  %7029 = vmatmul.mubr.f32.gmra.mrb[0].mxu0 %v6837
  %v7030 = vpop.f32.mrb[0].mxu0
  %v7031 = vadd.f32 0.0, %v7030
  %v7032 = vpop.f32.mrb[0].mxu0
  %7033 = vmatprep.mubr.f32.mxu0 0.0
  %7034 = vmatmul.mubr.f32.gmra.mrb[0].mxu0 %v6839
  %v7035 = vpop.f32.mrb[0].mxu0
  %v7036 = vadd.f32 0.0, %v7035
  %v7037 = vpop.f32.mrb[0].mxu0
  %7038 = vmatprep.mubr.f32.mxu0 0.0
  %7039 = vmatmul.mubr.f32.gmra.mrb[0].mxu0 %v6841
  %v7040 = vpop.f32.mrb[0].mxu0
  %v7041 = vadd.f32 0.0, %v7040
  %v7042 = vpop.f32.mrb[0].mxu0
  %7043 = vmatprep.mubr.f32.mxu0 0.0
  %7044 = vmatmul.mubr.f32.gmra.mrb[0].mxu0 %v6843
  %v7045 = vpop.f32.mrb[0].mxu0
  %v7046 = vadd.f32 0.0, %v7045
  %v7047 = vpop.f32.mrb[0].mxu0
  %7048 = vmatprep.mubr.f32.mxu0 0.0
  %7049 = vmatmul.mubr.f32.gmra.mrb[0].mxu0 %v6845
  %v7050 = vpop.f32.mrb[0].mxu0
  %v7051 = vadd.f32 0.0, %v7050
  %v7052 = vpop.f32.mrb[0].mxu0
  %7053 = vmatprep.mubr.f32.mxu0 0.0
  %7054 = vmatmul.mubr.f32.gmra.mrb[0].mxu0 %v6847
  %v7055 = vpop.f32.mrb[0].mxu0
  %v7056 = vadd.f32 0.0, %v7055
  %v7057 = vpop.f32.mrb[0].mxu0
  %7058 = vdwg.mxu0
  %v7059 = vsel %vm6790, %v6653, 0
  %v7061 = vsel %vm6790, %v6654, 0
  %v7063 = vsel %vm6790, %v6655, 0
  %v7065 = vsel %vm6790, %v6656, 0
  %v7067 = vsel %vm6790, %v6657, 0
  %v7069 = vsel %vm6790, %v6658, 0
  %v7071 = vsel %vm6790, %v6659, 0
  %v7073 = vsel %vm6790, %v6660, 0
  %v7075 = vsel %vm6790, %v6661, 0
  %v7077 = vsel %vm6790, %v6662, 0
  %v7079 = vsel %vm6790, %v6663, 0
  %v7081 = vsel %vm6790, %v6664, 0
  %v7083 = vsel %vm6790, %v6665, 0
  %v7085 = vsel %vm6790, %v6666, 0
  %v7087 = vsel %vm6790, %v6667, 0
  %v7089 = vsel %vm6790, %v6668, 0
  %v7091 = vsel %vm6790, %v6669, 0
  %v7093 = vsel %vm6790, %v6670, 0
  %v7095 = vsel %vm6790, %v6671, 0
  %v7097 = vsel %vm6790, %v6672, 0
  %v7099 = vsel %vm6790, %v6673, 0
  %v7101 = vsel %vm6790, %v6674, 0
  %v7103 = vsel %vm6790, %v6675, 0
  %v7105 = vsel %vm6790, %v6676, 0
  %v7107 = vsel %vm6790, %v6677, 0
  %v7109 = vsel %vm6790, %v6678, 0
  %v7111 = vsel %vm6790, %v6679, 0
  %v7113 = vsel %vm6790, %v6680, 0
  %v7115 = vsel %vm6790, %v6681, 0
  %7117 = vmatprep.subr.mxu0 0.0
  %7118 = vmatpush1.msra.mxu0 %v6684
  %7119 = vmatprep.subr.mxu0 0.0
  %7120 = vmatpush1.msra.mxu0 %v6685
  %7121 = vmatprep.subr.mxu0 0.0
  %7122 = vmatpush1.msra.mxu0 %v6686
  %7123 = vmatprep.subr.mxu0 0.0
  %7124 = vmatpush1.msra.mxu0 %v6687
  %7125 = vmatprep.subr.mxu0 0.0
  %7126 = vmatpush1.msra.mxu0 %v6688
  %7127 = vmatprep.subr.mxu0 0.0
  %7128 = vmatpush1.msra.mxu0 %v6689
  %7129 = vmatprep.subr.mxu0 0.0
  %7130 = vmatpush1.msra.mxu0 %v6690
  %7131 = vmatprep.subr.mxu0 0.0
  %7132 = vmatpush1.msra.mxu0 %v6691
  %7133 = vmatprep.subr.mxu0 0.0
  %7134 = vmatpush1.msra.mxu0 %v6692
  %7135 = vmatprep.subr.mxu0 0.0
  %7136 = vmatpush1.msra.mxu0 %v6693
  %7137 = vmatprep.subr.mxu0 0.0
  %7138 = vmatpush1.msra.mxu0 0.0
  %7139 = vmatprep.subr.mxu0 0.0
  %7140 = vmatpush1.msra.mxu0 0.0
  %7141 = vmatprep.subr.mxu0 0.0
  %7142 = vmatpush1.msra.mxu0 0.0
  %7143 = vmatprep.subr.mxu0 0.0
  %7144 = vmatpush1.msra.mxu0 0.0
  %7145 = vmatprep.subr.mxu0 0.0
  %7146 = vmatpush1.msra.mxu0 0.0
  %7147 = vmatprep.subr.mxu0 0.0
  %7148 = vmatpush1.msra.mxu0 0.0
  %7149 = vmatprep.subr.mxu0 0.0
  %7150 = vmatpush1.msra.mxu0 0.0
  %7151 = vmatprep.subr.mxu0 0.0
  %7152 = vmatpush1.msra.mxu0 0.0
  %7153 = vmatprep.subr.mxu0 0.0
  %7154 = vmatpush1.msra.mxu0 0.0
  %7155 = vmatprep.subr.mxu0 0.0
  %7156 = vmatpush1.msra.mxu0 0.0
  %7157 = vmatprep.subr.mxu0 0.0
  %7158 = vmatpush1.msra.mxu0 0.0
  %7159 = vmatprep.subr.mxu0 0.0
  %7160 = vmatpush1.msra.mxu0 0.0
  %7161 = vmatprep.subr.mxu0 0.0
  %7162 = vmatpush1.msra.mxu0 0.0
  %7163 = vmatprep.subr.mxu0 0.0
  %7164 = vmatpush1.msra.mxu0 0.0
  %7165 = vmatprep.subr.mxu0 0.0
  %7166 = vmatpush1.msra.mxu0 0.0
  %7167 = vmatprep.subr.mxu0 0.0
  %7168 = vmatpush1.msra.mxu0 0.0
  %7169 = vmatprep.subr.mxu0 0.0
  %7170 = vmatpush1.msra.mxu0 0.0
  %7171 = vmatprep.subr.mxu0 0.0
  %7172 = vmatpush1.msra.mxu0 0.0
  %7173 = vmatprep.subr.mxu0 0.0
  %7174 = vmatpush1.msra.mxu0 0.0
  %7175 = vmatprep.subr.mxu0 0.0
  %7176 = vmatpush1.msra.mxu0 0.0
  %7177 = vmatprep.subr.mxu0 0.0
  %7178 = vmatpush1.msra.mxu0 0.0
  %7179 = vmatprep.subr.mxu0 0.0
  %7180 = vmatpush1.msra.mxu0 0.0
  %7181 = vmatprep.mubr.f32.mxu0 0.0
  %7182 = vmatmul.mubr.f32.gmra.mrb[0].mxu0 %v7059
  %v7183 = vpop.f32.mrb[0].mxu0
  %v7184 = vadd.f32 %v6916, %v7183
  %v7185 = vpop.f32.mrb[0].mxu0
  %7186 = vmatprep.mubr.f32.mxu0 0.0
  %7187 = vmatmul.mubr.f32.gmra.mrb[0].mxu0 %v7061
  %v7188 = vpop.f32.mrb[0].mxu0
  %v7189 = vadd.f32 %v6921, %v7188
  %v7190 = vpop.f32.mrb[0].mxu0
  %7191 = vmatprep.mubr.f32.mxu0 0.0
  %7192 = vmatmul.mubr.f32.gmra.mrb[0].mxu0 %v7063
  %v7193 = vpop.f32.mrb[0].mxu0
  %v7194 = vadd.f32 %v6926, %v7193
  %v7195 = vpop.f32.mrb[0].mxu0
  %7196 = vmatprep.mubr.f32.mxu0 0.0
  %7197 = vmatmul.mubr.f32.gmra.mrb[0].mxu0 %v7065
  %v7198 = vpop.f32.mrb[0].mxu0
  %v7199 = vadd.f32 %v6931, %v7198
  %v7200 = vpop.f32.mrb[0].mxu0
  %7201 = vmatprep.mubr.f32.mxu0 0.0
  %7202 = vmatmul.mubr.f32.gmra.mrb[0].mxu0 %v7067
  %v7203 = vpop.f32.mrb[0].mxu0
  %v7204 = vadd.f32 %v6936, %v7203
  %v7205 = vpop.f32.mrb[0].mxu0
  %7206 = vmatprep.mubr.f32.mxu0 0.0
  %7207 = vmatmul.mubr.f32.gmra.mrb[0].mxu0 %v7069
  %v7208 = vpop.f32.mrb[0].mxu0
  %v7209 = vadd.f32 %v6941, %v7208
  %v7210 = vpop.f32.mrb[0].mxu0
  %7211 = vmatprep.mubr.f32.mxu0 0.0
  %7212 = vmatmul.mubr.f32.gmra.mrb[0].mxu0 %v7071
  %v7213 = vpop.f32.mrb[0].mxu0
  %v7214 = vadd.f32 %v6946, %v7213
  %v7215 = vpop.f32.mrb[0].mxu0
  %7216 = vmatprep.mubr.f32.mxu0 0.0
  %7217 = vmatmul.mubr.f32.gmra.mrb[0].mxu0 %v7073
  %v7218 = vpop.f32.mrb[0].mxu0
  %v7219 = vadd.f32 %v6951, %v7218
  %v7220 = vpop.f32.mrb[0].mxu0
  %7221 = vmatprep.mubr.f32.mxu0 0.0
  %7222 = vmatmul.mubr.f32.gmra.mrb[0].mxu0 %v7075
  %v7223 = vpop.f32.mrb[0].mxu0
  %v7224 = vadd.f32 %v6956, %v7223
  %v7225 = vpop.f32.mrb[0].mxu0
  %7226 = vmatprep.mubr.f32.mxu0 0.0
  %7227 = vmatmul.mubr.f32.gmra.mrb[0].mxu0 %v7077
  %v7228 = vpop.f32.mrb[0].mxu0
  %v7229 = vadd.f32 %v6961, %v7228
  %v7230 = vpop.f32.mrb[0].mxu0
  %7231 = vmatprep.mubr.f32.mxu0 0.0
  %7232 = vmatmul.mubr.f32.gmra.mrb[0].mxu0 %v7079
  %v7233 = vpop.f32.mrb[0].mxu0
  %v7234 = vadd.f32 %v6966, %v7233
  %v7235 = vpop.f32.mrb[0].mxu0
  %7236 = vmatprep.mubr.f32.mxu0 0.0
  %7237 = vmatmul.mubr.f32.gmra.mrb[0].mxu0 %v7081
  %v7238 = vpop.f32.mrb[0].mxu0
  %v7239 = vadd.f32 %v6971, %v7238
  %v7240 = vpop.f32.mrb[0].mxu0
  %7241 = vmatprep.mubr.f32.mxu0 0.0
  %7242 = vmatmul.mubr.f32.gmra.mrb[0].mxu0 %v7083
  %v7243 = vpop.f32.mrb[0].mxu0
  %v7244 = vadd.f32 %v6976, %v7243
  %v7245 = vpop.f32.mrb[0].mxu0
  %7246 = vmatprep.mubr.f32.mxu0 0.0
  %7247 = vmatmul.mubr.f32.gmra.mrb[0].mxu0 %v7085
  %v7248 = vpop.f32.mrb[0].mxu0
  %v7249 = vadd.f32 %v6981, %v7248
  %v7250 = vpop.f32.mrb[0].mxu0
  %7251 = vmatprep.mubr.f32.mxu0 0.0
  %7252 = vmatmul.mubr.f32.gmra.mrb[0].mxu0 %v7087
  %v7253 = vpop.f32.mrb[0].mxu0
  %v7254 = vadd.f32 %v6986, %v7253
  %v7255 = vpop.f32.mrb[0].mxu0
  %7256 = vmatprep.mubr.f32.mxu0 0.0
  %7257 = vmatmul.mubr.f32.gmra.mrb[0].mxu0 %v7089
  %v7258 = vpop.f32.mrb[0].mxu0
  %v7259 = vadd.f32 %v6991, %v7258
  %v7260 = vpop.f32.mrb[0].mxu0
  %7261 = vmatprep.mubr.f32.mxu0 0.0
  %7262 = vmatmul.mubr.f32.gmra.mrb[0].mxu0 %v7091
  %v7263 = vpop.f32.mrb[0].mxu0
  %v7264 = vadd.f32 %v6996, %v7263
  %v7265 = vpop.f32.mrb[0].mxu0
  %7266 = vmatprep.mubr.f32.mxu0 0.0
  %7267 = vmatmul.mubr.f32.gmra.mrb[0].mxu0 %v7093
  %v7268 = vpop.f32.mrb[0].mxu0
  %v7269 = vadd.f32 %v7001, %v7268
  %v7270 = vpop.f32.mrb[0].mxu0
  %7271 = vmatprep.mubr.f32.mxu0 0.0
  %7272 = vmatmul.mubr.f32.gmra.mrb[0].mxu0 %v7095
  %v7273 = vpop.f32.mrb[0].mxu0
  %v7274 = vadd.f32 %v7006, %v7273
  %v7275 = vpop.f32.mrb[0].mxu0
  %7276 = vmatprep.mubr.f32.mxu0 0.0
  %7277 = vmatmul.mubr.f32.gmra.mrb[0].mxu0 %v7097
  %v7278 = vpop.f32.mrb[0].mxu0
  %v7279 = vadd.f32 %v7011, %v7278
  %v7280 = vpop.f32.mrb[0].mxu0
  %7281 = vmatprep.mubr.f32.mxu0 0.0
  %7282 = vmatmul.mubr.f32.gmra.mrb[0].mxu0 %v7099
  %v7283 = vpop.f32.mrb[0].mxu0
  %v7284 = vadd.f32 %v7016, %v7283
  %v7285 = vpop.f32.mrb[0].mxu0
  %7286 = vmatprep.mubr.f32.mxu0 0.0
  %7287 = vmatmul.mubr.f32.gmra.mrb[0].mxu0 %v7101
  %v7288 = vpop.f32.mrb[0].mxu0
  %v7289 = vadd.f32 %v7021, %v7288
  %v7290 = vpop.f32.mrb[0].mxu0
  %7291 = vmatprep.mubr.f32.mxu0 0.0
  %7292 = vmatmul.mubr.f32.gmra.mrb[0].mxu0 %v7103
  %v7293 = vpop.f32.mrb[0].mxu0
  %v7294 = vadd.f32 %v7026, %v7293
  %v7295 = vpop.f32.mrb[0].mxu0
  %7296 = vmatprep.mubr.f32.mxu0 0.0
  %7297 = vmatmul.mubr.f32.gmra.mrb[0].mxu0 %v7105
  %v7298 = vpop.f32.mrb[0].mxu0
  %v7299 = vadd.f32 %v7031, %v7298
  %v7300 = vpop.f32.mrb[0].mxu0
  %7301 = vmatprep.mubr.f32.mxu0 0.0
  %7302 = vmatmul.mubr.f32.gmra.mrb[0].mxu0 %v7107
  %v7303 = vpop.f32.mrb[0].mxu0
  %v7304 = vadd.f32 %v7036, %v7303
  %v7305 = vpop.f32.mrb[0].mxu0
  %7306 = vmatprep.mubr.f32.mxu0 0.0
  %7307 = vmatmul.mubr.f32.gmra.mrb[0].mxu0 %v7109
  %v7308 = vpop.f32.mrb[0].mxu0
  %v7309 = vadd.f32 %v7041, %v7308
  %v7310 = vpop.f32.mrb[0].mxu0
  %7311 = vmatprep.mubr.f32.mxu0 0.0
  %7312 = vmatmul.mubr.f32.gmra.mrb[0].mxu0 %v7111
  %v7313 = vpop.f32.mrb[0].mxu0
  %v7314 = vadd.f32 %v7046, %v7313
  %v7315 = vpop.f32.mrb[0].mxu0
  %7316 = vmatprep.mubr.f32.mxu0 0.0
  %7317 = vmatmul.mubr.f32.gmra.mrb[0].mxu0 %v7113
  %v7318 = vpop.f32.mrb[0].mxu0
  %v7319 = vadd.f32 %v7051, %v7318
  %v7320 = vpop.f32.mrb[0].mxu0
  %7321 = vmatprep.mubr.f32.mxu0 0.0
  %7322 = vmatmul.mubr.f32.gmra.mrb[0].mxu0 %v7115
  %v7323 = vpop.f32.mrb[0].mxu0
  %v7324 = vadd.f32 %v7056, %v7323
  %v7325 = vpop.f32.mrb[0].mxu0
  %7326 = vdwg.mxu0
  %v7327 = vld [vmem:[%s7 + $0xa0] sm:$0xff]
  %v7328 = vld [vmem:[%s7 + $0xa8] sm:$0xff]
  %v7329 = vld [vmem:[%s7 + $0xb0] sm:$0xff]
  %v7330 = vld [vmem:[%s7 + $0xb8] sm:$0xff]
  %v7331 = vld [vmem:[%s7 + $0xc0] sm:$0xff]
  %v7332 = vld [vmem:[%s7 + $0xc8] sm:$0xff]
  %v7333 = vld [vmem:[%s7 + $0xd0] sm:$0xff]
  %v7334 = vld [vmem:[%s7 + $0xd8] sm:$0xff]
  %v7335 = vld [vmem:[%s7 + $0xe0] sm:$0xff]
  %v7336 = vld [vmem:[%s7 + $0xe8] sm:$0xff]
  %v7338 = vsel %vm6790, %v6682, 0
  %7340 = vmatprep.subr.mxu0 0.0
  %7341 = vmatpush1.msra.mxu0 %v7327
  %7342 = vmatprep.subr.mxu0 0.0
  %7343 = vmatpush1.msra.mxu0 %v7328
  %7344 = vmatprep.subr.mxu0 0.0
  %7345 = vmatpush1.msra.mxu0 %v7329
  %7346 = vmatprep.subr.mxu0 0.0
  %7347 = vmatpush1.msra.mxu0 %v7330
  %7348 = vmatprep.subr.mxu0 0.0
  %7349 = vmatpush1.msra.mxu0 %v7331
  %7350 = vmatprep.subr.mxu0 0.0
  %7351 = vmatpush1.msra.mxu0 %v7332
  %7352 = vmatprep.subr.mxu0 0.0
  %7353 = vmatpush1.msra.mxu0 %v7333
  %7354 = vmatprep.subr.mxu0 0.0
  %7355 = vmatpush1.msra.mxu0 %v7334
  %7356 = vmatprep.subr.mxu0 0.0
  %7357 = vmatpush1.msra.mxu0 %v7335
  %7358 = vmatprep.subr.mxu0 0.0
  %7359 = vmatpush1.msra.mxu0 %v7336
  %7360 = vmatprep.subr.mxu0 0.0
  %7361 = vmatpush1.msra.mxu0 0.0
  %7362 = vmatprep.subr.mxu0 0.0
  %7363 = vmatpush1.msra.mxu0 0.0
  %7364 = vmatprep.subr.mxu0 0.0
  %7365 = vmatpush1.msra.mxu0 0.0
  %7366 = vmatprep.subr.mxu0 0.0
  %7367 = vmatpush1.msra.mxu0 0.0
  %7368 = vmatprep.subr.mxu0 0.0
  %7369 = vmatpush1.msra.mxu0 0.0
  %7370 = vmatprep.subr.mxu0 0.0
  %7371 = vmatpush1.msra.mxu0 0.0
  %7372 = vmatprep.subr.mxu0 0.0
  %7373 = vmatpush1.msra.mxu0 0.0
  %7374 = vmatprep.subr.mxu0 0.0
  %7375 = vmatpush1.msra.mxu0 0.0
  %7376 = vmatprep.subr.mxu0 0.0
  %7377 = vmatpush1.msra.mxu0 0.0
  %7378 = vmatprep.subr.mxu0 0.0
  %7379 = vmatpush1.msra.mxu0 0.0
  %7380 = vmatprep.subr.mxu0 0.0
  %7381 = vmatpush1.msra.mxu0 0.0
  %7382 = vmatprep.subr.mxu0 0.0
  %7383 = vmatpush1.msra.mxu0 0.0
  %7384 = vmatprep.subr.mxu0 0.0
  %7385 = vmatpush1.msra.mxu0 0.0
  %7386 = vmatprep.subr.mxu0 0.0
  %7387 = vmatpush1.msra.mxu0 0.0
  %7388 = vmatprep.subr.mxu0 0.0
  %7389 = vmatpush1.msra.mxu0 0.0
  %7390 = vmatprep.subr.mxu0 0.0
  %7391 = vmatpush1.msra.mxu0 0.0
  %7392 = vmatprep.subr.mxu0 0.0
  %7393 = vmatpush1.msra.mxu0 0.0
  %7394 = vmatprep.subr.mxu0 0.0
  %7395 = vmatpush1.msra.mxu0 0.0
  %7396 = vmatprep.subr.mxu0 0.0
  %7397 = vmatpush1.msra.mxu0 0.0
  %7398 = vmatprep.subr.mxu0 0.0
  %7399 = vmatpush1.msra.mxu0 0.0
  %7400 = vmatprep.subr.mxu0 0.0
  %7401 = vmatpush1.msra.mxu0 0.0
  %7402 = vmatprep.subr.mxu0 0.0
  %7403 = vmatpush1.msra.mxu0 0.0
  %7404 = vmatprep.mubr.f32.mxu0 0.0
  %7405 = vmatmul.mubr.f32.gmra.mrb[0].mxu0 %v7061
  %v7406 = vpop.f32.mrb[0].mxu0
  %v7407 = vadd.f32 0.0, %v7406
  %v7408 = vpop.f32.mrb[0].mxu0
  %7409 = vmatprep.mubr.f32.mxu0 0.0
  %7410 = vmatmul.mubr.f32.gmra.mrb[0].mxu0 %v7063
  %v7411 = vpop.f32.mrb[0].mxu0
  %v7412 = vadd.f32 0.0, %v7411
  %v7413 = vpop.f32.mrb[0].mxu0
  %7414 = vmatprep.mubr.f32.mxu0 0.0
  %7415 = vmatmul.mubr.f32.gmra.mrb[0].mxu0 %v7065
  %v7416 = vpop.f32.mrb[0].mxu0
  %v7417 = vadd.f32 0.0, %v7416
  %v7418 = vpop.f32.mrb[0].mxu0
  %7419 = vmatprep.mubr.f32.mxu0 0.0
  %7420 = vmatmul.mubr.f32.gmra.mrb[0].mxu0 %v7067
  %v7421 = vpop.f32.mrb[0].mxu0
  %v7422 = vadd.f32 0.0, %v7421
  %v7423 = vpop.f32.mrb[0].mxu0
  %7424 = vmatprep.mubr.f32.mxu0 0.0
  %7425 = vmatmul.mubr.f32.gmra.mrb[0].mxu0 %v7069
  %v7426 = vpop.f32.mrb[0].mxu0
  %v7427 = vadd.f32 0.0, %v7426
  %v7428 = vpop.f32.mrb[0].mxu0
  %7429 = vmatprep.mubr.f32.mxu0 0.0
  %7430 = vmatmul.mubr.f32.gmra.mrb[0].mxu0 %v7071
  %v7431 = vpop.f32.mrb[0].mxu0
  %v7432 = vadd.f32 0.0, %v7431
  %v7433 = vpop.f32.mrb[0].mxu0
  %7434 = vmatprep.mubr.f32.mxu0 0.0
  %7435 = vmatmul.mubr.f32.gmra.mrb[0].mxu0 %v7073
  %v7436 = vpop.f32.mrb[0].mxu0
  %v7437 = vadd.f32 0.0, %v7436
  %v7438 = vpop.f32.mrb[0].mxu0
  %7439 = vmatprep.mubr.f32.mxu0 0.0
  %7440 = vmatmul.mubr.f32.gmra.mrb[0].mxu0 %v7075
  %v7441 = vpop.f32.mrb[0].mxu0
  %v7442 = vadd.f32 0.0, %v7441
  %v7443 = vpop.f32.mrb[0].mxu0
  %7444 = vmatprep.mubr.f32.mxu0 0.0
  %7445 = vmatmul.mubr.f32.gmra.mrb[0].mxu0 %v7077
  %v7446 = vpop.f32.mrb[0].mxu0
  %v7447 = vadd.f32 0.0, %v7446
  %v7448 = vpop.f32.mrb[0].mxu0
  %7449 = vmatprep.mubr.f32.mxu0 0.0
  %7450 = vmatmul.mubr.f32.gmra.mrb[0].mxu0 %v7079
  %v7451 = vpop.f32.mrb[0].mxu0
  %v7452 = vadd.f32 0.0, %v7451
  %v7453 = vpop.f32.mrb[0].mxu0
  %7454 = vmatprep.mubr.f32.mxu0 0.0
  %7455 = vmatmul.mubr.f32.gmra.mrb[0].mxu0 %v7081
  %v7456 = vpop.f32.mrb[0].mxu0
  %v7457 = vadd.f32 0.0, %v7456
  %v7458 = vpop.f32.mrb[0].mxu0
  %7459 = vmatprep.mubr.f32.mxu0 0.0
  %7460 = vmatmul.mubr.f32.gmra.mrb[0].mxu0 %v7083
  %v7461 = vpop.f32.mrb[0].mxu0
  %v7462 = vadd.f32 0.0, %v7461
  %v7463 = vpop.f32.mrb[0].mxu0
  %7464 = vmatprep.mubr.f32.mxu0 0.0
  %7465 = vmatmul.mubr.f32.gmra.mrb[0].mxu0 %v7085
  %v7466 = vpop.f32.mrb[0].mxu0
  %v7467 = vadd.f32 0.0, %v7466
  %v7468 = vpop.f32.mrb[0].mxu0
  %7469 = vmatprep.mubr.f32.mxu0 0.0
  %7470 = vmatmul.mubr.f32.gmra.mrb[0].mxu0 %v7087
  %v7471 = vpop.f32.mrb[0].mxu0
  %v7472 = vadd.f32 0.0, %v7471
  %v7473 = vpop.f32.mrb[0].mxu0
  %7474 = vmatprep.mubr.f32.mxu0 0.0
  %7475 = vmatmul.mubr.f32.gmra.mrb[0].mxu0 %v7089
  %v7476 = vpop.f32.mrb[0].mxu0
  %v7477 = vadd.f32 0.0, %v7476
  %v7478 = vpop.f32.mrb[0].mxu0
  %7479 = vmatprep.mubr.f32.mxu0 0.0
  %7480 = vmatmul.mubr.f32.gmra.mrb[0].mxu0 %v7091
  %v7481 = vpop.f32.mrb[0].mxu0
  %v7482 = vadd.f32 0.0, %v7481
  %v7483 = vpop.f32.mrb[0].mxu0
  %7484 = vmatprep.mubr.f32.mxu0 0.0
  %7485 = vmatmul.mubr.f32.gmra.mrb[0].mxu0 %v7093
  %v7486 = vpop.f32.mrb[0].mxu0
  %v7487 = vadd.f32 0.0, %v7486
  %v7488 = vpop.f32.mrb[0].mxu0
  %7489 = vmatprep.mubr.f32.mxu0 0.0
  %7490 = vmatmul.mubr.f32.gmra.mrb[0].mxu0 %v7095
  %v7491 = vpop.f32.mrb[0].mxu0
  %v7492 = vadd.f32 0.0, %v7491
  %v7493 = vpop.f32.mrb[0].mxu0
  %7494 = vmatprep.mubr.f32.mxu0 0.0
  %7495 = vmatmul.mubr.f32.gmra.mrb[0].mxu0 %v7097
  %v7496 = vpop.f32.mrb[0].mxu0
  %v7497 = vadd.f32 0.0, %v7496
  %v7498 = vpop.f32.mrb[0].mxu0
  %7499 = vmatprep.mubr.f32.mxu0 0.0
  %7500 = vmatmul.mubr.f32.gmra.mrb[0].mxu0 %v7099
  %v7501 = vpop.f32.mrb[0].mxu0
  %v7502 = vadd.f32 0.0, %v7501
  %v7503 = vpop.f32.mrb[0].mxu0
  %7504 = vmatprep.mubr.f32.mxu0 0.0
  %7505 = vmatmul.mubr.f32.gmra.mrb[0].mxu0 %v7101
  %v7506 = vpop.f32.mrb[0].mxu0
  %v7507 = vadd.f32 0.0, %v7506
  %v7508 = vpop.f32.mrb[0].mxu0
  %7509 = vmatprep.mubr.f32.mxu0 0.0
  %7510 = vmatmul.mubr.f32.gmra.mrb[0].mxu0 %v7103
  %v7511 = vpop.f32.mrb[0].mxu0
  %v7512 = vadd.f32 0.0, %v7511
  %v7513 = vpop.f32.mrb[0].mxu0
  %7514 = vmatprep.mubr.f32.mxu0 0.0
  %7515 = vmatmul.mubr.f32.gmra.mrb[0].mxu0 %v7105
  %v7516 = vpop.f32.mrb[0].mxu0
  %v7517 = vadd.f32 0.0, %v7516
  %v7518 = vpop.f32.mrb[0].mxu0
  %7519 = vmatprep.mubr.f32.mxu0 0.0
  %7520 = vmatmul.mubr.f32.gmra.mrb[0].mxu0 %v7107
  %v7521 = vpop.f32.mrb[0].mxu0
  %v7522 = vadd.f32 0.0, %v7521
  %v7523 = vpop.f32.mrb[0].mxu0
  %7524 = vmatprep.mubr.f32.mxu0 0.0
  %7525 = vmatmul.mubr.f32.gmra.mrb[0].mxu0 %v7109
  %v7526 = vpop.f32.mrb[0].mxu0
  %v7527 = vadd.f32 0.0, %v7526
  %v7528 = vpop.f32.mrb[0].mxu0
  %7529 = vmatprep.mubr.f32.mxu0 0.0
  %7530 = vmatmul.mubr.f32.gmra.mrb[0].mxu0 %v7111
  %v7531 = vpop.f32.mrb[0].mxu0
  %v7532 = vadd.f32 0.0, %v7531
  %v7533 = vpop.f32.mrb[0].mxu0
  %7534 = vmatprep.mubr.f32.mxu0 0.0
  %7535 = vmatmul.mubr.f32.gmra.mrb[0].mxu0 %v7113
  %v7536 = vpop.f32.mrb[0].mxu0
  %v7537 = vadd.f32 0.0, %v7536
  %v7538 = vpop.f32.mrb[0].mxu0
  %7539 = vmatprep.mubr.f32.mxu0 0.0
  %7540 = vmatmul.mubr.f32.gmra.mrb[0].mxu0 %v7115
  %v7541 = vpop.f32.mrb[0].mxu0
  %v7542 = vadd.f32 0.0, %v7541
  %v7543 = vpop.f32.mrb[0].mxu0
  %7544 = vmatprep.mubr.f32.mxu0 0.0
  %7545 = vmatmul.mubr.f32.gmra.mrb[0].mxu0 %v7338
  %v7546 = vpop.f32.mrb[0].mxu0
  %v7547 = vadd.f32 0.0, %v7546
  %v7548 = vpop.f32.mrb[0].mxu0
  %7549 = vdwg.mxu0
  %v7550 = vadd.f32 %v7184, %v7407
  %v7551 = vadd.f32 %v7189, %v7412
  %v7552 = vadd.f32 %v7194, %v7417
  %v7553 = vadd.f32 %v7199, %v7422
  %v7554 = vadd.f32 %v7204, %v7427
  %v7555 = vadd.f32 %v7209, %v7432
  %v7556 = vadd.f32 %v7214, %v7437
  %v7557 = vadd.f32 %v7219, %v7442
  %v7558 = vadd.f32 %v7224, %v7447
  %v7559 = vadd.f32 %v7229, %v7452
  %v7560 = vadd.f32 %v7234, %v7457
  %v7561 = vadd.f32 %v7239, %v7462
  %v7562 = vadd.f32 %v7244, %v7467
  %v7563 = vadd.f32 %v7249, %v7472
  %v7564 = vadd.f32 %v7254, %v7477
  %v7565 = vadd.f32 %v7259, %v7482
  %v7566 = vadd.f32 %v7264, %v7487
  %v7567 = vadd.f32 %v7269, %v7492
  %v7568 = vadd.f32 %v7274, %v7497
  %v7569 = vadd.f32 %v7279, %v7502
  %v7570 = vadd.f32 %v7284, %v7507
  %v7571 = vadd.f32 %v7289, %v7512
  %v7572 = vadd.f32 %v7294, %v7517
  %v7573 = vadd.f32 %v7299, %v7522
  %v7574 = vadd.f32 %v7304, %v7527
  %v7575 = vadd.f32 %v7309, %v7532
  %v7576 = vadd.f32 %v7314, %v7537
  %v7577 = vadd.f32 %v7319, %v7542
  %v7578 = vadd.f32 %v7324, %v7547
  %v7579 = vld [vmem:[%s7 + $0xf0] sm:$0xff]
  %v7580 = vld [vmem:[%s7 + $0xf8] sm:$0xff]
  %v7581 = vld [vmem:[%s7 + $0x100] sm:$0xff]
  %v7582 = vld [vmem:[%s7 + $0x108] sm:$0xff]
  %v7583 = vld [vmem:[%s7 + $0x110] sm:$0xff]
  %v7584 = vld [vmem:[%s7 + $0x118] sm:$0xff]
  %v7585 = vld [vmem:[%s7 + $0x120] sm:$0xff]
  %v7586 = vld [vmem:[%s7 + $0x128] sm:$0xff]
  %v7587 = vld [vmem:[%s7 + $0x130] sm:$0xff]
  %v7588 = vld [vmem:[%s7 + $0x138] sm:$0xff]
  %v7589 = vrot.slane %v6682, 4
  %v7590 = vsel %vm3622, %v6788, %v7589
  %v7591 = vsel %vm6790, %v7590, 0
  %v7593 = vsel %vm6790, %v7589, 0
  %7595 = vmatprep.subr.mxu0 0.0
  %7596 = vmatpush1.msra.mxu0 %v7579
  %7597 = vmatprep.subr.mxu0 0.0
  %7598 = vmatpush1.msra.mxu0 %v7580
  %7599 = vmatprep.subr.mxu0 0.0
  %7600 = vmatpush1.msra.mxu0 %v7581
  %7601 = vmatprep.subr.mxu0 0.0
  %7602 = vmatpush1.msra.mxu0 %v7582
  %7603 = vmatprep.subr.mxu0 0.0
  %7604 = vmatpush1.msra.mxu0 %v7583
  %7605 = vmatprep.subr.mxu0 0.0
  %7606 = vmatpush1.msra.mxu0 %v7584
  %7607 = vmatprep.subr.mxu0 0.0
  %7608 = vmatpush1.msra.mxu0 %v7585
  %7609 = vmatprep.subr.mxu0 0.0
  %7610 = vmatpush1.msra.mxu0 %v7586
  %7611 = vmatprep.subr.mxu0 0.0
  %7612 = vmatpush1.msra.mxu0 %v7587
  %7613 = vmatprep.subr.mxu0 0.0
  %7614 = vmatpush1.msra.mxu0 %v7588
  %7615 = vmatprep.subr.mxu0 0.0
  %7616 = vmatpush1.msra.mxu0 0.0
  %7617 = vmatprep.subr.mxu0 0.0
  %7618 = vmatpush1.msra.mxu0 0.0
  %7619 = vmatprep.subr.mxu0 0.0
  %7620 = vmatpush1.msra.mxu0 0.0
  %7621 = vmatprep.subr.mxu0 0.0
  %7622 = vmatpush1.msra.mxu0 0.0
  %7623 = vmatprep.subr.mxu0 0.0
  %7624 = vmatpush1.msra.mxu0 0.0
  %7625 = vmatprep.subr.mxu0 0.0
  %7626 = vmatpush1.msra.mxu0 0.0
  %7627 = vmatprep.subr.mxu0 0.0
  %7628 = vmatpush1.msra.mxu0 0.0
  %7629 = vmatprep.subr.mxu0 0.0
  %7630 = vmatpush1.msra.mxu0 0.0
  %7631 = vmatprep.subr.mxu0 0.0
  %7632 = vmatpush1.msra.mxu0 0.0
  %7633 = vmatprep.subr.mxu0 0.0
  %7634 = vmatpush1.msra.mxu0 0.0
  %7635 = vmatprep.subr.mxu0 0.0
  %7636 = vmatpush1.msra.mxu0 0.0
  %7637 = vmatprep.subr.mxu0 0.0
  %7638 = vmatpush1.msra.mxu0 0.0
  %7639 = vmatprep.subr.mxu0 0.0
  %7640 = vmatpush1.msra.mxu0 0.0
  %7641 = vmatprep.subr.mxu0 0.0
  %7642 = vmatpush1.msra.mxu0 0.0
  %7643 = vmatprep.subr.mxu0 0.0
  %7644 = vmatpush1.msra.mxu0 0.0
  %7645 = vmatprep.subr.mxu0 0.0
  %7646 = vmatpush1.msra.mxu0 0.0
  %7647 = vmatprep.subr.mxu0 0.0
  %7648 = vmatpush1.msra.mxu0 0.0
  %7649 = vmatprep.subr.mxu0 0.0
  %7650 = vmatpush1.msra.mxu0 0.0
  %7651 = vmatprep.subr.mxu0 0.0
  %7652 = vmatpush1.msra.mxu0 0.0
  %7653 = vmatprep.subr.mxu0 0.0
  %7654 = vmatpush1.msra.mxu0 0.0
  %7655 = vmatprep.subr.mxu0 0.0
  %7656 = vmatpush1.msra.mxu0 0.0
  %7657 = vmatprep.subr.mxu0 0.0
  %7658 = vmatpush1.msra.mxu0 0.0
  %7659 = vmatprep.mubr.f32.mxu0 0.0
  %7660 = vmatmul.mubr.f32.gmra.mrb[0].mxu0 %v6793
  %v7661 = vpop.f32.mrb[0].mxu0
  %v7662 = vadd.f32 0.0, %v7661
  %v7663 = vpop.f32.mrb[0].mxu0
  %7664 = vmatprep.mubr.f32.mxu0 0.0
  %7665 = vmatmul.mubr.f32.gmra.mrb[0].mxu0 %v6795
  %v7666 = vpop.f32.mrb[0].mxu0
  %v7667 = vadd.f32 0.0, %v7666
  %v7668 = vpop.f32.mrb[0].mxu0
  %7669 = vmatprep.mubr.f32.mxu0 0.0
  %7670 = vmatmul.mubr.f32.gmra.mrb[0].mxu0 %v6797
  %v7671 = vpop.f32.mrb[0].mxu0
  %v7672 = vadd.f32 0.0, %v7671
  %v7673 = vpop.f32.mrb[0].mxu0
  %7674 = vmatprep.mubr.f32.mxu0 0.0
  %7675 = vmatmul.mubr.f32.gmra.mrb[0].mxu0 %v6799
  %v7676 = vpop.f32.mrb[0].mxu0
  %v7677 = vadd.f32 0.0, %v7676
  %v7678 = vpop.f32.mrb[0].mxu0
  %7679 = vmatprep.mubr.f32.mxu0 0.0
  %7680 = vmatmul.mubr.f32.gmra.mrb[0].mxu0 %v6801
  %v7681 = vpop.f32.mrb[0].mxu0
  %v7682 = vadd.f32 0.0, %v7681
  %v7683 = vpop.f32.mrb[0].mxu0
  %7684 = vmatprep.mubr.f32.mxu0 0.0
  %7685 = vmatmul.mubr.f32.gmra.mrb[0].mxu0 %v6803
  %v7686 = vpop.f32.mrb[0].mxu0
  %v7687 = vadd.f32 0.0, %v7686
  %v7688 = vpop.f32.mrb[0].mxu0
  %7689 = vmatprep.mubr.f32.mxu0 0.0
  %7690 = vmatmul.mubr.f32.gmra.mrb[0].mxu0 %v6805
  %v7691 = vpop.f32.mrb[0].mxu0
  %v7692 = vadd.f32 0.0, %v7691
  %v7693 = vpop.f32.mrb[0].mxu0
  %7694 = vmatprep.mubr.f32.mxu0 0.0
  %7695 = vmatmul.mubr.f32.gmra.mrb[0].mxu0 %v6807
  %v7696 = vpop.f32.mrb[0].mxu0
  %v7697 = vadd.f32 0.0, %v7696
  %v7698 = vpop.f32.mrb[0].mxu0
  %7699 = vmatprep.mubr.f32.mxu0 0.0
  %7700 = vmatmul.mubr.f32.gmra.mrb[0].mxu0 %v6809
  %v7701 = vpop.f32.mrb[0].mxu0
  %v7702 = vadd.f32 0.0, %v7701
  %v7703 = vpop.f32.mrb[0].mxu0
  %7704 = vmatprep.mubr.f32.mxu0 0.0
  %7705 = vmatmul.mubr.f32.gmra.mrb[0].mxu0 %v6811
  %v7706 = vpop.f32.mrb[0].mxu0
  %v7707 = vadd.f32 0.0, %v7706
  %v7708 = vpop.f32.mrb[0].mxu0
  %7709 = vmatprep.mubr.f32.mxu0 0.0
  %7710 = vmatmul.mubr.f32.gmra.mrb[0].mxu0 %v6813
  %v7711 = vpop.f32.mrb[0].mxu0
  %v7712 = vadd.f32 0.0, %v7711
  %v7713 = vpop.f32.mrb[0].mxu0
  %7714 = vmatprep.mubr.f32.mxu0 0.0
  %7715 = vmatmul.mubr.f32.gmra.mrb[0].mxu0 %v6815
  %v7716 = vpop.f32.mrb[0].mxu0
  %v7717 = vadd.f32 0.0, %v7716
  %v7718 = vpop.f32.mrb[0].mxu0
  %7719 = vmatprep.mubr.f32.mxu0 0.0
  %7720 = vmatmul.mubr.f32.gmra.mrb[0].mxu0 %v6817
  %v7721 = vpop.f32.mrb[0].mxu0
  %v7722 = vadd.f32 0.0, %v7721
  %v7723 = vpop.f32.mrb[0].mxu0
  %7724 = vmatprep.mubr.f32.mxu0 0.0
  %7725 = vmatmul.mubr.f32.gmra.mrb[0].mxu0 %v6819
  %v7726 = vpop.f32.mrb[0].mxu0
  %v7727 = vadd.f32 0.0, %v7726
  %v7728 = vpop.f32.mrb[0].mxu0
  %7729 = vmatprep.mubr.f32.mxu0 0.0
  %7730 = vmatmul.mubr.f32.gmra.mrb[0].mxu0 %v6821
  %v7731 = vpop.f32.mrb[0].mxu0
  %v7732 = vadd.f32 0.0, %v7731
  %v7733 = vpop.f32.mrb[0].mxu0
  %7734 = vmatprep.mubr.f32.mxu0 0.0
  %7735 = vmatmul.mubr.f32.gmra.mrb[0].mxu0 %v6823
  %v7736 = vpop.f32.mrb[0].mxu0
  %v7737 = vadd.f32 0.0, %v7736
  %v7738 = vpop.f32.mrb[0].mxu0
  %7739 = vmatprep.mubr.f32.mxu0 0.0
  %7740 = vmatmul.mubr.f32.gmra.mrb[0].mxu0 %v6825
  %v7741 = vpop.f32.mrb[0].mxu0
  %v7742 = vadd.f32 0.0, %v7741
  %v7743 = vpop.f32.mrb[0].mxu0
  %7744 = vmatprep.mubr.f32.mxu0 0.0
  %7745 = vmatmul.mubr.f32.gmra.mrb[0].mxu0 %v6827
  %v7746 = vpop.f32.mrb[0].mxu0
  %v7747 = vadd.f32 0.0, %v7746
  %v7748 = vpop.f32.mrb[0].mxu0
  %7749 = vmatprep.mubr.f32.mxu0 0.0
  %7750 = vmatmul.mubr.f32.gmra.mrb[0].mxu0 %v6829
  %v7751 = vpop.f32.mrb[0].mxu0
  %v7752 = vadd.f32 0.0, %v7751
  %v7753 = vpop.f32.mrb[0].mxu0
  %7754 = vmatprep.mubr.f32.mxu0 0.0
  %7755 = vmatmul.mubr.f32.gmra.mrb[0].mxu0 %v6831
  %v7756 = vpop.f32.mrb[0].mxu0
  %v7757 = vadd.f32 0.0, %v7756
  %v7758 = vpop.f32.mrb[0].mxu0
  %7759 = vmatprep.mubr.f32.mxu0 0.0
  %7760 = vmatmul.mubr.f32.gmra.mrb[0].mxu0 %v6833
  %v7761 = vpop.f32.mrb[0].mxu0
  %v7762 = vadd.f32 0.0, %v7761
  %v7763 = vpop.f32.mrb[0].mxu0
  %7764 = vmatprep.mubr.f32.mxu0 0.0
  %7765 = vmatmul.mubr.f32.gmra.mrb[0].mxu0 %v6835
  %v7766 = vpop.f32.mrb[0].mxu0
  %v7767 = vadd.f32 0.0, %v7766
  %v7768 = vpop.f32.mrb[0].mxu0
  %7769 = vmatprep.mubr.f32.mxu0 0.0
  %7770 = vmatmul.mubr.f32.gmra.mrb[0].mxu0 %v6837
  %v7771 = vpop.f32.mrb[0].mxu0
  %v7772 = vadd.f32 0.0, %v7771
  %v7773 = vpop.f32.mrb[0].mxu0
  %7774 = vmatprep.mubr.f32.mxu0 0.0
  %7775 = vmatmul.mubr.f32.gmra.mrb[0].mxu0 %v6839
  %v7776 = vpop.f32.mrb[0].mxu0
  %v7777 = vadd.f32 0.0, %v7776
  %v7778 = vpop.f32.mrb[0].mxu0
  %7779 = vmatprep.mubr.f32.mxu0 0.0
  %7780 = vmatmul.mubr.f32.gmra.mrb[0].mxu0 %v6841
  %v7781 = vpop.f32.mrb[0].mxu0
  %v7782 = vadd.f32 0.0, %v7781
  %v7783 = vpop.f32.mrb[0].mxu0
  %7784 = vmatprep.mubr.f32.mxu0 0.0
  %7785 = vmatmul.mubr.f32.gmra.mrb[0].mxu0 %v6843
  %v7786 = vpop.f32.mrb[0].mxu0
  %v7787 = vadd.f32 0.0, %v7786
  %v7788 = vpop.f32.mrb[0].mxu0
  %7789 = vmatprep.mubr.f32.mxu0 0.0
  %7790 = vmatmul.mubr.f32.gmra.mrb[0].mxu0 %v6845
  %v7791 = vpop.f32.mrb[0].mxu0
  %v7792 = vadd.f32 0.0, %v7791
  %v7793 = vpop.f32.mrb[0].mxu0
  %7794 = vmatprep.mubr.f32.mxu0 0.0
  %7795 = vmatmul.mubr.f32.gmra.mrb[0].mxu0 %v7591
  %v7796 = vpop.f32.mrb[0].mxu0
  %v7797 = vadd.f32 0.0, %v7796
  %v7798 = vpop.f32.mrb[0].mxu0
  %7799 = vmatprep.mubr.f32.mxu0 0.0
  %7800 = vmatmul.mubr.f32.gmra.mrb[0].mxu0 %v7593
  %v7801 = vpop.f32.mrb[0].mxu0
  %v7802 = vadd.f32 0.0, %v7801
  %v7803 = vpop.f32.mrb[0].mxu0
  %7804 = vdwg.mxu0
  %v7805 = vadd.f32 %v7550, %v7662
  %v7806 = vadd.f32 %v7551, %v7667
  %v7807 = vadd.f32 %v7552, %v7672
  %v7808 = vadd.f32 %v7553, %v7677
  %v7809 = vadd.f32 %v7554, %v7682
  %v7810 = vadd.f32 %v7555, %v7687
  %v7811 = vadd.f32 %v7556, %v7692
  %v7812 = vadd.f32 %v7557, %v7697
  %v7813 = vadd.f32 %v7558, %v7702
  %v7814 = vadd.f32 %v7559, %v7707
  %v7815 = vadd.f32 %v7560, %v7712
  %v7816 = vadd.f32 %v7561, %v7717
  %v7817 = vadd.f32 %v7562, %v7722
  %v7818 = vadd.f32 %v7563, %v7727
  %v7819 = vadd.f32 %v7564, %v7732
  %v7820 = vadd.f32 %v7565, %v7737
  %v7821 = vadd.f32 %v7566, %v7742
  %v7822 = vadd.f32 %v7567, %v7747
  %v7823 = vadd.f32 %v7568, %v7752
  %v7824 = vadd.f32 %v7569, %v7757
  %v7825 = vadd.f32 %v7570, %v7762
  %v7826 = vadd.f32 %v7571, %v7767
  %v7827 = vadd.f32 %v7572, %v7772
  %v7828 = vadd.f32 %v7573, %v7777
  %v7829 = vadd.f32 %v7574, %v7782
  %v7830 = vadd.f32 %v7575, %v7787
  %v7831 = vadd.f32 %v7576, %v7792
  %v7832 = vadd.f32 %v7577, %v7797
  %v7833 = vadd.f32 %v7578, %v7802
  %v7834 = vld [vmem:[%s7 + $0x140] sm:$0xff]
  %v7835 = vld [vmem:[%s7 + $0x148] sm:$0xff]
  %v7836 = vld [vmem:[%s7 + $0x150] sm:$0xff]
  %v7837 = vld [vmem:[%s7 + $0x158] sm:$0xff]
  %v7838 = vld [vmem:[%s7 + $0x160] sm:$0xff]
  %v7839 = vld [vmem:[%s7 + $0x168] sm:$0xff]
  %v7840 = vld [vmem:[%s7 + $0x170] sm:$0xff]
  %v7841 = vld [vmem:[%s7 + $0x178] sm:$0xff]
  %v7842 = vld [vmem:[%s7 + $0x180] sm:$0xff]
  %v7843 = vld [vmem:[%s7 + $0x188] sm:$0xff]
  %v7845 = vsel %vm6790, %v6683, 0
  %7847 = vmatprep.subr.mxu0 0.0
  %7848 = vmatpush1.msra.mxu0 %v7834
  %7849 = vmatprep.subr.mxu0 0.0
  %7850 = vmatpush1.msra.mxu0 %v7835
  %7851 = vmatprep.subr.mxu0 0.0
  %7852 = vmatpush1.msra.mxu0 %v7836
  %7853 = vmatprep.subr.mxu0 0.0
  %7854 = vmatpush1.msra.mxu0 %v7837
  %7855 = vmatprep.subr.mxu0 0.0
  %7856 = vmatpush1.msra.mxu0 %v7838
  %7857 = vmatprep.subr.mxu0 0.0
  %7858 = vmatpush1.msra.mxu0 %v7839
  %7859 = vmatprep.subr.mxu0 0.0
  %7860 = vmatpush1.msra.mxu0 %v7840
  %7861 = vmatprep.subr.mxu0 0.0
  %7862 = vmatpush1.msra.mxu0 %v7841
  %7863 = vmatprep.subr.mxu0 0.0
  %7864 = vmatpush1.msra.mxu0 %v7842
  %7865 = vmatprep.subr.mxu0 0.0
  %7866 = vmatpush1.msra.mxu0 %v7843
  %7867 = vmatprep.subr.mxu0 0.0
  %7868 = vmatpush1.msra.mxu0 0.0
  %7869 = vmatprep.subr.mxu0 0.0
  %7870 = vmatpush1.msra.mxu0 0.0
  %7871 = vmatprep.subr.mxu0 0.0
  %7872 = vmatpush1.msra.mxu0 0.0
  %7873 = vmatprep.subr.mxu0 0.0
  %7874 = vmatpush1.msra.mxu0 0.0
  %7875 = vmatprep.subr.mxu0 0.0
  %7876 = vmatpush1.msra.mxu0 0.0
  %7877 = vmatprep.subr.mxu0 0.0
  %7878 = vmatpush1.msra.mxu0 0.0
  %7879 = vmatprep.subr.mxu0 0.0
  %7880 = vmatpush1.msra.mxu0 0.0
  %7881 = vmatprep.subr.mxu0 0.0
  %7882 = vmatpush1.msra.mxu0 0.0
  %7883 = vmatprep.subr.mxu0 0.0
  %7884 = vmatpush1.msra.mxu0 0.0
  %7885 = vmatprep.subr.mxu0 0.0
  %7886 = vmatpush1.msra.mxu0 0.0
  %7887 = vmatprep.subr.mxu0 0.0
  %7888 = vmatpush1.msra.mxu0 0.0
  %7889 = vmatprep.subr.mxu0 0.0
  %7890 = vmatpush1.msra.mxu0 0.0
  %7891 = vmatprep.subr.mxu0 0.0
  %7892 = vmatpush1.msra.mxu0 0.0
  %7893 = vmatprep.subr.mxu0 0.0
  %7894 = vmatpush1.msra.mxu0 0.0
  %7895 = vmatprep.subr.mxu0 0.0
  %7896 = vmatpush1.msra.mxu0 0.0
  %7897 = vmatprep.subr.mxu0 0.0
  %7898 = vmatpush1.msra.mxu0 0.0
  %7899 = vmatprep.subr.mxu0 0.0
  %7900 = vmatpush1.msra.mxu0 0.0
  %7901 = vmatprep.subr.mxu0 0.0
  %7902 = vmatpush1.msra.mxu0 0.0
  %7903 = vmatprep.subr.mxu0 0.0
  %7904 = vmatpush1.msra.mxu0 0.0
  %7905 = vmatprep.subr.mxu0 0.0
  %7906 = vmatpush1.msra.mxu0 0.0
  %7907 = vmatprep.subr.mxu0 0.0
  %7908 = vmatpush1.msra.mxu0 0.0
  %7909 = vmatprep.subr.mxu0 0.0
  %7910 = vmatpush1.msra.mxu0 0.0
  %7911 = vmatprep.mubr.f32.mxu0 0.0
  %7912 = vmatmul.mubr.f32.gmra.mrb[0].mxu0 %v7063
  %v7913 = vpop.f32.mrb[0].mxu0
  %v7914 = vadd.f32 0.0, %v7913
  %v7915 = vpop.f32.mrb[0].mxu0
  %7916 = vmatprep.mubr.f32.mxu0 0.0
  %7917 = vmatmul.mubr.f32.gmra.mrb[0].mxu0 %v7065
  %v7918 = vpop.f32.mrb[0].mxu0
  %v7919 = vadd.f32 0.0, %v7918
  %v7920 = vpop.f32.mrb[0].mxu0
  %7921 = vmatprep.mubr.f32.mxu0 0.0
  %7922 = vmatmul.mubr.f32.gmra.mrb[0].mxu0 %v7067
  %v7923 = vpop.f32.mrb[0].mxu0
  %v7924 = vadd.f32 0.0, %v7923
  %v7925 = vpop.f32.mrb[0].mxu0
  %7926 = vmatprep.mubr.f32.mxu0 0.0
  %7927 = vmatmul.mubr.f32.gmra.mrb[0].mxu0 %v7069
  %v7928 = vpop.f32.mrb[0].mxu0
  %v7929 = vadd.f32 0.0, %v7928
  %v7930 = vpop.f32.mrb[0].mxu0
  %7931 = vmatprep.mubr.f32.mxu0 0.0
  %7932 = vmatmul.mubr.f32.gmra.mrb[0].mxu0 %v7071
  %v7933 = vpop.f32.mrb[0].mxu0
  %v7934 = vadd.f32 0.0, %v7933
  %v7935 = vpop.f32.mrb[0].mxu0
  %7936 = vmatprep.mubr.f32.mxu0 0.0
  %7937 = vmatmul.mubr.f32.gmra.mrb[0].mxu0 %v7073
  %v7938 = vpop.f32.mrb[0].mxu0
  %v7939 = vadd.f32 0.0, %v7938
  %v7940 = vpop.f32.mrb[0].mxu0
  %7941 = vmatprep.mubr.f32.mxu0 0.0
  %7942 = vmatmul.mubr.f32.gmra.mrb[0].mxu0 %v7075
  %v7943 = vpop.f32.mrb[0].mxu0
  %v7944 = vadd.f32 0.0, %v7943
  %v7945 = vpop.f32.mrb[0].mxu0
  %7946 = vmatprep.mubr.f32.mxu0 0.0
  %7947 = vmatmul.mubr.f32.gmra.mrb[0].mxu0 %v7077
  %v7948 = vpop.f32.mrb[0].mxu0
  %v7949 = vadd.f32 0.0, %v7948
  %v7950 = vpop.f32.mrb[0].mxu0
  %7951 = vmatprep.mubr.f32.mxu0 0.0
  %7952 = vmatmul.mubr.f32.gmra.mrb[0].mxu0 %v7079
  %v7953 = vpop.f32.mrb[0].mxu0
  %v7954 = vadd.f32 0.0, %v7953
  %v7955 = vpop.f32.mrb[0].mxu0
  %7956 = vmatprep.mubr.f32.mxu0 0.0
  %7957 = vmatmul.mubr.f32.gmra.mrb[0].mxu0 %v7081
  %v7958 = vpop.f32.mrb[0].mxu0
  %v7959 = vadd.f32 0.0, %v7958
  %v7960 = vpop.f32.mrb[0].mxu0
  %7961 = vmatprep.mubr.f32.mxu0 0.0
  %7962 = vmatmul.mubr.f32.gmra.mrb[0].mxu0 %v7083
  %v7963 = vpop.f32.mrb[0].mxu0
  %v7964 = vadd.f32 0.0, %v7963
  %v7965 = vpop.f32.mrb[0].mxu0
  %7966 = vmatprep.mubr.f32.mxu0 0.0
  %7967 = vmatmul.mubr.f32.gmra.mrb[0].mxu0 %v7085
  %v7968 = vpop.f32.mrb[0].mxu0
  %v7969 = vadd.f32 0.0, %v7968
  %v7970 = vpop.f32.mrb[0].mxu0
  %7971 = vmatprep.mubr.f32.mxu0 0.0
  %7972 = vmatmul.mubr.f32.gmra.mrb[0].mxu0 %v7087
  %v7973 = vpop.f32.mrb[0].mxu0
  %v7974 = vadd.f32 0.0, %v7973
  %v7975 = vpop.f32.mrb[0].mxu0
  %7976 = vmatprep.mubr.f32.mxu0 0.0
  %7977 = vmatmul.mubr.f32.gmra.mrb[0].mxu0 %v7089
  %v7978 = vpop.f32.mrb[0].mxu0
  %v7979 = vadd.f32 0.0, %v7978
  %v7980 = vpop.f32.mrb[0].mxu0
  %7981 = vmatprep.mubr.f32.mxu0 0.0
  %7982 = vmatmul.mubr.f32.gmra.mrb[0].mxu0 %v7091
  %v7983 = vpop.f32.mrb[0].mxu0
  %v7984 = vadd.f32 0.0, %v7983
  %v7985 = vpop.f32.mrb[0].mxu0
  %7986 = vmatprep.mubr.f32.mxu0 0.0
  %7987 = vmatmul.mubr.f32.gmra.mrb[0].mxu0 %v7093
  %v7988 = vpop.f32.mrb[0].mxu0
  %v7989 = vadd.f32 0.0, %v7988
  %v7990 = vpop.f32.mrb[0].mxu0
  %7991 = vmatprep.mubr.f32.mxu0 0.0
  %7992 = vmatmul.mubr.f32.gmra.mrb[0].mxu0 %v7095
  %v7993 = vpop.f32.mrb[0].mxu0
  %v7994 = vadd.f32 0.0, %v7993
  %v7995 = vpop.f32.mrb[0].mxu0
  %7996 = vmatprep.mubr.f32.mxu0 0.0
  %7997 = vmatmul.mubr.f32.gmra.mrb[0].mxu0 %v7097
  %v7998 = vpop.f32.mrb[0].mxu0
  %v7999 = vadd.f32 0.0, %v7998
  %v8000 = vpop.f32.mrb[0].mxu0
  %8001 = vmatprep.mubr.f32.mxu0 0.0
  %8002 = vmatmul.mubr.f32.gmra.mrb[0].mxu0 %v7099
  %v8003 = vpop.f32.mrb[0].mxu0
  %v8004 = vadd.f32 0.0, %v8003
  %v8005 = vpop.f32.mrb[0].mxu0
  %8006 = vmatprep.mubr.f32.mxu0 0.0
  %8007 = vmatmul.mubr.f32.gmra.mrb[0].mxu0 %v7101
  %v8008 = vpop.f32.mrb[0].mxu0
  %v8009 = vadd.f32 0.0, %v8008
  %v8010 = vpop.f32.mrb[0].mxu0
  %8011 = vmatprep.mubr.f32.mxu0 0.0
  %8012 = vmatmul.mubr.f32.gmra.mrb[0].mxu0 %v7103
  %v8013 = vpop.f32.mrb[0].mxu0
  %v8014 = vadd.f32 0.0, %v8013
  %v8015 = vpop.f32.mrb[0].mxu0
  %8016 = vmatprep.mubr.f32.mxu0 0.0
  %8017 = vmatmul.mubr.f32.gmra.mrb[0].mxu0 %v7105
  %v8018 = vpop.f32.mrb[0].mxu0
  %v8019 = vadd.f32 0.0, %v8018
  %v8020 = vpop.f32.mrb[0].mxu0
  %8021 = vmatprep.mubr.f32.mxu0 0.0
  %8022 = vmatmul.mubr.f32.gmra.mrb[0].mxu0 %v7107
  %v8023 = vpop.f32.mrb[0].mxu0
  %v8024 = vadd.f32 0.0, %v8023
  %v8025 = vpop.f32.mrb[0].mxu0
  %8026 = vmatprep.mubr.f32.mxu0 0.0
  %8027 = vmatmul.mubr.f32.gmra.mrb[0].mxu0 %v7109
  %v8028 = vpop.f32.mrb[0].mxu0
  %v8029 = vadd.f32 0.0, %v8028
  %v8030 = vpop.f32.mrb[0].mxu0
  %8031 = vmatprep.mubr.f32.mxu0 0.0
  %8032 = vmatmul.mubr.f32.gmra.mrb[0].mxu0 %v7111
  %v8033 = vpop.f32.mrb[0].mxu0
  %v8034 = vadd.f32 0.0, %v8033
  %v8035 = vpop.f32.mrb[0].mxu0
  %8036 = vmatprep.mubr.f32.mxu0 0.0
  %8037 = vmatmul.mubr.f32.gmra.mrb[0].mxu0 %v7113
  %v8038 = vpop.f32.mrb[0].mxu0
  %v8039 = vadd.f32 0.0, %v8038
  %v8040 = vpop.f32.mrb[0].mxu0
  %8041 = vmatprep.mubr.f32.mxu0 0.0
  %8042 = vmatmul.mubr.f32.gmra.mrb[0].mxu0 %v7115
  %v8043 = vpop.f32.mrb[0].mxu0
  %v8044 = vadd.f32 0.0, %v8043
  %v8045 = vpop.f32.mrb[0].mxu0
  %8046 = vmatprep.mubr.f32.mxu0 0.0
  %8047 = vmatmul.mubr.f32.gmra.mrb[0].mxu0 %v7338
  %v8048 = vpop.f32.mrb[0].mxu0
  %v8049 = vadd.f32 0.0, %v8048
  %v8050 = vpop.f32.mrb[0].mxu0
  %8051 = vmatprep.mubr.f32.mxu0 0.0
  %8052 = vmatmul.mubr.f32.gmra.mrb[0].mxu0 %v7845
  %v8053 = vpop.f32.mrb[0].mxu0
  %v8054 = vadd.f32 0.0, %v8053
  %v8055 = vpop.f32.mrb[0].mxu0
  %8056 = vdwg.mxu0
  %v8057 = vadd.f32 %v7805, %v7914
  %v8058 = vadd.f32 %v7806, %v7919
  %v8059 = vadd.f32 %v7807, %v7924
  %v8060 = vadd.f32 %v7808, %v7929
  %v8061 = vadd.f32 %v7809, %v7934
  %v8062 = vadd.f32 %v7810, %v7939
  %v8063 = vadd.f32 %v7811, %v7944
  %v8064 = vadd.f32 %v7812, %v7949
  %v8065 = vadd.f32 %v7813, %v7954
  %v8066 = vadd.f32 %v7814, %v7959
  %v8067 = vadd.f32 %v7815, %v7964
  %v8068 = vadd.f32 %v7816, %v7969
  %v8069 = vadd.f32 %v7817, %v7974
  %v8070 = vadd.f32 %v7818, %v7979
  %v8071 = vadd.f32 %v7819, %v7984
  %v8072 = vadd.f32 %v7820, %v7989
  %v8073 = vadd.f32 %v7821, %v7994
  %v8074 = vadd.f32 %v7822, %v7999
  %v8075 = vadd.f32 %v7823, %v8004
  %v8076 = vadd.f32 %v7824, %v8009
  %v8077 = vadd.f32 %v7825, %v8014
  %v8078 = vadd.f32 %v7826, %v8019
  %v8079 = vadd.f32 %v7827, %v8024
  %v8080 = vadd.f32 %v7828, %v8029
  %v8081 = vadd.f32 %v7829, %v8034
  %v8082 = vadd.f32 %v7830, %v8039
  %v8083 = vadd.f32 %v7831, %v8044
  %v8084 = vadd.f32 %v7832, %v8049
  %v8085 = vadd.f32 %v7833, %v8054
  %v8086 = vld [vmem:[%s8] sm:$0xff]
  %v8087 = vld [vmem:[%s8 + $0x8] sm:$0xff]
  %v8088 = vld [vmem:[%s9] sm:$0x1]
  %v8090 = vlaneseq
  %v8091 = vshrl.u32 %v8090, 7
  %v8092 = vsub.s32 0, %v8091
  %v8093 = vrot.slane %v8088, %v8092
  %vm8095 = vcmask 793600
  %v8097 = vsel %vm8095, %v8087, 0
  %vm8099 = vcmask 1040384
  %v8101 = vsel %vm8099, %v8085, 0
  %8103 = vmatprep.subr.mxu0 0.0
  %8104 = vmatpush1.msra.mxu0 %v8057
  %8105 = vmatprep.subr.mxu0 0.0
  %8106 = vmatpush1.msra.mxu0 %v8058
  %8107 = vmatprep.subr.mxu0 0.0
  %8108 = vmatpush1.msra.mxu0 %v8059
  %8109 = vmatprep.subr.mxu0 0.0
  %8110 = vmatpush1.msra.mxu0 %v8060
  %8111 = vmatprep.subr.mxu0 0.0
  %8112 = vmatpush1.msra.mxu0 %v8061
  %8113 = vmatprep.subr.mxu0 0.0
  %8114 = vmatpush1.msra.mxu0 %v8062
  %8115 = vmatprep.subr.mxu0 0.0
  %8116 = vmatpush1.msra.mxu0 %v8063
  %8117 = vmatprep.subr.mxu0 0.0
  %8118 = vmatpush1.msra.mxu0 %v8064
  %8119 = vmatprep.subr.mxu0 0.0
  %8120 = vmatpush1.msra.mxu0 %v8065
  %8121 = vmatprep.subr.mxu0 0.0
  %8122 = vmatpush1.msra.mxu0 %v8066
  %8123 = vmatprep.subr.mxu0 0.0
  %8124 = vmatpush1.msra.mxu0 %v8067
  %8125 = vmatprep.subr.mxu0 0.0
  %8126 = vmatpush1.msra.mxu0 %v8068
  %8127 = vmatprep.subr.mxu0 0.0
  %8128 = vmatpush1.msra.mxu0 %v8069
  %8129 = vmatprep.subr.mxu0 0.0
  %8130 = vmatpush1.msra.mxu0 %v8070
  %8131 = vmatprep.subr.mxu0 0.0
  %8132 = vmatpush1.msra.mxu0 %v8071
  %8133 = vmatprep.subr.mxu0 0.0
  %8134 = vmatpush1.msra.mxu0 %v8072
  %8135 = vmatprep.subr.mxu0 0.0
  %8136 = vmatpush1.msra.mxu0 %v8073
  %8137 = vmatprep.subr.mxu0 0.0
  %8138 = vmatpush1.msra.mxu0 %v8074
  %8139 = vmatprep.subr.mxu0 0.0
  %8140 = vmatpush1.msra.mxu0 %v8075
  %8141 = vmatprep.subr.mxu0 0.0
  %8142 = vmatpush1.msra.mxu0 %v8076
  %8143 = vmatprep.subr.mxu0 0.0
  %8144 = vmatpush1.msra.mxu0 %v8077
  %8145 = vmatprep.subr.mxu0 0.0
  %8146 = vmatpush1.msra.mxu0 %v8078
  %8147 = vmatprep.subr.mxu0 0.0
  %8148 = vmatpush1.msra.mxu0 %v8079
  %8149 = vmatprep.subr.mxu0 0.0
  %8150 = vmatpush1.msra.mxu0 %v8080
  %8151 = vmatprep.subr.mxu0 0.0
  %8152 = vmatpush1.msra.mxu0 %v8081
  %8153 = vmatprep.subr.mxu0 0.0
  %8154 = vmatpush1.msra.mxu0 %v8082
  %8155 = vmatprep.subr.mxu0 0.0
  %8156 = vmatpush1.msra.mxu0 %v8083
  %8157 = vmatprep.subr.mxu0 0.0
  %8158 = vmatpush1.msra.mxu0 %v8084
  %8159 = vmatprep.subr.mxu0 0.0
  %8160 = vmatpush1.msra.mxu0 %v8101
  %8161 = vmatprep.subr.mxu0 0.0
  %8162 = vmatpush1.msra.mxu0 0.0
  %8163 = vmatprep.subr.mxu0 0.0
  %8164 = vmatpush1.msra.mxu0 0.0
  %8165 = vmatprep.subr.mxu0 0.0
  %8166 = vmatpush1.msra.mxu0 0.0
  %8167 = vmatprep.mubr.f32.mxu0 %v8097
  %8168 = vmatmul.mubr.f32.gmra.mrb[0].mxu0 %v8086
  %v8169 = vpop.f32.mrb[0].mxu0
  %v8170 = vadd.f32 %v8093, %v8169
  %v8171 = vpop.f32.mrb[0].mxu0
  %8172 = vdwg.mxu0
  %v8173 = vmax.f32 %v8170, 0.0
  %v8174 = vld [vmem:[%s10] sm:$0xff]
  %v8175 = vld [vmem:[%s10 + $0x8] sm:$0xff]
  %v8176 = vld [vmem:[%s10 + $0x10] sm:$0xff]
  %v8177 = vld [vmem:[%s10 + $0x18] sm:$0xff]
  %v8178 = vld [vmem:[%s10 + $0x20] sm:$0xff]
  %v8179 = vld [vmem:[%s10 + $0x28] sm:$0xff]
  %v8180 = vld [vmem:[%s10 + $0x30] sm:$0xff]
  %v8181 = vld [vmem:[%s10 + $0x38] sm:$0xff]
  %v8182 = vld [vmem:[%s10 + $0x40] sm:$0xff]
  %v8183 = vld [vmem:[%s10 + $0x48] sm:$0xff]
  %v8184 = vld [vmem:[%s10 + $0x50] sm:$0xff]
  %v8185 = vld [vmem:[%s10 + $0x58] sm:$0xff]
  %v8186 = vld [vmem:[%s10 + $0x60] sm:$0xff]
  %v8187 = vld [vmem:[%s10 + $0x68] sm:$0xff]
  %v8188 = vld [vmem:[%s10 + $0x70] sm:$0xff]
  %v8189 = vld [vmem:[%s11] sm:$0x1]
  %v8191 = vlaneseq
  %v8192 = vshrl.u32 %v8191, 7
  %v8193 = vsub.s32 0, %v8192
  %v8194 = vrot.slane %v8189, %v8193
  %vm8196 = vcmask 982016
  %v8198 = vsel %vm8196, %v8173, 0
  %8200 = vmatprep.subr.mxu0 0.0
  %8201 = vmatpush1.msra.mxu0 %v8174
  %8202 = vmatprep.subr.mxu0 0.0
  %8203 = vmatpush1.msra.mxu0 %v8175
  %8204 = vmatprep.subr.mxu0 0.0
  %8205 = vmatpush1.msra.mxu0 %v8176
  %8206 = vmatprep.subr.mxu0 0.0
  %8207 = vmatpush1.msra.mxu0 %v8177
  %8208 = vmatprep.subr.mxu0 0.0
  %8209 = vmatpush1.msra.mxu0 %v8178
  %8210 = vmatprep.subr.mxu0 0.0
  %8211 = vmatpush1.msra.mxu0 %v8179
  %8212 = vmatprep.subr.mxu0 0.0
  %8213 = vmatpush1.msra.mxu0 %v8180
  %8214 = vmatprep.subr.mxu0 0.0
  %8215 = vmatpush1.msra.mxu0 %v8181
  %8216 = vmatprep.subr.mxu0 0.0
  %8217 = vmatpush1.msra.mxu0 %v8182
  %8218 = vmatprep.subr.mxu0 0.0
  %8219 = vmatpush1.msra.mxu0 %v8183
  %8220 = vmatprep.subr.mxu0 0.0
  %8221 = vmatpush1.msra.mxu0 %v8184
  %8222 = vmatprep.subr.mxu0 0.0
  %8223 = vmatpush1.msra.mxu0 %v8185
  %8224 = vmatprep.subr.mxu0 0.0
  %8225 = vmatpush1.msra.mxu0 %v8186
  %8226 = vmatprep.subr.mxu0 0.0
  %8227 = vmatpush1.msra.mxu0 %v8187
  %8228 = vmatprep.subr.mxu0 0.0
  %8229 = vmatpush1.msra.mxu0 %v8188
  %8230 = vmatprep.subr.mxu0 0.0
  %8231 = vmatpush1.msra.mxu0 0.0
  %8232 = vmatprep.subr.mxu0 0.0
  %8233 = vmatpush1.msra.mxu0 0.0
  %8234 = vmatprep.subr.mxu0 0.0
  %8235 = vmatpush1.msra.mxu0 0.0
  %8236 = vmatprep.subr.mxu0 0.0
  %8237 = vmatpush1.msra.mxu0 0.0
  %8238 = vmatprep.subr.mxu0 0.0
  %8239 = vmatpush1.msra.mxu0 0.0
  %8240 = vmatprep.subr.mxu0 0.0
  %8241 = vmatpush1.msra.mxu0 0.0
  %8242 = vmatprep.subr.mxu0 0.0
  %8243 = vmatpush1.msra.mxu0 0.0
  %8244 = vmatprep.subr.mxu0 0.0
  %8245 = vmatpush1.msra.mxu0 0.0
  %8246 = vmatprep.subr.mxu0 0.0
  %8247 = vmatpush1.msra.mxu0 0.0
  %8248 = vmatprep.subr.mxu0 0.0
  %8249 = vmatpush1.msra.mxu0 0.0
  %8250 = vmatprep.subr.mxu0 0.0
  %8251 = vmatpush1.msra.mxu0 0.0
  %8252 = vmatprep.subr.mxu0 0.0
  %8253 = vmatpush1.msra.mxu0 0.0
  %8254 = vmatprep.subr.mxu0 0.0
  %8255 = vmatpush1.msra.mxu0 0.0
  %8256 = vmatprep.subr.mxu0 0.0
  %8257 = vmatpush1.msra.mxu0 0.0
  %8258 = vmatprep.subr.mxu0 0.0
  %8259 = vmatpush1.msra.mxu0 0.0
  %8260 = vmatprep.subr.mxu0 0.0
  %8261 = vmatpush1.msra.mxu0 0.0
  %8262 = vmatprep.subr.mxu0 0.0
  %8263 = vmatpush1.msra.mxu0 0.0
  %8264 = vmatprep.mubr.f32.mxu0 0.0
  %8265 = vmatmul.mubr.f32.gmra.mrb[0].mxu0 %v8198
  %v8266 = vpop.f32.mrb[0].mxu0
  %v8267 = vadd.f32 %v8194, %v8266
  %v8268 = vpop.f32.mrb[0].mxu0
  %8269 = vdwg.mxu0
  %v8270 = vmax.f32 %v8267, 0.0
  %v8271 = vld [vmem:[%s12] sm:$0xff]
  %v8272 = vld [vmem:[%s12 + $0x8] sm:$0xff]
  %v8273 = vld [vmem:[%s12 + $0x10] sm:$0xff]
  %v8274 = vld [vmem:[%s12 + $0x18] sm:$0xff]
  %v8275 = vld [vmem:[%s12 + $0x20] sm:$0xff]
  %v8276 = vld [vmem:[%s12 + $0x28] sm:$0xff]
  %v8277 = vld [vmem:[%s12 + $0x30] sm:$0xff]
  %v8278 = vld [vmem:[%s12 + $0x38] sm:$0xff]
  %v8279 = vld [vmem:[%s12 + $0x40] sm:$0xff]
  %v8280 = vld [vmem:[%s12 + $0x48] sm:$0xff]
  %v8281 = vld [vmem:[%s12 + $0x50] sm:$0xf]
  %v8282 = vld [vmem:[%s13] sm:$0x1]
  %v8284 = vlaneseq
  %v8285 = vshrl.u32 %v8284, 7
  %v8286 = vsub.s32 0, %v8285
  %v8287 = vrot.slane %v8282, %v8286
  %v8290 = vsel %vm3559, %v8270, 0
  %v8293 = vsel %vm3622, %v8281, 0
  %8295 = vmatprep.subr.mxu0 0.0
  %8296 = vmatpush1.msra.mxu0 %v8271
  %8297 = vmatprep.subr.mxu0 0.0
  %8298 = vmatpush1.msra.mxu0 %v8272
  %8299 = vmatprep.subr.mxu0 0.0
  %8300 = vmatpush1.msra.mxu0 %v8273
  %8301 = vmatprep.subr.mxu0 0.0
  %8302 = vmatpush1.msra.mxu0 %v8274
  %8303 = vmatprep.subr.mxu0 0.0
  %8304 = vmatpush1.msra.mxu0 %v8275
  %8305 = vmatprep.subr.mxu0 0.0
  %8306 = vmatpush1.msra.mxu0 %v8276
  %8307 = vmatprep.subr.mxu0 0.0
  %8308 = vmatpush1.msra.mxu0 %v8277
  %8309 = vmatprep.subr.mxu0 0.0
  %8310 = vmatpush1.msra.mxu0 %v8278
  %8311 = vmatprep.subr.mxu0 0.0
  %8312 = vmatpush1.msra.mxu0 %v8279
  %8313 = vmatprep.subr.mxu0 0.0
  %8314 = vmatpush1.msra.mxu0 %v8280
  %8315 = vmatprep.subr.mxu0 0.0
  %8316 = vmatpush1.msra.mxu0 %v8293
  %8317 = vmatprep.subr.mxu0 0.0
  %8318 = vmatpush1.msra.mxu0 0.0
  %8319 = vmatprep.subr.mxu0 0.0
  %8320 = vmatpush1.msra.mxu0 0.0
  %8321 = vmatprep.subr.mxu0 0.0
  %8322 = vmatpush1.msra.mxu0 0.0
  %8323 = vmatprep.subr.mxu0 0.0
  %8324 = vmatpush1.msra.mxu0 0.0
  %8325 = vmatprep.subr.mxu0 0.0
  %8326 = vmatpush1.msra.mxu0 0.0
  %8327 = vmatprep.subr.mxu0 0.0
  %8328 = vmatpush1.msra.mxu0 0.0
  %8329 = vmatprep.subr.mxu0 0.0
  %8330 = vmatpush1.msra.mxu0 0.0
  %8331 = vmatprep.subr.mxu0 0.0
  %8332 = vmatpush1.msra.mxu0 0.0
  %8333 = vmatprep.subr.mxu0 0.0
  %8334 = vmatpush1.msra.mxu0 0.0
  %8335 = vmatprep.subr.mxu0 0.0
  %8336 = vmatpush1.msra.mxu0 0.0
  %8337 = vmatprep.subr.mxu0 0.0
  %8338 = vmatpush1.msra.mxu0 0.0
  %8339 = vmatprep.subr.mxu0 0.0
  %8340 = vmatpush1.msra.mxu0 0.0
  %8341 = vmatprep.subr.mxu0 0.0
  %8342 = vmatpush1.msra.mxu0 0.0
  %8343 = vmatprep.subr.mxu0 0.0
  %8344 = vmatpush1.msra.mxu0 0.0
  %8345 = vmatprep.subr.mxu0 0.0
  %8346 = vmatpush1.msra.mxu0 0.0
  %8347 = vmatprep.subr.mxu0 0.0
  %8348 = vmatpush1.msra.mxu0 0.0
  %8349 = vmatprep.subr.mxu0 0.0
  %8350 = vmatpush1.msra.mxu0 0.0
  %8351 = vmatprep.subr.mxu0 0.0
  %8352 = vmatpush1.msra.mxu0 0.0
  %8353 = vmatprep.subr.mxu0 0.0
  %8354 = vmatpush1.msra.mxu0 0.0
  %8355 = vmatprep.subr.mxu0 0.0
  %8356 = vmatpush1.msra.mxu0 0.0
  %8357 = vmatprep.subr.mxu0 0.0
  %8358 = vmatpush1.msra.mxu0 0.0
  %8359 = vmatprep.mubr.f32.mxu0 0.0
  %8360 = vmatmul.mubr.f32.gmra.mrb[0].mxu0 %v8290
  %v8361 = vpop.f32.mrb[0].mxu0
  %v8362 = vadd.f32 %v8287, %v8361
  %v8363 = vpop.f32.mrb[0].mxu0
  %8364 = vdwg.mxu0
  %8365 = vst [vmem:[%s14] sm:$0xff] %v8362
  // Predicated region
  $region58: #{lenet5_forward.1} parent=0 // pred_check
    _
  $region59: #{lenet5_forward.1} parent=0 // pred_check_branch
    %8367 = sbr.rel (0) target = $region61
  $region60: #{lenet5_forward.1} parent=0 // pred_region
    _
  $region61: #{lenet5_forward.1} parent=0 // pred_fallthru
    _
  // Predicated region
  $region62: #{lenet5_forward.1} parent=0 // pred_check
    _
  $region63: #{lenet5_forward.1} parent=0 // pred_check_branch
    %8369 = sbr.rel (0) target = $region65
  $region64: #{lenet5_forward.1} parent=0 // pred_region
    _
  $region65: #{lenet5_forward.1} parent=0 // pred_fallthru
    _

</llo_original>
